<compile_context>
chip_gen: v7x
topology: tpu7x:2x2x1
jax: 0.10.0
libtpu: 0.0.40
codegen_flags: <defaults>
</compile_context>

<pallas_src>
import functools

import jax
import jax.numpy as jnp
from jax.experimental import pallas as pl
from jax.experimental.pallas import tpu as pltpu

EPS_BN = 0.8        # mirrors nn.BatchNorm1d(out_feat, 0.8); do NOT "fix" to 1e-5
NEG_SLOPE = 0.2


def _pick_tile(out_dim):
    # Largest lane-dense tile (multiple of 128, <= 512) that divides out_dim.
    for t in (512, 256, 128):
        if out_dim % t == 0:
            return t
    return out_dim


# ----------------------------------------------------------------------------
# Pallas kernels
# ----------------------------------------------------------------------------
def _linear_block_kernel(*refs, use_bn):
    """(N,K)bf16 @ (K,TN)bf16 -> f32 acc, + bias, [+ BN(batch stats)], LeakyReLU."""
    if use_bn:
        x_ref, w_ref, b_ref, g_ref, bt_ref, o_ref = refs
    else:
        x_ref, w_ref, b_ref, o_ref = refs

    acc = jnp.dot(x_ref[...], w_ref[...], preferred_element_type=jnp.float32)
    acc = acc + b_ref[...]
    if use_bn:
        # PyTorch training-mode BatchNorm1d: per-feature stats over the batch,
        # biased variance, eps=0.8.  Exact under feature-axis tiling because
        # the whole batch is present in every block.
        mean = jnp.mean(acc, axis=0, keepdims=True)
        var = jnp.mean(jnp.square(acc - mean), axis=0, keepdims=True)
        acc = (acc - mean) * jax.lax.rsqrt(var + EPS_BN)
        acc = acc * g_ref[...] + bt_ref[...]
    acc = jnp.where(acc >= 0.0, acc, NEG_SLOPE * acc)
    o_ref[...] = acc.astype(o_ref.dtype)


def _linear_tanh_kernel(x_ref, w_ref, b_ref, o_ref):
    acc = jnp.dot(x_ref[...], w_ref[...], preferred_element_type=jnp.float32)
    o_ref[...] = jnp.tanh(acc + b_ref[...]).astype(o_ref.dtype)


# ----------------------------------------------------------------------------
# pallas_call wrappers
# ----------------------------------------------------------------------------
def _compiler_params():
    return pltpu.CompilerParams(
        dimension_semantics=("parallel",),   # shard feature tiles across TCs (v7x)
        vmem_limit_bytes=32 << 20,           # explicit, with headroom on v7x
    )


def linear_block(x_bf16, w_bf16, b, gamma, beta, *, use_bn):
    n, k = x_bf16.shape
    out = w_bf16.shape[1]
    tn = _pick_tile(out)

    x_spec = pl.BlockSpec((n, k), lambda j: (0, 0))        # resident across tiles
    w_spec = pl.BlockSpec((k, tn), lambda j: (0, j))
    vec_spec = pl.BlockSpec((1, tn), lambda j: (0, j))
    out_spec = pl.BlockSpec((n, tn), lambda j: (0, j))

    in_specs = [x_spec, w_spec, vec_spec]
    operands = (x_bf16, w_bf16, b)
    if use_bn:
        in_specs += [vec_spec, vec_spec]
        operands += (gamma, beta)

    return pl.pallas_call(
        functools.partial(_linear_block_kernel, use_bn=use_bn),
        out_shape=jax.ShapeDtypeStruct((n, out), jnp.bfloat16),
        grid_spec=pltpu.PrefetchScalarGridSpec(
            num_scalar_prefetch=0,
            grid=(out // tn,),
            in_specs=in_specs,
            out_specs=out_spec,
        ),
        compiler_params=_compiler_params(),
    )(*operands)


def linear_tanh(x_bf16, w_bf16, b):
    n, k = x_bf16.shape
    out = w_bf16.shape[1]
    tn = _pick_tile(out)

    return pl.pallas_call(
        _linear_tanh_kernel,
        out_shape=jax.ShapeDtypeStruct((n, out), jnp.float32),
        grid_spec=pltpu.PrefetchScalarGridSpec(
            num_scalar_prefetch=0,
            grid=(out // tn,),
            in_specs=[pl.BlockSpec((n, k), lambda j: (0, 0)),
                      pl.BlockSpec((k, tn), lambda j: (0, j)),
                      pl.BlockSpec((1, tn), lambda j: (0, j))],
            out_specs=pl.BlockSpec((n, tn), lambda j: (0, j)),
        ),
        compiler_params=_compiler_params(),
    )(x_bf16, w_bf16, b)


# ----------------------------------------------------------------------------
# Parameter setup (deterministic, synthetic)
# ----------------------------------------------------------------------------
def init_params(key, latent_dim, img_channel, height, width):
    dims = [latent_dim, 256, 512, 1024, 2048]
    layer_params = []
    for i in range(4):
        cin, cout = dims[i], dims[i + 1]
        key, k1, k2, k3, k4 = jax.random.split(key, 5)
        w = (0.1 * jax.random.normal(k1, (cin, cout), jnp.float32)).astype(jnp.bfloat16)
        b = 0.1 * jax.random.normal(k2, (1, cout), jnp.float32)
        gamma = 1.0 + 0.1 * jax.random.normal(k3, (1, cout), jnp.float32)
        beta = 0.1 * jax.random.normal(k4, (1, cout), jnp.float32)
        layer_params.append((w, b, gamma, beta))

    out_feat = img_channel * height * width
    key, k1, k2 = jax.random.split(key, 3)
    wf = (0.1 * jax.random.normal(k1, (2048, out_feat), jnp.float32)).astype(jnp.bfloat16)
    bf = 0.1 * jax.random.normal(k2, (1, out_feat), jnp.float32)
    return layer_params, (wf, bf)


# ----------------------------------------------------------------------------
# Forward pass (mirrors Generator.forward)
# ----------------------------------------------------------------------------
def generator_forward(z, layer_params, final_params, *, img_channel, height, width):
    x = z.astype(jnp.bfloat16)
    for i, (w, b, g, bt) in enumerate(layer_params):
        x = linear_block(x, w, b, g, bt, use_bn=(i != 0))   # block 0 has no BN
    wf, bf = final_params
    img_flat = linear_tanh(x, wf, bf)
    return img_flat.reshape(z.shape[0], img_channel, height, width)


# Pure-JAX reference (same bf16 intermediate casts) for correctness checking.
def reference_forward(z, layer_params, final_params, *, img_channel, height, width):
    x = z.astype(jnp.bfloat16)
    for i, (w, b, g, bt) in enumerate(layer_params):
        acc = jnp.dot(x.astype(jnp.float32), w.astype(jnp.float32)) + b
        if i != 0:
            mean = jnp.mean(acc, axis=0, keepdims=True)
            var = jnp.mean(jnp.square(acc - mean), axis=0, keepdims=True)
            acc = (acc - mean) * jax.lax.rsqrt(var + EPS_BN)
            acc = acc * g + bt
        acc = jnp.where(acc >= 0.0, acc, NEG_SLOPE * acc)
        x = acc.astype(jnp.bfloat16)
    wf, bf = final_params
    out = jnp.tanh(jnp.dot(x.astype(jnp.float32), wf.astype(jnp.float32)) + bf)
    return out.reshape(z.shape[0], img_channel, height, width)


if __name__ == "__main__":
    N, LATENT, C, H, W = 2, 64, 4, 16, 16

    key = jax.random.PRNGKey(0)
    key, k_z = jax.random.split(key)
    z = jax.random.normal(k_z, (N, LATENT), jnp.float32)

    layer_params, final_params = init_params(jax.random.PRNGKey(0), LATENT, C, H, W)

    fwd = jax.jit(functools.partial(generator_forward,
                                    img_channel=C, height=H, width=W))
    img = jax.block_until_ready(fwd(z, layer_params, final_params))

    assert img.shape == (N, C, H, W), img.shape
    assert bool(jnp.all(jnp.isfinite(img)))
    assert bool(jnp.all((img >= -1.0) & (img <= 1.0)))   # Tanh range

    ref = reference_forward(z, layer_params, final_params,
                            img_channel=C, height=H, width=W)
    max_err = float(jnp.max(jnp.abs(img - ref)))
    assert max_err < 3e-2, f"mismatch vs reference: max abs err {max_err}"

    print("KERNEL_OK")
</pallas_src>

<mosaic_0001>
module attributes {stable_mosaic.version = 11 : i64} {
  func.func @_linear_block_kernel(%arg0: i32, %arg1: memref<2x512xbf16, #tpu.memory_space<vmem>>, %arg2: memref<512x512xbf16, #tpu.memory_space<vmem>>, %arg3: memref<1x512xf32, #tpu.memory_space<vmem>>, %arg4: memref<1x512xf32, #tpu.memory_space<vmem>>, %arg5: memref<1x512xf32, #tpu.memory_space<vmem>>, %arg6: memref<2x512xbf16, #tpu.memory_space<vmem>>) attributes {dimension_semantics = [#tpu.dimension_semantics<parallel>], iteration_bounds = array<i64: 2>, scalar_prefetch = 0 : i64, scratch_operands = 0 : i64, tpu.core_type = #tpu.core_type<tc>, window_params = [{pipeline_mode = #tpu.pipeline_mode<synchronous>, transform_indices = @transform_0, window_bounds = array<i64: 2, 512>}, {transform_indices = @transform_1, window_bounds = array<i64: 512, 512>}, {transform_indices = @transform_2, window_bounds = array<i64: 1, 512>}, {transform_indices = @transform_3, window_bounds = array<i64: 1, 512>}, {transform_indices = @transform_4, window_bounds = array<i64: 1, 512>}, {transform_indices = @transform_5, window_bounds = array<i64: 2, 512>}]} {
    %c0 = arith.constant 0 : index
    %c0_0 = arith.constant 0 : index
    %0 = vector.load %arg1[%c0, %c0_0] : memref<2x512xbf16, #tpu.memory_space<vmem>>, vector<2x512xbf16>
    %c0_1 = arith.constant 0 : index
    %c0_2 = arith.constant 0 : index
    %1 = vector.load %arg2[%c0_1, %c0_2] : memref<512x512xbf16, #tpu.memory_space<vmem>>, vector<512x512xbf16>
    %cst = arith.constant dense<0.000000e+00> : vector<2x512xf32>
    %2 = tpu.matmul %0, %1, %cst {dimension_numbers = #tpu.dot_dimension_numbers<[1], [0], [0], [1], [0, 0, 1, 1], [], []>} : vector<2x512xbf16>, vector<512x512xbf16>, vector<2x512xf32> -> vector<2x512xf32>
    %c0_3 = arith.constant 0 : index
    %c0_4 = arith.constant 0 : index
    %3 = vector.load %arg3[%c0_3, %c0_4] : memref<1x512xf32, #tpu.memory_space<vmem>>, vector<1x512xf32>
    %4 = vector.broadcast %3 : vector<1x512xf32> to vector<2x512xf32>
    %5 = arith.addf %2, %4 : vector<2x512xf32>
    %cst_5 = arith.constant dense<0.000000e+00> : vector<512xf32>
    %6 = vector.multi_reduction <add>, %5, %cst_5 [0] : vector<2x512xf32> to vector<512xf32>
    %7 = vector.shape_cast %6 : vector<512xf32> to vector<1x512xf32>
    %cst_6 = arith.constant 2.000000e+00 : f32
    %8 = vector.broadcast %cst_6 : f32 to vector<1x512xf32>
    %9 = arith.divf %7, %8 : vector<1x512xf32>
    %10 = vector.broadcast %9 : vector<1x512xf32> to vector<2x512xf32>
    %11 = arith.subf %5, %10 : vector<2x512xf32>
    %12 = arith.mulf %11, %11 : vector<2x512xf32>
    %cst_7 = arith.constant dense<0.000000e+00> : vector<512xf32>
    %13 = vector.multi_reduction <add>, %12, %cst_7 [0] : vector<2x512xf32> to vector<512xf32>
    %14 = vector.shape_cast %13 : vector<512xf32> to vector<1x512xf32>
    %cst_8 = arith.constant 2.000000e+00 : f32
    %15 = vector.broadcast %cst_8 : f32 to vector<1x512xf32>
    %16 = arith.divf %14, %15 : vector<1x512xf32>
    %17 = vector.broadcast %9 : vector<1x512xf32> to vector<2x512xf32>
    %18 = arith.subf %5, %17 : vector<2x512xf32>
    %cst_9 = arith.constant 8.000000e-01 : f32
    %19 = vector.broadcast %cst_9 : f32 to vector<1x512xf32>
    %20 = arith.addf %16, %19 : vector<1x512xf32>
    %21 = math.rsqrt %20 : vector<1x512xf32>
    %22 = vector.broadcast %21 : vector<1x512xf32> to vector<2x512xf32>
    %23 = arith.mulf %18, %22 : vector<2x512xf32>
    %c0_10 = arith.constant 0 : index
    %c0_11 = arith.constant 0 : index
    %24 = vector.load %arg4[%c0_10, %c0_11] : memref<1x512xf32, #tpu.memory_space<vmem>>, vector<1x512xf32>
    %25 = vector.broadcast %24 : vector<1x512xf32> to vector<2x512xf32>
    %26 = arith.mulf %23, %25 : vector<2x512xf32>
    %c0_12 = arith.constant 0 : index
    %c0_13 = arith.constant 0 : index
    %27 = vector.load %arg5[%c0_12, %c0_13] : memref<1x512xf32, #tpu.memory_space<vmem>>, vector<1x512xf32>
    %28 = vector.broadcast %27 : vector<1x512xf32> to vector<2x512xf32>
    %29 = arith.addf %26, %28 : vector<2x512xf32>
    %cst_14 = arith.constant 0.000000e+00 : f32
    %30 = vector.broadcast %cst_14 : f32 to vector<2x512xf32>
    %31 = arith.cmpf oge, %29, %30 : vector<2x512xf32>
    %cst_15 = arith.constant 2.000000e-01 : f32
    %32 = vector.broadcast %cst_15 : f32 to vector<2x512xf32>
    %33 = arith.mulf %32, %29 : vector<2x512xf32>
    %34 = arith.select %31, %29, %33 : vector<2x512xi1>, vector<2x512xf32>
    %35 = arith.truncf %34 : vector<2x512xf32> to vector<2x512xbf16>
    %c0_16 = arith.constant 0 : index
    %c0_17 = arith.constant 0 : index
    %36 = vector.load %arg6[%c0_16, %c0_17] : memref<2x512xbf16, #tpu.memory_space<vmem>>, vector<2x512xbf16>
    tpu.vector_store %arg6[%c0_16, %c0_17], %35 {strides = array<i32>} : memref<2x512xbf16, #tpu.memory_space<vmem>>, vector<2x512xbf16>,
    return
  }
  func.func @transform_0(%arg0: i32) -> (i32, i32) {
    %c0_i32 = arith.constant 0 : i32
    %c0_i32_0 = arith.constant 0 : i32
    %c0_i32_1 = arith.constant 0 : i32
    return %c0_i32, %c0_i32_0 : i32, i32
  }
  func.func @transform_1(%arg0: i32) -> (i32, i32) {
    %c0_i32 = arith.constant 0 : i32
    %c0_i32_0 = arith.constant 0 : i32
    return %c0_i32, %arg0 : i32, i32
  }
  func.func @transform_2(%arg0: i32) -> (i32, i32) {
    %c0_i32 = arith.constant 0 : i32
    %c0_i32_0 = arith.constant 0 : i32
    return %c0_i32, %arg0 : i32, i32
  }
  func.func @transform_3(%arg0: i32) -> (i32, i32) {
    %c0_i32 = arith.constant 0 : i32
    %c0_i32_0 = arith.constant 0 : i32
    return %c0_i32, %arg0 : i32, i32
  }
  func.func @transform_4(%arg0: i32) -> (i32, i32) {
    %c0_i32 = arith.constant 0 : i32
    %c0_i32_0 = arith.constant 0 : i32
    return %c0_i32, %arg0 : i32, i32
  }
  func.func @transform_5(%arg0: i32) -> (i32, i32) {
    %c0_i32 = arith.constant 0 : i32
    %c0_i32_0 = arith.constant 0 : i32
    return %c0_i32, %arg0 : i32, i32
  }
}

module attributes {stable_mosaic.version = 11 : i64} {
  func.func @_linear_block_kernel(%arg0: i32, %arg1: memref<2x256xbf16, #tpu.memory_space<vmem>>, %arg2: memref<256x512xbf16, #tpu.memory_space<vmem>>, %arg3: memref<1x512xf32, #tpu.memory_space<vmem>>, %arg4: memref<1x512xf32, #tpu.memory_space<vmem>>, %arg5: memref<1x512xf32, #tpu.memory_space<vmem>>, %arg6: memref<2x512xbf16, #tpu.memory_space<vmem>>) attributes {dimension_semantics = [#tpu.dimension_semantics<parallel>], iteration_bounds = array<i64: 1>, scalar_prefetch = 0 : i64, scratch_operands = 0 : i64, tpu.core_type = #tpu.core_type<tc>, window_params = [{pipeline_mode = #tpu.pipeline_mode<synchronous>, transform_indices = @transform_0, window_bounds = array<i64: 2, 256>}, {transform_indices = @transform_1, window_bounds = array<i64: 256, 512>}, {transform_indices = @transform_2, window_bounds = array<i64: 1, 512>}, {transform_indices = @transform_3, window_bounds = array<i64: 1, 512>}, {transform_indices = @transform_4, window_bounds = array<i64: 1, 512>}, {transform_indices = @transform_5, window_bounds = array<i64: 2, 512>}]} {
    %c0 = arith.constant 0 : index
    %c0_0 = arith.constant 0 : index
    %0 = vector.load %arg1[%c0, %c0_0] : memref<2x256xbf16, #tpu.memory_space<vmem>>, vector<2x256xbf16>
    %c0_1 = arith.constant 0 : index
    %c0_2 = arith.constant 0 : index
    %1 = vector.load %arg2[%c0_1, %c0_2] : memref<256x512xbf16, #tpu.memory_space<vmem>>, vector<256x512xbf16>
    %cst = arith.constant dense<0.000000e+00> : vector<2x512xf32>
    %2 = tpu.matmul %0, %1, %cst {dimension_numbers = #tpu.dot_dimension_numbers<[1], [0], [0], [1], [0, 0, 1, 1], [], []>} : vector<2x256xbf16>, vector<256x512xbf16>, vector<2x512xf32> -> vector<2x512xf32>
    %c0_3 = arith.constant 0 : index
    %c0_4 = arith.constant 0 : index
    %3 = vector.load %arg3[%c0_3, %c0_4] : memref<1x512xf32, #tpu.memory_space<vmem>>, vector<1x512xf32>
    %4 = vector.broadcast %3 : vector<1x512xf32> to vector<2x512xf32>
    %5 = arith.addf %2, %4 : vector<2x512xf32>
    %cst_5 = arith.constant dense<0.000000e+00> : vector<512xf32>
    %6 = vector.multi_reduction <add>, %5, %cst_5 [0] : vector<2x512xf32> to vector<512xf32>
    %7 = vector.shape_cast %6 : vector<512xf32> to vector<1x512xf32>
    %cst_6 = arith.constant 2.000000e+00 : f32
    %8 = vector.broadcast %cst_6 : f32 to vector<1x512xf32>
    %9 = arith.divf %7, %8 : vector<1x512xf32>
    %10 = vector.broadcast %9 : vector<1x512xf32> to vector<2x512xf32>
    %11 = arith.subf %5, %10 : vector<2x512xf32>
    %12 = arith.mulf %11, %11 : vector<2x512xf32>
    %cst_7 = arith.constant dense<0.000000e+00> : vector<512xf32>
    %13 = vector.multi_reduction <add>, %12, %cst_7 [0] : vector<2x512xf32> to vector<512xf32>
    %14 = vector.shape_cast %13 : vector<512xf32> to vector<1x512xf32>
    %cst_8 = arith.constant 2.000000e+00 : f32
    %15 = vector.broadcast %cst_8 : f32 to vector<1x512xf32>
    %16 = arith.divf %14, %15 : vector<1x512xf32>
    %17 = vector.broadcast %9 : vector<1x512xf32> to vector<2x512xf32>
    %18 = arith.subf %5, %17 : vector<2x512xf32>
    %cst_9 = arith.constant 8.000000e-01 : f32
    %19 = vector.broadcast %cst_9 : f32 to vector<1x512xf32>
    %20 = arith.addf %16, %19 : vector<1x512xf32>
    %21 = math.rsqrt %20 : vector<1x512xf32>
    %22 = vector.broadcast %21 : vector<1x512xf32> to vector<2x512xf32>
    %23 = arith.mulf %18, %22 : vector<2x512xf32>
    %c0_10 = arith.constant 0 : index
    %c0_11 = arith.constant 0 : index
    %24 = vector.load %arg4[%c0_10, %c0_11] : memref<1x512xf32, #tpu.memory_space<vmem>>, vector<1x512xf32>
    %25 = vector.broadcast %24 : vector<1x512xf32> to vector<2x512xf32>
    %26 = arith.mulf %23, %25 : vector<2x512xf32>
    %c0_12 = arith.constant 0 : index
    %c0_13 = arith.constant 0 : index
    %27 = vector.load %arg5[%c0_12, %c0_13] : memref<1x512xf32, #tpu.memory_space<vmem>>, vector<1x512xf32>
    %28 = vector.broadcast %27 : vector<1x512xf32> to vector<2x512xf32>
    %29 = arith.addf %26, %28 : vector<2x512xf32>
    %cst_14 = arith.constant 0.000000e+00 : f32
    %30 = vector.broadcast %cst_14 : f32 to vector<2x512xf32>
    %31 = arith.cmpf oge, %29, %30 : vector<2x512xf32>
    %cst_15 = arith.constant 2.000000e-01 : f32
    %32 = vector.broadcast %cst_15 : f32 to vector<2x512xf32>
    %33 = arith.mulf %32, %29 : vector<2x512xf32>
    %34 = arith.select %31, %29, %33 : vector<2x512xi1>, vector<2x512xf32>
    %35 = arith.truncf %34 : vector<2x512xf32> to vector<2x512xbf16>
    %c0_16 = arith.constant 0 : index
    %c0_17 = arith.constant 0 : index
    %36 = vector.load %arg6[%c0_16, %c0_17] : memref<2x512xbf16, #tpu.memory_space<vmem>>, vector<2x512xbf16>
    tpu.vector_store %arg6[%c0_16, %c0_17], %35 {strides = array<i32>} : memref<2x512xbf16, #tpu.memory_space<vmem>>, vector<2x512xbf16>,
    return
  }
  func.func @transform_0(%arg0: i32) -> (i32, i32) {
    %c0_i32 = arith.constant 0 : i32
    %c0_i32_0 = arith.constant 0 : i32
    %c0_i32_1 = arith.constant 0 : i32
    return %c0_i32, %c0_i32_0 : i32, i32
  }
  func.func @transform_1(%arg0: i32) -> (i32, i32) {
    %c0_i32 = arith.constant 0 : i32
    %c0_i32_0 = arith.constant 0 : i32
    return %c0_i32, %arg0 : i32, i32
  }
  func.func @transform_2(%arg0: i32) -> (i32, i32) {
    %c0_i32 = arith.constant 0 : i32
    %c0_i32_0 = arith.constant 0 : i32
    return %c0_i32, %arg0 : i32, i32
  }
  func.func @transform_3(%arg0: i32) -> (i32, i32) {
    %c0_i32 = arith.constant 0 : i32
    %c0_i32_0 = arith.constant 0 : i32
    return %c0_i32, %arg0 : i32, i32
  }
  func.func @transform_4(%arg0: i32) -> (i32, i32) {
    %c0_i32 = arith.constant 0 : i32
    %c0_i32_0 = arith.constant 0 : i32
    return %c0_i32, %arg0 : i32, i32
  }
  func.func @transform_5(%arg0: i32) -> (i32, i32) {
    %c0_i32 = arith.constant 0 : i32
    %c0_i32_0 = arith.constant 0 : i32
    return %c0_i32, %arg0 : i32, i32
  }
}

module attributes {stable_mosaic.version = 11 : i64} {
  func.func @_linear_block_kernel(%arg0: i32, %arg1: memref<2x64xbf16, #tpu.memory_space<vmem>>, %arg2: memref<64x256xbf16, #tpu.memory_space<vmem>>, %arg3: memref<1x256xf32, #tpu.memory_space<vmem>>, %arg4: memref<2x256xbf16, #tpu.memory_space<vmem>>) attributes {dimension_semantics = [#tpu.dimension_semantics<parallel>], iteration_bounds = array<i64: 1>, scalar_prefetch = 0 : i64, scratch_operands = 0 : i64, tpu.core_type = #tpu.core_type<tc>, window_params = [{pipeline_mode = #tpu.pipeline_mode<synchronous>, transform_indices = @transform_0, window_bounds = array<i64: 2, 64>}, {transform_indices = @transform_1, window_bounds = array<i64: 64, 256>}, {transform_indices = @transform_2, window_bounds = array<i64: 1, 256>}, {transform_indices = @transform_3, window_bounds = array<i64: 2, 256>}]} {
    %c0 = arith.constant 0 : index
    %c0_0 = arith.constant 0 : index
    %0 = vector.load %arg1[%c0, %c0_0] : memref<2x64xbf16, #tpu.memory_space<vmem>>, vector<2x64xbf16>
    %c0_1 = arith.constant 0 : index
    %c0_2 = arith.constant 0 : index
    %1 = vector.load %arg2[%c0_1, %c0_2] : memref<64x256xbf16, #tpu.memory_space<vmem>>, vector<64x256xbf16>
    %cst = arith.constant dense<0.000000e+00> : vector<2x256xf32>
    %2 = tpu.matmul %0, %1, %cst {dimension_numbers = #tpu.dot_dimension_numbers<[1], [0], [0], [1], [0, 0, 1, 1], [], []>} : vector<2x64xbf16>, vector<64x256xbf16>, vector<2x256xf32> -> vector<2x256xf32>
    %c0_3 = arith.constant 0 : index
    %c0_4 = arith.constant 0 : index
    %3 = vector.load %arg3[%c0_3, %c0_4] : memref<1x256xf32, #tpu.memory_space<vmem>>, vector<1x256xf32>
    %4 = vector.broadcast %3 : vector<1x256xf32> to vector<2x256xf32>
    %5 = arith.addf %2, %4 : vector<2x256xf32>
    %cst_5 = arith.constant 0.000000e+00 : f32
    %6 = vector.broadcast %cst_5 : f32 to vector<2x256xf32>
    %7 = arith.cmpf oge, %5, %6 : vector<2x256xf32>
    %cst_6 = arith.constant 2.000000e-01 : f32
    %8 = vector.broadcast %cst_6 : f32 to vector<2x256xf32>
    %9 = arith.mulf %8, %5 : vector<2x256xf32>
    %10 = arith.select %7, %5, %9 : vector<2x256xi1>, vector<2x256xf32>
    %11 = arith.truncf %10 : vector<2x256xf32> to vector<2x256xbf16>
    %c0_7 = arith.constant 0 : index
    %c0_8 = arith.constant 0 : index
    %12 = vector.load %arg4[%c0_7, %c0_8] : memref<2x256xbf16, #tpu.memory_space<vmem>>, vector<2x256xbf16>
    tpu.vector_store %arg4[%c0_7, %c0_8], %11 {strides = array<i32>} : memref<2x256xbf16, #tpu.memory_space<vmem>>, vector<2x256xbf16>,
    return
  }
  func.func @transform_0(%arg0: i32) -> (i32, i32) {
    %c0_i32 = arith.constant 0 : i32
    %c0_i32_0 = arith.constant 0 : i32
    %c0_i32_1 = arith.constant 0 : i32
    return %c0_i32, %c0_i32_0 : i32, i32
  }
  func.func @transform_1(%arg0: i32) -> (i32, i32) {
    %c0_i32 = arith.constant 0 : i32
    %c0_i32_0 = arith.constant 0 : i32
    return %c0_i32, %arg0 : i32, i32
  }
  func.func @transform_2(%arg0: i32) -> (i32, i32) {
    %c0_i32 = arith.constant 0 : i32
    %c0_i32_0 = arith.constant 0 : i32
    return %c0_i32, %arg0 : i32, i32
  }
  func.func @transform_3(%arg0: i32) -> (i32, i32) {
    %c0_i32 = arith.constant 0 : i32
    %c0_i32_0 = arith.constant 0 : i32
    return %c0_i32, %arg0 : i32, i32
  }
}

module attributes {stable_mosaic.version = 11 : i64} {
  func.func @_linear_block_kernel(%arg0: i32, %arg1: memref<2x1024xbf16, #tpu.memory_space<vmem>>, %arg2: memref<1024x512xbf16, #tpu.memory_space<vmem>>, %arg3: memref<1x512xf32, #tpu.memory_space<vmem>>, %arg4: memref<1x512xf32, #tpu.memory_space<vmem>>, %arg5: memref<1x512xf32, #tpu.memory_space<vmem>>, %arg6: memref<2x512xbf16, #tpu.memory_space<vmem>>) attributes {dimension_semantics = [#tpu.dimension_semantics<parallel>], iteration_bounds = array<i64: 4>, scalar_prefetch = 0 : i64, scratch_operands = 0 : i64, tpu.core_type = #tpu.core_type<tc>, window_params = [{pipeline_mode = #tpu.pipeline_mode<synchronous>, transform_indices = @transform_0, window_bounds = array<i64: 2, 1024>}, {transform_indices = @transform_1, window_bounds = array<i64: 1024, 512>}, {transform_indices = @transform_2, window_bounds = array<i64: 1, 512>}, {transform_indices = @transform_3, window_bounds = array<i64: 1, 512>}, {transform_indices = @transform_4, window_bounds = array<i64: 1, 512>}, {transform_indices = @transform_5, window_bounds = array<i64: 2, 512>}]} {
    %c0 = arith.constant 0 : index
    %c0_0 = arith.constant 0 : index
    %0 = vector.load %arg1[%c0, %c0_0] : memref<2x1024xbf16, #tpu.memory_space<vmem>>, vector<2x1024xbf16>
    %c0_1 = arith.constant 0 : index
    %c0_2 = arith.constant 0 : index
    %1 = vector.load %arg2[%c0_1, %c0_2] : memref<1024x512xbf16, #tpu.memory_space<vmem>>, vector<1024x512xbf16>
    %cst = arith.constant dense<0.000000e+00> : vector<2x512xf32>
    %2 = tpu.matmul %0, %1, %cst {dimension_numbers = #tpu.dot_dimension_numbers<[1], [0], [0], [1], [0, 0, 1, 1], [], []>} : vector<2x1024xbf16>, vector<1024x512xbf16>, vector<2x512xf32> -> vector<2x512xf32>
    %c0_3 = arith.constant 0 : index
    %c0_4 = arith.constant 0 : index
    %3 = vector.load %arg3[%c0_3, %c0_4] : memref<1x512xf32, #tpu.memory_space<vmem>>, vector<1x512xf32>
    %4 = vector.broadcast %3 : vector<1x512xf32> to vector<2x512xf32>
    %5 = arith.addf %2, %4 : vector<2x512xf32>
    %cst_5 = arith.constant dense<0.000000e+00> : vector<512xf32>
    %6 = vector.multi_reduction <add>, %5, %cst_5 [0] : vector<2x512xf32> to vector<512xf32>
    %7 = vector.shape_cast %6 : vector<512xf32> to vector<1x512xf32>
    %cst_6 = arith.constant 2.000000e+00 : f32
    %8 = vector.broadcast %cst_6 : f32 to vector<1x512xf32>
    %9 = arith.divf %7, %8 : vector<1x512xf32>
    %10 = vector.broadcast %9 : vector<1x512xf32> to vector<2x512xf32>
    %11 = arith.subf %5, %10 : vector<2x512xf32>
    %12 = arith.mulf %11, %11 : vector<2x512xf32>
    %cst_7 = arith.constant dense<0.000000e+00> : vector<512xf32>
    %13 = vector.multi_reduction <add>, %12, %cst_7 [0] : vector<2x512xf32> to vector<512xf32>
    %14 = vector.shape_cast %13 : vector<512xf32> to vector<1x512xf32>
    %cst_8 = arith.constant 2.000000e+00 : f32
    %15 = vector.broadcast %cst_8 : f32 to vector<1x512xf32>
    %16 = arith.divf %14, %15 : vector<1x512xf32>
    %17 = vector.broadcast %9 : vector<1x512xf32> to vector<2x512xf32>
    %18 = arith.subf %5, %17 : vector<2x512xf32>
    %cst_9 = arith.constant 8.000000e-01 : f32
    %19 = vector.broadcast %cst_9 : f32 to vector<1x512xf32>
    %20 = arith.addf %16, %19 : vector<1x512xf32>
    %21 = math.rsqrt %20 : vector<1x512xf32>
    %22 = vector.broadcast %21 : vector<1x512xf32> to vector<2x512xf32>
    %23 = arith.mulf %18, %22 : vector<2x512xf32>
    %c0_10 = arith.constant 0 : index
    %c0_11 = arith.constant 0 : index
    %24 = vector.load %arg4[%c0_10, %c0_11] : memref<1x512xf32, #tpu.memory_space<vmem>>, vector<1x512xf32>
    %25 = vector.broadcast %24 : vector<1x512xf32> to vector<2x512xf32>
    %26 = arith.mulf %23, %25 : vector<2x512xf32>
    %c0_12 = arith.constant 0 : index
    %c0_13 = arith.constant 0 : index
    %27 = vector.load %arg5[%c0_12, %c0_13] : memref<1x512xf32, #tpu.memory_space<vmem>>, vector<1x512xf32>
    %28 = vector.broadcast %27 : vector<1x512xf32> to vector<2x512xf32>
    %29 = arith.addf %26, %28 : vector<2x512xf32>
    %cst_14 = arith.constant 0.000000e+00 : f32
    %30 = vector.broadcast %cst_14 : f32 to vector<2x512xf32>
    %31 = arith.cmpf oge, %29, %30 : vector<2x512xf32>
    %cst_15 = arith.constant 2.000000e-01 : f32
    %32 = vector.broadcast %cst_15 : f32 to vector<2x512xf32>
    %33 = arith.mulf %32, %29 : vector<2x512xf32>
    %34 = arith.select %31, %29, %33 : vector<2x512xi1>, vector<2x512xf32>
    %35 = arith.truncf %34 : vector<2x512xf32> to vector<2x512xbf16>
    %c0_16 = arith.constant 0 : index
    %c0_17 = arith.constant 0 : index
    %36 = vector.load %arg6[%c0_16, %c0_17] : memref<2x512xbf16, #tpu.memory_space<vmem>>, vector<2x512xbf16>
    tpu.vector_store %arg6[%c0_16, %c0_17], %35 {strides = array<i32>} : memref<2x512xbf16, #tpu.memory_space<vmem>>, vector<2x512xbf16>,
    return
  }
  func.func @transform_0(%arg0: i32) -> (i32, i32) {
    %c0_i32 = arith.constant 0 : i32
    %c0_i32_0 = arith.constant 0 : i32
    %c0_i32_1 = arith.constant 0 : i32
    return %c0_i32, %c0_i32_0 : i32, i32
  }
  func.func @transform_1(%arg0: i32) -> (i32, i32) {
    %c0_i32 = arith.constant 0 : i32
    %c0_i32_0 = arith.constant 0 : i32
    return %c0_i32, %arg0 : i32, i32
  }
  func.func @transform_2(%arg0: i32) -> (i32, i32) {
    %c0_i32 = arith.constant 0 : i32
    %c0_i32_0 = arith.constant 0 : i32
    return %c0_i32, %arg0 : i32, i32
  }
  func.func @transform_3(%arg0: i32) -> (i32, i32) {
    %c0_i32 = arith.constant 0 : i32
    %c0_i32_0 = arith.constant 0 : i32
    return %c0_i32, %arg0 : i32, i32
  }
  func.func @transform_4(%arg0: i32) -> (i32, i32) {
    %c0_i32 = arith.constant 0 : i32
    %c0_i32_0 = arith.constant 0 : i32
    return %c0_i32, %arg0 : i32, i32
  }
  func.func @transform_5(%arg0: i32) -> (i32, i32) {
    %c0_i32 = arith.constant 0 : i32
    %c0_i32_0 = arith.constant 0 : i32
    return %c0_i32, %arg0 : i32, i32
  }
}

module attributes {stable_mosaic.version = 11 : i64} {
  func.func @_linear_tanh_kernel(%arg0: i32, %arg1: memref<2x2048xbf16, #tpu.memory_space<vmem>>, %arg2: memref<2048x512xbf16, #tpu.memory_space<vmem>>, %arg3: memref<1x512xf32, #tpu.memory_space<vmem>>, %arg4: memref<2x512xf32, #tpu.memory_space<vmem>>) attributes {dimension_semantics = [#tpu.dimension_semantics<parallel>], iteration_bounds = array<i64: 2>, scalar_prefetch = 0 : i64, scratch_operands = 0 : i64, tpu.core_type = #tpu.core_type<tc>, window_params = [{pipeline_mode = #tpu.pipeline_mode<synchronous>, transform_indices = @transform_0, window_bounds = array<i64: 2, 2048>}, {transform_indices = @transform_1, window_bounds = array<i64: 2048, 512>}, {transform_indices = @transform_2, window_bounds = array<i64: 1, 512>}, {transform_indices = @transform_3, window_bounds = array<i64: 2, 512>}]} {
    %c0 = arith.constant 0 : index
    %c0_0 = arith.constant 0 : index
    %0 = vector.load %arg1[%c0, %c0_0] : memref<2x2048xbf16, #tpu.memory_space<vmem>>, vector<2x2048xbf16>
    %c0_1 = arith.constant 0 : index
    %c0_2 = arith.constant 0 : index
    %1 = vector.load %arg2[%c0_1, %c0_2] : memref<2048x512xbf16, #tpu.memory_space<vmem>>, vector<2048x512xbf16>
    %cst = arith.constant dense<0.000000e+00> : vector<2x512xf32>
    %2 = tpu.matmul %0, %1, %cst {dimension_numbers = #tpu.dot_dimension_numbers<[1], [0], [0], [1], [0, 0, 1, 1], [], []>} : vector<2x2048xbf16>, vector<2048x512xbf16>, vector<2x512xf32> -> vector<2x512xf32>
    %c0_3 = arith.constant 0 : index
    %c0_4 = arith.constant 0 : index
    %3 = vector.load %arg3[%c0_3, %c0_4] : memref<1x512xf32, #tpu.memory_space<vmem>>, vector<1x512xf32>
    %4 = vector.broadcast %3 : vector<1x512xf32> to vector<2x512xf32>
    %5 = arith.addf %2, %4 : vector<2x512xf32>
    %6 = math.tanh %5 : vector<2x512xf32>
    %c0_5 = arith.constant 0 : index
    %c0_6 = arith.constant 0 : index
    %7 = vector.load %arg4[%c0_5, %c0_6] : memref<2x512xf32, #tpu.memory_space<vmem>>, vector<2x512xf32>
    tpu.vector_store %arg4[%c0_5, %c0_6], %6 {strides = array<i32>} : memref<2x512xf32, #tpu.memory_space<vmem>>, vector<2x512xf32>,
    return
  }
  func.func @transform_0(%arg0: i32) -> (i32, i32) {
    %c0_i32 = arith.constant 0 : i32
    %c0_i32_0 = arith.constant 0 : i32
    %c0_i32_1 = arith.constant 0 : i32
    return %c0_i32, %c0_i32_0 : i32, i32
  }
  func.func @transform_1(%arg0: i32) -> (i32, i32) {
    %c0_i32 = arith.constant 0 : i32
    %c0_i32_0 = arith.constant 0 : i32
    return %c0_i32, %arg0 : i32, i32
  }
  func.func @transform_2(%arg0: i32) -> (i32, i32) {
    %c0_i32 = arith.constant 0 : i32
    %c0_i32_0 = arith.constant 0 : i32
    return %c0_i32, %arg0 : i32, i32
  }
  func.func @transform_3(%arg0: i32) -> (i32, i32) {
    %c0_i32 = arith.constant 0 : i32
    %c0_i32_0 = arith.constant 0 : i32
    return %c0_i32, %arg0 : i32, i32
  }
}

</mosaic_0001>

<llo_original>
// kernel: generator_forward.5
$region0: #{generator_forward.5}
  #allocation0 [shape = 'u32[]', space=smem, size = 0x4, offset = 0x4, fixed_abs, tag = 'smem constant byte address 0x4 - core index']
  #allocation1 [shape = 'u32[144,128]{1,0:T(1,128)}', space=vmem, size = 0x12000, scoped, tag = 'internal scratch']
  %s0 = inlined_call_operand.vmem [shape: bf16[2,64], index: 0, kind: input, shape index: {}]
  %s1 = inlined_call_operand.hbm [shape: bf16[64,256], index: 1, kind: input, shape index: {}]
  %s2 = inlined_call_operand.hbm [shape: f32[1,256], index: 2, kind: input, shape index: {}]
  %s3 = inlined_call_operand.vmem [shape: bf16[2,256], index: 3, kind: output, shape index: {}]
  %s4 = sld [smem:[#allocation0]]
  $region30: #{generator_forward.5} parent=0
    _
  %s6 = ssub.s32 1, %s4
  %s7 = scalar_select 0, %s6, %s4
  $region1: #{generator_forward.5} parent=0
    #allocation2 [shape = 'u8[32768]{0}', space=vmem, size = 0x8000, scoped, tag = 'input window, operand 1, single buffered']
    #allocation3 [shape = 's32[1]{0}', space=sflag, size = 0x4, scoped, tag = 'scoped memory for generator_forward.5']
    #allocation4 [shape = 'u8[1024]{0}', space=vmem, size = 0x400, scoped, tag = 'input window, operand 2, single buffered']
    #allocation5 [shape = 's32[1]{0}', space=sflag, size = 0x4, scoped, tag = 'scoped memory for generator_forward.5']
    %8 = vsyncpa [#allocation3], 0
    %9 = vsyncpa [#allocation5], 0
    // Predicated region
    $region2: #{generator_forward.5} parent=1 // pred_check
      _
    $region3: #{generator_forward.5} parent=1 // pred_check_branch
      %11 = sbr.rel (0) target = $region5
    $region4: #{generator_forward.5} parent=1 // pred_region
      _
    $region5: #{generator_forward.5} parent=1 // pred_fallthru
      _
    // Predicated region
    $region6: #{generator_forward.5} parent=1 // pred_check
      _
    $region7: #{generator_forward.5} parent=1 // pred_check_branch
      %13 = sbr.rel (0) target = $region9
    $region8: #{generator_forward.5} parent=1 // pred_region
      %s15 = ssub.s32 1024, 1024
      %16 = vsyncadd [#allocation3], %s15
      %s17 = sshll.u32 [#allocation2], 4
      %s18 = int_to_ptr.vmem [resolvable:$true] %s17
      %23 = dma.hbm_to_vmem [thread:$0]  %s1, 1024, %s18, [#allocation3], 128, 128, 8
    $region9: #{generator_forward.5} parent=1 // pred_fallthru
      _
    // Predicated region
    $region10: #{generator_forward.5} parent=1 // pred_check
      _
    $region11: #{generator_forward.5} parent=1 // pred_check_branch
      %25 = sbr.rel (0) target = $region13
    $region12: #{generator_forward.5} parent=1 // pred_region
      %s27 = ssub.s32 32, 32
      %28 = vsyncadd [#allocation5], %s27
      %s30 = sshll.u32 [#allocation4], 4
      %s31 = int_to_ptr.vmem [resolvable:$true] %s30
      %33 = dma.hbm_to_vmem [thread:$0]  %s2, 32, %s31, [#allocation5]
    $region13: #{generator_forward.5} parent=1 // pred_fallthru
      _
    // Predicated region
    $region14: #{generator_forward.5} parent=1 // pred_check
      _
    $region15: #{generator_forward.5} parent=1 // pred_check_branch
      %35 = sbr.rel (0) target = $region17
    $region16: #{generator_forward.5} parent=1 // pred_region
      %36 = dma.done [#allocation3], 1024
    $region17: #{generator_forward.5} parent=1 // pred_fallthru
      _
    // Predicated region
    $region18: #{generator_forward.5} parent=1 // pred_check
      _
    $region19: #{generator_forward.5} parent=1 // pred_check_branch
      %38 = sbr.rel (0) target = $region21
    $region20: #{generator_forward.5} parent=1 // pred_region
      %39 = dma.done [#allocation5], 32
    $region21: #{generator_forward.5} parent=1 // pred_fallthru
      _
    %v41 = vld [vmem:[%s0] sm:$0x1]
    %v42 = vld [vmem:[#allocation2] sm:$0xff]
    %v43 = vld [vmem:[#allocation2 + $0x8] sm:$0xff]
    %v44 = vld [vmem:[#allocation2 + $0x10] sm:$0xff]
    %v45 = vld [vmem:[#allocation2 + $0x18] sm:$0xff]
    %v46 = vld [vmem:[#allocation2 + $0x20] sm:$0xff]
    %v47 = vld [vmem:[#allocation2 + $0x28] sm:$0xff]
    %v48 = vld [vmem:[#allocation2 + $0x30] sm:$0xff]
    %v49 = vld [vmem:[#allocation2 + $0x38] sm:$0xff]
    %v50 = vld [vmem:[#allocation4] sm:$0x3]
    %v52 = vlaneseq
    %v53 = vshrl.u32 %v52, 7
    %v54 = vsub.s32 0, %v53
    %v55 = vrot.slane %v50, %v54
    %v56 = vlaneseq
    %v57 = vshrl.u32 %v56, 7
    %v58 = vsub.s32 1, %v57
    %v59 = vrot.slane %v50, %v58
    %v70 = vunpack.c.l.b16 %v42
    %v71 = vunpack.c.h.b16 %v42
    %v72 = vunpack.c.l.b16 %v43
    %v73 = vunpack.c.h.b16 %v43
    %v74 = vunpack.c.l.b16 %v44
    %v75 = vunpack.c.h.b16 %v44
    %v76 = vunpack.c.l.b16 %v45
    %v77 = vunpack.c.h.b16 %v45
    %v78 = vunpack.c.l.b16 %v46
    %v79 = vunpack.c.h.b16 %v46
    %v80 = vunpack.c.l.b16 %v47
    %v81 = vunpack.c.h.b16 %v47
    %v82 = vunpack.c.l.b16 %v48
    %v83 = vunpack.c.h.b16 %v48
    %v84 = vunpack.c.l.b16 %v49
    %v85 = vunpack.c.h.b16 %v49
    %v86 = vpack.c.b16 %v72, %v70
    %v87 = vpack.c.b16 %v73, %v71
    %v88 = vpack.c.b16 %v76, %v74
    %v89 = vpack.c.b16 %v77, %v75
    %v90 = vpack.c.b16 %v80, %v78
    %v91 = vpack.c.b16 %v81, %v79
    %v92 = vpack.c.b16 %v84, %v82
    %v93 = vpack.c.b16 %v85, %v83
    %vm102 = vcmask 523264
    %v104 = vsel %vm102, %v41, 0
    %106 = vmatprep.subr.bf16.mxu0 %v87
    %107 = vmatpush1.bf16.msra.mxu0 %v86
    %108 = vmatprep.subr.bf16.mxu0 %v89
    %109 = vmatpush1.bf16.msra.mxu0 %v88
    %110 = vmatprep.subr.bf16.mxu0 %v91
    %111 = vmatpush1.bf16.msra.mxu0 %v90
    %112 = vmatprep.subr.bf16.mxu0 %v93
    %113 = vmatpush1.bf16.msra.mxu0 %v92
    %114 = vmatprep.subr.bf16.mxu0 0
    %115 = vmatpush1.bf16.msra.mxu0 0
    %116 = vmatprep.subr.bf16.mxu0 0
    %117 = vmatpush1.bf16.msra.mxu0 0
    %118 = vmatprep.subr.bf16.mxu0 0
    %119 = vmatpush1.bf16.msra.mxu0 0
    %120 = vmatprep.subr.bf16.mxu0 0
    %121 = vmatpush1.bf16.msra.mxu0 0
    %122 = vmatprep.subr.bf16.mxu0 0
    %123 = vmatpush1.bf16.msra.mxu0 0
    %124 = vmatprep.subr.bf16.mxu0 0
    %125 = vmatpush1.bf16.msra.mxu0 0
    %126 = vmatprep.subr.bf16.mxu0 0
    %127 = vmatpush1.bf16.msra.mxu0 0
    %128 = vmatprep.subr.bf16.mxu0 0
    %129 = vmatpush1.bf16.msra.mxu0 0
    %130 = vmatprep.subr.bf16.mxu0 0
    %131 = vmatpush1.bf16.msra.mxu0 0
    %132 = vmatprep.subr.bf16.mxu0 0
    %133 = vmatpush1.bf16.msra.mxu0 0
    %134 = vmatprep.subr.bf16.mxu0 0
    %135 = vmatpush1.bf16.msra.mxu0 0
    %136 = vmatprep.subr.bf16.mxu0 0
    %137 = vmatpush1.bf16.msra.mxu0 0
    %138 = vmatprep.mubr.bf16.mxu0 0
    %139 = vmatmul.mubr.bf16.gmra.mrb[0].mxu0 %v104
    %v140 = vpop.f32.mrb[0].mxu0
    %v141 = vadd.f32 %v55, %v140
    %v142 = vpop.f32.mrb[0].mxu0
    %v143 = vadd.f32 %v59, %v142
    %v144 = vpop.f32.mrb[0].mxu0
    %v145 = vpop.f32.mrb[0].mxu0
    %146 = vdwg.mxu0
    %vm147 = vcmp.ge.f32.partialorder %v141, 0.0
    %vm148 = vcmp.ge.f32.partialorder %v143, 0.0
    %v149 = vmul.f32 %v141, 0.2
    %v150 = vmul.f32 %v143, 0.2
    %v151 = vsel %vm147, %v141, %v149
    %v152 = vsel %vm148, %v143, %v150
    %v153 = vpack.c.bf16 %v151, %v151
    %v154 = vpack.c.bf16 %v152, %v152
    %v157 = vcombine.low %v153, %v154
    %v159 = vunpack.c.l.s4 1966171168
    %v160 = vunpack.c.0.s8 %v159
    %v161 = vlaneseq
    %v162 = vshrl.u32 %v161, 7
    %v163 = vsub.s32 %v160, %v162
    %v164 = vrot.slane %v157, %v163
    %v166 = vunpack.c.l.s4 1966171168
    %v167 = vunpack.c.0.s8 %v166
    %v168 = vlaneseq
    %v169 = vshrl.u32 %v168, 7
    %v170 = vsub.s32 %v167, %v169
    %v171 = vrot.slane %v164, %v170
    %173 = vst [vmem:[%s3] sm:$0x3] %v171
    // Predicated region
    $region22: #{generator_forward.5} parent=1 // pred_check
      _
    $region23: #{generator_forward.5} parent=1 // pred_check_branch
      %175 = sbr.rel (0) target = $region25
    $region24: #{generator_forward.5} parent=1 // pred_region
      _
    $region25: #{generator_forward.5} parent=1 // pred_fallthru
      _
    // Predicated region
    $region26: #{generator_forward.5} parent=1 // pred_check
      _
    $region27: #{generator_forward.5} parent=1 // pred_check_branch
      %177 = sbr.rel (0) target = $region29
    $region28: #{generator_forward.5} parent=1 // pred_region
      _
    $region29: #{generator_forward.5} parent=1 // pred_fallthru
      _
    %178 = vsyncpa [#allocation3], 1
    %179 = vsyncpa [#allocation5], 1

// kernel: generator_forward.6
$region0: #{generator_forward.6}
  #allocation0 [shape = 'u32[]', space=smem, size = 0x4, offset = 0x4, fixed_abs, tag = 'smem constant byte address 0x4 - core index']
  #allocation1 [shape = 'u32[144,128]{1,0:T(1,128)}', space=vmem, size = 0x12000, scoped, tag = 'internal scratch']
  %s0 = inlined_call_operand.vmem [shape: bf16[2,256], index: 0, kind: input, shape index: {}]
  %s1 = inlined_call_operand.hbm [shape: bf16[256,512], index: 1, kind: input, shape index: {}]
  %s2 = inlined_call_operand.hbm [shape: f32[1,512], index: 2, kind: input, shape index: {}]
  %s3 = inlined_call_operand.hbm [shape: f32[1,512], index: 3, kind: input, shape index: {}]
  %s4 = inlined_call_operand.hbm [shape: f32[1,512], index: 4, kind: input, shape index: {}]
  %s5 = inlined_call_operand.vmem [shape: bf16[2,512], index: 5, kind: output, shape index: {}]
  %s6 = sld [smem:[#allocation0]]
  $region46: #{generator_forward.6} parent=0
    _
  %s8 = ssub.s32 1, %s6
  %s9 = scalar_select 0, %s8, %s6
  $region1: #{generator_forward.6} parent=0
    #allocation2 [shape = 'u8[262144]{0}', space=vmem, size = 0x40000, scoped, tag = 'input window, operand 1, single buffered']
    #allocation3 [shape = 's32[1]{0}', space=sflag, size = 0x4, scoped, tag = 'scoped memory for generator_forward.6']
    #allocation4 [shape = 'u8[2048]{0}', space=vmem, size = 0x800, scoped, tag = 'input window, operand 2, single buffered']
    #allocation5 [shape = 's32[1]{0}', space=sflag, size = 0x4, scoped, tag = 'scoped memory for generator_forward.6']
    #allocation6 [shape = 'u8[2048]{0}', space=vmem, size = 0x800, scoped, tag = 'input window, operand 3, single buffered']
    #allocation7 [shape = 'u8[2048]{0}', space=vmem, size = 0x800, scoped, tag = 'input window, operand 4, single buffered']
    #allocation8 [shape = 's32[1]{0}', space=sflag, size = 0x4, scoped, tag = 'scoped memory for generator_forward.6']
    %10 = vsyncpa [#allocation3], 0
    %11 = vsyncpa [#allocation5], 0
    %12 = vsyncpa [#allocation8], 0
    // Predicated region
    $region2: #{generator_forward.6} parent=1 // pred_check
      _
    $region3: #{generator_forward.6} parent=1 // pred_check_branch
      %14 = sbr.rel (0) target = $region5
    $region4: #{generator_forward.6} parent=1 // pred_region
      _
    $region5: #{generator_forward.6} parent=1 // pred_fallthru
      _
    // Predicated region
    $region6: #{generator_forward.6} parent=1 // pred_check
      _
    $region7: #{generator_forward.6} parent=1 // pred_check_branch
      %16 = sbr.rel (0) target = $region9
    $region8: #{generator_forward.6} parent=1 // pred_region
      %s18 = ssub.s32 8192, 8192
      %19 = vsyncadd [#allocation3], %s18
      %s20 = sshll.u32 [#allocation2], 4
      %s21 = int_to_ptr.vmem [resolvable:$true] %s20
      %26 = dma.hbm_to_vmem [thread:$0]  %s1, 8192, %s21, [#allocation3], 256, 256, 16
    $region9: #{generator_forward.6} parent=1 // pred_fallthru
      _
    // Predicated region
    $region10: #{generator_forward.6} parent=1 // pred_check
      _
    $region11: #{generator_forward.6} parent=1 // pred_check_branch
      %28 = sbr.rel (0) target = $region13
    $region12: #{generator_forward.6} parent=1 // pred_region
      %s30 = ssub.s32 64, 64
      %31 = vsyncadd [#allocation5], %s30
      %s33 = sshll.u32 [#allocation4], 4
      %s34 = int_to_ptr.vmem [resolvable:$true] %s33
      %36 = dma.hbm_to_vmem [thread:$0]  %s2, 64, %s34, [#allocation5]
    $region13: #{generator_forward.6} parent=1 // pred_fallthru
      _
    // Predicated region
    $region14: #{generator_forward.6} parent=1 // pred_check
      _
    $region15: #{generator_forward.6} parent=1 // pred_check_branch
      %38 = sbr.rel (0) target = $region17
    $region16: #{generator_forward.6} parent=1 // pred_region
      %s40 = ssub.s32 64, 64
      %41 = vsyncadd [#allocation5], %s40
      %s43 = sshll.u32 [#allocation6], 4
      %s44 = int_to_ptr.vmem [resolvable:$true] %s43
      %46 = dma.hbm_to_vmem [thread:$0]  %s3, 64, %s44, [#allocation5]
    $region17: #{generator_forward.6} parent=1 // pred_fallthru
      _
    // Predicated region
    $region18: #{generator_forward.6} parent=1 // pred_check
      _
    $region19: #{generator_forward.6} parent=1 // pred_check_branch
      %48 = sbr.rel (0) target = $region21
    $region20: #{generator_forward.6} parent=1 // pred_region
      %s50 = ssub.s32 64, 64
      %51 = vsyncadd [#allocation8], %s50
      %s53 = sshll.u32 [#allocation7], 4
      %s54 = int_to_ptr.vmem [resolvable:$true] %s53
      %56 = dma.hbm_to_vmem [thread:$0]  %s4, 64, %s54, [#allocation8]
    $region21: #{generator_forward.6} parent=1 // pred_fallthru
      _
    // Predicated region
    $region22: #{generator_forward.6} parent=1 // pred_check
      _
    $region23: #{generator_forward.6} parent=1 // pred_check_branch
      %58 = sbr.rel (0) target = $region25
    $region24: #{generator_forward.6} parent=1 // pred_region
      %59 = dma.done [#allocation3], 8192
    $region25: #{generator_forward.6} parent=1 // pred_fallthru
      _
    // Predicated region
    $region26: #{generator_forward.6} parent=1 // pred_check
      _
    $region27: #{generator_forward.6} parent=1 // pred_check_branch
      %61 = sbr.rel (0) target = $region29
    $region28: #{generator_forward.6} parent=1 // pred_region
      %62 = dma.done [#allocation5], 64
    $region29: #{generator_forward.6} parent=1 // pred_fallthru
      _
    // Predicated region
    $region30: #{generator_forward.6} parent=1 // pred_check
      _
    $region31: #{generator_forward.6} parent=1 // pred_check_branch
      %64 = sbr.rel (0) target = $region33
    $region32: #{generator_forward.6} parent=1 // pred_region
      %65 = dma.done [#allocation5], 64
    $region33: #{generator_forward.6} parent=1 // pred_fallthru
      _
    // Predicated region
    $region34: #{generator_forward.6} parent=1 // pred_check
      _
    $region35: #{generator_forward.6} parent=1 // pred_check_branch
      %67 = sbr.rel (0) target = $region37
    $region36: #{generator_forward.6} parent=1 // pred_region
      %68 = dma.done [#allocation8], 64
    $region37: #{generator_forward.6} parent=1 // pred_fallthru
      _
    %v69 = vld [vmem:[%s0] sm:$0x3]
    %v70 = vld [vmem:[#allocation2] sm:$0xff]
    %v71 = vld [vmem:[#allocation2 + $0x8] sm:$0xff]
    %v72 = vld [vmem:[#allocation2 + $0x10] sm:$0xff]
    %v73 = vld [vmem:[#allocation2 + $0x18] sm:$0xff]
    %v74 = vld [vmem:[#allocation2 + $0x20] sm:$0xff]
    %v75 = vld [vmem:[#allocation2 + $0x28] sm:$0xff]
    %v76 = vld [vmem:[#allocation2 + $0x30] sm:$0xff]
    %v77 = vld [vmem:[#allocation2 + $0x38] sm:$0xff]
    %v78 = vld [vmem:[#allocation2 + $0x40] sm:$0xff]
    %v79 = vld [vmem:[#allocation2 + $0x48] sm:$0xff]
    %v80 = vld [vmem:[#allocation2 + $0x50] sm:$0xff]
    %v81 = vld [vmem:[#allocation2 + $0x58] sm:$0xff]
    %v82 = vld [vmem:[#allocation2 + $0x60] sm:$0xff]
    %v83 = vld [vmem:[#allocation2 + $0x68] sm:$0xff]
    %v84 = vld [vmem:[#allocation2 + $0x70] sm:$0xff]
    %v85 = vld [vmem:[#allocation2 + $0x78] sm:$0xff]
    %v86 = vld [vmem:[#allocation2 + $0x80] sm:$0xff]
    %v87 = vld [vmem:[#allocation2 + $0x88] sm:$0xff]
    %v88 = vld [vmem:[#allocation2 + $0x90] sm:$0xff]
    %v89 = vld [vmem:[#allocation2 + $0x98] sm:$0xff]
    %v90 = vld [vmem:[#allocation2 + $0xa0] sm:$0xff]
    %v91 = vld [vmem:[#allocation2 + $0xa8] sm:$0xff]
    %v92 = vld [vmem:[#allocation2 + $0xb0] sm:$0xff]
    %v93 = vld [vmem:[#allocation2 + $0xb8] sm:$0xff]
    %v94 = vld [vmem:[#allocation2 + $0xc0] sm:$0xff]
    %v95 = vld [vmem:[#allocation2 + $0xc8] sm:$0xff]
    %v96 = vld [vmem:[#allocation2 + $0xd0] sm:$0xff]
    %v97 = vld [vmem:[#allocation2 + $0xd8] sm:$0xff]
    %v98 = vld [vmem:[#allocation2 + $0xe0] sm:$0xff]
    %v99 = vld [vmem:[#allocation2 + $0xe8] sm:$0xff]
    %v100 = vld [vmem:[#allocation2 + $0xf0] sm:$0xff]
    %v101 = vld [vmem:[#allocation2 + $0xf8] sm:$0xff]
    %v102 = vld [vmem:[#allocation2 + $0x100] sm:$0xff]
    %v103 = vld [vmem:[#allocation2 + $0x108] sm:$0xff]
    %v104 = vld [vmem:[#allocation2 + $0x110] sm:$0xff]
    %v105 = vld [vmem:[#allocation2 + $0x118] sm:$0xff]
    %v106 = vld [vmem:[#allocation2 + $0x120] sm:$0xff]
    %v107 = vld [vmem:[#allocation2 + $0x128] sm:$0xff]
    %v108 = vld [vmem:[#allocation2 + $0x130] sm:$0xff]
    %v109 = vld [vmem:[#allocation2 + $0x138] sm:$0xff]
    %v110 = vld [vmem:[#allocation2 + $0x140] sm:$0xff]
    %v111 = vld [vmem:[#allocation2 + $0x148] sm:$0xff]
    %v112 = vld [vmem:[#allocation2 + $0x150] sm:$0xff]
    %v113 = vld [vmem:[#allocation2 + $0x158] sm:$0xff]
    %v114 = vld [vmem:[#allocation2 + $0x160] sm:$0xff]
    %v115 = vld [vmem:[#allocation2 + $0x168] sm:$0xff]
    %v116 = vld [vmem:[#allocation2 + $0x170] sm:$0xff]
    %v117 = vld [vmem:[#allocation2 + $0x178] sm:$0xff]
    %v118 = vld [vmem:[#allocation2 + $0x180] sm:$0xff]
    %v119 = vld [vmem:[#allocation2 + $0x188] sm:$0xff]
    %v120 = vld [vmem:[#allocation2 + $0x190] sm:$0xff]
    %v121 = vld [vmem:[#allocation2 + $0x198] sm:$0xff]
    %v122 = vld [vmem:[#allocation2 + $0x1a0] sm:$0xff]
    %v123 = vld [vmem:[#allocation2 + $0x1a8] sm:$0xff]
    %v124 = vld [vmem:[#allocation2 + $0x1b0] sm:$0xff]
    %v125 = vld [vmem:[#allocation2 + $0x1b8] sm:$0xff]
    %v126 = vld [vmem:[#allocation2 + $0x1c0] sm:$0xff]
    %v127 = vld [vmem:[#allocation2 + $0x1c8] sm:$0xff]
    %v128 = vld [vmem:[#allocation2 + $0x1d0] sm:$0xff]
    %v129 = vld [vmem:[#allocation2 + $0x1d8] sm:$0xff]
    %v130 = vld [vmem:[#allocation2 + $0x1e0] sm:$0xff]
    %v131 = vld [vmem:[#allocation2 + $0x1e8] sm:$0xff]
    %v132 = vld [vmem:[#allocation2 + $0x1f0] sm:$0xff]
    %v133 = vld [vmem:[#allocation2 + $0x1f8] sm:$0xff]
    %v134 = vld [vmem:[#allocation4] sm:$0xf]
    %v136 = vlaneseq
    %v137 = vshrl.u32 %v136, 7
    %v138 = vsub.s32 0, %v137
    %v139 = vrot.slane %v134, %v138
    %v140 = vlaneseq
    %v141 = vshrl.u32 %v140, 7
    %v142 = vsub.s32 1, %v141
    %v143 = vrot.slane %v134, %v142
    %v144 = vlaneseq
    %v145 = vshrl.u32 %v144, 7
    %v146 = vsub.s32 2, %v145
    %v147 = vrot.slane %v134, %v146
    %v148 = vlaneseq
    %v149 = vshrl.u32 %v148, 7
    %v150 = vsub.s32 3, %v149
    %v151 = vrot.slane %v134, %v150
    %v158 = vunpack.c.l.s4 1966171168
    %v159 = vunpack.c.0.s8 %v158
    %v160 = vlaneseq
    %v161 = vshrl.u32 %v160, 7
    %v162 = vsub.s32 %v159, %v161
    %v163 = vrot.slane %v69, %v162
    %v164 = vcombine.high %v163, %v163
    %v166 = vunpack.c.l.s4 1966171168
    %v167 = vunpack.c.0.s8 %v166
    %v168 = vlaneseq
    %v169 = vshrl.u32 %v168, 7
    %v170 = vsub.s32 %v167, %v169
    %v171 = vrot.slane %v163, %v170
    %v173 = vunpack.c.l.s4 1966171168
    %v174 = vunpack.c.0.s8 %v173
    %v175 = vlaneseq
    %v176 = vshrl.u32 %v175, 7
    %v177 = vsub.s32 %v174, %v176
    %v178 = vrot.slane %v164, %v177
    %v245 = vunpack.c.l.b16 %v70
    %v246 = vunpack.c.h.b16 %v70
    %v247 = vunpack.c.l.b16 %v71
    %v248 = vunpack.c.h.b16 %v71
    %v249 = vunpack.c.l.b16 %v72
    %v250 = vunpack.c.h.b16 %v72
    %v251 = vunpack.c.l.b16 %v73
    %v252 = vunpack.c.h.b16 %v73
    %v253 = vunpack.c.l.b16 %v74
    %v254 = vunpack.c.h.b16 %v74
    %v255 = vunpack.c.l.b16 %v75
    %v256 = vunpack.c.h.b16 %v75
    %v257 = vunpack.c.l.b16 %v76
    %v258 = vunpack.c.h.b16 %v76
    %v259 = vunpack.c.l.b16 %v77
    %v260 = vunpack.c.h.b16 %v77
    %v261 = vunpack.c.l.b16 %v78
    %v262 = vunpack.c.h.b16 %v78
    %v263 = vunpack.c.l.b16 %v79
    %v264 = vunpack.c.h.b16 %v79
    %v265 = vunpack.c.l.b16 %v80
    %v266 = vunpack.c.h.b16 %v80
    %v267 = vunpack.c.l.b16 %v81
    %v268 = vunpack.c.h.b16 %v81
    %v269 = vunpack.c.l.b16 %v82
    %v270 = vunpack.c.h.b16 %v82
    %v271 = vunpack.c.l.b16 %v83
    %v272 = vunpack.c.h.b16 %v83
    %v273 = vunpack.c.l.b16 %v84
    %v274 = vunpack.c.h.b16 %v84
    %v275 = vunpack.c.l.b16 %v85
    %v276 = vunpack.c.h.b16 %v85
    %v277 = vunpack.c.l.b16 %v86
    %v278 = vunpack.c.h.b16 %v86
    %v279 = vunpack.c.l.b16 %v87
    %v280 = vunpack.c.h.b16 %v87
    %v281 = vunpack.c.l.b16 %v88
    %v282 = vunpack.c.h.b16 %v88
    %v283 = vunpack.c.l.b16 %v89
    %v284 = vunpack.c.h.b16 %v89
    %v285 = vunpack.c.l.b16 %v90
    %v286 = vunpack.c.h.b16 %v90
    %v287 = vunpack.c.l.b16 %v91
    %v288 = vunpack.c.h.b16 %v91
    %v289 = vunpack.c.l.b16 %v92
    %v290 = vunpack.c.h.b16 %v92
    %v291 = vunpack.c.l.b16 %v93
    %v292 = vunpack.c.h.b16 %v93
    %v293 = vunpack.c.l.b16 %v94
    %v294 = vunpack.c.h.b16 %v94
    %v295 = vunpack.c.l.b16 %v95
    %v296 = vunpack.c.h.b16 %v95
    %v297 = vunpack.c.l.b16 %v96
    %v298 = vunpack.c.h.b16 %v96
    %v299 = vunpack.c.l.b16 %v97
    %v300 = vunpack.c.h.b16 %v97
    %v301 = vunpack.c.l.b16 %v98
    %v302 = vunpack.c.h.b16 %v98
    %v303 = vunpack.c.l.b16 %v99
    %v304 = vunpack.c.h.b16 %v99
    %v305 = vunpack.c.l.b16 %v100
    %v306 = vunpack.c.h.b16 %v100
    %v307 = vunpack.c.l.b16 %v101
    %v308 = vunpack.c.h.b16 %v101
    %v309 = vunpack.c.l.b16 %v102
    %v310 = vunpack.c.h.b16 %v102
    %v311 = vunpack.c.l.b16 %v103
    %v312 = vunpack.c.h.b16 %v103
    %v313 = vunpack.c.l.b16 %v104
    %v314 = vunpack.c.h.b16 %v104
    %v315 = vunpack.c.l.b16 %v105
    %v316 = vunpack.c.h.b16 %v105
    %v317 = vunpack.c.l.b16 %v106
    %v318 = vunpack.c.h.b16 %v106
    %v319 = vunpack.c.l.b16 %v107
    %v320 = vunpack.c.h.b16 %v107
    %v321 = vunpack.c.l.b16 %v108
    %v322 = vunpack.c.h.b16 %v108
    %v323 = vunpack.c.l.b16 %v109
    %v324 = vunpack.c.h.b16 %v109
    %v325 = vunpack.c.l.b16 %v110
    %v326 = vunpack.c.h.b16 %v110
    %v327 = vunpack.c.l.b16 %v111
    %v328 = vunpack.c.h.b16 %v111
    %v329 = vunpack.c.l.b16 %v112
    %v330 = vunpack.c.h.b16 %v112
    %v331 = vunpack.c.l.b16 %v113
    %v332 = vunpack.c.h.b16 %v113
    %v333 = vunpack.c.l.b16 %v114
    %v334 = vunpack.c.h.b16 %v114
    %v335 = vunpack.c.l.b16 %v115
    %v336 = vunpack.c.h.b16 %v115
    %v337 = vunpack.c.l.b16 %v116
    %v338 = vunpack.c.h.b16 %v116
    %v339 = vunpack.c.l.b16 %v117
    %v340 = vunpack.c.h.b16 %v117
    %v341 = vunpack.c.l.b16 %v118
    %v342 = vunpack.c.h.b16 %v118
    %v343 = vunpack.c.l.b16 %v119
    %v344 = vunpack.c.h.b16 %v119
    %v345 = vunpack.c.l.b16 %v120
    %v346 = vunpack.c.h.b16 %v120
    %v347 = vunpack.c.l.b16 %v121
    %v348 = vunpack.c.h.b16 %v121
    %v349 = vunpack.c.l.b16 %v122
    %v350 = vunpack.c.h.b16 %v122
    %v351 = vunpack.c.l.b16 %v123
    %v352 = vunpack.c.h.b16 %v123
    %v353 = vunpack.c.l.b16 %v124
    %v354 = vunpack.c.h.b16 %v124
    %v355 = vunpack.c.l.b16 %v125
    %v356 = vunpack.c.h.b16 %v125
    %v357 = vunpack.c.l.b16 %v126
    %v358 = vunpack.c.h.b16 %v126
    %v359 = vunpack.c.l.b16 %v127
    %v360 = vunpack.c.h.b16 %v127
    %v361 = vunpack.c.l.b16 %v128
    %v362 = vunpack.c.h.b16 %v128
    %v363 = vunpack.c.l.b16 %v129
    %v364 = vunpack.c.h.b16 %v129
    %v365 = vunpack.c.l.b16 %v130
    %v366 = vunpack.c.h.b16 %v130
    %v367 = vunpack.c.l.b16 %v131
    %v368 = vunpack.c.h.b16 %v131
    %v369 = vunpack.c.l.b16 %v132
    %v370 = vunpack.c.h.b16 %v132
    %v371 = vunpack.c.l.b16 %v133
    %v372 = vunpack.c.h.b16 %v133
    %v373 = vpack.c.b16 %v249, %v245
    %v374 = vpack.c.b16 %v250, %v246
    %v375 = vpack.c.b16 %v251, %v247
    %v376 = vpack.c.b16 %v252, %v248
    %v377 = vpack.c.b16 %v257, %v253
    %v378 = vpack.c.b16 %v258, %v254
    %v379 = vpack.c.b16 %v259, %v255
    %v380 = vpack.c.b16 %v260, %v256
    %v381 = vpack.c.b16 %v265, %v261
    %v382 = vpack.c.b16 %v266, %v262
    %v383 = vpack.c.b16 %v267, %v263
    %v384 = vpack.c.b16 %v268, %v264
    %v385 = vpack.c.b16 %v273, %v269
    %v386 = vpack.c.b16 %v274, %v270
    %v387 = vpack.c.b16 %v275, %v271
    %v388 = vpack.c.b16 %v276, %v272
    %v389 = vpack.c.b16 %v281, %v277
    %v390 = vpack.c.b16 %v282, %v278
    %v391 = vpack.c.b16 %v283, %v279
    %v392 = vpack.c.b16 %v284, %v280
    %v393 = vpack.c.b16 %v289, %v285
    %v394 = vpack.c.b16 %v290, %v286
    %v395 = vpack.c.b16 %v291, %v287
    %v396 = vpack.c.b16 %v292, %v288
    %v397 = vpack.c.b16 %v297, %v293
    %v398 = vpack.c.b16 %v298, %v294
    %v399 = vpack.c.b16 %v299, %v295
    %v400 = vpack.c.b16 %v300, %v296
    %v401 = vpack.c.b16 %v305, %v301
    %v402 = vpack.c.b16 %v306, %v302
    %v403 = vpack.c.b16 %v307, %v303
    %v404 = vpack.c.b16 %v308, %v304
    %v405 = vpack.c.b16 %v313, %v309
    %v406 = vpack.c.b16 %v314, %v310
    %v407 = vpack.c.b16 %v315, %v311
    %v408 = vpack.c.b16 %v316, %v312
    %v409 = vpack.c.b16 %v321, %v317
    %v410 = vpack.c.b16 %v322, %v318
    %v411 = vpack.c.b16 %v323, %v319
    %v412 = vpack.c.b16 %v324, %v320
    %v413 = vpack.c.b16 %v329, %v325
    %v414 = vpack.c.b16 %v330, %v326
    %v415 = vpack.c.b16 %v331, %v327
    %v416 = vpack.c.b16 %v332, %v328
    %v417 = vpack.c.b16 %v337, %v333
    %v418 = vpack.c.b16 %v338, %v334
    %v419 = vpack.c.b16 %v339, %v335
    %v420 = vpack.c.b16 %v340, %v336
    %v421 = vpack.c.b16 %v345, %v341
    %v422 = vpack.c.b16 %v346, %v342
    %v423 = vpack.c.b16 %v347, %v343
    %v424 = vpack.c.b16 %v348, %v344
    %v425 = vpack.c.b16 %v353, %v349
    %v426 = vpack.c.b16 %v354, %v350
    %v427 = vpack.c.b16 %v355, %v351
    %v428 = vpack.c.b16 %v356, %v352
    %v429 = vpack.c.b16 %v361, %v357
    %v430 = vpack.c.b16 %v362, %v358
    %v431 = vpack.c.b16 %v363, %v359
    %v432 = vpack.c.b16 %v364, %v360
    %v433 = vpack.c.b16 %v369, %v365
    %v434 = vpack.c.b16 %v370, %v366
    %v435 = vpack.c.b16 %v371, %v367
    %v436 = vpack.c.b16 %v372, %v368
    %501 = vmatprep.subr.bf16.mxu0 %v374
    %502 = vmatpush1.bf16.msra.mxu0 %v373
    %503 = vmatprep.subr.bf16.mxu0 %v378
    %504 = vmatpush1.bf16.msra.mxu0 %v377
    %505 = vmatprep.subr.bf16.mxu0 %v382
    %506 = vmatpush1.bf16.msra.mxu0 %v381
    %507 = vmatprep.subr.bf16.mxu0 %v386
    %508 = vmatpush1.bf16.msra.mxu0 %v385
    %509 = vmatprep.subr.bf16.mxu0 %v390
    %510 = vmatpush1.bf16.msra.mxu0 %v389
    %511 = vmatprep.subr.bf16.mxu0 %v394
    %512 = vmatpush1.bf16.msra.mxu0 %v393
    %513 = vmatprep.subr.bf16.mxu0 %v398
    %514 = vmatpush1.bf16.msra.mxu0 %v397
    %515 = vmatprep.subr.bf16.mxu0 %v402
    %516 = vmatpush1.bf16.msra.mxu0 %v401
    %517 = vmatprep.subr.bf16.mxu0 %v406
    %518 = vmatpush1.bf16.msra.mxu0 %v405
    %519 = vmatprep.subr.bf16.mxu0 %v410
    %520 = vmatpush1.bf16.msra.mxu0 %v409
    %521 = vmatprep.subr.bf16.mxu0 %v414
    %522 = vmatpush1.bf16.msra.mxu0 %v413
    %523 = vmatprep.subr.bf16.mxu0 %v418
    %524 = vmatpush1.bf16.msra.mxu0 %v417
    %525 = vmatprep.subr.bf16.mxu0 %v422
    %526 = vmatpush1.bf16.msra.mxu0 %v421
    %527 = vmatprep.subr.bf16.mxu0 %v426
    %528 = vmatpush1.bf16.msra.mxu0 %v425
    %529 = vmatprep.subr.bf16.mxu0 %v430
    %530 = vmatpush1.bf16.msra.mxu0 %v429
    %531 = vmatprep.subr.bf16.mxu0 %v434
    %532 = vmatpush1.bf16.msra.mxu0 %v433
    %533 = vmatprep.mubr.bf16.mxu0 %v178
    %534 = vmatmul.mubr.bf16.gmra.mrb[0].mxu0 %v171
    %v535 = vpop.f32.mrb[0].mxu0
    %v536 = vadd.f32 %v139, %v535
    %v537 = vpop.f32.mrb[0].mxu0
    %v538 = vadd.f32 %v143, %v537
    %v539 = vpop.f32.mrb[0].mxu0
    %v540 = vpop.f32.mrb[0].mxu0
    %541 = vdwg.mxu0
    %542 = vmatprep.subr.bf16.mxu0 %v376
    %543 = vmatpush1.bf16.msra.mxu0 %v375
    %544 = vmatprep.subr.bf16.mxu0 %v380
    %545 = vmatpush1.bf16.msra.mxu0 %v379
    %546 = vmatprep.subr.bf16.mxu0 %v384
    %547 = vmatpush1.bf16.msra.mxu0 %v383
    %548 = vmatprep.subr.bf16.mxu0 %v388
    %549 = vmatpush1.bf16.msra.mxu0 %v387
    %550 = vmatprep.subr.bf16.mxu0 %v392
    %551 = vmatpush1.bf16.msra.mxu0 %v391
    %552 = vmatprep.subr.bf16.mxu0 %v396
    %553 = vmatpush1.bf16.msra.mxu0 %v395
    %554 = vmatprep.subr.bf16.mxu0 %v400
    %555 = vmatpush1.bf16.msra.mxu0 %v399
    %556 = vmatprep.subr.bf16.mxu0 %v404
    %557 = vmatpush1.bf16.msra.mxu0 %v403
    %558 = vmatprep.subr.bf16.mxu0 %v408
    %559 = vmatpush1.bf16.msra.mxu0 %v407
    %560 = vmatprep.subr.bf16.mxu0 %v412
    %561 = vmatpush1.bf16.msra.mxu0 %v411
    %562 = vmatprep.subr.bf16.mxu0 %v416
    %563 = vmatpush1.bf16.msra.mxu0 %v415
    %564 = vmatprep.subr.bf16.mxu0 %v420
    %565 = vmatpush1.bf16.msra.mxu0 %v419
    %566 = vmatprep.subr.bf16.mxu0 %v424
    %567 = vmatpush1.bf16.msra.mxu0 %v423
    %568 = vmatprep.subr.bf16.mxu0 %v428
    %569 = vmatpush1.bf16.msra.mxu0 %v427
    %570 = vmatprep.subr.bf16.mxu0 %v432
    %571 = vmatpush1.bf16.msra.mxu0 %v431
    %572 = vmatprep.subr.bf16.mxu0 %v436
    %573 = vmatpush1.bf16.msra.mxu0 %v435
    %574 = vmatprep.mubr.bf16.mxu0 %v178
    %575 = vmatmul.mubr.bf16.gmra.mrb[0].mxu0 %v171
    %v576 = vpop.f32.mrb[0].mxu0
    %v577 = vadd.f32 %v147, %v576
    %v578 = vpop.f32.mrb[0].mxu0
    %v579 = vadd.f32 %v151, %v578
    %v580 = vpop.f32.mrb[0].mxu0
    %v581 = vpop.f32.mrb[0].mxu0
    %582 = vdwg.mxu0
    %vm583 = vcmask 1041408
    %v584 = vsel %vm583, %v536, 0.0
    %v585 = vrot.slane %v584, 4
    %v586 = vadd.f32 %v584, %v585
    %v587 = vrot.slane %v586, 2
    %v588 = vadd.f32 %v586, %v587
    %v589 = vrot.slane %v588, 1
    %v590 = vadd.f32 %v588, %v589
    %v591 = vsel %vm583, %v538, 0.0
    %v592 = vrot.slane %v591, 4
    %v593 = vadd.f32 %v591, %v592
    %v594 = vrot.slane %v593, 2
    %v595 = vadd.f32 %v593, %v594
    %v596 = vrot.slane %v595, 1
    %v597 = vadd.f32 %v595, %v596
    %v598 = vsel %vm583, %v577, 0.0
    %v599 = vrot.slane %v598, 4
    %v600 = vadd.f32 %v598, %v599
    %v601 = vrot.slane %v600, 2
    %v602 = vadd.f32 %v600, %v601
    %v603 = vrot.slane %v602, 1
    %v604 = vadd.f32 %v602, %v603
    %v605 = vsel %vm583, %v579, 0.0
    %v606 = vrot.slane %v605, 4
    %v607 = vadd.f32 %v605, %v606
    %v608 = vrot.slane %v607, 2
    %v609 = vadd.f32 %v607, %v608
    %v610 = vrot.slane %v609, 1
    %v611 = vadd.f32 %v609, %v610
    %v612 = vrcp.pop 2.0
    %v613 = vmul.f32 %v590, %v612
    %v614 = vmul.f32 %v597, %v612
    %v615 = vmul.f32 %v604, %v612
    %v616 = vmul.f32 %v611, %v612
    %v617 = vsub.f32 %v536, %v613
    %v618 = vsub.f32 %v538, %v614
    %v619 = vsub.f32 %v577, %v615
    %v620 = vsub.f32 %v579, %v616
    %v621 = vmul.f32 %v617, %v617
    %v622 = vmul.f32 %v618, %v618
    %v623 = vmul.f32 %v619, %v619
    %v624 = vmul.f32 %v620, %v620
    %v625 = vsel %vm583, %v621, 0.0
    %v626 = vrot.slane %v625, 4
    %v627 = vadd.f32 %v625, %v626
    %v628 = vrot.slane %v627, 2
    %v629 = vadd.f32 %v627, %v628
    %v630 = vrot.slane %v629, 1
    %v631 = vadd.f32 %v629, %v630
    %v632 = vsel %vm583, %v622, 0.0
    %v633 = vrot.slane %v632, 4
    %v634 = vadd.f32 %v632, %v633
    %v635 = vrot.slane %v634, 2
    %v636 = vadd.f32 %v634, %v635
    %v637 = vrot.slane %v636, 1
    %v638 = vadd.f32 %v636, %v637
    %v639 = vsel %vm583, %v623, 0.0
    %v640 = vrot.slane %v639, 4
    %v641 = vadd.f32 %v639, %v640
    %v642 = vrot.slane %v641, 2
    %v643 = vadd.f32 %v641, %v642
    %v644 = vrot.slane %v643, 1
    %v645 = vadd.f32 %v643, %v644
    %v646 = vsel %vm583, %v624, 0.0
    %v647 = vrot.slane %v646, 4
    %v648 = vadd.f32 %v646, %v647
    %v649 = vrot.slane %v648, 2
    %v650 = vadd.f32 %v648, %v649
    %v651 = vrot.slane %v650, 1
    %v652 = vadd.f32 %v650, %v651
    %v653 = vmul.f32 %v631, %v612
    %v654 = vmul.f32 %v638, %v612
    %v655 = vmul.f32 %v645, %v612
    %v656 = vmul.f32 %v652, %v612
    %v657 = vadd.f32 %v653, 0.8
    %v658 = vadd.f32 %v654, 0.8
    %v659 = vadd.f32 %v655, 0.8
    %v660 = vadd.f32 %v656, 0.8
    %v661 = vrsqrt.pop %v657
    %v662 = vrsqrt.pop %v658
    %v663 = vrsqrt.pop %v659
    %v664 = vrsqrt.pop %v660
    %v665 = vmul.f32 %v617, %v661
    %v666 = vmul.f32 %v618, %v662
    %v667 = vmul.f32 %v619, %v663
    %v668 = vmul.f32 %v620, %v664
    %v669 = vld [vmem:[#allocation6] sm:$0xf]
    %v671 = vlaneseq
    %v672 = vshrl.u32 %v671, 7
    %v673 = vsub.s32 0, %v672
    %v674 = vrot.slane %v669, %v673
    %v675 = vlaneseq
    %v676 = vshrl.u32 %v675, 7
    %v677 = vsub.s32 1, %v676
    %v678 = vrot.slane %v669, %v677
    %v679 = vlaneseq
    %v680 = vshrl.u32 %v679, 7
    %v681 = vsub.s32 2, %v680
    %v682 = vrot.slane %v669, %v681
    %v683 = vlaneseq
    %v684 = vshrl.u32 %v683, 7
    %v685 = vsub.s32 3, %v684
    %v686 = vrot.slane %v669, %v685
    %v691 = vmul.f32 %v665, %v674
    %v692 = vmul.f32 %v666, %v678
    %v693 = vmul.f32 %v667, %v682
    %v694 = vmul.f32 %v668, %v686
    %v695 = vld [vmem:[#allocation7] sm:$0xf]
    %v697 = vlaneseq
    %v698 = vshrl.u32 %v697, 7
    %v699 = vsub.s32 0, %v698
    %v700 = vrot.slane %v695, %v699
    %v701 = vlaneseq
    %v702 = vshrl.u32 %v701, 7
    %v703 = vsub.s32 1, %v702
    %v704 = vrot.slane %v695, %v703
    %v705 = vlaneseq
    %v706 = vshrl.u32 %v705, 7
    %v707 = vsub.s32 2, %v706
    %v708 = vrot.slane %v695, %v707
    %v709 = vlaneseq
    %v710 = vshrl.u32 %v709, 7
    %v711 = vsub.s32 3, %v710
    %v712 = vrot.slane %v695, %v711
    %v717 = vadd.f32 %v691, %v700
    %v718 = vadd.f32 %v692, %v704
    %v719 = vadd.f32 %v693, %v708
    %v720 = vadd.f32 %v694, %v712
    %vm721 = vcmp.ge.f32.partialorder %v717, 0.0
    %vm722 = vcmp.ge.f32.partialorder %v718, 0.0
    %vm723 = vcmp.ge.f32.partialorder %v719, 0.0
    %vm724 = vcmp.ge.f32.partialorder %v720, 0.0
    %v725 = vmul.f32 %v717, 0.2
    %v726 = vmul.f32 %v718, 0.2
    %v727 = vmul.f32 %v719, 0.2
    %v728 = vmul.f32 %v720, 0.2
    %v729 = vsel %vm721, %v717, %v725
    %v730 = vsel %vm722, %v718, %v726
    %v731 = vsel %vm723, %v719, %v727
    %v732 = vsel %vm724, %v720, %v728
    %v733 = vpack.c.bf16 %v729, %v729
    %v734 = vpack.c.bf16 %v730, %v730
    %v735 = vpack.c.bf16 %v731, %v731
    %v736 = vpack.c.bf16 %v732, %v732
    %v741 = vcombine.low %v733, %v734
    %v742 = vcombine.low %v735, %v736
    %v744 = vunpack.c.l.s4 1966171168
    %v745 = vunpack.c.0.s8 %v744
    %v746 = vlaneseq
    %v747 = vshrl.u32 %v746, 7
    %v748 = vsub.s32 %v745, %v747
    %v749 = vrot.slane %v741, %v748
    %v751 = vunpack.c.l.s4 1966171168
    %v752 = vunpack.c.0.s8 %v751
    %v753 = vlaneseq
    %v754 = vshrl.u32 %v753, 7
    %v755 = vsub.s32 %v752, %v754
    %v756 = vrot.slane %v742, %v755
    %v757 = vcombine.low %v749, %v756
    %v759 = vunpack.c.l.s4 1966171168
    %v760 = vunpack.c.0.s8 %v759
    %v761 = vlaneseq
    %v762 = vshrl.u32 %v761, 7
    %v763 = vsub.s32 %v760, %v762
    %v764 = vrot.slane %v757, %v763
    %766 = vst [vmem:[%s5] sm:$0xf] %v764
    // Predicated region
    $region38: #{generator_forward.6} parent=1 // pred_check
      _
    $region39: #{generator_forward.6} parent=1 // pred_check_branch
      %768 = sbr.rel (0) target = $region41
    $region40: #{generator_forward.6} parent=1 // pred_region
      _
    $region41: #{generator_forward.6} parent=1 // pred_fallthru
      _
    // Predicated region
    $region42: #{generator_forward.6} parent=1 // pred_check
      _
    $region43: #{generator_forward.6} parent=1 // pred_check_branch
      %770 = sbr.rel (0) target = $region45
    $region44: #{generator_forward.6} parent=1 // pred_region
      _
    $region45: #{generator_forward.6} parent=1 // pred_fallthru
      _
    %771 = vsyncpa [#allocation3], 1
    %772 = vsyncpa [#allocation5], 1
    %773 = vsyncpa [#allocation8], 1

// kernel: generator_forward.7
$region0: #{generator_forward.7}
  #allocation0 [shape = 'u32[]', space=smem, size = 0x4, offset = 0x4, fixed_abs, tag = 'smem constant byte address 0x4 - core index']
  #allocation1 [shape = 'u32[144,128]{1,0:T(1,128)}', space=vmem, size = 0x12000, scoped, tag = 'internal scratch']
  %s0 = inlined_call_operand.vmem [shape: bf16[2,512], index: 0, kind: input, shape index: {}]
  %s1 = inlined_call_operand.hbm [shape: bf16[512,1024], index: 1, kind: input, shape index: {}]
  %s2 = inlined_call_operand.hbm [shape: f32[1,1024], index: 2, kind: input, shape index: {}]
  %s3 = inlined_call_operand.hbm [shape: f32[1,1024], index: 3, kind: input, shape index: {}]
  %s4 = inlined_call_operand.hbm [shape: f32[1,1024], index: 4, kind: input, shape index: {}]
  %s5 = inlined_call_operand.vmem [shape: bf16[2,1024], index: 5, kind: output, shape index: {}]
  %s6 = sld [smem:[#allocation0]]
  $region69: #{generator_forward.7} parent=0
    _
  %s8 = ssub.s32 1, %s6
  %s9 = scalar_select 0, %s8, %s6
  $region1: #{generator_forward.7} parent=0
    #allocation2 [shape = 'u8[1048576]{0}', space=vmem, size = 0x100000, scoped, tag = 'input window, operand 1']
    #allocation3 [shape = 's32[2]{0}', space=sflag, size = 0x8, scoped, tag = 'scoped memory for generator_forward.7']
    #allocation4 [shape = 'u8[4096]{0}', space=vmem, size = 0x1000, scoped, tag = 'input window, operand 2']
    #allocation5 [shape = 's32[2]{0}', space=sflag, size = 0x8, scoped, tag = 'scoped memory for generator_forward.7']
    #allocation6 [shape = 'u8[4096]{0}', space=vmem, size = 0x1000, scoped, tag = 'input window, operand 3']
    #allocation7 [shape = 'u8[4096]{0}', space=vmem, size = 0x1000, scoped, tag = 'input window, operand 4']
    #allocation8 [shape = 's32[2]{0}', space=sflag, size = 0x8, scoped, tag = 'scoped memory for generator_forward.7']
    %10 = vsyncpa [#allocation3], 0
    %s11 = scalar_lea.sflag [#allocation3], 1
    %12 = vsyncpa %s11, 0
    %13 = vsyncpa [#allocation5], 0
    %s14 = scalar_lea.sflag [#allocation5], 1
    %15 = vsyncpa %s14, 0
    %16 = vsyncpa [#allocation8], 0
    %s17 = scalar_lea.sflag [#allocation8], 1
    %18 = vsyncpa %s17, 0
    loop: start=0, step=1, limit=4
    $region2: #{generator_forward.7} parent=1 // loop_pre_header
      _
    $region3: #{generator_forward.7} parent=1 // loop_header
      %s20 = sphi 0, %s24
      %p21 = scmp.ge.s32.totalorder %s20, 4
      %s28 = sphi 0, %s28
      %s30 = sphi 0, %s28
      %s31 = sphi 0, %s30
      %s45 = sphi 0, %s31
      %s51 = sphi 0, %s53
      %s54 = sphi 0, %s51
      %s55 = sphi 0, %s54
      %s71 = sphi 0, %s55
      %s77 = sphi 0, %s79
      %s80 = sphi 0, %s77
      %s81 = sphi 0, %s80
      %s97 = sphi 0, %s81
      %s103 = sphi 0, %s105
      %s106 = sphi 0, %s103
      %s107 = sphi 0, %s106
      %s123 = sphi 0, %s107
      %s129 = sphi 0, %s131
      %s132 = sphi 0, %s129
      %s133 = sphi 0, %s132
      %s149 = sphi 0, %s133
      %s155 = sphi 0, %s157
      %s158 = sphi 0, %s155
      %s159 = sphi 0, %s158
      %s175 = sphi 0, %s159
    $region4: #{generator_forward.7} parent=1 // loop_header_branch
      %23 = sbr.rel (%p21) target = $region8
    $region5: #{generator_forward.7} parent=1 // loop_body
      %s25 = ssub.s32 %s20, 1
      %s26 = ssub.s32 %s20, 2
      %s27 = sadd.s32 %s20, 1
      %s29 = sadd.s32 %s28, 1
      %p32 = scmp.eq.s32.totalorder %s20, 1
      %p33 = scmp.ne.s32.totalorder %s28, %s30
      %p34 = scmp.eq.s32.totalorder %s20, 0
      %p35 = por %p33, %p34
      %p36 = scmp.ne.s32.totalorder %s28, %s30
      %p37 = scmp.eq.s32.totalorder %s25, 1
      %p38 = por %p36, %p37
      %p39 = scmp.ne.s32.totalorder %s30, %s31
      %p40 = scmp.eq.s32.totalorder %s25, 0
      %p41 = por %p39, %p40
      %p42 = scmp.ne.s32.totalorder %s30, %s31
      %p43 = scmp.eq.s32.totalorder %s26, 1
      %p44 = por %p42, %p43
      %p46 = scmp.ne.s32.totalorder %s31, %s45
      %p47 = scmp.eq.s32.totalorder %s26, 0
      %p48 = por %p46, %p47
      %s49 = ssub.s32 %s20, %s27
      %p50 = scmp.eq.s32.totalorder %s49, 0
      %s52 = sadd.s32 %s51, 1
      %s53 = scalar_select %p50, %s51, %s52
      %p56 = pneg %p50
      %p57 = scmp.eq.s32.totalorder %s20, 1
      %p58 = por %p56, %p57
      %p59 = scmp.ne.s32.totalorder %s51, %s54
      %p60 = scmp.eq.s32.totalorder %s20, 0
      %p61 = por %p59, %p60
      %p62 = scmp.ne.s32.totalorder %s51, %s54
      %p63 = scmp.eq.s32.totalorder %s25, 1
      %p64 = por %p62, %p63
      %p65 = scmp.ne.s32.totalorder %s54, %s55
      %p66 = scmp.eq.s32.totalorder %s25, 0
      %p67 = por %p65, %p66
      %p68 = scmp.ne.s32.totalorder %s54, %s55
      %p69 = scmp.eq.s32.totalorder %s26, 1
      %p70 = por %p68, %p69
      %p72 = scmp.ne.s32.totalorder %s55, %s71
      %p73 = scmp.eq.s32.totalorder %s26, 0
      %p74 = por %p72, %p73
      %s75 = ssub.s32 %s20, %s27
      %p76 = scmp.eq.s32.totalorder %s75, 0
      %s78 = sadd.s32 %s77, 1
      %s79 = scalar_select %p76, %s77, %s78
      %p82 = pneg %p76
      %p83 = scmp.eq.s32.totalorder %s20, 1
      %p84 = por %p82, %p83
      %p85 = scmp.ne.s32.totalorder %s77, %s80
      %p86 = scmp.eq.s32.totalorder %s20, 0
      %p87 = por %p85, %p86
      %p88 = scmp.ne.s32.totalorder %s77, %s80
      %p89 = scmp.eq.s32.totalorder %s25, 1
      %p90 = por %p88, %p89
      %p91 = scmp.ne.s32.totalorder %s80, %s81
      %p92 = scmp.eq.s32.totalorder %s25, 0
      %p93 = por %p91, %p92
      %p94 = scmp.ne.s32.totalorder %s80, %s81
      %p95 = scmp.eq.s32.totalorder %s26, 1
      %p96 = por %p94, %p95
      %p98 = scmp.ne.s32.totalorder %s81, %s97
      %p99 = scmp.eq.s32.totalorder %s26, 0
      %p100 = por %p98, %p99
      %s101 = ssub.s32 %s20, %s27
      %p102 = scmp.eq.s32.totalorder %s101, 0
      %s104 = sadd.s32 %s103, 1
      %s105 = scalar_select %p102, %s103, %s104
      %p108 = pneg %p102
      %p109 = scmp.eq.s32.totalorder %s20, 1
      %p110 = por %p108, %p109
      %p111 = scmp.ne.s32.totalorder %s103, %s106
      %p112 = scmp.eq.s32.totalorder %s20, 0
      %p113 = por %p111, %p112
      %p114 = scmp.ne.s32.totalorder %s103, %s106
      %p115 = scmp.eq.s32.totalorder %s25, 1
      %p116 = por %p114, %p115
      %p117 = scmp.ne.s32.totalorder %s106, %s107
      %p118 = scmp.eq.s32.totalorder %s25, 0
      %p119 = por %p117, %p118
      %p120 = scmp.ne.s32.totalorder %s106, %s107
      %p121 = scmp.eq.s32.totalorder %s26, 1
      %p122 = por %p120, %p121
      %p124 = scmp.ne.s32.totalorder %s107, %s123
      %p125 = scmp.eq.s32.totalorder %s26, 0
      %p126 = por %p124, %p125
      %s127 = ssub.s32 %s20, %s27
      %p128 = scmp.eq.s32.totalorder %s127, 0
      %s130 = sadd.s32 %s129, 1
      %s131 = scalar_select %p128, %s129, %s130
      %p134 = pneg %p128
      %p135 = scmp.eq.s32.totalorder %s20, 1
      %p136 = por %p134, %p135
      %p137 = scmp.ne.s32.totalorder %s129, %s132
      %p138 = scmp.eq.s32.totalorder %s20, 0
      %p139 = por %p137, %p138
      %p140 = scmp.ne.s32.totalorder %s129, %s132
      %p141 = scmp.eq.s32.totalorder %s25, 1
      %p142 = por %p140, %p141
      %p143 = scmp.ne.s32.totalorder %s132, %s133
      %p144 = scmp.eq.s32.totalorder %s25, 0
      %p145 = por %p143, %p144
      %p146 = scmp.ne.s32.totalorder %s132, %s133
      %p147 = scmp.eq.s32.totalorder %s26, 1
      %p148 = por %p146, %p147
      %p150 = scmp.ne.s32.totalorder %s133, %s149
      %p151 = scmp.eq.s32.totalorder %s26, 0
      %p152 = por %p150, %p151
      %s153 = ssub.s32 %s20, %s27
      %p154 = scmp.eq.s32.totalorder %s153, 0
      %s156 = sadd.s32 %s155, 1
      %s157 = scalar_select %p154, %s155, %s156
      %p160 = pneg %p154
      %p161 = scmp.eq.s32.totalorder %s20, 1
      %p162 = por %p160, %p161
      %p163 = scmp.ne.s32.totalorder %s155, %s158
      %p164 = scmp.eq.s32.totalorder %s20, 0
      %p165 = por %p163, %p164
      %p166 = scmp.ne.s32.totalorder %s155, %s158
      %p167 = scmp.eq.s32.totalorder %s25, 1
      %p168 = por %p166, %p167
      %p169 = scmp.ne.s32.totalorder %s158, %s159
      %p170 = scmp.eq.s32.totalorder %s25, 0
      %p171 = por %p169, %p170
      %p172 = scmp.ne.s32.totalorder %s158, %s159
      %p173 = scmp.eq.s32.totalorder %s26, 1
      %p174 = por %p172, %p173
      %p176 = scmp.ne.s32.totalorder %s159, %s175
      %p177 = scmp.eq.s32.totalorder %s26, 0
      %p178 = por %p176, %p177
      %p179 = scmp.le.s32.totalorder 1, %s20
      %p180 = scmp.lt.s32.totalorder %s20, 3
      %p181 = pnand %p179, %p180
      %p182 = pneg %p181
      // Predicated region
      $region9: #{generator_forward.7} parent=5 // pred_check
        _
      $region10: #{generator_forward.7} parent=5 // pred_check_branch
        %184 = sbr.rel (%p181) target = $region12
      $region11: #{generator_forward.7} parent=5 // pred_region
        %s185 = ssub.s32 %s20, 1
        // Predicated region
        $region13: #{generator_forward.7} parent=11 // pred_check
          %p186 = pneg %p41
        $region14: #{generator_forward.7} parent=11 // pred_check_branch
          %188 = sbr.rel (%p186) target = $region16
        $region15: #{generator_forward.7} parent=11 // pred_region
          _
        $region16: #{generator_forward.7} parent=11 // pred_fallthru
          _
      $region12: #{generator_forward.7} parent=5 // pred_fallthru
        _
      %p189 = scmp.lt.s32.totalorder %s20, 2
      // Predicated region
      $region17: #{generator_forward.7} parent=5 // pred_check
        %p190 = pneg %p189
      $region18: #{generator_forward.7} parent=5 // pred_check_branch
        %192 = sbr.rel (%p190) target = $region20
      $region19: #{generator_forward.7} parent=5 // pred_region
        // Predicated region
        $region21: #{generator_forward.7} parent=19 // pred_check
          %p193 = pneg %p61
        $region22: #{generator_forward.7} parent=19 // pred_check_branch
          %195 = sbr.rel (%p193) target = $region24
        $region23: #{generator_forward.7} parent=19 // pred_region
          %s196 = sand.u32 %s51, 1
          %s197 = scalar_lea.sflag [#allocation3], %s196
          %s198 = sand.u32 %s51, 1
          %s199 = smul.addr %s198, 1024
          %s200 = scalar_lea.vmem [#allocation2], %s199
          %s201 = smul.u32 4, %s20
          %s203 = ssub.s32 16384, 16384
          %204 = vsyncadd %s197, %s203
          %s205 = smul.addr %s201, 64
          %s206 = scalar_lea.hbm %s1, %s205
          %s207 = sshll.u32 %s200, 4
          %s208 = int_to_ptr.vmem [resolvable:$true] %s207
          %213 = dma.hbm_to_vmem [thread:$0]  %s206, 16384, %s208, %s197, 512, 256, 16
        $region24: #{generator_forward.7} parent=19 // pred_fallthru
          _
        // Predicated region
        $region25: #{generator_forward.7} parent=19 // pred_check
          %p214 = pneg %p87
        $region26: #{generator_forward.7} parent=19 // pred_check_branch
          %216 = sbr.rel (%p214) target = $region28
        $region27: #{generator_forward.7} parent=19 // pred_region
          %s217 = sand.u32 %s20, 1
          %s218 = scalar_lea.sflag [#allocation5], %s217
          %s219 = sand.u32 %s77, 1
          %s220 = smul.addr %s219, 4
          %s221 = scalar_lea.vmem [#allocation4], %s220
          %s222 = smul.u32 4, %s20
          %s224 = ssub.s32 64, 64
          %225 = vsyncadd %s218, %s224
          %s226 = smul.addr %s222, 16
          %s227 = scalar_lea.hbm %s2, %s226
          %s229 = sshll.u32 %s221, 4
          %s230 = int_to_ptr.vmem [resolvable:$true] %s229
          %232 = dma.hbm_to_vmem [thread:$0]  %s227, 64, %s230, %s218
        $region28: #{generator_forward.7} parent=19 // pred_fallthru
          _
        // Predicated region
        $region29: #{generator_forward.7} parent=19 // pred_check
          %p233 = pneg %p113
        $region30: #{generator_forward.7} parent=19 // pred_check_branch
          %235 = sbr.rel (%p233) target = $region32
        $region31: #{generator_forward.7} parent=19 // pred_region
          %s236 = sand.u32 %s20, 1
          %s237 = scalar_lea.sflag [#allocation5], %s236
          %s238 = sand.u32 %s103, 1
          %s239 = smul.addr %s238, 4
          %s240 = scalar_lea.vmem [#allocation6], %s239
          %s241 = smul.u32 4, %s20
          %s243 = ssub.s32 64, 64
          %244 = vsyncadd %s237, %s243
          %s245 = smul.addr %s241, 16
          %s246 = scalar_lea.hbm %s3, %s245
          %s248 = sshll.u32 %s240, 4
          %s249 = int_to_ptr.vmem [resolvable:$true] %s248
          %251 = dma.hbm_to_vmem [thread:$0]  %s246, 64, %s249, %s237
        $region32: #{generator_forward.7} parent=19 // pred_fallthru
          _
        // Predicated region
        $region33: #{generator_forward.7} parent=19 // pred_check
          %p252 = pneg %p139
        $region34: #{generator_forward.7} parent=19 // pred_check_branch
          %254 = sbr.rel (%p252) target = $region36
        $region35: #{generator_forward.7} parent=19 // pred_region
          %s255 = sand.u32 %s129, 1
          %s256 = scalar_lea.sflag [#allocation8], %s255
          %s257 = sand.u32 %s129, 1
          %s258 = smul.addr %s257, 4
          %s259 = scalar_lea.vmem [#allocation7], %s258
          %s260 = smul.u32 4, %s20
          %s262 = ssub.s32 64, 64
          %263 = vsyncadd %s256, %s262
          %s264 = smul.addr %s260, 16
          %s265 = scalar_lea.hbm %s4, %s264
          %s267 = sshll.u32 %s259, 4
          %s268 = int_to_ptr.vmem [resolvable:$true] %s267
          %270 = dma.hbm_to_vmem [thread:$0]  %s265, 64, %s268, %s256
        $region36: #{generator_forward.7} parent=19 // pred_fallthru
          _
      $region20: #{generator_forward.7} parent=5 // pred_fallthru
        _
      %p271 = scmp.le.s32.totalorder 1, %s20
      %p272 = scmp.lt.s32.totalorder %s20, 3
      %p273 = pnand %p271, %p272
      %p274 = pneg %p273
      // Predicated region
      $region37: #{generator_forward.7} parent=5 // pred_check
        _
      $region38: #{generator_forward.7} parent=5 // pred_check_branch
        %276 = sbr.rel (%p273) target = $region40
      $region39: #{generator_forward.7} parent=5 // pred_region
        %s277 = ssub.s32 %s20, 1
        %s278 = sand.u32 %s54, 1
        %s279 = scalar_lea.sflag [#allocation3], %s278
        %s280 = sand.u32 %s54, 1
        %s281 = smul.addr %s280, 1024
        %s282 = scalar_lea.vmem [#allocation2], %s281
        // Predicated region
        $region41: #{generator_forward.7} parent=39 // pred_check
          %p283 = pneg %p67
        $region42: #{generator_forward.7} parent=39 // pred_check_branch
          %285 = sbr.rel (%p283) target = $region44
        $region43: #{generator_forward.7} parent=39 // pred_region
          %286 = dma.done %s279, 16384
        $region44: #{generator_forward.7} parent=39 // pred_fallthru
          _
        %s287 = sand.u32 %s25, 1
        %s288 = scalar_lea.sflag [#allocation5], %s287
        %s289 = sand.u32 %s80, 1
        %s290 = smul.addr %s289, 4
        %s291 = scalar_lea.vmem [#allocation4], %s290
        // Predicated region
        $region45: #{generator_forward.7} parent=39 // pred_check
          %p292 = pneg %p93
        $region46: #{generator_forward.7} parent=39 // pred_check_branch
          %294 = sbr.rel (%p292) target = $region48
        $region47: #{generator_forward.7} parent=39 // pred_region
          %295 = dma.done %s288, 64
        $region48: #{generator_forward.7} parent=39 // pred_fallthru
          _
        %s296 = sand.u32 %s25, 1
        %s297 = scalar_lea.sflag [#allocation5], %s296
        %s298 = sand.u32 %s106, 1
        %s299 = smul.addr %s298, 4
        %s300 = scalar_lea.vmem [#allocation6], %s299
        // Predicated region
        $region49: #{generator_forward.7} parent=39 // pred_check
          %p301 = pneg %p119
        $region50: #{generator_forward.7} parent=39 // pred_check_branch
          %303 = sbr.rel (%p301) target = $region52
        $region51: #{generator_forward.7} parent=39 // pred_region
          %304 = dma.done %s297, 64
        $region52: #{generator_forward.7} parent=39 // pred_fallthru
          _
        %s305 = sand.u32 %s132, 1
        %s306 = scalar_lea.sflag [#allocation8], %s305
        %s307 = sand.u32 %s132, 1
        %s308 = smul.addr %s307, 4
        %s309 = scalar_lea.vmem [#allocation7], %s308
        // Predicated region
        $region53: #{generator_forward.7} parent=39 // pred_check
          %p310 = pneg %p145
        $region54: #{generator_forward.7} parent=39 // pred_check_branch
          %312 = sbr.rel (%p310) target = $region56
        $region55: #{generator_forward.7} parent=39 // pred_region
          %313 = dma.done %s306, 64
        $region56: #{generator_forward.7} parent=39 // pred_fallthru
          _
        %p314 = pneg %p41
        %p315 = pneg %p38
        %s316 = sand.u32 %s54, 1
        %s317 = scalar_lea.sflag [#allocation3], %s316
        %s318 = sand.u32 %s54, 1
        %s319 = smul.addr %s318, 1024
        %s320 = scalar_lea.vmem [#allocation2], %s319
        %p321 = pneg %p67
        %p322 = pneg %p64
        %s323 = sand.u32 %s25, 1
        %s324 = scalar_lea.sflag [#allocation5], %s323
        %s325 = sand.u32 %s80, 1
        %s326 = smul.addr %s325, 4
        %s327 = scalar_lea.vmem [#allocation4], %s326
        %p328 = pneg %p93
        %p329 = pneg %p90
        %s330 = sand.u32 %s25, 1
        %s331 = scalar_lea.sflag [#allocation5], %s330
        %s332 = sand.u32 %s106, 1
        %s333 = smul.addr %s332, 4
        %s334 = scalar_lea.vmem [#allocation6], %s333
        %p335 = pneg %p119
        %p336 = pneg %p116
        %s337 = sand.u32 %s132, 1
        %s338 = scalar_lea.sflag [#allocation8], %s337
        %s339 = sand.u32 %s132, 1
        %s340 = smul.addr %s339, 4
        %s341 = scalar_lea.vmem [#allocation7], %s340
        %p342 = pneg %p145
        %p343 = pneg %p142
        %p344 = pneg %p171
        %p345 = pneg %p168
        %s346 = smul.u32 4, %s25
        %p347 = scmp.lt.s32.totalorder %s346, 7
        %s348 = scalar_select %p347, %s346, 7
        %s349 = scalar_lea.vmem %s5, %s348
        %s350 = smul.u32 4, %s25
        %s351 = smul.u32 4, %s25
        %s352 = smul.u32 4, %s25
        %s353 = smul.u32 4, %s25
        %s354 = smul.u32 4, %s25
        %p355 = scmp.lt.s32.totalorder %s354, 7
        %s356 = scalar_select %p355, %s354, 7
        %s357 = scalar_lea.vmem %s5, %s356
        %s358 = smul.u32 4, %s25
        %v359 = vld [vmem:[%s0] sm:$0xf]
        %v360 = vld [vmem:[%s282] sm:$0xff]
        %v361 = vld [vmem:[%s282 + $0x8] sm:$0xff]
        %v362 = vld [vmem:[%s282 + $0x10] sm:$0xff]
        %v363 = vld [vmem:[%s282 + $0x18] sm:$0xff]
        %v364 = vld [vmem:[%s282 + $0x20] sm:$0xff]
        %v365 = vld [vmem:[%s282 + $0x28] sm:$0xff]
        %v366 = vld [vmem:[%s282 + $0x30] sm:$0xff]
        %v367 = vld [vmem:[%s282 + $0x38] sm:$0xff]
        %v368 = vld [vmem:[%s282 + $0x40] sm:$0xff]
        %v369 = vld [vmem:[%s282 + $0x48] sm:$0xff]
        %v370 = vld [vmem:[%s282 + $0x50] sm:$0xff]
        %v371 = vld [vmem:[%s282 + $0x58] sm:$0xff]
        %v372 = vld [vmem:[%s282 + $0x60] sm:$0xff]
        %v373 = vld [vmem:[%s282 + $0x68] sm:$0xff]
        %v374 = vld [vmem:[%s282 + $0x70] sm:$0xff]
        %v375 = vld [vmem:[%s282 + $0x78] sm:$0xff]
        %v376 = vld [vmem:[%s282 + $0x80] sm:$0xff]
        %v377 = vld [vmem:[%s282 + $0x88] sm:$0xff]
        %v378 = vld [vmem:[%s282 + $0x90] sm:$0xff]
        %v379 = vld [vmem:[%s282 + $0x98] sm:$0xff]
        %v380 = vld [vmem:[%s282 + $0xa0] sm:$0xff]
        %v381 = vld [vmem:[%s282 + $0xa8] sm:$0xff]
        %v382 = vld [vmem:[%s282 + $0xb0] sm:$0xff]
        %v383 = vld [vmem:[%s282 + $0xb8] sm:$0xff]
        %v384 = vld [vmem:[%s282 + $0xc0] sm:$0xff]
        %v385 = vld [vmem:[%s282 + $0xc8] sm:$0xff]
        %v386 = vld [vmem:[%s282 + $0xd0] sm:$0xff]
        %v387 = vld [vmem:[%s282 + $0xd8] sm:$0xff]
        %v388 = vld [vmem:[%s282 + $0xe0] sm:$0xff]
        %v389 = vld [vmem:[%s282 + $0xe8] sm:$0xff]
        %v390 = vld [vmem:[%s282 + $0xf0] sm:$0xff]
        %v391 = vld [vmem:[%s282 + $0xf8] sm:$0xff]
        %v392 = vld [vmem:[%s282 + $0x100] sm:$0xff]
        %v393 = vld [vmem:[%s282 + $0x108] sm:$0xff]
        %v394 = vld [vmem:[%s282 + $0x110] sm:$0xff]
        %v395 = vld [vmem:[%s282 + $0x118] sm:$0xff]
        %v396 = vld [vmem:[%s282 + $0x120] sm:$0xff]
        %v397 = vld [vmem:[%s282 + $0x128] sm:$0xff]
        %v398 = vld [vmem:[%s282 + $0x130] sm:$0xff]
        %v399 = vld [vmem:[%s282 + $0x138] sm:$0xff]
        %v400 = vld [vmem:[%s282 + $0x140] sm:$0xff]
        %v401 = vld [vmem:[%s282 + $0x148] sm:$0xff]
        %v402 = vld [vmem:[%s282 + $0x150] sm:$0xff]
        %v403 = vld [vmem:[%s282 + $0x158] sm:$0xff]
        %v404 = vld [vmem:[%s282 + $0x160] sm:$0xff]
        %v405 = vld [vmem:[%s282 + $0x168] sm:$0xff]
        %v406 = vld [vmem:[%s282 + $0x170] sm:$0xff]
        %v407 = vld [vmem:[%s282 + $0x178] sm:$0xff]
        %v408 = vld [vmem:[%s282 + $0x180] sm:$0xff]
        %v409 = vld [vmem:[%s282 + $0x188] sm:$0xff]
        %v410 = vld [vmem:[%s282 + $0x190] sm:$0xff]
        %v411 = vld [vmem:[%s282 + $0x198] sm:$0xff]
        %v412 = vld [vmem:[%s282 + $0x1a0] sm:$0xff]
        %v413 = vld [vmem:[%s282 + $0x1a8] sm:$0xff]
        %v414 = vld [vmem:[%s282 + $0x1b0] sm:$0xff]
        %v415 = vld [vmem:[%s282 + $0x1b8] sm:$0xff]
        %v416 = vld [vmem:[%s282 + $0x1c0] sm:$0xff]
        %v417 = vld [vmem:[%s282 + $0x1c8] sm:$0xff]
        %v418 = vld [vmem:[%s282 + $0x1d0] sm:$0xff]
        %v419 = vld [vmem:[%s282 + $0x1d8] sm:$0xff]
        %v420 = vld [vmem:[%s282 + $0x1e0] sm:$0xff]
        %v421 = vld [vmem:[%s282 + $0x1e8] sm:$0xff]
        %v422 = vld [vmem:[%s282 + $0x1f0] sm:$0xff]
        %v423 = vld [vmem:[%s282 + $0x1f8] sm:$0xff]
        %v424 = vld [vmem:[%s282 + $0x200] sm:$0xff]
        %v425 = vld [vmem:[%s282 + $0x208] sm:$0xff]
        %v426 = vld [vmem:[%s282 + $0x210] sm:$0xff]
        %v427 = vld [vmem:[%s282 + $0x218] sm:$0xff]
        %v428 = vld [vmem:[%s282 + $0x220] sm:$0xff]
        %v429 = vld [vmem:[%s282 + $0x228] sm:$0xff]
        %v430 = vld [vmem:[%s282 + $0x230] sm:$0xff]
        %v431 = vld [vmem:[%s282 + $0x238] sm:$0xff]
        %v432 = vld [vmem:[%s282 + $0x240] sm:$0xff]
        %v433 = vld [vmem:[%s282 + $0x248] sm:$0xff]
        %v434 = vld [vmem:[%s282 + $0x250] sm:$0xff]
        %v435 = vld [vmem:[%s282 + $0x258] sm:$0xff]
        %v436 = vld [vmem:[%s282 + $0x260] sm:$0xff]
        %v437 = vld [vmem:[%s282 + $0x268] sm:$0xff]
        %v438 = vld [vmem:[%s282 + $0x270] sm:$0xff]
        %v439 = vld [vmem:[%s282 + $0x278] sm:$0xff]
        %v440 = vld [vmem:[%s282 + $0x280] sm:$0xff]
        %v441 = vld [vmem:[%s282 + $0x288] sm:$0xff]
        %v442 = vld [vmem:[%s282 + $0x290] sm:$0xff]
        %v443 = vld [vmem:[%s282 + $0x298] sm:$0xff]
        %v444 = vld [vmem:[%s282 + $0x2a0] sm:$0xff]
        %v445 = vld [vmem:[%s282 + $0x2a8] sm:$0xff]
        %v446 = vld [vmem:[%s282 + $0x2b0] sm:$0xff]
        %v447 = vld [vmem:[%s282 + $0x2b8] sm:$0xff]
        %v448 = vld [vmem:[%s282 + $0x2c0] sm:$0xff]
        %v449 = vld [vmem:[%s282 + $0x2c8] sm:$0xff]
        %v450 = vld [vmem:[%s282 + $0x2d0] sm:$0xff]
        %v451 = vld [vmem:[%s282 + $0x2d8] sm:$0xff]
        %v452 = vld [vmem:[%s282 + $0x2e0] sm:$0xff]
        %v453 = vld [vmem:[%s282 + $0x2e8] sm:$0xff]
        %v454 = vld [vmem:[%s282 + $0x2f0] sm:$0xff]
        %v455 = vld [vmem:[%s282 + $0x2f8] sm:$0xff]
        %v456 = vld [vmem:[%s282 + $0x300] sm:$0xff]
        %v457 = vld [vmem:[%s282 + $0x308] sm:$0xff]
        %v458 = vld [vmem:[%s282 + $0x310] sm:$0xff]
        %v459 = vld [vmem:[%s282 + $0x318] sm:$0xff]
        %v460 = vld [vmem:[%s282 + $0x320] sm:$0xff]
        %v461 = vld [vmem:[%s282 + $0x328] sm:$0xff]
        %v462 = vld [vmem:[%s282 + $0x330] sm:$0xff]
        %v463 = vld [vmem:[%s282 + $0x338] sm:$0xff]
        %v464 = vld [vmem:[%s282 + $0x340] sm:$0xff]
        %v465 = vld [vmem:[%s282 + $0x348] sm:$0xff]
        %v466 = vld [vmem:[%s282 + $0x350] sm:$0xff]
        %v467 = vld [vmem:[%s282 + $0x358] sm:$0xff]
        %v468 = vld [vmem:[%s282 + $0x360] sm:$0xff]
        %v469 = vld [vmem:[%s282 + $0x368] sm:$0xff]
        %v470 = vld [vmem:[%s282 + $0x370] sm:$0xff]
        %v471 = vld [vmem:[%s282 + $0x378] sm:$0xff]
        %v472 = vld [vmem:[%s282 + $0x380] sm:$0xff]
        %v473 = vld [vmem:[%s282 + $0x388] sm:$0xff]
        %v474 = vld [vmem:[%s282 + $0x390] sm:$0xff]
        %v475 = vld [vmem:[%s282 + $0x398] sm:$0xff]
        %v476 = vld [vmem:[%s282 + $0x3a0] sm:$0xff]
        %v477 = vld [vmem:[%s282 + $0x3a8] sm:$0xff]
        %v478 = vld [vmem:[%s282 + $0x3b0] sm:$0xff]
        %v479 = vld [vmem:[%s282 + $0x3b8] sm:$0xff]
        %v480 = vld [vmem:[%s282 + $0x3c0] sm:$0xff]
        %v481 = vld [vmem:[%s282 + $0x3c8] sm:$0xff]
        %v482 = vld [vmem:[%s282 + $0x3d0] sm:$0xff]
        %v483 = vld [vmem:[%s282 + $0x3d8] sm:$0xff]
        %v484 = vld [vmem:[%s282 + $0x3e0] sm:$0xff]
        %v485 = vld [vmem:[%s282 + $0x3e8] sm:$0xff]
        %v486 = vld [vmem:[%s282 + $0x3f0] sm:$0xff]
        %v487 = vld [vmem:[%s282 + $0x3f8] sm:$0xff]
        %v488 = vld [vmem:[%s291] sm:$0xf]
        %v490 = vlaneseq
        %v491 = vshrl.u32 %v490, 7
        %v492 = vsub.s32 0, %v491
        %v493 = vrot.slane %v488, %v492
        %v494 = vlaneseq
        %v495 = vshrl.u32 %v494, 7
        %v496 = vsub.s32 1, %v495
        %v497 = vrot.slane %v488, %v496
        %v498 = vlaneseq
        %v499 = vshrl.u32 %v498, 7
        %v500 = vsub.s32 2, %v499
        %v501 = vrot.slane %v488, %v500
        %v502 = vlaneseq
        %v503 = vshrl.u32 %v502, 7
        %v504 = vsub.s32 3, %v503
        %v505 = vrot.slane %v488, %v504
        %v512 = vunpack.c.l.s4 1966171168
        %v513 = vunpack.c.0.s8 %v512
        %v514 = vlaneseq
        %v515 = vshrl.u32 %v514, 7
        %v516 = vsub.s32 %v513, %v515
        %v517 = vrot.slane %v359, %v516
        %v518 = vcombine.high %v517, %v517
        %v520 = vunpack.c.l.s4 1966171168
        %v521 = vunpack.c.0.s8 %v520
        %v522 = vlaneseq
        %v523 = vshrl.u32 %v522, 7
        %v524 = vsub.s32 %v521, %v523
        %v525 = vrot.slane %v517, %v524
        %v527 = vunpack.c.l.s4 1966171168
        %v528 = vunpack.c.0.s8 %v527
        %v529 = vlaneseq
        %v530 = vshrl.u32 %v529, 7
        %v531 = vsub.s32 %v528, %v530
        %v532 = vrot.slane %v518, %v531
        %v533 = vcombine.high %v525, %v525
        %v534 = vcombine.high %v532, %v532
        %v667 = vunpack.c.l.b16 %v360
        %v668 = vunpack.c.h.b16 %v360
        %v669 = vunpack.c.l.b16 %v361
        %v670 = vunpack.c.h.b16 %v361
        %v671 = vunpack.c.l.b16 %v362
        %v672 = vunpack.c.h.b16 %v362
        %v673 = vunpack.c.l.b16 %v363
        %v674 = vunpack.c.h.b16 %v363
        %v675 = vunpack.c.l.b16 %v364
        %v676 = vunpack.c.h.b16 %v364
        %v677 = vunpack.c.l.b16 %v365
        %v678 = vunpack.c.h.b16 %v365
        %v679 = vunpack.c.l.b16 %v366
        %v680 = vunpack.c.h.b16 %v366
        %v681 = vunpack.c.l.b16 %v367
        %v682 = vunpack.c.h.b16 %v367
        %v683 = vunpack.c.l.b16 %v368
        %v684 = vunpack.c.h.b16 %v368
        %v685 = vunpack.c.l.b16 %v369
        %v686 = vunpack.c.h.b16 %v369
        %v687 = vunpack.c.l.b16 %v370
        %v688 = vunpack.c.h.b16 %v370
        %v689 = vunpack.c.l.b16 %v371
        %v690 = vunpack.c.h.b16 %v371
        %v691 = vunpack.c.l.b16 %v372
        %v692 = vunpack.c.h.b16 %v372
        %v693 = vunpack.c.l.b16 %v373
        %v694 = vunpack.c.h.b16 %v373
        %v695 = vunpack.c.l.b16 %v374
        %v696 = vunpack.c.h.b16 %v374
        %v697 = vunpack.c.l.b16 %v375
        %v698 = vunpack.c.h.b16 %v375
        %v699 = vunpack.c.l.b16 %v376
        %v700 = vunpack.c.h.b16 %v376
        %v701 = vunpack.c.l.b16 %v377
        %v702 = vunpack.c.h.b16 %v377
        %v703 = vunpack.c.l.b16 %v378
        %v704 = vunpack.c.h.b16 %v378
        %v705 = vunpack.c.l.b16 %v379
        %v706 = vunpack.c.h.b16 %v379
        %v707 = vunpack.c.l.b16 %v380
        %v708 = vunpack.c.h.b16 %v380
        %v709 = vunpack.c.l.b16 %v381
        %v710 = vunpack.c.h.b16 %v381
        %v711 = vunpack.c.l.b16 %v382
        %v712 = vunpack.c.h.b16 %v382
        %v713 = vunpack.c.l.b16 %v383
        %v714 = vunpack.c.h.b16 %v383
        %v715 = vunpack.c.l.b16 %v384
        %v716 = vunpack.c.h.b16 %v384
        %v717 = vunpack.c.l.b16 %v385
        %v718 = vunpack.c.h.b16 %v385
        %v719 = vunpack.c.l.b16 %v386
        %v720 = vunpack.c.h.b16 %v386
        %v721 = vunpack.c.l.b16 %v387
        %v722 = vunpack.c.h.b16 %v387
        %v723 = vunpack.c.l.b16 %v388
        %v724 = vunpack.c.h.b16 %v388
        %v725 = vunpack.c.l.b16 %v389
        %v726 = vunpack.c.h.b16 %v389
        %v727 = vunpack.c.l.b16 %v390
        %v728 = vunpack.c.h.b16 %v390
        %v729 = vunpack.c.l.b16 %v391
        %v730 = vunpack.c.h.b16 %v391
        %v731 = vunpack.c.l.b16 %v392
        %v732 = vunpack.c.h.b16 %v392
        %v733 = vunpack.c.l.b16 %v393
        %v734 = vunpack.c.h.b16 %v393
        %v735 = vunpack.c.l.b16 %v394
        %v736 = vunpack.c.h.b16 %v394
        %v737 = vunpack.c.l.b16 %v395
        %v738 = vunpack.c.h.b16 %v395
        %v739 = vunpack.c.l.b16 %v396
        %v740 = vunpack.c.h.b16 %v396
        %v741 = vunpack.c.l.b16 %v397
        %v742 = vunpack.c.h.b16 %v397
        %v743 = vunpack.c.l.b16 %v398
        %v744 = vunpack.c.h.b16 %v398
        %v745 = vunpack.c.l.b16 %v399
        %v746 = vunpack.c.h.b16 %v399
        %v747 = vunpack.c.l.b16 %v400
        %v748 = vunpack.c.h.b16 %v400
        %v749 = vunpack.c.l.b16 %v401
        %v750 = vunpack.c.h.b16 %v401
        %v751 = vunpack.c.l.b16 %v402
        %v752 = vunpack.c.h.b16 %v402
        %v753 = vunpack.c.l.b16 %v403
        %v754 = vunpack.c.h.b16 %v403
        %v755 = vunpack.c.l.b16 %v404
        %v756 = vunpack.c.h.b16 %v404
        %v757 = vunpack.c.l.b16 %v405
        %v758 = vunpack.c.h.b16 %v405
        %v759 = vunpack.c.l.b16 %v406
        %v760 = vunpack.c.h.b16 %v406
        %v761 = vunpack.c.l.b16 %v407
        %v762 = vunpack.c.h.b16 %v407
        %v763 = vunpack.c.l.b16 %v408
        %v764 = vunpack.c.h.b16 %v408
        %v765 = vunpack.c.l.b16 %v409
        %v766 = vunpack.c.h.b16 %v409
        %v767 = vunpack.c.l.b16 %v410
        %v768 = vunpack.c.h.b16 %v410
        %v769 = vunpack.c.l.b16 %v411
        %v770 = vunpack.c.h.b16 %v411
        %v771 = vunpack.c.l.b16 %v412
        %v772 = vunpack.c.h.b16 %v412
        %v773 = vunpack.c.l.b16 %v413
        %v774 = vunpack.c.h.b16 %v413
        %v775 = vunpack.c.l.b16 %v414
        %v776 = vunpack.c.h.b16 %v414
        %v777 = vunpack.c.l.b16 %v415
        %v778 = vunpack.c.h.b16 %v415
        %v779 = vunpack.c.l.b16 %v416
        %v780 = vunpack.c.h.b16 %v416
        %v781 = vunpack.c.l.b16 %v417
        %v782 = vunpack.c.h.b16 %v417
        %v783 = vunpack.c.l.b16 %v418
        %v784 = vunpack.c.h.b16 %v418
        %v785 = vunpack.c.l.b16 %v419
        %v786 = vunpack.c.h.b16 %v419
        %v787 = vunpack.c.l.b16 %v420
        %v788 = vunpack.c.h.b16 %v420
        %v789 = vunpack.c.l.b16 %v421
        %v790 = vunpack.c.h.b16 %v421
        %v791 = vunpack.c.l.b16 %v422
        %v792 = vunpack.c.h.b16 %v422
        %v793 = vunpack.c.l.b16 %v423
        %v794 = vunpack.c.h.b16 %v423
        %v795 = vunpack.c.l.b16 %v424
        %v796 = vunpack.c.h.b16 %v424
        %v797 = vunpack.c.l.b16 %v425
        %v798 = vunpack.c.h.b16 %v425
        %v799 = vunpack.c.l.b16 %v426
        %v800 = vunpack.c.h.b16 %v426
        %v801 = vunpack.c.l.b16 %v427
        %v802 = vunpack.c.h.b16 %v427
        %v803 = vunpack.c.l.b16 %v428
        %v804 = vunpack.c.h.b16 %v428
        %v805 = vunpack.c.l.b16 %v429
        %v806 = vunpack.c.h.b16 %v429
        %v807 = vunpack.c.l.b16 %v430
        %v808 = vunpack.c.h.b16 %v430
        %v809 = vunpack.c.l.b16 %v431
        %v810 = vunpack.c.h.b16 %v431
        %v811 = vunpack.c.l.b16 %v432
        %v812 = vunpack.c.h.b16 %v432
        %v813 = vunpack.c.l.b16 %v433
        %v814 = vunpack.c.h.b16 %v433
        %v815 = vunpack.c.l.b16 %v434
        %v816 = vunpack.c.h.b16 %v434
        %v817 = vunpack.c.l.b16 %v435
        %v818 = vunpack.c.h.b16 %v435
        %v819 = vunpack.c.l.b16 %v436
        %v820 = vunpack.c.h.b16 %v436
        %v821 = vunpack.c.l.b16 %v437
        %v822 = vunpack.c.h.b16 %v437
        %v823 = vunpack.c.l.b16 %v438
        %v824 = vunpack.c.h.b16 %v438
        %v825 = vunpack.c.l.b16 %v439
        %v826 = vunpack.c.h.b16 %v439
        %v827 = vunpack.c.l.b16 %v440
        %v828 = vunpack.c.h.b16 %v440
        %v829 = vunpack.c.l.b16 %v441
        %v830 = vunpack.c.h.b16 %v441
        %v831 = vunpack.c.l.b16 %v442
        %v832 = vunpack.c.h.b16 %v442
        %v833 = vunpack.c.l.b16 %v443
        %v834 = vunpack.c.h.b16 %v443
        %v835 = vunpack.c.l.b16 %v444
        %v836 = vunpack.c.h.b16 %v444
        %v837 = vunpack.c.l.b16 %v445
        %v838 = vunpack.c.h.b16 %v445
        %v839 = vunpack.c.l.b16 %v446
        %v840 = vunpack.c.h.b16 %v446
        %v841 = vunpack.c.l.b16 %v447
        %v842 = vunpack.c.h.b16 %v447
        %v843 = vunpack.c.l.b16 %v448
        %v844 = vunpack.c.h.b16 %v448
        %v845 = vunpack.c.l.b16 %v449
        %v846 = vunpack.c.h.b16 %v449
        %v847 = vunpack.c.l.b16 %v450
        %v848 = vunpack.c.h.b16 %v450
        %v849 = vunpack.c.l.b16 %v451
        %v850 = vunpack.c.h.b16 %v451
        %v851 = vunpack.c.l.b16 %v452
        %v852 = vunpack.c.h.b16 %v452
        %v853 = vunpack.c.l.b16 %v453
        %v854 = vunpack.c.h.b16 %v453
        %v855 = vunpack.c.l.b16 %v454
        %v856 = vunpack.c.h.b16 %v454
        %v857 = vunpack.c.l.b16 %v455
        %v858 = vunpack.c.h.b16 %v455
        %v859 = vunpack.c.l.b16 %v456
        %v860 = vunpack.c.h.b16 %v456
        %v861 = vunpack.c.l.b16 %v457
        %v862 = vunpack.c.h.b16 %v457
        %v863 = vunpack.c.l.b16 %v458
        %v864 = vunpack.c.h.b16 %v458
        %v865 = vunpack.c.l.b16 %v459
        %v866 = vunpack.c.h.b16 %v459
        %v867 = vunpack.c.l.b16 %v460
        %v868 = vunpack.c.h.b16 %v460
        %v869 = vunpack.c.l.b16 %v461
        %v870 = vunpack.c.h.b16 %v461
        %v871 = vunpack.c.l.b16 %v462
        %v872 = vunpack.c.h.b16 %v462
        %v873 = vunpack.c.l.b16 %v463
        %v874 = vunpack.c.h.b16 %v463
        %v875 = vunpack.c.l.b16 %v464
        %v876 = vunpack.c.h.b16 %v464
        %v877 = vunpack.c.l.b16 %v465
        %v878 = vunpack.c.h.b16 %v465
        %v879 = vunpack.c.l.b16 %v466
        %v880 = vunpack.c.h.b16 %v466
        %v881 = vunpack.c.l.b16 %v467
        %v882 = vunpack.c.h.b16 %v467
        %v883 = vunpack.c.l.b16 %v468
        %v884 = vunpack.c.h.b16 %v468
        %v885 = vunpack.c.l.b16 %v469
        %v886 = vunpack.c.h.b16 %v469
        %v887 = vunpack.c.l.b16 %v470
        %v888 = vunpack.c.h.b16 %v470
        %v889 = vunpack.c.l.b16 %v471
        %v890 = vunpack.c.h.b16 %v471
        %v891 = vunpack.c.l.b16 %v472
        %v892 = vunpack.c.h.b16 %v472
        %v893 = vunpack.c.l.b16 %v473
        %v894 = vunpack.c.h.b16 %v473
        %v895 = vunpack.c.l.b16 %v474
        %v896 = vunpack.c.h.b16 %v474
        %v897 = vunpack.c.l.b16 %v475
        %v898 = vunpack.c.h.b16 %v475
        %v899 = vunpack.c.l.b16 %v476
        %v900 = vunpack.c.h.b16 %v476
        %v901 = vunpack.c.l.b16 %v477
        %v902 = vunpack.c.h.b16 %v477
        %v903 = vunpack.c.l.b16 %v478
        %v904 = vunpack.c.h.b16 %v478
        %v905 = vunpack.c.l.b16 %v479
        %v906 = vunpack.c.h.b16 %v479
        %v907 = vunpack.c.l.b16 %v480
        %v908 = vunpack.c.h.b16 %v480
        %v909 = vunpack.c.l.b16 %v481
        %v910 = vunpack.c.h.b16 %v481
        %v911 = vunpack.c.l.b16 %v482
        %v912 = vunpack.c.h.b16 %v482
        %v913 = vunpack.c.l.b16 %v483
        %v914 = vunpack.c.h.b16 %v483
        %v915 = vunpack.c.l.b16 %v484
        %v916 = vunpack.c.h.b16 %v484
        %v917 = vunpack.c.l.b16 %v485
        %v918 = vunpack.c.h.b16 %v485
        %v919 = vunpack.c.l.b16 %v486
        %v920 = vunpack.c.h.b16 %v486
        %v921 = vunpack.c.l.b16 %v487
        %v922 = vunpack.c.h.b16 %v487
        %v923 = vpack.c.b16 %v671, %v667
        %v924 = vpack.c.b16 %v672, %v668
        %v925 = vpack.c.b16 %v673, %v669
        %v926 = vpack.c.b16 %v674, %v670
        %v927 = vpack.c.b16 %v679, %v675
        %v928 = vpack.c.b16 %v680, %v676
        %v929 = vpack.c.b16 %v681, %v677
        %v930 = vpack.c.b16 %v682, %v678
        %v931 = vpack.c.b16 %v687, %v683
        %v932 = vpack.c.b16 %v688, %v684
        %v933 = vpack.c.b16 %v689, %v685
        %v934 = vpack.c.b16 %v690, %v686
        %v935 = vpack.c.b16 %v695, %v691
        %v936 = vpack.c.b16 %v696, %v692
        %v937 = vpack.c.b16 %v697, %v693
        %v938 = vpack.c.b16 %v698, %v694
        %v939 = vpack.c.b16 %v703, %v699
        %v940 = vpack.c.b16 %v704, %v700
        %v941 = vpack.c.b16 %v705, %v701
        %v942 = vpack.c.b16 %v706, %v702
        %v943 = vpack.c.b16 %v711, %v707
        %v944 = vpack.c.b16 %v712, %v708
        %v945 = vpack.c.b16 %v713, %v709
        %v946 = vpack.c.b16 %v714, %v710
        %v947 = vpack.c.b16 %v719, %v715
        %v948 = vpack.c.b16 %v720, %v716
        %v949 = vpack.c.b16 %v721, %v717
        %v950 = vpack.c.b16 %v722, %v718
        %v951 = vpack.c.b16 %v727, %v723
        %v952 = vpack.c.b16 %v728, %v724
        %v953 = vpack.c.b16 %v729, %v725
        %v954 = vpack.c.b16 %v730, %v726
        %v955 = vpack.c.b16 %v735, %v731
        %v956 = vpack.c.b16 %v736, %v732
        %v957 = vpack.c.b16 %v737, %v733
        %v958 = vpack.c.b16 %v738, %v734
        %v959 = vpack.c.b16 %v743, %v739
        %v960 = vpack.c.b16 %v744, %v740
        %v961 = vpack.c.b16 %v745, %v741
        %v962 = vpack.c.b16 %v746, %v742
        %v963 = vpack.c.b16 %v751, %v747
        %v964 = vpack.c.b16 %v752, %v748
        %v965 = vpack.c.b16 %v753, %v749
        %v966 = vpack.c.b16 %v754, %v750
        %v967 = vpack.c.b16 %v759, %v755
        %v968 = vpack.c.b16 %v760, %v756
        %v969 = vpack.c.b16 %v761, %v757
        %v970 = vpack.c.b16 %v762, %v758
        %v971 = vpack.c.b16 %v767, %v763
        %v972 = vpack.c.b16 %v768, %v764
        %v973 = vpack.c.b16 %v769, %v765
        %v974 = vpack.c.b16 %v770, %v766
        %v975 = vpack.c.b16 %v775, %v771
        %v976 = vpack.c.b16 %v776, %v772
        %v977 = vpack.c.b16 %v777, %v773
        %v978 = vpack.c.b16 %v778, %v774
        %v979 = vpack.c.b16 %v783, %v779
        %v980 = vpack.c.b16 %v784, %v780
        %v981 = vpack.c.b16 %v785, %v781
        %v982 = vpack.c.b16 %v786, %v782
        %v983 = vpack.c.b16 %v791, %v787
        %v984 = vpack.c.b16 %v792, %v788
        %v985 = vpack.c.b16 %v793, %v789
        %v986 = vpack.c.b16 %v794, %v790
        %v987 = vpack.c.b16 %v799, %v795
        %v988 = vpack.c.b16 %v800, %v796
        %v989 = vpack.c.b16 %v801, %v797
        %v990 = vpack.c.b16 %v802, %v798
        %v991 = vpack.c.b16 %v807, %v803
        %v992 = vpack.c.b16 %v808, %v804
        %v993 = vpack.c.b16 %v809, %v805
        %v994 = vpack.c.b16 %v810, %v806
        %v995 = vpack.c.b16 %v815, %v811
        %v996 = vpack.c.b16 %v816, %v812
        %v997 = vpack.c.b16 %v817, %v813
        %v998 = vpack.c.b16 %v818, %v814
        %v999 = vpack.c.b16 %v823, %v819
        %v1000 = vpack.c.b16 %v824, %v820
        %v1001 = vpack.c.b16 %v825, %v821
        %v1002 = vpack.c.b16 %v826, %v822
        %v1003 = vpack.c.b16 %v831, %v827
        %v1004 = vpack.c.b16 %v832, %v828
        %v1005 = vpack.c.b16 %v833, %v829
        %v1006 = vpack.c.b16 %v834, %v830
        %v1007 = vpack.c.b16 %v839, %v835
        %v1008 = vpack.c.b16 %v840, %v836
        %v1009 = vpack.c.b16 %v841, %v837
        %v1010 = vpack.c.b16 %v842, %v838
        %v1011 = vpack.c.b16 %v847, %v843
        %v1012 = vpack.c.b16 %v848, %v844
        %v1013 = vpack.c.b16 %v849, %v845
        %v1014 = vpack.c.b16 %v850, %v846
        %v1015 = vpack.c.b16 %v855, %v851
        %v1016 = vpack.c.b16 %v856, %v852
        %v1017 = vpack.c.b16 %v857, %v853
        %v1018 = vpack.c.b16 %v858, %v854
        %v1019 = vpack.c.b16 %v863, %v859
        %v1020 = vpack.c.b16 %v864, %v860
        %v1021 = vpack.c.b16 %v865, %v861
        %v1022 = vpack.c.b16 %v866, %v862
        %v1023 = vpack.c.b16 %v871, %v867
        %v1024 = vpack.c.b16 %v872, %v868
        %v1025 = vpack.c.b16 %v873, %v869
        %v1026 = vpack.c.b16 %v874, %v870
        %v1027 = vpack.c.b16 %v879, %v875
        %v1028 = vpack.c.b16 %v880, %v876
        %v1029 = vpack.c.b16 %v881, %v877
        %v1030 = vpack.c.b16 %v882, %v878
        %v1031 = vpack.c.b16 %v887, %v883
        %v1032 = vpack.c.b16 %v888, %v884
        %v1033 = vpack.c.b16 %v889, %v885
        %v1034 = vpack.c.b16 %v890, %v886
        %v1035 = vpack.c.b16 %v895, %v891
        %v1036 = vpack.c.b16 %v896, %v892
        %v1037 = vpack.c.b16 %v897, %v893
        %v1038 = vpack.c.b16 %v898, %v894
        %v1039 = vpack.c.b16 %v903, %v899
        %v1040 = vpack.c.b16 %v904, %v900
        %v1041 = vpack.c.b16 %v905, %v901
        %v1042 = vpack.c.b16 %v906, %v902
        %v1043 = vpack.c.b16 %v911, %v907
        %v1044 = vpack.c.b16 %v912, %v908
        %v1045 = vpack.c.b16 %v913, %v909
        %v1046 = vpack.c.b16 %v914, %v910
        %v1047 = vpack.c.b16 %v919, %v915
        %v1048 = vpack.c.b16 %v920, %v916
        %v1049 = vpack.c.b16 %v921, %v917
        %v1050 = vpack.c.b16 %v922, %v918
        %1179 = vmatprep.subr.bf16.mxu0 %v924
        %1180 = vmatpush1.bf16.msra.mxu0 %v923
        %1181 = vmatprep.subr.bf16.mxu0 %v928
        %1182 = vmatpush1.bf16.msra.mxu0 %v927
        %1183 = vmatprep.subr.bf16.mxu0 %v932
        %1184 = vmatpush1.bf16.msra.mxu0 %v931
        %1185 = vmatprep.subr.bf16.mxu0 %v936
        %1186 = vmatpush1.bf16.msra.mxu0 %v935
        %1187 = vmatprep.subr.bf16.mxu0 %v940
        %1188 = vmatpush1.bf16.msra.mxu0 %v939
        %1189 = vmatprep.subr.bf16.mxu0 %v944
        %1190 = vmatpush1.bf16.msra.mxu0 %v943
        %1191 = vmatprep.subr.bf16.mxu0 %v948
        %1192 = vmatpush1.bf16.msra.mxu0 %v947
        %1193 = vmatprep.subr.bf16.mxu0 %v952
        %1194 = vmatpush1.bf16.msra.mxu0 %v951
        %1195 = vmatprep.subr.bf16.mxu0 %v956
        %1196 = vmatpush1.bf16.msra.mxu0 %v955
        %1197 = vmatprep.subr.bf16.mxu0 %v960
        %1198 = vmatpush1.bf16.msra.mxu0 %v959
        %1199 = vmatprep.subr.bf16.mxu0 %v964
        %1200 = vmatpush1.bf16.msra.mxu0 %v963
        %1201 = vmatprep.subr.bf16.mxu0 %v968
        %1202 = vmatpush1.bf16.msra.mxu0 %v967
        %1203 = vmatprep.subr.bf16.mxu0 %v972
        %1204 = vmatpush1.bf16.msra.mxu0 %v971
        %1205 = vmatprep.subr.bf16.mxu0 %v976
        %1206 = vmatpush1.bf16.msra.mxu0 %v975
        %1207 = vmatprep.subr.bf16.mxu0 %v980
        %1208 = vmatpush1.bf16.msra.mxu0 %v979
        %1209 = vmatprep.subr.bf16.mxu0 %v984
        %1210 = vmatpush1.bf16.msra.mxu0 %v983
        %1211 = vmatprep.mubr.bf16.mxu0 %v532
        %1212 = vmatmul.mubr.bf16.gmra.mrb[0].mxu0 %v525
        %v1213 = vpop.f32.mrb[0].mxu0
        %v1214 = vadd.f32 %v493, %v1213
        %v1215 = vpop.f32.mrb[0].mxu0
        %v1216 = vadd.f32 %v497, %v1215
        %v1217 = vpop.f32.mrb[0].mxu0
        %v1218 = vpop.f32.mrb[0].mxu0
        %1219 = vdwg.mxu0
        %1220 = vmatprep.subr.bf16.mxu0 %v988
        %1221 = vmatpush1.bf16.msra.mxu0 %v987
        %1222 = vmatprep.subr.bf16.mxu0 %v992
        %1223 = vmatpush1.bf16.msra.mxu0 %v991
        %1224 = vmatprep.subr.bf16.mxu0 %v996
        %1225 = vmatpush1.bf16.msra.mxu0 %v995
        %1226 = vmatprep.subr.bf16.mxu0 %v1000
        %1227 = vmatpush1.bf16.msra.mxu0 %v999
        %1228 = vmatprep.subr.bf16.mxu0 %v1004
        %1229 = vmatpush1.bf16.msra.mxu0 %v1003
        %1230 = vmatprep.subr.bf16.mxu0 %v1008
        %1231 = vmatpush1.bf16.msra.mxu0 %v1007
        %1232 = vmatprep.subr.bf16.mxu0 %v1012
        %1233 = vmatpush1.bf16.msra.mxu0 %v1011
        %1234 = vmatprep.subr.bf16.mxu0 %v1016
        %1235 = vmatpush1.bf16.msra.mxu0 %v1015
        %1236 = vmatprep.subr.bf16.mxu0 %v1020
        %1237 = vmatpush1.bf16.msra.mxu0 %v1019
        %1238 = vmatprep.subr.bf16.mxu0 %v1024
        %1239 = vmatpush1.bf16.msra.mxu0 %v1023
        %1240 = vmatprep.subr.bf16.mxu0 %v1028
        %1241 = vmatpush1.bf16.msra.mxu0 %v1027
        %1242 = vmatprep.subr.bf16.mxu0 %v1032
        %1243 = vmatpush1.bf16.msra.mxu0 %v1031
        %1244 = vmatprep.subr.bf16.mxu0 %v1036
        %1245 = vmatpush1.bf16.msra.mxu0 %v1035
        %1246 = vmatprep.subr.bf16.mxu0 %v1040
        %1247 = vmatpush1.bf16.msra.mxu0 %v1039
        %1248 = vmatprep.subr.bf16.mxu0 %v1044
        %1249 = vmatpush1.bf16.msra.mxu0 %v1043
        %1250 = vmatprep.subr.bf16.mxu0 %v1048
        %1251 = vmatpush1.bf16.msra.mxu0 %v1047
        %1252 = vmatprep.mubr.bf16.mxu0 %v534
        %1253 = vmatmul.mubr.bf16.gmra.mrb[0].mxu0 %v533
        %v1254 = vpop.f32.mrb[0].mxu0
        %v1255 = vadd.f32 %v1214, %v1254
        %v1256 = vpop.f32.mrb[0].mxu0
        %v1257 = vadd.f32 %v1216, %v1256
        %v1258 = vpop.f32.mrb[0].mxu0
        %v1259 = vpop.f32.mrb[0].mxu0
        %1260 = vdwg.mxu0
        %1261 = vmatprep.subr.bf16.mxu0 %v926
        %1262 = vmatpush1.bf16.msra.mxu0 %v925
        %1263 = vmatprep.subr.bf16.mxu0 %v930
        %1264 = vmatpush1.bf16.msra.mxu0 %v929
        %1265 = vmatprep.subr.bf16.mxu0 %v934
        %1266 = vmatpush1.bf16.msra.mxu0 %v933
        %1267 = vmatprep.subr.bf16.mxu0 %v938
        %1268 = vmatpush1.bf16.msra.mxu0 %v937
        %1269 = vmatprep.subr.bf16.mxu0 %v942
        %1270 = vmatpush1.bf16.msra.mxu0 %v941
        %1271 = vmatprep.subr.bf16.mxu0 %v946
        %1272 = vmatpush1.bf16.msra.mxu0 %v945
        %1273 = vmatprep.subr.bf16.mxu0 %v950
        %1274 = vmatpush1.bf16.msra.mxu0 %v949
        %1275 = vmatprep.subr.bf16.mxu0 %v954
        %1276 = vmatpush1.bf16.msra.mxu0 %v953
        %1277 = vmatprep.subr.bf16.mxu0 %v958
        %1278 = vmatpush1.bf16.msra.mxu0 %v957
        %1279 = vmatprep.subr.bf16.mxu0 %v962
        %1280 = vmatpush1.bf16.msra.mxu0 %v961
        %1281 = vmatprep.subr.bf16.mxu0 %v966
        %1282 = vmatpush1.bf16.msra.mxu0 %v965
        %1283 = vmatprep.subr.bf16.mxu0 %v970
        %1284 = vmatpush1.bf16.msra.mxu0 %v969
        %1285 = vmatprep.subr.bf16.mxu0 %v974
        %1286 = vmatpush1.bf16.msra.mxu0 %v973
        %1287 = vmatprep.subr.bf16.mxu0 %v978
        %1288 = vmatpush1.bf16.msra.mxu0 %v977
        %1289 = vmatprep.subr.bf16.mxu0 %v982
        %1290 = vmatpush1.bf16.msra.mxu0 %v981
        %1291 = vmatprep.subr.bf16.mxu0 %v986
        %1292 = vmatpush1.bf16.msra.mxu0 %v985
        %1293 = vmatprep.mubr.bf16.mxu0 %v532
        %1294 = vmatmul.mubr.bf16.gmra.mrb[0].mxu0 %v525
        %v1295 = vpop.f32.mrb[0].mxu0
        %v1296 = vadd.f32 %v501, %v1295
        %v1297 = vpop.f32.mrb[0].mxu0
        %v1298 = vadd.f32 %v505, %v1297
        %v1299 = vpop.f32.mrb[0].mxu0
        %v1300 = vpop.f32.mrb[0].mxu0
        %1301 = vdwg.mxu0
        %1302 = vmatprep.subr.bf16.mxu0 %v990
        %1303 = vmatpush1.bf16.msra.mxu0 %v989
        %1304 = vmatprep.subr.bf16.mxu0 %v994
        %1305 = vmatpush1.bf16.msra.mxu0 %v993
        %1306 = vmatprep.subr.bf16.mxu0 %v998
        %1307 = vmatpush1.bf16.msra.mxu0 %v997
        %1308 = vmatprep.subr.bf16.mxu0 %v1002
        %1309 = vmatpush1.bf16.msra.mxu0 %v1001
        %1310 = vmatprep.subr.bf16.mxu0 %v1006
        %1311 = vmatpush1.bf16.msra.mxu0 %v1005
        %1312 = vmatprep.subr.bf16.mxu0 %v1010
        %1313 = vmatpush1.bf16.msra.mxu0 %v1009
        %1314 = vmatprep.subr.bf16.mxu0 %v1014
        %1315 = vmatpush1.bf16.msra.mxu0 %v1013
        %1316 = vmatprep.subr.bf16.mxu0 %v1018
        %1317 = vmatpush1.bf16.msra.mxu0 %v1017
        %1318 = vmatprep.subr.bf16.mxu0 %v1022
        %1319 = vmatpush1.bf16.msra.mxu0 %v1021
        %1320 = vmatprep.subr.bf16.mxu0 %v1026
        %1321 = vmatpush1.bf16.msra.mxu0 %v1025
        %1322 = vmatprep.subr.bf16.mxu0 %v1030
        %1323 = vmatpush1.bf16.msra.mxu0 %v1029
        %1324 = vmatprep.subr.bf16.mxu0 %v1034
        %1325 = vmatpush1.bf16.msra.mxu0 %v1033
        %1326 = vmatprep.subr.bf16.mxu0 %v1038
        %1327 = vmatpush1.bf16.msra.mxu0 %v1037
        %1328 = vmatprep.subr.bf16.mxu0 %v1042
        %1329 = vmatpush1.bf16.msra.mxu0 %v1041
        %1330 = vmatprep.subr.bf16.mxu0 %v1046
        %1331 = vmatpush1.bf16.msra.mxu0 %v1045
        %1332 = vmatprep.subr.bf16.mxu0 %v1050
        %1333 = vmatpush1.bf16.msra.mxu0 %v1049
        %1334 = vmatprep.mubr.bf16.mxu0 %v534
        %1335 = vmatmul.mubr.bf16.gmra.mrb[0].mxu0 %v533
        %v1336 = vpop.f32.mrb[0].mxu0
        %v1337 = vadd.f32 %v1296, %v1336
        %v1338 = vpop.f32.mrb[0].mxu0
        %v1339 = vadd.f32 %v1298, %v1338
        %v1340 = vpop.f32.mrb[0].mxu0
        %v1341 = vpop.f32.mrb[0].mxu0
        %1342 = vdwg.mxu0
        %vm1343 = vcmask 1041408
        %v1344 = vsel %vm1343, %v1255, 0.0
        %v1345 = vrot.slane %v1344, 4
        %v1346 = vadd.f32 %v1344, %v1345
        %v1347 = vrot.slane %v1346, 2
        %v1348 = vadd.f32 %v1346, %v1347
        %v1349 = vrot.slane %v1348, 1
        %v1350 = vadd.f32 %v1348, %v1349
        %v1351 = vsel %vm1343, %v1257, 0.0
        %v1352 = vrot.slane %v1351, 4
        %v1353 = vadd.f32 %v1351, %v1352
        %v1354 = vrot.slane %v1353, 2
        %v1355 = vadd.f32 %v1353, %v1354
        %v1356 = vrot.slane %v1355, 1
        %v1357 = vadd.f32 %v1355, %v1356
        %v1358 = vsel %vm1343, %v1337, 0.0
        %v1359 = vrot.slane %v1358, 4
        %v1360 = vadd.f32 %v1358, %v1359
        %v1361 = vrot.slane %v1360, 2
        %v1362 = vadd.f32 %v1360, %v1361
        %v1363 = vrot.slane %v1362, 1
        %v1364 = vadd.f32 %v1362, %v1363
        %v1365 = vsel %vm1343, %v1339, 0.0
        %v1366 = vrot.slane %v1365, 4
        %v1367 = vadd.f32 %v1365, %v1366
        %v1368 = vrot.slane %v1367, 2
        %v1369 = vadd.f32 %v1367, %v1368
        %v1370 = vrot.slane %v1369, 1
        %v1371 = vadd.f32 %v1369, %v1370
        %v1372 = vrcp.pop 2.0
        %v1373 = vmul.f32 %v1350, %v1372
        %v1374 = vmul.f32 %v1357, %v1372
        %v1375 = vmul.f32 %v1364, %v1372
        %v1376 = vmul.f32 %v1371, %v1372
        %v1377 = vsub.f32 %v1255, %v1373
        %v1378 = vsub.f32 %v1257, %v1374
        %v1379 = vsub.f32 %v1337, %v1375
        %v1380 = vsub.f32 %v1339, %v1376
        %v1381 = vmul.f32 %v1377, %v1377
        %v1382 = vmul.f32 %v1378, %v1378
        %v1383 = vmul.f32 %v1379, %v1379
        %v1384 = vmul.f32 %v1380, %v1380
        %v1385 = vsel %vm1343, %v1381, 0.0
        %v1386 = vrot.slane %v1385, 4
        %v1387 = vadd.f32 %v1385, %v1386
        %v1388 = vrot.slane %v1387, 2
        %v1389 = vadd.f32 %v1387, %v1388
        %v1390 = vrot.slane %v1389, 1
        %v1391 = vadd.f32 %v1389, %v1390
        %v1392 = vsel %vm1343, %v1382, 0.0
        %v1393 = vrot.slane %v1392, 4
        %v1394 = vadd.f32 %v1392, %v1393
        %v1395 = vrot.slane %v1394, 2
        %v1396 = vadd.f32 %v1394, %v1395
        %v1397 = vrot.slane %v1396, 1
        %v1398 = vadd.f32 %v1396, %v1397
        %v1399 = vsel %vm1343, %v1383, 0.0
        %v1400 = vrot.slane %v1399, 4
        %v1401 = vadd.f32 %v1399, %v1400
        %v1402 = vrot.slane %v1401, 2
        %v1403 = vadd.f32 %v1401, %v1402
        %v1404 = vrot.slane %v1403, 1
        %v1405 = vadd.f32 %v1403, %v1404
        %v1406 = vsel %vm1343, %v1384, 0.0
        %v1407 = vrot.slane %v1406, 4
        %v1408 = vadd.f32 %v1406, %v1407
        %v1409 = vrot.slane %v1408, 2
        %v1410 = vadd.f32 %v1408, %v1409
        %v1411 = vrot.slane %v1410, 1
        %v1412 = vadd.f32 %v1410, %v1411
        %v1413 = vmul.f32 %v1391, %v1372
        %v1414 = vmul.f32 %v1398, %v1372
        %v1415 = vmul.f32 %v1405, %v1372
        %v1416 = vmul.f32 %v1412, %v1372
        %v1417 = vadd.f32 %v1413, 0.8
        %v1418 = vadd.f32 %v1414, 0.8
        %v1419 = vadd.f32 %v1415, 0.8
        %v1420 = vadd.f32 %v1416, 0.8
        %v1421 = vrsqrt.pop %v1417
        %v1422 = vrsqrt.pop %v1418
        %v1423 = vrsqrt.pop %v1419
        %v1424 = vrsqrt.pop %v1420
        %v1425 = vmul.f32 %v1377, %v1421
        %v1426 = vmul.f32 %v1378, %v1422
        %v1427 = vmul.f32 %v1379, %v1423
        %v1428 = vmul.f32 %v1380, %v1424
        %v1429 = vld [vmem:[%s300] sm:$0xf]
        %v1431 = vlaneseq
        %v1432 = vshrl.u32 %v1431, 7
        %v1433 = vsub.s32 0, %v1432
        %v1434 = vrot.slane %v1429, %v1433
        %v1435 = vlaneseq
        %v1436 = vshrl.u32 %v1435, 7
        %v1437 = vsub.s32 1, %v1436
        %v1438 = vrot.slane %v1429, %v1437
        %v1439 = vlaneseq
        %v1440 = vshrl.u32 %v1439, 7
        %v1441 = vsub.s32 2, %v1440
        %v1442 = vrot.slane %v1429, %v1441
        %v1443 = vlaneseq
        %v1444 = vshrl.u32 %v1443, 7
        %v1445 = vsub.s32 3, %v1444
        %v1446 = vrot.slane %v1429, %v1445
        %v1451 = vmul.f32 %v1425, %v1434
        %v1452 = vmul.f32 %v1426, %v1438
        %v1453 = vmul.f32 %v1427, %v1442
        %v1454 = vmul.f32 %v1428, %v1446
        %v1455 = vld [vmem:[%s309] sm:$0xf]
        %v1457 = vlaneseq
        %v1458 = vshrl.u32 %v1457, 7
        %v1459 = vsub.s32 0, %v1458
        %v1460 = vrot.slane %v1455, %v1459
        %v1461 = vlaneseq
        %v1462 = vshrl.u32 %v1461, 7
        %v1463 = vsub.s32 1, %v1462
        %v1464 = vrot.slane %v1455, %v1463
        %v1465 = vlaneseq
        %v1466 = vshrl.u32 %v1465, 7
        %v1467 = vsub.s32 2, %v1466
        %v1468 = vrot.slane %v1455, %v1467
        %v1469 = vlaneseq
        %v1470 = vshrl.u32 %v1469, 7
        %v1471 = vsub.s32 3, %v1470
        %v1472 = vrot.slane %v1455, %v1471
        %v1477 = vadd.f32 %v1451, %v1460
        %v1478 = vadd.f32 %v1452, %v1464
        %v1479 = vadd.f32 %v1453, %v1468
        %v1480 = vadd.f32 %v1454, %v1472
        %vm1481 = vcmp.ge.f32.partialorder %v1477, 0.0
        %vm1482 = vcmp.ge.f32.partialorder %v1478, 0.0
        %vm1483 = vcmp.ge.f32.partialorder %v1479, 0.0
        %vm1484 = vcmp.ge.f32.partialorder %v1480, 0.0
        %v1485 = vmul.f32 %v1477, 0.2
        %v1486 = vmul.f32 %v1478, 0.2
        %v1487 = vmul.f32 %v1479, 0.2
        %v1488 = vmul.f32 %v1480, 0.2
        %v1489 = vsel %vm1481, %v1477, %v1485
        %v1490 = vsel %vm1482, %v1478, %v1486
        %v1491 = vsel %vm1483, %v1479, %v1487
        %v1492 = vsel %vm1484, %v1480, %v1488
        %v1493 = vpack.c.bf16 %v1489, %v1489
        %v1494 = vpack.c.bf16 %v1490, %v1490
        %v1495 = vpack.c.bf16 %v1491, %v1491
        %v1496 = vpack.c.bf16 %v1492, %v1492
        %v1501 = vcombine.low %v1493, %v1494
        %v1502 = vcombine.low %v1495, %v1496
        %v1504 = vunpack.c.l.s4 1966171168
        %v1505 = vunpack.c.0.s8 %v1504
        %v1506 = vlaneseq
        %v1507 = vshrl.u32 %v1506, 7
        %v1508 = vsub.s32 %v1505, %v1507
        %v1509 = vrot.slane %v1501, %v1508
        %v1511 = vunpack.c.l.s4 1966171168
        %v1512 = vunpack.c.0.s8 %v1511
        %v1513 = vlaneseq
        %v1514 = vshrl.u32 %v1513, 7
        %v1515 = vsub.s32 %v1512, %v1514
        %v1516 = vrot.slane %v1502, %v1515
        %v1517 = vcombine.low %v1509, %v1516
        %v1519 = vunpack.c.l.s4 1966171168
        %v1520 = vunpack.c.0.s8 %v1519
        %v1521 = vlaneseq
        %v1522 = vshrl.u32 %v1521, 7
        %v1523 = vsub.s32 %v1520, %v1522
        %v1524 = vrot.slane %v1517, %v1523
        %1526 = vst [vmem:[%s357] sm:$0xf] %v1524
        %s1527 = smul.u32 4, %s25
        %p1528 = scmp.lt.s32.totalorder %s1527, 7
        %s1529 = scalar_select %p1528, %s1527, 7
        %s1530 = scalar_lea.vmem %s5, %s1529
        // Predicated region
        $region57: #{generator_forward.7} parent=39 // pred_check
          %p1531 = pneg %p168
        $region58: #{generator_forward.7} parent=39 // pred_check_branch
          %1533 = sbr.rel (%p1531) target = $region60
        $region59: #{generator_forward.7} parent=39 // pred_region
          %s1534 = smul.u32 4, %s25
        $region60: #{generator_forward.7} parent=39 // pred_fallthru
          _
      $region40: #{generator_forward.7} parent=5 // pred_fallthru
        _
      %p1535 = scmp.le.s32.totalorder 2, %s20
      // Predicated region
      $region61: #{generator_forward.7} parent=5 // pred_check
        %p1536 = pneg %p1535
      $region62: #{generator_forward.7} parent=5 // pred_check_branch
        %1538 = sbr.rel (%p1536) target = $region64
      $region63: #{generator_forward.7} parent=5 // pred_region
        %s1539 = ssub.s32 %s20, 2
        // Predicated region
        $region65: #{generator_forward.7} parent=63 // pred_check
          %p1540 = pneg %p174
        $region66: #{generator_forward.7} parent=63 // pred_check_branch
          %1542 = sbr.rel (%p1540) target = $region68
        $region67: #{generator_forward.7} parent=63 // pred_region
          %s1543 = smul.u32 4, %s26
          %p1544 = scmp.lt.s32.totalorder %s1543, 7
          %s1545 = scalar_select %p1544, %s1543, 7
          %s1546 = scalar_lea.vmem %s5, %s1545
        $region68: #{generator_forward.7} parent=63 // pred_fallthru
          _
      $region64: #{generator_forward.7} parent=5 // pred_fallthru
        _
    $region6: #{generator_forward.7} parent=1 // loop_footer
      %s24 = sadd.s32 1, %s20
    $region7: #{generator_forward.7} parent=1 // loop_footer_branch
      %19 = sbr.rel target = $region3
    $region8: #{generator_forward.7} parent=1 // loop_exit
      _
    %1547 = vsyncpa [#allocation3], 1
    %s1548 = scalar_lea.sflag [#allocation3], 1
    %1549 = vsyncpa %s1548, 1
    %1550 = vsyncpa [#allocation5], 1
    %s1551 = scalar_lea.sflag [#allocation5], 1
    %1552 = vsyncpa %s1551, 1
    %1553 = vsyncpa [#allocation8], 1
    %s1554 = scalar_lea.sflag [#allocation8], 1
    %1555 = vsyncpa %s1554, 1

// kernel: generator_forward.8
$region0: #{generator_forward.8}
  #allocation0 [shape = 'u32[]', space=smem, size = 0x4, offset = 0x4, fixed_abs, tag = 'smem constant byte address 0x4 - core index']
  #allocation1 [shape = 'u32[144,128]{1,0:T(1,128)}', space=vmem, size = 0x12000, scoped, tag = 'internal scratch']
  %s0 = inlined_call_operand.vmem [shape: bf16[2,1024], index: 0, kind: input, shape index: {}]
  %s1 = inlined_call_operand.hbm [shape: bf16[1024,2048], index: 1, kind: input, shape index: {}]
  %s2 = inlined_call_operand.hbm [shape: f32[1,2048], index: 2, kind: input, shape index: {}]
  %s3 = inlined_call_operand.hbm [shape: f32[1,2048], index: 3, kind: input, shape index: {}]
  %s4 = inlined_call_operand.hbm [shape: f32[1,2048], index: 4, kind: input, shape index: {}]
  %s5 = inlined_call_operand.vmem [shape: bf16[2,2048], index: 5, kind: output, shape index: {}]
  %s6 = sld [smem:[#allocation0]]
  $region69: #{generator_forward.8} parent=0
    _
  %s8 = ssub.s32 1, %s6
  %s9 = scalar_select 0, %s8, %s6
  $region1: #{generator_forward.8} parent=0
    #allocation2 [shape = 'u8[2097152]{0}', space=vmem, size = 0x200000, scoped, tag = 'input window, operand 1']
    #allocation3 [shape = 's32[2]{0}', space=sflag, size = 0x8, scoped, tag = 'scoped memory for generator_forward.8']
    #allocation4 [shape = 'u8[4096]{0}', space=vmem, size = 0x1000, scoped, tag = 'input window, operand 2']
    #allocation5 [shape = 's32[2]{0}', space=sflag, size = 0x8, scoped, tag = 'scoped memory for generator_forward.8']
    #allocation6 [shape = 'u8[4096]{0}', space=vmem, size = 0x1000, scoped, tag = 'input window, operand 3']
    #allocation7 [shape = 'u8[4096]{0}', space=vmem, size = 0x1000, scoped, tag = 'input window, operand 4']
    #allocation8 [shape = 's32[2]{0}', space=sflag, size = 0x8, scoped, tag = 'scoped memory for generator_forward.8']
    %10 = vsyncpa [#allocation3], 0
    %s11 = scalar_lea.sflag [#allocation3], 1
    %12 = vsyncpa %s11, 0
    %13 = vsyncpa [#allocation5], 0
    %s14 = scalar_lea.sflag [#allocation5], 1
    %15 = vsyncpa %s14, 0
    %16 = vsyncpa [#allocation8], 0
    %s17 = scalar_lea.sflag [#allocation8], 1
    %18 = vsyncpa %s17, 0
    loop: start=0, step=1, limit=6
    $region2: #{generator_forward.8} parent=1 // loop_pre_header
      _
    $region3: #{generator_forward.8} parent=1 // loop_header
      %s20 = sphi 0, %s24
      %p21 = scmp.ge.s32.totalorder %s20, 6
      %s28 = sphi 0, %s28
      %s30 = sphi 0, %s28
      %s31 = sphi 0, %s30
      %s45 = sphi 0, %s31
      %s51 = sphi 0, %s53
      %s54 = sphi 0, %s51
      %s55 = sphi 0, %s54
      %s71 = sphi 0, %s55
      %s77 = sphi 0, %s79
      %s80 = sphi 0, %s77
      %s81 = sphi 0, %s80
      %s97 = sphi 0, %s81
      %s103 = sphi 0, %s105
      %s106 = sphi 0, %s103
      %s107 = sphi 0, %s106
      %s123 = sphi 0, %s107
      %s129 = sphi 0, %s131
      %s132 = sphi 0, %s129
      %s133 = sphi 0, %s132
      %s149 = sphi 0, %s133
      %s155 = sphi 0, %s157
      %s158 = sphi 0, %s155
      %s159 = sphi 0, %s158
      %s175 = sphi 0, %s159
    $region4: #{generator_forward.8} parent=1 // loop_header_branch
      %23 = sbr.rel (%p21) target = $region8
    $region5: #{generator_forward.8} parent=1 // loop_body
      %s25 = ssub.s32 %s20, 1
      %s26 = ssub.s32 %s20, 2
      %s27 = sadd.s32 %s20, 1
      %s29 = sadd.s32 %s28, 1
      %p32 = scmp.eq.s32.totalorder %s20, 3
      %p33 = scmp.ne.s32.totalorder %s28, %s30
      %p34 = scmp.eq.s32.totalorder %s20, 0
      %p35 = por %p33, %p34
      %p36 = scmp.ne.s32.totalorder %s28, %s30
      %p37 = scmp.eq.s32.totalorder %s25, 3
      %p38 = por %p36, %p37
      %p39 = scmp.ne.s32.totalorder %s30, %s31
      %p40 = scmp.eq.s32.totalorder %s25, 0
      %p41 = por %p39, %p40
      %p42 = scmp.ne.s32.totalorder %s30, %s31
      %p43 = scmp.eq.s32.totalorder %s26, 3
      %p44 = por %p42, %p43
      %p46 = scmp.ne.s32.totalorder %s31, %s45
      %p47 = scmp.eq.s32.totalorder %s26, 0
      %p48 = por %p46, %p47
      %s49 = ssub.s32 %s20, %s27
      %p50 = scmp.eq.s32.totalorder %s49, 0
      %s52 = sadd.s32 %s51, 1
      %s53 = scalar_select %p50, %s51, %s52
      %p56 = pneg %p50
      %p57 = scmp.eq.s32.totalorder %s20, 3
      %p58 = por %p56, %p57
      %p59 = scmp.ne.s32.totalorder %s51, %s54
      %p60 = scmp.eq.s32.totalorder %s20, 0
      %p61 = por %p59, %p60
      %p62 = scmp.ne.s32.totalorder %s51, %s54
      %p63 = scmp.eq.s32.totalorder %s25, 3
      %p64 = por %p62, %p63
      %p65 = scmp.ne.s32.totalorder %s54, %s55
      %p66 = scmp.eq.s32.totalorder %s25, 0
      %p67 = por %p65, %p66
      %p68 = scmp.ne.s32.totalorder %s54, %s55
      %p69 = scmp.eq.s32.totalorder %s26, 3
      %p70 = por %p68, %p69
      %p72 = scmp.ne.s32.totalorder %s55, %s71
      %p73 = scmp.eq.s32.totalorder %s26, 0
      %p74 = por %p72, %p73
      %s75 = ssub.s32 %s20, %s27
      %p76 = scmp.eq.s32.totalorder %s75, 0
      %s78 = sadd.s32 %s77, 1
      %s79 = scalar_select %p76, %s77, %s78
      %p82 = pneg %p76
      %p83 = scmp.eq.s32.totalorder %s20, 3
      %p84 = por %p82, %p83
      %p85 = scmp.ne.s32.totalorder %s77, %s80
      %p86 = scmp.eq.s32.totalorder %s20, 0
      %p87 = por %p85, %p86
      %p88 = scmp.ne.s32.totalorder %s77, %s80
      %p89 = scmp.eq.s32.totalorder %s25, 3
      %p90 = por %p88, %p89
      %p91 = scmp.ne.s32.totalorder %s80, %s81
      %p92 = scmp.eq.s32.totalorder %s25, 0
      %p93 = por %p91, %p92
      %p94 = scmp.ne.s32.totalorder %s80, %s81
      %p95 = scmp.eq.s32.totalorder %s26, 3
      %p96 = por %p94, %p95
      %p98 = scmp.ne.s32.totalorder %s81, %s97
      %p99 = scmp.eq.s32.totalorder %s26, 0
      %p100 = por %p98, %p99
      %s101 = ssub.s32 %s20, %s27
      %p102 = scmp.eq.s32.totalorder %s101, 0
      %s104 = sadd.s32 %s103, 1
      %s105 = scalar_select %p102, %s103, %s104
      %p108 = pneg %p102
      %p109 = scmp.eq.s32.totalorder %s20, 3
      %p110 = por %p108, %p109
      %p111 = scmp.ne.s32.totalorder %s103, %s106
      %p112 = scmp.eq.s32.totalorder %s20, 0
      %p113 = por %p111, %p112
      %p114 = scmp.ne.s32.totalorder %s103, %s106
      %p115 = scmp.eq.s32.totalorder %s25, 3
      %p116 = por %p114, %p115
      %p117 = scmp.ne.s32.totalorder %s106, %s107
      %p118 = scmp.eq.s32.totalorder %s25, 0
      %p119 = por %p117, %p118
      %p120 = scmp.ne.s32.totalorder %s106, %s107
      %p121 = scmp.eq.s32.totalorder %s26, 3
      %p122 = por %p120, %p121
      %p124 = scmp.ne.s32.totalorder %s107, %s123
      %p125 = scmp.eq.s32.totalorder %s26, 0
      %p126 = por %p124, %p125
      %s127 = ssub.s32 %s20, %s27
      %p128 = scmp.eq.s32.totalorder %s127, 0
      %s130 = sadd.s32 %s129, 1
      %s131 = scalar_select %p128, %s129, %s130
      %p134 = pneg %p128
      %p135 = scmp.eq.s32.totalorder %s20, 3
      %p136 = por %p134, %p135
      %p137 = scmp.ne.s32.totalorder %s129, %s132
      %p138 = scmp.eq.s32.totalorder %s20, 0
      %p139 = por %p137, %p138
      %p140 = scmp.ne.s32.totalorder %s129, %s132
      %p141 = scmp.eq.s32.totalorder %s25, 3
      %p142 = por %p140, %p141
      %p143 = scmp.ne.s32.totalorder %s132, %s133
      %p144 = scmp.eq.s32.totalorder %s25, 0
      %p145 = por %p143, %p144
      %p146 = scmp.ne.s32.totalorder %s132, %s133
      %p147 = scmp.eq.s32.totalorder %s26, 3
      %p148 = por %p146, %p147
      %p150 = scmp.ne.s32.totalorder %s133, %s149
      %p151 = scmp.eq.s32.totalorder %s26, 0
      %p152 = por %p150, %p151
      %s153 = ssub.s32 %s20, %s27
      %p154 = scmp.eq.s32.totalorder %s153, 0
      %s156 = sadd.s32 %s155, 1
      %s157 = scalar_select %p154, %s155, %s156
      %p160 = pneg %p154
      %p161 = scmp.eq.s32.totalorder %s20, 3
      %p162 = por %p160, %p161
      %p163 = scmp.ne.s32.totalorder %s155, %s158
      %p164 = scmp.eq.s32.totalorder %s20, 0
      %p165 = por %p163, %p164
      %p166 = scmp.ne.s32.totalorder %s155, %s158
      %p167 = scmp.eq.s32.totalorder %s25, 3
      %p168 = por %p166, %p167
      %p169 = scmp.ne.s32.totalorder %s158, %s159
      %p170 = scmp.eq.s32.totalorder %s25, 0
      %p171 = por %p169, %p170
      %p172 = scmp.ne.s32.totalorder %s158, %s159
      %p173 = scmp.eq.s32.totalorder %s26, 3
      %p174 = por %p172, %p173
      %p176 = scmp.ne.s32.totalorder %s159, %s175
      %p177 = scmp.eq.s32.totalorder %s26, 0
      %p178 = por %p176, %p177
      %p179 = scmp.le.s32.totalorder 1, %s20
      %p180 = scmp.lt.s32.totalorder %s20, 5
      %p181 = pnand %p179, %p180
      %p182 = pneg %p181
      // Predicated region
      $region9: #{generator_forward.8} parent=5 // pred_check
        _
      $region10: #{generator_forward.8} parent=5 // pred_check_branch
        %184 = sbr.rel (%p181) target = $region12
      $region11: #{generator_forward.8} parent=5 // pred_region
        %s185 = ssub.s32 %s20, 1
        // Predicated region
        $region13: #{generator_forward.8} parent=11 // pred_check
          %p186 = pneg %p41
        $region14: #{generator_forward.8} parent=11 // pred_check_branch
          %188 = sbr.rel (%p186) target = $region16
        $region15: #{generator_forward.8} parent=11 // pred_region
          _
        $region16: #{generator_forward.8} parent=11 // pred_fallthru
          _
      $region12: #{generator_forward.8} parent=5 // pred_fallthru
        _
      %p189 = scmp.lt.s32.totalorder %s20, 4
      // Predicated region
      $region17: #{generator_forward.8} parent=5 // pred_check
        %p190 = pneg %p189
      $region18: #{generator_forward.8} parent=5 // pred_check_branch
        %192 = sbr.rel (%p190) target = $region20
      $region19: #{generator_forward.8} parent=5 // pred_region
        // Predicated region
        $region21: #{generator_forward.8} parent=19 // pred_check
          %p193 = pneg %p61
        $region22: #{generator_forward.8} parent=19 // pred_check_branch
          %195 = sbr.rel (%p193) target = $region24
        $region23: #{generator_forward.8} parent=19 // pred_region
          %s196 = sand.u32 %s51, 1
          %s197 = scalar_lea.sflag [#allocation3], %s196
          %s198 = sand.u32 %s51, 1
          %s199 = smul.addr %s198, 2048
          %s200 = scalar_lea.vmem [#allocation2], %s199
          %s201 = smul.u32 4, %s20
          %s203 = ssub.s32 32768, 32768
          %204 = vsyncadd %s197, %s203
          %s205 = smul.addr %s201, 64
          %s206 = scalar_lea.hbm %s1, %s205
          %s207 = sshll.u32 %s200, 4
          %s208 = int_to_ptr.vmem [resolvable:$true] %s207
          %213 = dma.hbm_to_vmem [thread:$0]  %s206, 32768, %s208, %s197, 1024, 256, 16
        $region24: #{generator_forward.8} parent=19 // pred_fallthru
          _
        // Predicated region
        $region25: #{generator_forward.8} parent=19 // pred_check
          %p214 = pneg %p87
        $region26: #{generator_forward.8} parent=19 // pred_check_branch
          %216 = sbr.rel (%p214) target = $region28
        $region27: #{generator_forward.8} parent=19 // pred_region
          %s217 = sand.u32 %s20, 1
          %s218 = scalar_lea.sflag [#allocation5], %s217
          %s219 = sand.u32 %s77, 1
          %s220 = smul.addr %s219, 4
          %s221 = scalar_lea.vmem [#allocation4], %s220
          %s222 = smul.u32 4, %s20
          %s224 = ssub.s32 64, 64
          %225 = vsyncadd %s218, %s224
          %s226 = smul.addr %s222, 16
          %s227 = scalar_lea.hbm %s2, %s226
          %s229 = sshll.u32 %s221, 4
          %s230 = int_to_ptr.vmem [resolvable:$true] %s229
          %232 = dma.hbm_to_vmem [thread:$0]  %s227, 64, %s230, %s218
        $region28: #{generator_forward.8} parent=19 // pred_fallthru
          _
        // Predicated region
        $region29: #{generator_forward.8} parent=19 // pred_check
          %p233 = pneg %p113
        $region30: #{generator_forward.8} parent=19 // pred_check_branch
          %235 = sbr.rel (%p233) target = $region32
        $region31: #{generator_forward.8} parent=19 // pred_region
          %s236 = sand.u32 %s20, 1
          %s237 = scalar_lea.sflag [#allocation5], %s236
          %s238 = sand.u32 %s103, 1
          %s239 = smul.addr %s238, 4
          %s240 = scalar_lea.vmem [#allocation6], %s239
          %s241 = smul.u32 4, %s20
          %s243 = ssub.s32 64, 64
          %244 = vsyncadd %s237, %s243
          %s245 = smul.addr %s241, 16
          %s246 = scalar_lea.hbm %s3, %s245
          %s248 = sshll.u32 %s240, 4
          %s249 = int_to_ptr.vmem [resolvable:$true] %s248
          %251 = dma.hbm_to_vmem [thread:$0]  %s246, 64, %s249, %s237
        $region32: #{generator_forward.8} parent=19 // pred_fallthru
          _
        // Predicated region
        $region33: #{generator_forward.8} parent=19 // pred_check
          %p252 = pneg %p139
        $region34: #{generator_forward.8} parent=19 // pred_check_branch
          %254 = sbr.rel (%p252) target = $region36
        $region35: #{generator_forward.8} parent=19 // pred_region
          %s255 = sand.u32 %s129, 1
          %s256 = scalar_lea.sflag [#allocation8], %s255
          %s257 = sand.u32 %s129, 1
          %s258 = smul.addr %s257, 4
          %s259 = scalar_lea.vmem [#allocation7], %s258
          %s260 = smul.u32 4, %s20
          %s262 = ssub.s32 64, 64
          %263 = vsyncadd %s256, %s262
          %s264 = smul.addr %s260, 16
          %s265 = scalar_lea.hbm %s4, %s264
          %s267 = sshll.u32 %s259, 4
          %s268 = int_to_ptr.vmem [resolvable:$true] %s267
          %270 = dma.hbm_to_vmem [thread:$0]  %s265, 64, %s268, %s256
        $region36: #{generator_forward.8} parent=19 // pred_fallthru
          _
      $region20: #{generator_forward.8} parent=5 // pred_fallthru
        _
      %p271 = scmp.le.s32.totalorder 1, %s20
      %p272 = scmp.lt.s32.totalorder %s20, 5
      %p273 = pnand %p271, %p272
      %p274 = pneg %p273
      // Predicated region
      $region37: #{generator_forward.8} parent=5 // pred_check
        _
      $region38: #{generator_forward.8} parent=5 // pred_check_branch
        %276 = sbr.rel (%p273) target = $region40
      $region39: #{generator_forward.8} parent=5 // pred_region
        %s277 = ssub.s32 %s20, 1
        %s278 = sand.u32 %s54, 1
        %s279 = scalar_lea.sflag [#allocation3], %s278
        %s280 = sand.u32 %s54, 1
        %s281 = smul.addr %s280, 2048
        %s282 = scalar_lea.vmem [#allocation2], %s281
        // Predicated region
        $region41: #{generator_forward.8} parent=39 // pred_check
          %p283 = pneg %p67
        $region42: #{generator_forward.8} parent=39 // pred_check_branch
          %285 = sbr.rel (%p283) target = $region44
        $region43: #{generator_forward.8} parent=39 // pred_region
          %286 = dma.done %s279, 32768
        $region44: #{generator_forward.8} parent=39 // pred_fallthru
          _
        %s287 = sand.u32 %s25, 1
        %s288 = scalar_lea.sflag [#allocation5], %s287
        %s289 = sand.u32 %s80, 1
        %s290 = smul.addr %s289, 4
        %s291 = scalar_lea.vmem [#allocation4], %s290
        // Predicated region
        $region45: #{generator_forward.8} parent=39 // pred_check
          %p292 = pneg %p93
        $region46: #{generator_forward.8} parent=39 // pred_check_branch
          %294 = sbr.rel (%p292) target = $region48
        $region47: #{generator_forward.8} parent=39 // pred_region
          %295 = dma.done %s288, 64
        $region48: #{generator_forward.8} parent=39 // pred_fallthru
          _
        %s296 = sand.u32 %s25, 1
        %s297 = scalar_lea.sflag [#allocation5], %s296
        %s298 = sand.u32 %s106, 1
        %s299 = smul.addr %s298, 4
        %s300 = scalar_lea.vmem [#allocation6], %s299
        // Predicated region
        $region49: #{generator_forward.8} parent=39 // pred_check
          %p301 = pneg %p119
        $region50: #{generator_forward.8} parent=39 // pred_check_branch
          %303 = sbr.rel (%p301) target = $region52
        $region51: #{generator_forward.8} parent=39 // pred_region
          %304 = dma.done %s297, 64
        $region52: #{generator_forward.8} parent=39 // pred_fallthru
          _
        %s305 = sand.u32 %s132, 1
        %s306 = scalar_lea.sflag [#allocation8], %s305
        %s307 = sand.u32 %s132, 1
        %s308 = smul.addr %s307, 4
        %s309 = scalar_lea.vmem [#allocation7], %s308
        // Predicated region
        $region53: #{generator_forward.8} parent=39 // pred_check
          %p310 = pneg %p145
        $region54: #{generator_forward.8} parent=39 // pred_check_branch
          %312 = sbr.rel (%p310) target = $region56
        $region55: #{generator_forward.8} parent=39 // pred_region
          %313 = dma.done %s306, 64
        $region56: #{generator_forward.8} parent=39 // pred_fallthru
          _
        %p314 = pneg %p41
        %p315 = pneg %p38
        %s316 = sand.u32 %s54, 1
        %s317 = scalar_lea.sflag [#allocation3], %s316
        %s318 = sand.u32 %s54, 1
        %s319 = smul.addr %s318, 2048
        %s320 = scalar_lea.vmem [#allocation2], %s319
        %p321 = pneg %p67
        %p322 = pneg %p64
        %s323 = sand.u32 %s25, 1
        %s324 = scalar_lea.sflag [#allocation5], %s323
        %s325 = sand.u32 %s80, 1
        %s326 = smul.addr %s325, 4
        %s327 = scalar_lea.vmem [#allocation4], %s326
        %p328 = pneg %p93
        %p329 = pneg %p90
        %s330 = sand.u32 %s25, 1
        %s331 = scalar_lea.sflag [#allocation5], %s330
        %s332 = sand.u32 %s106, 1
        %s333 = smul.addr %s332, 4
        %s334 = scalar_lea.vmem [#allocation6], %s333
        %p335 = pneg %p119
        %p336 = pneg %p116
        %s337 = sand.u32 %s132, 1
        %s338 = scalar_lea.sflag [#allocation8], %s337
        %s339 = sand.u32 %s132, 1
        %s340 = smul.addr %s339, 4
        %s341 = scalar_lea.vmem [#allocation7], %s340
        %p342 = pneg %p145
        %p343 = pneg %p142
        %p344 = pneg %p171
        %p345 = pneg %p168
        %s346 = smul.u32 4, %s25
        %p347 = scmp.lt.s32.totalorder %s346, 15
        %s348 = scalar_select %p347, %s346, 15
        %s349 = scalar_lea.vmem %s5, %s348
        %s350 = smul.u32 4, %s25
        %s351 = smul.u32 4, %s25
        %s352 = smul.u32 4, %s25
        %s353 = smul.u32 4, %s25
        %s354 = smul.u32 4, %s25
        %p355 = scmp.lt.s32.totalorder %s354, 15
        %s356 = scalar_select %p355, %s354, 15
        %s357 = scalar_lea.vmem %s5, %s356
        %s358 = smul.u32 4, %s25
        %v359 = vld [vmem:[%s0] sm:$0xff]
        %v360 = vld [vmem:[%s282] sm:$0xff]
        %v361 = vld [vmem:[%s282 + $0x8] sm:$0xff]
        %v362 = vld [vmem:[%s282 + $0x10] sm:$0xff]
        %v363 = vld [vmem:[%s282 + $0x18] sm:$0xff]
        %v364 = vld [vmem:[%s282 + $0x20] sm:$0xff]
        %v365 = vld [vmem:[%s282 + $0x28] sm:$0xff]
        %v366 = vld [vmem:[%s282 + $0x30] sm:$0xff]
        %v367 = vld [vmem:[%s282 + $0x38] sm:$0xff]
        %v368 = vld [vmem:[%s282 + $0x40] sm:$0xff]
        %v369 = vld [vmem:[%s282 + $0x48] sm:$0xff]
        %v370 = vld [vmem:[%s282 + $0x50] sm:$0xff]
        %v371 = vld [vmem:[%s282 + $0x58] sm:$0xff]
        %v372 = vld [vmem:[%s282 + $0x60] sm:$0xff]
        %v373 = vld [vmem:[%s282 + $0x68] sm:$0xff]
        %v374 = vld [vmem:[%s282 + $0x70] sm:$0xff]
        %v375 = vld [vmem:[%s282 + $0x78] sm:$0xff]
        %v376 = vld [vmem:[%s282 + $0x80] sm:$0xff]
        %v377 = vld [vmem:[%s282 + $0x88] sm:$0xff]
        %v378 = vld [vmem:[%s282 + $0x90] sm:$0xff]
        %v379 = vld [vmem:[%s282 + $0x98] sm:$0xff]
        %v380 = vld [vmem:[%s282 + $0xa0] sm:$0xff]
        %v381 = vld [vmem:[%s282 + $0xa8] sm:$0xff]
        %v382 = vld [vmem:[%s282 + $0xb0] sm:$0xff]
        %v383 = vld [vmem:[%s282 + $0xb8] sm:$0xff]
        %v384 = vld [vmem:[%s282 + $0xc0] sm:$0xff]
        %v385 = vld [vmem:[%s282 + $0xc8] sm:$0xff]
        %v386 = vld [vmem:[%s282 + $0xd0] sm:$0xff]
        %v387 = vld [vmem:[%s282 + $0xd8] sm:$0xff]
        %v388 = vld [vmem:[%s282 + $0xe0] sm:$0xff]
        %v389 = vld [vmem:[%s282 + $0xe8] sm:$0xff]
        %v390 = vld [vmem:[%s282 + $0xf0] sm:$0xff]
        %v391 = vld [vmem:[%s282 + $0xf8] sm:$0xff]
        %v392 = vld [vmem:[%s282 + $0x100] sm:$0xff]
        %v393 = vld [vmem:[%s282 + $0x108] sm:$0xff]
        %v394 = vld [vmem:[%s282 + $0x110] sm:$0xff]
        %v395 = vld [vmem:[%s282 + $0x118] sm:$0xff]
        %v396 = vld [vmem:[%s282 + $0x120] sm:$0xff]
        %v397 = vld [vmem:[%s282 + $0x128] sm:$0xff]
        %v398 = vld [vmem:[%s282 + $0x130] sm:$0xff]
        %v399 = vld [vmem:[%s282 + $0x138] sm:$0xff]
        %v400 = vld [vmem:[%s282 + $0x140] sm:$0xff]
        %v401 = vld [vmem:[%s282 + $0x148] sm:$0xff]
        %v402 = vld [vmem:[%s282 + $0x150] sm:$0xff]
        %v403 = vld [vmem:[%s282 + $0x158] sm:$0xff]
        %v404 = vld [vmem:[%s282 + $0x160] sm:$0xff]
        %v405 = vld [vmem:[%s282 + $0x168] sm:$0xff]
        %v406 = vld [vmem:[%s282 + $0x170] sm:$0xff]
        %v407 = vld [vmem:[%s282 + $0x178] sm:$0xff]
        %v408 = vld [vmem:[%s282 + $0x180] sm:$0xff]
        %v409 = vld [vmem:[%s282 + $0x188] sm:$0xff]
        %v410 = vld [vmem:[%s282 + $0x190] sm:$0xff]
        %v411 = vld [vmem:[%s282 + $0x198] sm:$0xff]
        %v412 = vld [vmem:[%s282 + $0x1a0] sm:$0xff]
        %v413 = vld [vmem:[%s282 + $0x1a8] sm:$0xff]
        %v414 = vld [vmem:[%s282 + $0x1b0] sm:$0xff]
        %v415 = vld [vmem:[%s282 + $0x1b8] sm:$0xff]
        %v416 = vld [vmem:[%s282 + $0x1c0] sm:$0xff]
        %v417 = vld [vmem:[%s282 + $0x1c8] sm:$0xff]
        %v418 = vld [vmem:[%s282 + $0x1d0] sm:$0xff]
        %v419 = vld [vmem:[%s282 + $0x1d8] sm:$0xff]
        %v420 = vld [vmem:[%s282 + $0x1e0] sm:$0xff]
        %v421 = vld [vmem:[%s282 + $0x1e8] sm:$0xff]
        %v422 = vld [vmem:[%s282 + $0x1f0] sm:$0xff]
        %v423 = vld [vmem:[%s282 + $0x1f8] sm:$0xff]
        %v424 = vld [vmem:[%s282 + $0x200] sm:$0xff]
        %v425 = vld [vmem:[%s282 + $0x208] sm:$0xff]
        %v426 = vld [vmem:[%s282 + $0x210] sm:$0xff]
        %v427 = vld [vmem:[%s282 + $0x218] sm:$0xff]
        %v428 = vld [vmem:[%s282 + $0x220] sm:$0xff]
        %v429 = vld [vmem:[%s282 + $0x228] sm:$0xff]
        %v430 = vld [vmem:[%s282 + $0x230] sm:$0xff]
        %v431 = vld [vmem:[%s282 + $0x238] sm:$0xff]
        %v432 = vld [vmem:[%s282 + $0x240] sm:$0xff]
        %v433 = vld [vmem:[%s282 + $0x248] sm:$0xff]
        %v434 = vld [vmem:[%s282 + $0x250] sm:$0xff]
        %v435 = vld [vmem:[%s282 + $0x258] sm:$0xff]
        %v436 = vld [vmem:[%s282 + $0x260] sm:$0xff]
        %v437 = vld [vmem:[%s282 + $0x268] sm:$0xff]
        %v438 = vld [vmem:[%s282 + $0x270] sm:$0xff]
        %v439 = vld [vmem:[%s282 + $0x278] sm:$0xff]
        %v440 = vld [vmem:[%s282 + $0x280] sm:$0xff]
        %v441 = vld [vmem:[%s282 + $0x288] sm:$0xff]
        %v442 = vld [vmem:[%s282 + $0x290] sm:$0xff]
        %v443 = vld [vmem:[%s282 + $0x298] sm:$0xff]
        %v444 = vld [vmem:[%s282 + $0x2a0] sm:$0xff]
        %v445 = vld [vmem:[%s282 + $0x2a8] sm:$0xff]
        %v446 = vld [vmem:[%s282 + $0x2b0] sm:$0xff]
        %v447 = vld [vmem:[%s282 + $0x2b8] sm:$0xff]
        %v448 = vld [vmem:[%s282 + $0x2c0] sm:$0xff]
        %v449 = vld [vmem:[%s282 + $0x2c8] sm:$0xff]
        %v450 = vld [vmem:[%s282 + $0x2d0] sm:$0xff]
        %v451 = vld [vmem:[%s282 + $0x2d8] sm:$0xff]
        %v452 = vld [vmem:[%s282 + $0x2e0] sm:$0xff]
        %v453 = vld [vmem:[%s282 + $0x2e8] sm:$0xff]
        %v454 = vld [vmem:[%s282 + $0x2f0] sm:$0xff]
        %v455 = vld [vmem:[%s282 + $0x2f8] sm:$0xff]
        %v456 = vld [vmem:[%s282 + $0x300] sm:$0xff]
        %v457 = vld [vmem:[%s282 + $0x308] sm:$0xff]
        %v458 = vld [vmem:[%s282 + $0x310] sm:$0xff]
        %v459 = vld [vmem:[%s282 + $0x318] sm:$0xff]
        %v460 = vld [vmem:[%s282 + $0x320] sm:$0xff]
        %v461 = vld [vmem:[%s282 + $0x328] sm:$0xff]
        %v462 = vld [vmem:[%s282 + $0x330] sm:$0xff]
        %v463 = vld [vmem:[%s282 + $0x338] sm:$0xff]
        %v464 = vld [vmem:[%s282 + $0x340] sm:$0xff]
        %v465 = vld [vmem:[%s282 + $0x348] sm:$0xff]
        %v466 = vld [vmem:[%s282 + $0x350] sm:$0xff]
        %v467 = vld [vmem:[%s282 + $0x358] sm:$0xff]
        %v468 = vld [vmem:[%s282 + $0x360] sm:$0xff]
        %v469 = vld [vmem:[%s282 + $0x368] sm:$0xff]
        %v470 = vld [vmem:[%s282 + $0x370] sm:$0xff]
        %v471 = vld [vmem:[%s282 + $0x378] sm:$0xff]
        %v472 = vld [vmem:[%s282 + $0x380] sm:$0xff]
        %v473 = vld [vmem:[%s282 + $0x388] sm:$0xff]
        %v474 = vld [vmem:[%s282 + $0x390] sm:$0xff]
        %v475 = vld [vmem:[%s282 + $0x398] sm:$0xff]
        %v476 = vld [vmem:[%s282 + $0x3a0] sm:$0xff]
        %v477 = vld [vmem:[%s282 + $0x3a8] sm:$0xff]
        %v478 = vld [vmem:[%s282 + $0x3b0] sm:$0xff]
        %v479 = vld [vmem:[%s282 + $0x3b8] sm:$0xff]
        %v480 = vld [vmem:[%s282 + $0x3c0] sm:$0xff]
        %v481 = vld [vmem:[%s282 + $0x3c8] sm:$0xff]
        %v482 = vld [vmem:[%s282 + $0x3d0] sm:$0xff]
        %v483 = vld [vmem:[%s282 + $0x3d8] sm:$0xff]
        %v484 = vld [vmem:[%s282 + $0x3e0] sm:$0xff]
        %v485 = vld [vmem:[%s282 + $0x3e8] sm:$0xff]
        %v486 = vld [vmem:[%s282 + $0x3f0] sm:$0xff]
        %v487 = vld [vmem:[%s282 + $0x3f8] sm:$0xff]
        %v488 = vld [vmem:[%s282 + $0x400] sm:$0xff]
        %v489 = vld [vmem:[%s282 + $0x408] sm:$0xff]
        %v490 = vld [vmem:[%s282 + $0x410] sm:$0xff]
        %v491 = vld [vmem:[%s282 + $0x418] sm:$0xff]
        %v492 = vld [vmem:[%s282 + $0x420] sm:$0xff]
        %v493 = vld [vmem:[%s282 + $0x428] sm:$0xff]
        %v494 = vld [vmem:[%s282 + $0x430] sm:$0xff]
        %v495 = vld [vmem:[%s282 + $0x438] sm:$0xff]
        %v496 = vld [vmem:[%s282 + $0x440] sm:$0xff]
        %v497 = vld [vmem:[%s282 + $0x448] sm:$0xff]
        %v498 = vld [vmem:[%s282 + $0x450] sm:$0xff]
        %v499 = vld [vmem:[%s282 + $0x458] sm:$0xff]
        %v500 = vld [vmem:[%s282 + $0x460] sm:$0xff]
        %v501 = vld [vmem:[%s282 + $0x468] sm:$0xff]
        %v502 = vld [vmem:[%s282 + $0x470] sm:$0xff]
        %v503 = vld [vmem:[%s282 + $0x478] sm:$0xff]
        %v504 = vld [vmem:[%s282 + $0x480] sm:$0xff]
        %v505 = vld [vmem:[%s282 + $0x488] sm:$0xff]
        %v506 = vld [vmem:[%s282 + $0x490] sm:$0xff]
        %v507 = vld [vmem:[%s282 + $0x498] sm:$0xff]
        %v508 = vld [vmem:[%s282 + $0x4a0] sm:$0xff]
        %v509 = vld [vmem:[%s282 + $0x4a8] sm:$0xff]
        %v510 = vld [vmem:[%s282 + $0x4b0] sm:$0xff]
        %v511 = vld [vmem:[%s282 + $0x4b8] sm:$0xff]
        %v512 = vld [vmem:[%s282 + $0x4c0] sm:$0xff]
        %v513 = vld [vmem:[%s282 + $0x4c8] sm:$0xff]
        %v514 = vld [vmem:[%s282 + $0x4d0] sm:$0xff]
        %v515 = vld [vmem:[%s282 + $0x4d8] sm:$0xff]
        %v516 = vld [vmem:[%s282 + $0x4e0] sm:$0xff]
        %v517 = vld [vmem:[%s282 + $0x4e8] sm:$0xff]
        %v518 = vld [vmem:[%s282 + $0x4f0] sm:$0xff]
        %v519 = vld [vmem:[%s282 + $0x4f8] sm:$0xff]
        %v520 = vld [vmem:[%s282 + $0x500] sm:$0xff]
        %v521 = vld [vmem:[%s282 + $0x508] sm:$0xff]
        %v522 = vld [vmem:[%s282 + $0x510] sm:$0xff]
        %v523 = vld [vmem:[%s282 + $0x518] sm:$0xff]
        %v524 = vld [vmem:[%s282 + $0x520] sm:$0xff]
        %v525 = vld [vmem:[%s282 + $0x528] sm:$0xff]
        %v526 = vld [vmem:[%s282 + $0x530] sm:$0xff]
        %v527 = vld [vmem:[%s282 + $0x538] sm:$0xff]
        %v528 = vld [vmem:[%s282 + $0x540] sm:$0xff]
        %v529 = vld [vmem:[%s282 + $0x548] sm:$0xff]
        %v530 = vld [vmem:[%s282 + $0x550] sm:$0xff]
        %v531 = vld [vmem:[%s282 + $0x558] sm:$0xff]
        %v532 = vld [vmem:[%s282 + $0x560] sm:$0xff]
        %v533 = vld [vmem:[%s282 + $0x568] sm:$0xff]
        %v534 = vld [vmem:[%s282 + $0x570] sm:$0xff]
        %v535 = vld [vmem:[%s282 + $0x578] sm:$0xff]
        %v536 = vld [vmem:[%s282 + $0x580] sm:$0xff]
        %v537 = vld [vmem:[%s282 + $0x588] sm:$0xff]
        %v538 = vld [vmem:[%s282 + $0x590] sm:$0xff]
        %v539 = vld [vmem:[%s282 + $0x598] sm:$0xff]
        %v540 = vld [vmem:[%s282 + $0x5a0] sm:$0xff]
        %v541 = vld [vmem:[%s282 + $0x5a8] sm:$0xff]
        %v542 = vld [vmem:[%s282 + $0x5b0] sm:$0xff]
        %v543 = vld [vmem:[%s282 + $0x5b8] sm:$0xff]
        %v544 = vld [vmem:[%s282 + $0x5c0] sm:$0xff]
        %v545 = vld [vmem:[%s282 + $0x5c8] sm:$0xff]
        %v546 = vld [vmem:[%s282 + $0x5d0] sm:$0xff]
        %v547 = vld [vmem:[%s282 + $0x5d8] sm:$0xff]
        %v548 = vld [vmem:[%s282 + $0x5e0] sm:$0xff]
        %v549 = vld [vmem:[%s282 + $0x5e8] sm:$0xff]
        %v550 = vld [vmem:[%s282 + $0x5f0] sm:$0xff]
        %v551 = vld [vmem:[%s282 + $0x5f8] sm:$0xff]
        %v552 = vld [vmem:[%s282 + $0x600] sm:$0xff]
        %v553 = vld [vmem:[%s282 + $0x608] sm:$0xff]
        %v554 = vld [vmem:[%s282 + $0x610] sm:$0xff]
        %v555 = vld [vmem:[%s282 + $0x618] sm:$0xff]
        %v556 = vld [vmem:[%s282 + $0x620] sm:$0xff]
        %v557 = vld [vmem:[%s282 + $0x628] sm:$0xff]
        %v558 = vld [vmem:[%s282 + $0x630] sm:$0xff]
        %v559 = vld [vmem:[%s282 + $0x638] sm:$0xff]
        %v560 = vld [vmem:[%s282 + $0x640] sm:$0xff]
        %v561 = vld [vmem:[%s282 + $0x648] sm:$0xff]
        %v562 = vld [vmem:[%s282 + $0x650] sm:$0xff]
        %v563 = vld [vmem:[%s282 + $0x658] sm:$0xff]
        %v564 = vld [vmem:[%s282 + $0x660] sm:$0xff]
        %v565 = vld [vmem:[%s282 + $0x668] sm:$0xff]
        %v566 = vld [vmem:[%s282 + $0x670] sm:$0xff]
        %v567 = vld [vmem:[%s282 + $0x678] sm:$0xff]
        %v568 = vld [vmem:[%s282 + $0x680] sm:$0xff]
        %v569 = vld [vmem:[%s282 + $0x688] sm:$0xff]
        %v570 = vld [vmem:[%s282 + $0x690] sm:$0xff]
        %v571 = vld [vmem:[%s282 + $0x698] sm:$0xff]
        %v572 = vld [vmem:[%s282 + $0x6a0] sm:$0xff]
        %v573 = vld [vmem:[%s282 + $0x6a8] sm:$0xff]
        %v574 = vld [vmem:[%s282 + $0x6b0] sm:$0xff]
        %v575 = vld [vmem:[%s282 + $0x6b8] sm:$0xff]
        %v576 = vld [vmem:[%s282 + $0x6c0] sm:$0xff]
        %v577 = vld [vmem:[%s282 + $0x6c8] sm:$0xff]
        %v578 = vld [vmem:[%s282 + $0x6d0] sm:$0xff]
        %v579 = vld [vmem:[%s282 + $0x6d8] sm:$0xff]
        %v580 = vld [vmem:[%s282 + $0x6e0] sm:$0xff]
        %v581 = vld [vmem:[%s282 + $0x6e8] sm:$0xff]
        %v582 = vld [vmem:[%s282 + $0x6f0] sm:$0xff]
        %v583 = vld [vmem:[%s282 + $0x6f8] sm:$0xff]
        %v584 = vld [vmem:[%s282 + $0x700] sm:$0xff]
        %v585 = vld [vmem:[%s282 + $0x708] sm:$0xff]
        %v586 = vld [vmem:[%s282 + $0x710] sm:$0xff]
        %v587 = vld [vmem:[%s282 + $0x718] sm:$0xff]
        %v588 = vld [vmem:[%s282 + $0x720] sm:$0xff]
        %v589 = vld [vmem:[%s282 + $0x728] sm:$0xff]
        %v590 = vld [vmem:[%s282 + $0x730] sm:$0xff]
        %v591 = vld [vmem:[%s282 + $0x738] sm:$0xff]
        %v592 = vld [vmem:[%s282 + $0x740] sm:$0xff]
        %v593 = vld [vmem:[%s282 + $0x748] sm:$0xff]
        %v594 = vld [vmem:[%s282 + $0x750] sm:$0xff]
        %v595 = vld [vmem:[%s282 + $0x758] sm:$0xff]
        %v596 = vld [vmem:[%s282 + $0x760] sm:$0xff]
        %v597 = vld [vmem:[%s282 + $0x768] sm:$0xff]
        %v598 = vld [vmem:[%s282 + $0x770] sm:$0xff]
        %v599 = vld [vmem:[%s282 + $0x778] sm:$0xff]
        %v600 = vld [vmem:[%s282 + $0x780] sm:$0xff]
        %v601 = vld [vmem:[%s282 + $0x788] sm:$0xff]
        %v602 = vld [vmem:[%s282 + $0x790] sm:$0xff]
        %v603 = vld [vmem:[%s282 + $0x798] sm:$0xff]
        %v604 = vld [vmem:[%s282 + $0x7a0] sm:$0xff]
        %v605 = vld [vmem:[%s282 + $0x7a8] sm:$0xff]
        %v606 = vld [vmem:[%s282 + $0x7b0] sm:$0xff]
        %v607 = vld [vmem:[%s282 + $0x7b8] sm:$0xff]
        %v608 = vld [vmem:[%s282 + $0x7c0] sm:$0xff]
        %v609 = vld [vmem:[%s282 + $0x7c8] sm:$0xff]
        %v610 = vld [vmem:[%s282 + $0x7d0] sm:$0xff]
        %v611 = vld [vmem:[%s282 + $0x7d8] sm:$0xff]
        %v612 = vld [vmem:[%s282 + $0x7e0] sm:$0xff]
        %v613 = vld [vmem:[%s282 + $0x7e8] sm:$0xff]
        %v614 = vld [vmem:[%s282 + $0x7f0] sm:$0xff]
        %v615 = vld [vmem:[%s282 + $0x7f8] sm:$0xff]
        %v616 = vld [vmem:[%s291] sm:$0xf]
        %v618 = vlaneseq
        %v619 = vshrl.u32 %v618, 7
        %v620 = vsub.s32 0, %v619
        %v621 = vrot.slane %v616, %v620
        %v622 = vlaneseq
        %v623 = vshrl.u32 %v622, 7
        %v624 = vsub.s32 1, %v623
        %v625 = vrot.slane %v616, %v624
        %v626 = vlaneseq
        %v627 = vshrl.u32 %v626, 7
        %v628 = vsub.s32 2, %v627
        %v629 = vrot.slane %v616, %v628
        %v630 = vlaneseq
        %v631 = vshrl.u32 %v630, 7
        %v632 = vsub.s32 3, %v631
        %v633 = vrot.slane %v616, %v632
        %v639 = vcombine.high %v359, %v359
        %v641 = vunpack.c.l.s4 1966171168
        %v642 = vunpack.c.0.s8 %v641
        %v643 = vlaneseq
        %v644 = vshrl.u32 %v643, 7
        %v645 = vsub.s32 %v642, %v644
        %v646 = vrot.slane %v359, %v645
        %v648 = vunpack.c.l.s4 1966171168
        %v649 = vunpack.c.0.s8 %v648
        %v650 = vlaneseq
        %v651 = vshrl.u32 %v650, 7
        %v652 = vsub.s32 %v649, %v651
        %v653 = vrot.slane %v639, %v652
        %v654 = vcombine.high %v646, %v646
        %v655 = vcombine.high %v653, %v653
        %v657 = vunpack.c.l.s4 1966171168
        %v658 = vunpack.c.0.s8 %v657
        %v659 = vlaneseq
        %v660 = vshrl.u32 %v659, 7
        %v661 = vsub.s32 %v658, %v660
        %v662 = vrot.slane %v646, %v661
        %v664 = vunpack.c.l.s4 1966171168
        %v665 = vunpack.c.0.s8 %v664
        %v666 = vlaneseq
        %v667 = vshrl.u32 %v666, 7
        %v668 = vsub.s32 %v665, %v667
        %v669 = vrot.slane %v653, %v668
        %v671 = vunpack.c.l.s4 1966171168
        %v672 = vunpack.c.0.s8 %v671
        %v673 = vlaneseq
        %v674 = vshrl.u32 %v673, 7
        %v675 = vsub.s32 %v672, %v674
        %v676 = vrot.slane %v654, %v675
        %v678 = vunpack.c.l.s4 1966171168
        %v679 = vunpack.c.0.s8 %v678
        %v680 = vlaneseq
        %v681 = vshrl.u32 %v680, 7
        %v682 = vsub.s32 %v679, %v681
        %v683 = vrot.slane %v655, %v682
        %v684 = vcombine.high %v662, %v662
        %v685 = vcombine.high %v669, %v669
        %v686 = vcombine.high %v676, %v676
        %v687 = vcombine.high %v683, %v683
        %v952 = vunpack.c.l.b16 %v360
        %v953 = vunpack.c.h.b16 %v360
        %v954 = vunpack.c.l.b16 %v361
        %v955 = vunpack.c.h.b16 %v361
        %v956 = vunpack.c.l.b16 %v362
        %v957 = vunpack.c.h.b16 %v362
        %v958 = vunpack.c.l.b16 %v363
        %v959 = vunpack.c.h.b16 %v363
        %v960 = vunpack.c.l.b16 %v364
        %v961 = vunpack.c.h.b16 %v364
        %v962 = vunpack.c.l.b16 %v365
        %v963 = vunpack.c.h.b16 %v365
        %v964 = vunpack.c.l.b16 %v366
        %v965 = vunpack.c.h.b16 %v366
        %v966 = vunpack.c.l.b16 %v367
        %v967 = vunpack.c.h.b16 %v367
        %v968 = vunpack.c.l.b16 %v368
        %v969 = vunpack.c.h.b16 %v368
        %v970 = vunpack.c.l.b16 %v369
        %v971 = vunpack.c.h.b16 %v369
        %v972 = vunpack.c.l.b16 %v370
        %v973 = vunpack.c.h.b16 %v370
        %v974 = vunpack.c.l.b16 %v371
        %v975 = vunpack.c.h.b16 %v371
        %v976 = vunpack.c.l.b16 %v372
        %v977 = vunpack.c.h.b16 %v372
        %v978 = vunpack.c.l.b16 %v373
        %v979 = vunpack.c.h.b16 %v373
        %v980 = vunpack.c.l.b16 %v374
        %v981 = vunpack.c.h.b16 %v374
        %v982 = vunpack.c.l.b16 %v375
        %v983 = vunpack.c.h.b16 %v375
        %v984 = vunpack.c.l.b16 %v376
        %v985 = vunpack.c.h.b16 %v376
        %v986 = vunpack.c.l.b16 %v377
        %v987 = vunpack.c.h.b16 %v377
        %v988 = vunpack.c.l.b16 %v378
        %v989 = vunpack.c.h.b16 %v378
        %v990 = vunpack.c.l.b16 %v379
        %v991 = vunpack.c.h.b16 %v379
        %v992 = vunpack.c.l.b16 %v380
        %v993 = vunpack.c.h.b16 %v380
        %v994 = vunpack.c.l.b16 %v381
        %v995 = vunpack.c.h.b16 %v381
        %v996 = vunpack.c.l.b16 %v382
        %v997 = vunpack.c.h.b16 %v382
        %v998 = vunpack.c.l.b16 %v383
        %v999 = vunpack.c.h.b16 %v383
        %v1000 = vunpack.c.l.b16 %v384
        %v1001 = vunpack.c.h.b16 %v384
        %v1002 = vunpack.c.l.b16 %v385
        %v1003 = vunpack.c.h.b16 %v385
        %v1004 = vunpack.c.l.b16 %v386
        %v1005 = vunpack.c.h.b16 %v386
        %v1006 = vunpack.c.l.b16 %v387
        %v1007 = vunpack.c.h.b16 %v387
        %v1008 = vunpack.c.l.b16 %v388
        %v1009 = vunpack.c.h.b16 %v388
        %v1010 = vunpack.c.l.b16 %v389
        %v1011 = vunpack.c.h.b16 %v389
        %v1012 = vunpack.c.l.b16 %v390
        %v1013 = vunpack.c.h.b16 %v390
        %v1014 = vunpack.c.l.b16 %v391
        %v1015 = vunpack.c.h.b16 %v391
        %v1016 = vunpack.c.l.b16 %v392
        %v1017 = vunpack.c.h.b16 %v392
        %v1018 = vunpack.c.l.b16 %v393
        %v1019 = vunpack.c.h.b16 %v393
        %v1020 = vunpack.c.l.b16 %v394
        %v1021 = vunpack.c.h.b16 %v394
        %v1022 = vunpack.c.l.b16 %v395
        %v1023 = vunpack.c.h.b16 %v395
        %v1024 = vunpack.c.l.b16 %v396
        %v1025 = vunpack.c.h.b16 %v396
        %v1026 = vunpack.c.l.b16 %v397
        %v1027 = vunpack.c.h.b16 %v397
        %v1028 = vunpack.c.l.b16 %v398
        %v1029 = vunpack.c.h.b16 %v398
        %v1030 = vunpack.c.l.b16 %v399
        %v1031 = vunpack.c.h.b16 %v399
        %v1032 = vunpack.c.l.b16 %v400
        %v1033 = vunpack.c.h.b16 %v400
        %v1034 = vunpack.c.l.b16 %v401
        %v1035 = vunpack.c.h.b16 %v401
        %v1036 = vunpack.c.l.b16 %v402
        %v1037 = vunpack.c.h.b16 %v402
        %v1038 = vunpack.c.l.b16 %v403
        %v1039 = vunpack.c.h.b16 %v403
        %v1040 = vunpack.c.l.b16 %v404
        %v1041 = vunpack.c.h.b16 %v404
        %v1042 = vunpack.c.l.b16 %v405
        %v1043 = vunpack.c.h.b16 %v405
        %v1044 = vunpack.c.l.b16 %v406
        %v1045 = vunpack.c.h.b16 %v406
        %v1046 = vunpack.c.l.b16 %v407
        %v1047 = vunpack.c.h.b16 %v407
        %v1048 = vunpack.c.l.b16 %v408
        %v1049 = vunpack.c.h.b16 %v408
        %v1050 = vunpack.c.l.b16 %v409
        %v1051 = vunpack.c.h.b16 %v409
        %v1052 = vunpack.c.l.b16 %v410
        %v1053 = vunpack.c.h.b16 %v410
        %v1054 = vunpack.c.l.b16 %v411
        %v1055 = vunpack.c.h.b16 %v411
        %v1056 = vunpack.c.l.b16 %v412
        %v1057 = vunpack.c.h.b16 %v412
        %v1058 = vunpack.c.l.b16 %v413
        %v1059 = vunpack.c.h.b16 %v413
        %v1060 = vunpack.c.l.b16 %v414
        %v1061 = vunpack.c.h.b16 %v414
        %v1062 = vunpack.c.l.b16 %v415
        %v1063 = vunpack.c.h.b16 %v415
        %v1064 = vunpack.c.l.b16 %v416
        %v1065 = vunpack.c.h.b16 %v416
        %v1066 = vunpack.c.l.b16 %v417
        %v1067 = vunpack.c.h.b16 %v417
        %v1068 = vunpack.c.l.b16 %v418
        %v1069 = vunpack.c.h.b16 %v418
        %v1070 = vunpack.c.l.b16 %v419
        %v1071 = vunpack.c.h.b16 %v419
        %v1072 = vunpack.c.l.b16 %v420
        %v1073 = vunpack.c.h.b16 %v420
        %v1074 = vunpack.c.l.b16 %v421
        %v1075 = vunpack.c.h.b16 %v421
        %v1076 = vunpack.c.l.b16 %v422
        %v1077 = vunpack.c.h.b16 %v422
        %v1078 = vunpack.c.l.b16 %v423
        %v1079 = vunpack.c.h.b16 %v423
        %v1080 = vunpack.c.l.b16 %v424
        %v1081 = vunpack.c.h.b16 %v424
        %v1082 = vunpack.c.l.b16 %v425
        %v1083 = vunpack.c.h.b16 %v425
        %v1084 = vunpack.c.l.b16 %v426
        %v1085 = vunpack.c.h.b16 %v426
        %v1086 = vunpack.c.l.b16 %v427
        %v1087 = vunpack.c.h.b16 %v427
        %v1088 = vunpack.c.l.b16 %v428
        %v1089 = vunpack.c.h.b16 %v428
        %v1090 = vunpack.c.l.b16 %v429
        %v1091 = vunpack.c.h.b16 %v429
        %v1092 = vunpack.c.l.b16 %v430
        %v1093 = vunpack.c.h.b16 %v430
        %v1094 = vunpack.c.l.b16 %v431
        %v1095 = vunpack.c.h.b16 %v431
        %v1096 = vunpack.c.l.b16 %v432
        %v1097 = vunpack.c.h.b16 %v432
        %v1098 = vunpack.c.l.b16 %v433
        %v1099 = vunpack.c.h.b16 %v433
        %v1100 = vunpack.c.l.b16 %v434
        %v1101 = vunpack.c.h.b16 %v434
        %v1102 = vunpack.c.l.b16 %v435
        %v1103 = vunpack.c.h.b16 %v435
        %v1104 = vunpack.c.l.b16 %v436
        %v1105 = vunpack.c.h.b16 %v436
        %v1106 = vunpack.c.l.b16 %v437
        %v1107 = vunpack.c.h.b16 %v437
        %v1108 = vunpack.c.l.b16 %v438
        %v1109 = vunpack.c.h.b16 %v438
        %v1110 = vunpack.c.l.b16 %v439
        %v1111 = vunpack.c.h.b16 %v439
        %v1112 = vunpack.c.l.b16 %v440
        %v1113 = vunpack.c.h.b16 %v440
        %v1114 = vunpack.c.l.b16 %v441
        %v1115 = vunpack.c.h.b16 %v441
        %v1116 = vunpack.c.l.b16 %v442
        %v1117 = vunpack.c.h.b16 %v442
        %v1118 = vunpack.c.l.b16 %v443
        %v1119 = vunpack.c.h.b16 %v443
        %v1120 = vunpack.c.l.b16 %v444
        %v1121 = vunpack.c.h.b16 %v444
        %v1122 = vunpack.c.l.b16 %v445
        %v1123 = vunpack.c.h.b16 %v445
        %v1124 = vunpack.c.l.b16 %v446
        %v1125 = vunpack.c.h.b16 %v446
        %v1126 = vunpack.c.l.b16 %v447
        %v1127 = vunpack.c.h.b16 %v447
        %v1128 = vunpack.c.l.b16 %v448
        %v1129 = vunpack.c.h.b16 %v448
        %v1130 = vunpack.c.l.b16 %v449
        %v1131 = vunpack.c.h.b16 %v449
        %v1132 = vunpack.c.l.b16 %v450
        %v1133 = vunpack.c.h.b16 %v450
        %v1134 = vunpack.c.l.b16 %v451
        %v1135 = vunpack.c.h.b16 %v451
        %v1136 = vunpack.c.l.b16 %v452
        %v1137 = vunpack.c.h.b16 %v452
        %v1138 = vunpack.c.l.b16 %v453
        %v1139 = vunpack.c.h.b16 %v453
        %v1140 = vunpack.c.l.b16 %v454
        %v1141 = vunpack.c.h.b16 %v454
        %v1142 = vunpack.c.l.b16 %v455
        %v1143 = vunpack.c.h.b16 %v455
        %v1144 = vunpack.c.l.b16 %v456
        %v1145 = vunpack.c.h.b16 %v456
        %v1146 = vunpack.c.l.b16 %v457
        %v1147 = vunpack.c.h.b16 %v457
        %v1148 = vunpack.c.l.b16 %v458
        %v1149 = vunpack.c.h.b16 %v458
        %v1150 = vunpack.c.l.b16 %v459
        %v1151 = vunpack.c.h.b16 %v459
        %v1152 = vunpack.c.l.b16 %v460
        %v1153 = vunpack.c.h.b16 %v460
        %v1154 = vunpack.c.l.b16 %v461
        %v1155 = vunpack.c.h.b16 %v461
        %v1156 = vunpack.c.l.b16 %v462
        %v1157 = vunpack.c.h.b16 %v462
        %v1158 = vunpack.c.l.b16 %v463
        %v1159 = vunpack.c.h.b16 %v463
        %v1160 = vunpack.c.l.b16 %v464
        %v1161 = vunpack.c.h.b16 %v464
        %v1162 = vunpack.c.l.b16 %v465
        %v1163 = vunpack.c.h.b16 %v465
        %v1164 = vunpack.c.l.b16 %v466
        %v1165 = vunpack.c.h.b16 %v466
        %v1166 = vunpack.c.l.b16 %v467
        %v1167 = vunpack.c.h.b16 %v467
        %v1168 = vunpack.c.l.b16 %v468
        %v1169 = vunpack.c.h.b16 %v468
        %v1170 = vunpack.c.l.b16 %v469
        %v1171 = vunpack.c.h.b16 %v469
        %v1172 = vunpack.c.l.b16 %v470
        %v1173 = vunpack.c.h.b16 %v470
        %v1174 = vunpack.c.l.b16 %v471
        %v1175 = vunpack.c.h.b16 %v471
        %v1176 = vunpack.c.l.b16 %v472
        %v1177 = vunpack.c.h.b16 %v472
        %v1178 = vunpack.c.l.b16 %v473
        %v1179 = vunpack.c.h.b16 %v473
        %v1180 = vunpack.c.l.b16 %v474
        %v1181 = vunpack.c.h.b16 %v474
        %v1182 = vunpack.c.l.b16 %v475
        %v1183 = vunpack.c.h.b16 %v475
        %v1184 = vunpack.c.l.b16 %v476
        %v1185 = vunpack.c.h.b16 %v476
        %v1186 = vunpack.c.l.b16 %v477
        %v1187 = vunpack.c.h.b16 %v477
        %v1188 = vunpack.c.l.b16 %v478
        %v1189 = vunpack.c.h.b16 %v478
        %v1190 = vunpack.c.l.b16 %v479
        %v1191 = vunpack.c.h.b16 %v479
        %v1192 = vunpack.c.l.b16 %v480
        %v1193 = vunpack.c.h.b16 %v480
        %v1194 = vunpack.c.l.b16 %v481
        %v1195 = vunpack.c.h.b16 %v481
        %v1196 = vunpack.c.l.b16 %v482
        %v1197 = vunpack.c.h.b16 %v482
        %v1198 = vunpack.c.l.b16 %v483
        %v1199 = vunpack.c.h.b16 %v483
        %v1200 = vunpack.c.l.b16 %v484
        %v1201 = vunpack.c.h.b16 %v484
        %v1202 = vunpack.c.l.b16 %v485
        %v1203 = vunpack.c.h.b16 %v485
        %v1204 = vunpack.c.l.b16 %v486
        %v1205 = vunpack.c.h.b16 %v486
        %v1206 = vunpack.c.l.b16 %v487
        %v1207 = vunpack.c.h.b16 %v487
        %v1208 = vunpack.c.l.b16 %v488
        %v1209 = vunpack.c.h.b16 %v488
        %v1210 = vunpack.c.l.b16 %v489
        %v1211 = vunpack.c.h.b16 %v489
        %v1212 = vunpack.c.l.b16 %v490
        %v1213 = vunpack.c.h.b16 %v490
        %v1214 = vunpack.c.l.b16 %v491
        %v1215 = vunpack.c.h.b16 %v491
        %v1216 = vunpack.c.l.b16 %v492
        %v1217 = vunpack.c.h.b16 %v492
        %v1218 = vunpack.c.l.b16 %v493
        %v1219 = vunpack.c.h.b16 %v493
        %v1220 = vunpack.c.l.b16 %v494
        %v1221 = vunpack.c.h.b16 %v494
        %v1222 = vunpack.c.l.b16 %v495
        %v1223 = vunpack.c.h.b16 %v495
        %v1224 = vunpack.c.l.b16 %v496
        %v1225 = vunpack.c.h.b16 %v496
        %v1226 = vunpack.c.l.b16 %v497
        %v1227 = vunpack.c.h.b16 %v497
        %v1228 = vunpack.c.l.b16 %v498
        %v1229 = vunpack.c.h.b16 %v498
        %v1230 = vunpack.c.l.b16 %v499
        %v1231 = vunpack.c.h.b16 %v499
        %v1232 = vunpack.c.l.b16 %v500
        %v1233 = vunpack.c.h.b16 %v500
        %v1234 = vunpack.c.l.b16 %v501
        %v1235 = vunpack.c.h.b16 %v501
        %v1236 = vunpack.c.l.b16 %v502
        %v1237 = vunpack.c.h.b16 %v502
        %v1238 = vunpack.c.l.b16 %v503
        %v1239 = vunpack.c.h.b16 %v503
        %v1240 = vunpack.c.l.b16 %v504
        %v1241 = vunpack.c.h.b16 %v504
        %v1242 = vunpack.c.l.b16 %v505
        %v1243 = vunpack.c.h.b16 %v505
        %v1244 = vunpack.c.l.b16 %v506
        %v1245 = vunpack.c.h.b16 %v506
        %v1246 = vunpack.c.l.b16 %v507
        %v1247 = vunpack.c.h.b16 %v507
        %v1248 = vunpack.c.l.b16 %v508
        %v1249 = vunpack.c.h.b16 %v508
        %v1250 = vunpack.c.l.b16 %v509
        %v1251 = vunpack.c.h.b16 %v509
        %v1252 = vunpack.c.l.b16 %v510
        %v1253 = vunpack.c.h.b16 %v510
        %v1254 = vunpack.c.l.b16 %v511
        %v1255 = vunpack.c.h.b16 %v511
        %v1256 = vunpack.c.l.b16 %v512
        %v1257 = vunpack.c.h.b16 %v512
        %v1258 = vunpack.c.l.b16 %v513
        %v1259 = vunpack.c.h.b16 %v513
        %v1260 = vunpack.c.l.b16 %v514
        %v1261 = vunpack.c.h.b16 %v514
        %v1262 = vunpack.c.l.b16 %v515
        %v1263 = vunpack.c.h.b16 %v515
        %v1264 = vunpack.c.l.b16 %v516
        %v1265 = vunpack.c.h.b16 %v516
        %v1266 = vunpack.c.l.b16 %v517
        %v1267 = vunpack.c.h.b16 %v517
        %v1268 = vunpack.c.l.b16 %v518
        %v1269 = vunpack.c.h.b16 %v518
        %v1270 = vunpack.c.l.b16 %v519
        %v1271 = vunpack.c.h.b16 %v519
        %v1272 = vunpack.c.l.b16 %v520
        %v1273 = vunpack.c.h.b16 %v520
        %v1274 = vunpack.c.l.b16 %v521
        %v1275 = vunpack.c.h.b16 %v521
        %v1276 = vunpack.c.l.b16 %v522
        %v1277 = vunpack.c.h.b16 %v522
        %v1278 = vunpack.c.l.b16 %v523
        %v1279 = vunpack.c.h.b16 %v523
        %v1280 = vunpack.c.l.b16 %v524
        %v1281 = vunpack.c.h.b16 %v524
        %v1282 = vunpack.c.l.b16 %v525
        %v1283 = vunpack.c.h.b16 %v525
        %v1284 = vunpack.c.l.b16 %v526
        %v1285 = vunpack.c.h.b16 %v526
        %v1286 = vunpack.c.l.b16 %v527
        %v1287 = vunpack.c.h.b16 %v527
        %v1288 = vunpack.c.l.b16 %v528
        %v1289 = vunpack.c.h.b16 %v528
        %v1290 = vunpack.c.l.b16 %v529
        %v1291 = vunpack.c.h.b16 %v529
        %v1292 = vunpack.c.l.b16 %v530
        %v1293 = vunpack.c.h.b16 %v530
        %v1294 = vunpack.c.l.b16 %v531
        %v1295 = vunpack.c.h.b16 %v531
        %v1296 = vunpack.c.l.b16 %v532
        %v1297 = vunpack.c.h.b16 %v532
        %v1298 = vunpack.c.l.b16 %v533
        %v1299 = vunpack.c.h.b16 %v533
        %v1300 = vunpack.c.l.b16 %v534
        %v1301 = vunpack.c.h.b16 %v534
        %v1302 = vunpack.c.l.b16 %v535
        %v1303 = vunpack.c.h.b16 %v535
        %v1304 = vunpack.c.l.b16 %v536
        %v1305 = vunpack.c.h.b16 %v536
        %v1306 = vunpack.c.l.b16 %v537
        %v1307 = vunpack.c.h.b16 %v537
        %v1308 = vunpack.c.l.b16 %v538
        %v1309 = vunpack.c.h.b16 %v538
        %v1310 = vunpack.c.l.b16 %v539
        %v1311 = vunpack.c.h.b16 %v539
        %v1312 = vunpack.c.l.b16 %v540
        %v1313 = vunpack.c.h.b16 %v540
        %v1314 = vunpack.c.l.b16 %v541
        %v1315 = vunpack.c.h.b16 %v541
        %v1316 = vunpack.c.l.b16 %v542
        %v1317 = vunpack.c.h.b16 %v542
        %v1318 = vunpack.c.l.b16 %v543
        %v1319 = vunpack.c.h.b16 %v543
        %v1320 = vunpack.c.l.b16 %v544
        %v1321 = vunpack.c.h.b16 %v544
        %v1322 = vunpack.c.l.b16 %v545
        %v1323 = vunpack.c.h.b16 %v545
        %v1324 = vunpack.c.l.b16 %v546
        %v1325 = vunpack.c.h.b16 %v546
        %v1326 = vunpack.c.l.b16 %v547
        %v1327 = vunpack.c.h.b16 %v547
        %v1328 = vunpack.c.l.b16 %v548
        %v1329 = vunpack.c.h.b16 %v548
        %v1330 = vunpack.c.l.b16 %v549
        %v1331 = vunpack.c.h.b16 %v549
        %v1332 = vunpack.c.l.b16 %v550
        %v1333 = vunpack.c.h.b16 %v550
        %v1334 = vunpack.c.l.b16 %v551
        %v1335 = vunpack.c.h.b16 %v551
        %v1336 = vunpack.c.l.b16 %v552
        %v1337 = vunpack.c.h.b16 %v552
        %v1338 = vunpack.c.l.b16 %v553
        %v1339 = vunpack.c.h.b16 %v553
        %v1340 = vunpack.c.l.b16 %v554
        %v1341 = vunpack.c.h.b16 %v554
        %v1342 = vunpack.c.l.b16 %v555
        %v1343 = vunpack.c.h.b16 %v555
        %v1344 = vunpack.c.l.b16 %v556
        %v1345 = vunpack.c.h.b16 %v556
        %v1346 = vunpack.c.l.b16 %v557
        %v1347 = vunpack.c.h.b16 %v557
        %v1348 = vunpack.c.l.b16 %v558
        %v1349 = vunpack.c.h.b16 %v558
        %v1350 = vunpack.c.l.b16 %v559
        %v1351 = vunpack.c.h.b16 %v559
        %v1352 = vunpack.c.l.b16 %v560
        %v1353 = vunpack.c.h.b16 %v560
        %v1354 = vunpack.c.l.b16 %v561
        %v1355 = vunpack.c.h.b16 %v561
        %v1356 = vunpack.c.l.b16 %v562
        %v1357 = vunpack.c.h.b16 %v562
        %v1358 = vunpack.c.l.b16 %v563
        %v1359 = vunpack.c.h.b16 %v563
        %v1360 = vunpack.c.l.b16 %v564
        %v1361 = vunpack.c.h.b16 %v564
        %v1362 = vunpack.c.l.b16 %v565
        %v1363 = vunpack.c.h.b16 %v565
        %v1364 = vunpack.c.l.b16 %v566
        %v1365 = vunpack.c.h.b16 %v566
        %v1366 = vunpack.c.l.b16 %v567
        %v1367 = vunpack.c.h.b16 %v567
        %v1368 = vunpack.c.l.b16 %v568
        %v1369 = vunpack.c.h.b16 %v568
        %v1370 = vunpack.c.l.b16 %v569
        %v1371 = vunpack.c.h.b16 %v569
        %v1372 = vunpack.c.l.b16 %v570
        %v1373 = vunpack.c.h.b16 %v570
        %v1374 = vunpack.c.l.b16 %v571
        %v1375 = vunpack.c.h.b16 %v571
        %v1376 = vunpack.c.l.b16 %v572
        %v1377 = vunpack.c.h.b16 %v572
        %v1378 = vunpack.c.l.b16 %v573
        %v1379 = vunpack.c.h.b16 %v573
        %v1380 = vunpack.c.l.b16 %v574
        %v1381 = vunpack.c.h.b16 %v574
        %v1382 = vunpack.c.l.b16 %v575
        %v1383 = vunpack.c.h.b16 %v575
        %v1384 = vunpack.c.l.b16 %v576
        %v1385 = vunpack.c.h.b16 %v576
        %v1386 = vunpack.c.l.b16 %v577
        %v1387 = vunpack.c.h.b16 %v577
        %v1388 = vunpack.c.l.b16 %v578
        %v1389 = vunpack.c.h.b16 %v578
        %v1390 = vunpack.c.l.b16 %v579
        %v1391 = vunpack.c.h.b16 %v579
        %v1392 = vunpack.c.l.b16 %v580
        %v1393 = vunpack.c.h.b16 %v580
        %v1394 = vunpack.c.l.b16 %v581
        %v1395 = vunpack.c.h.b16 %v581
        %v1396 = vunpack.c.l.b16 %v582
        %v1397 = vunpack.c.h.b16 %v582
        %v1398 = vunpack.c.l.b16 %v583
        %v1399 = vunpack.c.h.b16 %v583
        %v1400 = vunpack.c.l.b16 %v584
        %v1401 = vunpack.c.h.b16 %v584
        %v1402 = vunpack.c.l.b16 %v585
        %v1403 = vunpack.c.h.b16 %v585
        %v1404 = vunpack.c.l.b16 %v586
        %v1405 = vunpack.c.h.b16 %v586
        %v1406 = vunpack.c.l.b16 %v587
        %v1407 = vunpack.c.h.b16 %v587
        %v1408 = vunpack.c.l.b16 %v588
        %v1409 = vunpack.c.h.b16 %v588
        %v1410 = vunpack.c.l.b16 %v589
        %v1411 = vunpack.c.h.b16 %v589
        %v1412 = vunpack.c.l.b16 %v590
        %v1413 = vunpack.c.h.b16 %v590
        %v1414 = vunpack.c.l.b16 %v591
        %v1415 = vunpack.c.h.b16 %v591
        %v1416 = vunpack.c.l.b16 %v592
        %v1417 = vunpack.c.h.b16 %v592
        %v1418 = vunpack.c.l.b16 %v593
        %v1419 = vunpack.c.h.b16 %v593
        %v1420 = vunpack.c.l.b16 %v594
        %v1421 = vunpack.c.h.b16 %v594
        %v1422 = vunpack.c.l.b16 %v595
        %v1423 = vunpack.c.h.b16 %v595
        %v1424 = vunpack.c.l.b16 %v596
        %v1425 = vunpack.c.h.b16 %v596
        %v1426 = vunpack.c.l.b16 %v597
        %v1427 = vunpack.c.h.b16 %v597
        %v1428 = vunpack.c.l.b16 %v598
        %v1429 = vunpack.c.h.b16 %v598
        %v1430 = vunpack.c.l.b16 %v599
        %v1431 = vunpack.c.h.b16 %v599
        %v1432 = vunpack.c.l.b16 %v600
        %v1433 = vunpack.c.h.b16 %v600
        %v1434 = vunpack.c.l.b16 %v601
        %v1435 = vunpack.c.h.b16 %v601
        %v1436 = vunpack.c.l.b16 %v602
        %v1437 = vunpack.c.h.b16 %v602
        %v1438 = vunpack.c.l.b16 %v603
        %v1439 = vunpack.c.h.b16 %v603
        %v1440 = vunpack.c.l.b16 %v604
        %v1441 = vunpack.c.h.b16 %v604
        %v1442 = vunpack.c.l.b16 %v605
        %v1443 = vunpack.c.h.b16 %v605
        %v1444 = vunpack.c.l.b16 %v606
        %v1445 = vunpack.c.h.b16 %v606
        %v1446 = vunpack.c.l.b16 %v607
        %v1447 = vunpack.c.h.b16 %v607
        %v1448 = vunpack.c.l.b16 %v608
        %v1449 = vunpack.c.h.b16 %v608
        %v1450 = vunpack.c.l.b16 %v609
        %v1451 = vunpack.c.h.b16 %v609
        %v1452 = vunpack.c.l.b16 %v610
        %v1453 = vunpack.c.h.b16 %v610
        %v1454 = vunpack.c.l.b16 %v611
        %v1455 = vunpack.c.h.b16 %v611
        %v1456 = vunpack.c.l.b16 %v612
        %v1457 = vunpack.c.h.b16 %v612
        %v1458 = vunpack.c.l.b16 %v613
        %v1459 = vunpack.c.h.b16 %v613
        %v1460 = vunpack.c.l.b16 %v614
        %v1461 = vunpack.c.h.b16 %v614
        %v1462 = vunpack.c.l.b16 %v615
        %v1463 = vunpack.c.h.b16 %v615
        %v1464 = vpack.c.b16 %v956, %v952
        %v1465 = vpack.c.b16 %v957, %v953
        %v1466 = vpack.c.b16 %v958, %v954
        %v1467 = vpack.c.b16 %v959, %v955
        %v1468 = vpack.c.b16 %v964, %v960
        %v1469 = vpack.c.b16 %v965, %v961
        %v1470 = vpack.c.b16 %v966, %v962
        %v1471 = vpack.c.b16 %v967, %v963
        %v1472 = vpack.c.b16 %v972, %v968
        %v1473 = vpack.c.b16 %v973, %v969
        %v1474 = vpack.c.b16 %v974, %v970
        %v1475 = vpack.c.b16 %v975, %v971
        %v1476 = vpack.c.b16 %v980, %v976
        %v1477 = vpack.c.b16 %v981, %v977
        %v1478 = vpack.c.b16 %v982, %v978
        %v1479 = vpack.c.b16 %v983, %v979
        %v1480 = vpack.c.b16 %v988, %v984
        %v1481 = vpack.c.b16 %v989, %v985
        %v1482 = vpack.c.b16 %v990, %v986
        %v1483 = vpack.c.b16 %v991, %v987
        %v1484 = vpack.c.b16 %v996, %v992
        %v1485 = vpack.c.b16 %v997, %v993
        %v1486 = vpack.c.b16 %v998, %v994
        %v1487 = vpack.c.b16 %v999, %v995
        %v1488 = vpack.c.b16 %v1004, %v1000
        %v1489 = vpack.c.b16 %v1005, %v1001
        %v1490 = vpack.c.b16 %v1006, %v1002
        %v1491 = vpack.c.b16 %v1007, %v1003
        %v1492 = vpack.c.b16 %v1012, %v1008
        %v1493 = vpack.c.b16 %v1013, %v1009
        %v1494 = vpack.c.b16 %v1014, %v1010
        %v1495 = vpack.c.b16 %v1015, %v1011
        %v1496 = vpack.c.b16 %v1020, %v1016
        %v1497 = vpack.c.b16 %v1021, %v1017
        %v1498 = vpack.c.b16 %v1022, %v1018
        %v1499 = vpack.c.b16 %v1023, %v1019
        %v1500 = vpack.c.b16 %v1028, %v1024
        %v1501 = vpack.c.b16 %v1029, %v1025
        %v1502 = vpack.c.b16 %v1030, %v1026
        %v1503 = vpack.c.b16 %v1031, %v1027
        %v1504 = vpack.c.b16 %v1036, %v1032
        %v1505 = vpack.c.b16 %v1037, %v1033
        %v1506 = vpack.c.b16 %v1038, %v1034
        %v1507 = vpack.c.b16 %v1039, %v1035
        %v1508 = vpack.c.b16 %v1044, %v1040
        %v1509 = vpack.c.b16 %v1045, %v1041
        %v1510 = vpack.c.b16 %v1046, %v1042
        %v1511 = vpack.c.b16 %v1047, %v1043
        %v1512 = vpack.c.b16 %v1052, %v1048
        %v1513 = vpack.c.b16 %v1053, %v1049
        %v1514 = vpack.c.b16 %v1054, %v1050
        %v1515 = vpack.c.b16 %v1055, %v1051
        %v1516 = vpack.c.b16 %v1060, %v1056
        %v1517 = vpack.c.b16 %v1061, %v1057
        %v1518 = vpack.c.b16 %v1062, %v1058
        %v1519 = vpack.c.b16 %v1063, %v1059
        %v1520 = vpack.c.b16 %v1068, %v1064
        %v1521 = vpack.c.b16 %v1069, %v1065
        %v1522 = vpack.c.b16 %v1070, %v1066
        %v1523 = vpack.c.b16 %v1071, %v1067
        %v1524 = vpack.c.b16 %v1076, %v1072
        %v1525 = vpack.c.b16 %v1077, %v1073
        %v1526 = vpack.c.b16 %v1078, %v1074
        %v1527 = vpack.c.b16 %v1079, %v1075
        %v1528 = vpack.c.b16 %v1084, %v1080
        %v1529 = vpack.c.b16 %v1085, %v1081
        %v1530 = vpack.c.b16 %v1086, %v1082
        %v1531 = vpack.c.b16 %v1087, %v1083
        %v1532 = vpack.c.b16 %v1092, %v1088
        %v1533 = vpack.c.b16 %v1093, %v1089
        %v1534 = vpack.c.b16 %v1094, %v1090
        %v1535 = vpack.c.b16 %v1095, %v1091
        %v1536 = vpack.c.b16 %v1100, %v1096
        %v1537 = vpack.c.b16 %v1101, %v1097
        %v1538 = vpack.c.b16 %v1102, %v1098
        %v1539 = vpack.c.b16 %v1103, %v1099
        %v1540 = vpack.c.b16 %v1108, %v1104
        %v1541 = vpack.c.b16 %v1109, %v1105
        %v1542 = vpack.c.b16 %v1110, %v1106
        %v1543 = vpack.c.b16 %v1111, %v1107
        %v1544 = vpack.c.b16 %v1116, %v1112
        %v1545 = vpack.c.b16 %v1117, %v1113
        %v1546 = vpack.c.b16 %v1118, %v1114
        %v1547 = vpack.c.b16 %v1119, %v1115
        %v1548 = vpack.c.b16 %v1124, %v1120
        %v1549 = vpack.c.b16 %v1125, %v1121
        %v1550 = vpack.c.b16 %v1126, %v1122
        %v1551 = vpack.c.b16 %v1127, %v1123
        %v1552 = vpack.c.b16 %v1132, %v1128
        %v1553 = vpack.c.b16 %v1133, %v1129
        %v1554 = vpack.c.b16 %v1134, %v1130
        %v1555 = vpack.c.b16 %v1135, %v1131
        %v1556 = vpack.c.b16 %v1140, %v1136
        %v1557 = vpack.c.b16 %v1141, %v1137
        %v1558 = vpack.c.b16 %v1142, %v1138
        %v1559 = vpack.c.b16 %v1143, %v1139
        %v1560 = vpack.c.b16 %v1148, %v1144
        %v1561 = vpack.c.b16 %v1149, %v1145
        %v1562 = vpack.c.b16 %v1150, %v1146
        %v1563 = vpack.c.b16 %v1151, %v1147
        %v1564 = vpack.c.b16 %v1156, %v1152
        %v1565 = vpack.c.b16 %v1157, %v1153
        %v1566 = vpack.c.b16 %v1158, %v1154
        %v1567 = vpack.c.b16 %v1159, %v1155
        %v1568 = vpack.c.b16 %v1164, %v1160
        %v1569 = vpack.c.b16 %v1165, %v1161
        %v1570 = vpack.c.b16 %v1166, %v1162
        %v1571 = vpack.c.b16 %v1167, %v1163
        %v1572 = vpack.c.b16 %v1172, %v1168
        %v1573 = vpack.c.b16 %v1173, %v1169
        %v1574 = vpack.c.b16 %v1174, %v1170
        %v1575 = vpack.c.b16 %v1175, %v1171
        %v1576 = vpack.c.b16 %v1180, %v1176
        %v1577 = vpack.c.b16 %v1181, %v1177
        %v1578 = vpack.c.b16 %v1182, %v1178
        %v1579 = vpack.c.b16 %v1183, %v1179
        %v1580 = vpack.c.b16 %v1188, %v1184
        %v1581 = vpack.c.b16 %v1189, %v1185
        %v1582 = vpack.c.b16 %v1190, %v1186
        %v1583 = vpack.c.b16 %v1191, %v1187
        %v1584 = vpack.c.b16 %v1196, %v1192
        %v1585 = vpack.c.b16 %v1197, %v1193
        %v1586 = vpack.c.b16 %v1198, %v1194
        %v1587 = vpack.c.b16 %v1199, %v1195
        %v1588 = vpack.c.b16 %v1204, %v1200
        %v1589 = vpack.c.b16 %v1205, %v1201
        %v1590 = vpack.c.b16 %v1206, %v1202
        %v1591 = vpack.c.b16 %v1207, %v1203
        %v1592 = vpack.c.b16 %v1212, %v1208
        %v1593 = vpack.c.b16 %v1213, %v1209
        %v1594 = vpack.c.b16 %v1214, %v1210
        %v1595 = vpack.c.b16 %v1215, %v1211
        %v1596 = vpack.c.b16 %v1220, %v1216
        %v1597 = vpack.c.b16 %v1221, %v1217
        %v1598 = vpack.c.b16 %v1222, %v1218
        %v1599 = vpack.c.b16 %v1223, %v1219
        %v1600 = vpack.c.b16 %v1228, %v1224
        %v1601 = vpack.c.b16 %v1229, %v1225
        %v1602 = vpack.c.b16 %v1230, %v1226
        %v1603 = vpack.c.b16 %v1231, %v1227
        %v1604 = vpack.c.b16 %v1236, %v1232
        %v1605 = vpack.c.b16 %v1237, %v1233
        %v1606 = vpack.c.b16 %v1238, %v1234
        %v1607 = vpack.c.b16 %v1239, %v1235
        %v1608 = vpack.c.b16 %v1244, %v1240
        %v1609 = vpack.c.b16 %v1245, %v1241
        %v1610 = vpack.c.b16 %v1246, %v1242
        %v1611 = vpack.c.b16 %v1247, %v1243
        %v1612 = vpack.c.b16 %v1252, %v1248
        %v1613 = vpack.c.b16 %v1253, %v1249
        %v1614 = vpack.c.b16 %v1254, %v1250
        %v1615 = vpack.c.b16 %v1255, %v1251
        %v1616 = vpack.c.b16 %v1260, %v1256
        %v1617 = vpack.c.b16 %v1261, %v1257
        %v1618 = vpack.c.b16 %v1262, %v1258
        %v1619 = vpack.c.b16 %v1263, %v1259
        %v1620 = vpack.c.b16 %v1268, %v1264
        %v1621 = vpack.c.b16 %v1269, %v1265
        %v1622 = vpack.c.b16 %v1270, %v1266
        %v1623 = vpack.c.b16 %v1271, %v1267
        %v1624 = vpack.c.b16 %v1276, %v1272
        %v1625 = vpack.c.b16 %v1277, %v1273
        %v1626 = vpack.c.b16 %v1278, %v1274
        %v1627 = vpack.c.b16 %v1279, %v1275
        %v1628 = vpack.c.b16 %v1284, %v1280
        %v1629 = vpack.c.b16 %v1285, %v1281
        %v1630 = vpack.c.b16 %v1286, %v1282
        %v1631 = vpack.c.b16 %v1287, %v1283
        %v1632 = vpack.c.b16 %v1292, %v1288
        %v1633 = vpack.c.b16 %v1293, %v1289
        %v1634 = vpack.c.b16 %v1294, %v1290
        %v1635 = vpack.c.b16 %v1295, %v1291
        %v1636 = vpack.c.b16 %v1300, %v1296
        %v1637 = vpack.c.b16 %v1301, %v1297
        %v1638 = vpack.c.b16 %v1302, %v1298
        %v1639 = vpack.c.b16 %v1303, %v1299
        %v1640 = vpack.c.b16 %v1308, %v1304
        %v1641 = vpack.c.b16 %v1309, %v1305
        %v1642 = vpack.c.b16 %v1310, %v1306
        %v1643 = vpack.c.b16 %v1311, %v1307
        %v1644 = vpack.c.b16 %v1316, %v1312
        %v1645 = vpack.c.b16 %v1317, %v1313
        %v1646 = vpack.c.b16 %v1318, %v1314
        %v1647 = vpack.c.b16 %v1319, %v1315
        %v1648 = vpack.c.b16 %v1324, %v1320
        %v1649 = vpack.c.b16 %v1325, %v1321
        %v1650 = vpack.c.b16 %v1326, %v1322
        %v1651 = vpack.c.b16 %v1327, %v1323
        %v1652 = vpack.c.b16 %v1332, %v1328
        %v1653 = vpack.c.b16 %v1333, %v1329
        %v1654 = vpack.c.b16 %v1334, %v1330
        %v1655 = vpack.c.b16 %v1335, %v1331
        %v1656 = vpack.c.b16 %v1340, %v1336
        %v1657 = vpack.c.b16 %v1341, %v1337
        %v1658 = vpack.c.b16 %v1342, %v1338
        %v1659 = vpack.c.b16 %v1343, %v1339
        %v1660 = vpack.c.b16 %v1348, %v1344
        %v1661 = vpack.c.b16 %v1349, %v1345
        %v1662 = vpack.c.b16 %v1350, %v1346
        %v1663 = vpack.c.b16 %v1351, %v1347
        %v1664 = vpack.c.b16 %v1356, %v1352
        %v1665 = vpack.c.b16 %v1357, %v1353
        %v1666 = vpack.c.b16 %v1358, %v1354
        %v1667 = vpack.c.b16 %v1359, %v1355
        %v1668 = vpack.c.b16 %v1364, %v1360
        %v1669 = vpack.c.b16 %v1365, %v1361
        %v1670 = vpack.c.b16 %v1366, %v1362
        %v1671 = vpack.c.b16 %v1367, %v1363
        %v1672 = vpack.c.b16 %v1372, %v1368
        %v1673 = vpack.c.b16 %v1373, %v1369
        %v1674 = vpack.c.b16 %v1374, %v1370
        %v1675 = vpack.c.b16 %v1375, %v1371
        %v1676 = vpack.c.b16 %v1380, %v1376
        %v1677 = vpack.c.b16 %v1381, %v1377
        %v1678 = vpack.c.b16 %v1382, %v1378
        %v1679 = vpack.c.b16 %v1383, %v1379
        %v1680 = vpack.c.b16 %v1388, %v1384
        %v1681 = vpack.c.b16 %v1389, %v1385
        %v1682 = vpack.c.b16 %v1390, %v1386
        %v1683 = vpack.c.b16 %v1391, %v1387
        %v1684 = vpack.c.b16 %v1396, %v1392
        %v1685 = vpack.c.b16 %v1397, %v1393
        %v1686 = vpack.c.b16 %v1398, %v1394
        %v1687 = vpack.c.b16 %v1399, %v1395
        %v1688 = vpack.c.b16 %v1404, %v1400
        %v1689 = vpack.c.b16 %v1405, %v1401
        %v1690 = vpack.c.b16 %v1406, %v1402
        %v1691 = vpack.c.b16 %v1407, %v1403
        %v1692 = vpack.c.b16 %v1412, %v1408
        %v1693 = vpack.c.b16 %v1413, %v1409
        %v1694 = vpack.c.b16 %v1414, %v1410
        %v1695 = vpack.c.b16 %v1415, %v1411
        %v1696 = vpack.c.b16 %v1420, %v1416
        %v1697 = vpack.c.b16 %v1421, %v1417
        %v1698 = vpack.c.b16 %v1422, %v1418
        %v1699 = vpack.c.b16 %v1423, %v1419
        %v1700 = vpack.c.b16 %v1428, %v1424
        %v1701 = vpack.c.b16 %v1429, %v1425
        %v1702 = vpack.c.b16 %v1430, %v1426
        %v1703 = vpack.c.b16 %v1431, %v1427
        %v1704 = vpack.c.b16 %v1436, %v1432
        %v1705 = vpack.c.b16 %v1437, %v1433
        %v1706 = vpack.c.b16 %v1438, %v1434
        %v1707 = vpack.c.b16 %v1439, %v1435
        %v1708 = vpack.c.b16 %v1444, %v1440
        %v1709 = vpack.c.b16 %v1445, %v1441
        %v1710 = vpack.c.b16 %v1446, %v1442
        %v1711 = vpack.c.b16 %v1447, %v1443
        %v1712 = vpack.c.b16 %v1452, %v1448
        %v1713 = vpack.c.b16 %v1453, %v1449
        %v1714 = vpack.c.b16 %v1454, %v1450
        %v1715 = vpack.c.b16 %v1455, %v1451
        %v1716 = vpack.c.b16 %v1460, %v1456
        %v1717 = vpack.c.b16 %v1461, %v1457
        %v1718 = vpack.c.b16 %v1462, %v1458
        %v1719 = vpack.c.b16 %v1463, %v1459
        %1976 = vmatprep.subr.bf16.mxu0 %v1465
        %1977 = vmatpush1.bf16.msra.mxu0 %v1464
        %1978 = vmatprep.subr.bf16.mxu0 %v1469
        %1979 = vmatpush1.bf16.msra.mxu0 %v1468
        %1980 = vmatprep.subr.bf16.mxu0 %v1473
        %1981 = vmatpush1.bf16.msra.mxu0 %v1472
        %1982 = vmatprep.subr.bf16.mxu0 %v1477
        %1983 = vmatpush1.bf16.msra.mxu0 %v1476
        %1984 = vmatprep.subr.bf16.mxu0 %v1481
        %1985 = vmatpush1.bf16.msra.mxu0 %v1480
        %1986 = vmatprep.subr.bf16.mxu0 %v1485
        %1987 = vmatpush1.bf16.msra.mxu0 %v1484
        %1988 = vmatprep.subr.bf16.mxu0 %v1489
        %1989 = vmatpush1.bf16.msra.mxu0 %v1488
        %1990 = vmatprep.subr.bf16.mxu0 %v1493
        %1991 = vmatpush1.bf16.msra.mxu0 %v1492
        %1992 = vmatprep.subr.bf16.mxu0 %v1497
        %1993 = vmatpush1.bf16.msra.mxu0 %v1496
        %1994 = vmatprep.subr.bf16.mxu0 %v1501
        %1995 = vmatpush1.bf16.msra.mxu0 %v1500
        %1996 = vmatprep.subr.bf16.mxu0 %v1505
        %1997 = vmatpush1.bf16.msra.mxu0 %v1504
        %1998 = vmatprep.subr.bf16.mxu0 %v1509
        %1999 = vmatpush1.bf16.msra.mxu0 %v1508
        %2000 = vmatprep.subr.bf16.mxu0 %v1513
        %2001 = vmatpush1.bf16.msra.mxu0 %v1512
        %2002 = vmatprep.subr.bf16.mxu0 %v1517
        %2003 = vmatpush1.bf16.msra.mxu0 %v1516
        %2004 = vmatprep.subr.bf16.mxu0 %v1521
        %2005 = vmatpush1.bf16.msra.mxu0 %v1520
        %2006 = vmatprep.subr.bf16.mxu0 %v1525
        %2007 = vmatpush1.bf16.msra.mxu0 %v1524
        %2008 = vmatprep.mubr.bf16.mxu0 %v676
        %2009 = vmatmul.mubr.bf16.gmra.mrb[0].mxu0 %v662
        %v2010 = vpop.f32.mrb[0].mxu0
        %v2011 = vadd.f32 %v621, %v2010
        %v2012 = vpop.f32.mrb[0].mxu0
        %v2013 = vadd.f32 %v625, %v2012
        %v2014 = vpop.f32.mrb[0].mxu0
        %v2015 = vpop.f32.mrb[0].mxu0
        %2016 = vdwg.mxu0
        %2017 = vmatprep.subr.bf16.mxu0 %v1529
        %2018 = vmatpush1.bf16.msra.mxu0 %v1528
        %2019 = vmatprep.subr.bf16.mxu0 %v1533
        %2020 = vmatpush1.bf16.msra.mxu0 %v1532
        %2021 = vmatprep.subr.bf16.mxu0 %v1537
        %2022 = vmatpush1.bf16.msra.mxu0 %v1536
        %2023 = vmatprep.subr.bf16.mxu0 %v1541
        %2024 = vmatpush1.bf16.msra.mxu0 %v1540
        %2025 = vmatprep.subr.bf16.mxu0 %v1545
        %2026 = vmatpush1.bf16.msra.mxu0 %v1544
        %2027 = vmatprep.subr.bf16.mxu0 %v1549
        %2028 = vmatpush1.bf16.msra.mxu0 %v1548
        %2029 = vmatprep.subr.bf16.mxu0 %v1553
        %2030 = vmatpush1.bf16.msra.mxu0 %v1552
        %2031 = vmatprep.subr.bf16.mxu0 %v1557
        %2032 = vmatpush1.bf16.msra.mxu0 %v1556
        %2033 = vmatprep.subr.bf16.mxu0 %v1561
        %2034 = vmatpush1.bf16.msra.mxu0 %v1560
        %2035 = vmatprep.subr.bf16.mxu0 %v1565
        %2036 = vmatpush1.bf16.msra.mxu0 %v1564
        %2037 = vmatprep.subr.bf16.mxu0 %v1569
        %2038 = vmatpush1.bf16.msra.mxu0 %v1568
        %2039 = vmatprep.subr.bf16.mxu0 %v1573
        %2040 = vmatpush1.bf16.msra.mxu0 %v1572
        %2041 = vmatprep.subr.bf16.mxu0 %v1577
        %2042 = vmatpush1.bf16.msra.mxu0 %v1576
        %2043 = vmatprep.subr.bf16.mxu0 %v1581
        %2044 = vmatpush1.bf16.msra.mxu0 %v1580
        %2045 = vmatprep.subr.bf16.mxu0 %v1585
        %2046 = vmatpush1.bf16.msra.mxu0 %v1584
        %2047 = vmatprep.subr.bf16.mxu0 %v1589
        %2048 = vmatpush1.bf16.msra.mxu0 %v1588
        %2049 = vmatprep.mubr.bf16.mxu0 %v686
        %2050 = vmatmul.mubr.bf16.gmra.mrb[0].mxu0 %v684
        %v2051 = vpop.f32.mrb[0].mxu0
        %v2052 = vadd.f32 %v2011, %v2051
        %v2053 = vpop.f32.mrb[0].mxu0
        %v2054 = vadd.f32 %v2013, %v2053
        %v2055 = vpop.f32.mrb[0].mxu0
        %v2056 = vpop.f32.mrb[0].mxu0
        %2057 = vdwg.mxu0
        %2058 = vmatprep.subr.bf16.mxu0 %v1593
        %2059 = vmatpush1.bf16.msra.mxu0 %v1592
        %2060 = vmatprep.subr.bf16.mxu0 %v1597
        %2061 = vmatpush1.bf16.msra.mxu0 %v1596
        %2062 = vmatprep.subr.bf16.mxu0 %v1601
        %2063 = vmatpush1.bf16.msra.mxu0 %v1600
        %2064 = vmatprep.subr.bf16.mxu0 %v1605
        %2065 = vmatpush1.bf16.msra.mxu0 %v1604
        %2066 = vmatprep.subr.bf16.mxu0 %v1609
        %2067 = vmatpush1.bf16.msra.mxu0 %v1608
        %2068 = vmatprep.subr.bf16.mxu0 %v1613
        %2069 = vmatpush1.bf16.msra.mxu0 %v1612
        %2070 = vmatprep.subr.bf16.mxu0 %v1617
        %2071 = vmatpush1.bf16.msra.mxu0 %v1616
        %2072 = vmatprep.subr.bf16.mxu0 %v1621
        %2073 = vmatpush1.bf16.msra.mxu0 %v1620
        %2074 = vmatprep.subr.bf16.mxu0 %v1625
        %2075 = vmatpush1.bf16.msra.mxu0 %v1624
        %2076 = vmatprep.subr.bf16.mxu0 %v1629
        %2077 = vmatpush1.bf16.msra.mxu0 %v1628
        %2078 = vmatprep.subr.bf16.mxu0 %v1633
        %2079 = vmatpush1.bf16.msra.mxu0 %v1632
        %2080 = vmatprep.subr.bf16.mxu0 %v1637
        %2081 = vmatpush1.bf16.msra.mxu0 %v1636
        %2082 = vmatprep.subr.bf16.mxu0 %v1641
        %2083 = vmatpush1.bf16.msra.mxu0 %v1640
        %2084 = vmatprep.subr.bf16.mxu0 %v1645
        %2085 = vmatpush1.bf16.msra.mxu0 %v1644
        %2086 = vmatprep.subr.bf16.mxu0 %v1649
        %2087 = vmatpush1.bf16.msra.mxu0 %v1648
        %2088 = vmatprep.subr.bf16.mxu0 %v1653
        %2089 = vmatpush1.bf16.msra.mxu0 %v1652
        %2090 = vmatprep.mubr.bf16.mxu0 %v683
        %2091 = vmatmul.mubr.bf16.gmra.mrb[0].mxu0 %v669
        %v2092 = vpop.f32.mrb[0].mxu0
        %v2093 = vadd.f32 %v2052, %v2092
        %v2094 = vpop.f32.mrb[0].mxu0
        %v2095 = vadd.f32 %v2054, %v2094
        %v2096 = vpop.f32.mrb[0].mxu0
        %v2097 = vpop.f32.mrb[0].mxu0
        %2098 = vdwg.mxu0
        %2099 = vmatprep.subr.bf16.mxu0 %v1657
        %2100 = vmatpush1.bf16.msra.mxu0 %v1656
        %2101 = vmatprep.subr.bf16.mxu0 %v1661
        %2102 = vmatpush1.bf16.msra.mxu0 %v1660
        %2103 = vmatprep.subr.bf16.mxu0 %v1665
        %2104 = vmatpush1.bf16.msra.mxu0 %v1664
        %2105 = vmatprep.subr.bf16.mxu0 %v1669
        %2106 = vmatpush1.bf16.msra.mxu0 %v1668
        %2107 = vmatprep.subr.bf16.mxu0 %v1673
        %2108 = vmatpush1.bf16.msra.mxu0 %v1672
        %2109 = vmatprep.subr.bf16.mxu0 %v1677
        %2110 = vmatpush1.bf16.msra.mxu0 %v1676
        %2111 = vmatprep.subr.bf16.mxu0 %v1681
        %2112 = vmatpush1.bf16.msra.mxu0 %v1680
        %2113 = vmatprep.subr.bf16.mxu0 %v1685
        %2114 = vmatpush1.bf16.msra.mxu0 %v1684
        %2115 = vmatprep.subr.bf16.mxu0 %v1689
        %2116 = vmatpush1.bf16.msra.mxu0 %v1688
        %2117 = vmatprep.subr.bf16.mxu0 %v1693
        %2118 = vmatpush1.bf16.msra.mxu0 %v1692
        %2119 = vmatprep.subr.bf16.mxu0 %v1697
        %2120 = vmatpush1.bf16.msra.mxu0 %v1696
        %2121 = vmatprep.subr.bf16.mxu0 %v1701
        %2122 = vmatpush1.bf16.msra.mxu0 %v1700
        %2123 = vmatprep.subr.bf16.mxu0 %v1705
        %2124 = vmatpush1.bf16.msra.mxu0 %v1704
        %2125 = vmatprep.subr.bf16.mxu0 %v1709
        %2126 = vmatpush1.bf16.msra.mxu0 %v1708
        %2127 = vmatprep.subr.bf16.mxu0 %v1713
        %2128 = vmatpush1.bf16.msra.mxu0 %v1712
        %2129 = vmatprep.subr.bf16.mxu0 %v1717
        %2130 = vmatpush1.bf16.msra.mxu0 %v1716
        %2131 = vmatprep.mubr.bf16.mxu0 %v687
        %2132 = vmatmul.mubr.bf16.gmra.mrb[0].mxu0 %v685
        %v2133 = vpop.f32.mrb[0].mxu0
        %v2134 = vadd.f32 %v2093, %v2133
        %v2135 = vpop.f32.mrb[0].mxu0
        %v2136 = vadd.f32 %v2095, %v2135
        %v2137 = vpop.f32.mrb[0].mxu0
        %v2138 = vpop.f32.mrb[0].mxu0
        %2139 = vdwg.mxu0
        %2140 = vmatprep.subr.bf16.mxu0 %v1467
        %2141 = vmatpush1.bf16.msra.mxu0 %v1466
        %2142 = vmatprep.subr.bf16.mxu0 %v1471
        %2143 = vmatpush1.bf16.msra.mxu0 %v1470
        %2144 = vmatprep.subr.bf16.mxu0 %v1475
        %2145 = vmatpush1.bf16.msra.mxu0 %v1474
        %2146 = vmatprep.subr.bf16.mxu0 %v1479
        %2147 = vmatpush1.bf16.msra.mxu0 %v1478
        %2148 = vmatprep.subr.bf16.mxu0 %v1483
        %2149 = vmatpush1.bf16.msra.mxu0 %v1482
        %2150 = vmatprep.subr.bf16.mxu0 %v1487
        %2151 = vmatpush1.bf16.msra.mxu0 %v1486
        %2152 = vmatprep.subr.bf16.mxu0 %v1491
        %2153 = vmatpush1.bf16.msra.mxu0 %v1490
        %2154 = vmatprep.subr.bf16.mxu0 %v1495
        %2155 = vmatpush1.bf16.msra.mxu0 %v1494
        %2156 = vmatprep.subr.bf16.mxu0 %v1499
        %2157 = vmatpush1.bf16.msra.mxu0 %v1498
        %2158 = vmatprep.subr.bf16.mxu0 %v1503
        %2159 = vmatpush1.bf16.msra.mxu0 %v1502
        %2160 = vmatprep.subr.bf16.mxu0 %v1507
        %2161 = vmatpush1.bf16.msra.mxu0 %v1506
        %2162 = vmatprep.subr.bf16.mxu0 %v1511
        %2163 = vmatpush1.bf16.msra.mxu0 %v1510
        %2164 = vmatprep.subr.bf16.mxu0 %v1515
        %2165 = vmatpush1.bf16.msra.mxu0 %v1514
        %2166 = vmatprep.subr.bf16.mxu0 %v1519
        %2167 = vmatpush1.bf16.msra.mxu0 %v1518
        %2168 = vmatprep.subr.bf16.mxu0 %v1523
        %2169 = vmatpush1.bf16.msra.mxu0 %v1522
        %2170 = vmatprep.subr.bf16.mxu0 %v1527
        %2171 = vmatpush1.bf16.msra.mxu0 %v1526
        %2172 = vmatprep.mubr.bf16.mxu0 %v676
        %2173 = vmatmul.mubr.bf16.gmra.mrb[0].mxu0 %v662
        %v2174 = vpop.f32.mrb[0].mxu0
        %v2175 = vadd.f32 %v629, %v2174
        %v2176 = vpop.f32.mrb[0].mxu0
        %v2177 = vadd.f32 %v633, %v2176
        %v2178 = vpop.f32.mrb[0].mxu0
        %v2179 = vpop.f32.mrb[0].mxu0
        %2180 = vdwg.mxu0
        %2181 = vmatprep.subr.bf16.mxu0 %v1531
        %2182 = vmatpush1.bf16.msra.mxu0 %v1530
        %2183 = vmatprep.subr.bf16.mxu0 %v1535
        %2184 = vmatpush1.bf16.msra.mxu0 %v1534
        %2185 = vmatprep.subr.bf16.mxu0 %v1539
        %2186 = vmatpush1.bf16.msra.mxu0 %v1538
        %2187 = vmatprep.subr.bf16.mxu0 %v1543
        %2188 = vmatpush1.bf16.msra.mxu0 %v1542
        %2189 = vmatprep.subr.bf16.mxu0 %v1547
        %2190 = vmatpush1.bf16.msra.mxu0 %v1546
        %2191 = vmatprep.subr.bf16.mxu0 %v1551
        %2192 = vmatpush1.bf16.msra.mxu0 %v1550
        %2193 = vmatprep.subr.bf16.mxu0 %v1555
        %2194 = vmatpush1.bf16.msra.mxu0 %v1554
        %2195 = vmatprep.subr.bf16.mxu0 %v1559
        %2196 = vmatpush1.bf16.msra.mxu0 %v1558
        %2197 = vmatprep.subr.bf16.mxu0 %v1563
        %2198 = vmatpush1.bf16.msra.mxu0 %v1562
        %2199 = vmatprep.subr.bf16.mxu0 %v1567
        %2200 = vmatpush1.bf16.msra.mxu0 %v1566
        %2201 = vmatprep.subr.bf16.mxu0 %v1571
        %2202 = vmatpush1.bf16.msra.mxu0 %v1570
        %2203 = vmatprep.subr.bf16.mxu0 %v1575
        %2204 = vmatpush1.bf16.msra.mxu0 %v1574
        %2205 = vmatprep.subr.bf16.mxu0 %v1579
        %2206 = vmatpush1.bf16.msra.mxu0 %v1578
        %2207 = vmatprep.subr.bf16.mxu0 %v1583
        %2208 = vmatpush1.bf16.msra.mxu0 %v1582
        %2209 = vmatprep.subr.bf16.mxu0 %v1587
        %2210 = vmatpush1.bf16.msra.mxu0 %v1586
        %2211 = vmatprep.subr.bf16.mxu0 %v1591
        %2212 = vmatpush1.bf16.msra.mxu0 %v1590
        %2213 = vmatprep.mubr.bf16.mxu0 %v686
        %2214 = vmatmul.mubr.bf16.gmra.mrb[0].mxu0 %v684
        %v2215 = vpop.f32.mrb[0].mxu0
        %v2216 = vadd.f32 %v2175, %v2215
        %v2217 = vpop.f32.mrb[0].mxu0
        %v2218 = vadd.f32 %v2177, %v2217
        %v2219 = vpop.f32.mrb[0].mxu0
        %v2220 = vpop.f32.mrb[0].mxu0
        %2221 = vdwg.mxu0
        %2222 = vmatprep.subr.bf16.mxu0 %v1595
        %2223 = vmatpush1.bf16.msra.mxu0 %v1594
        %2224 = vmatprep.subr.bf16.mxu0 %v1599
        %2225 = vmatpush1.bf16.msra.mxu0 %v1598
        %2226 = vmatprep.subr.bf16.mxu0 %v1603
        %2227 = vmatpush1.bf16.msra.mxu0 %v1602
        %2228 = vmatprep.subr.bf16.mxu0 %v1607
        %2229 = vmatpush1.bf16.msra.mxu0 %v1606
        %2230 = vmatprep.subr.bf16.mxu0 %v1611
        %2231 = vmatpush1.bf16.msra.mxu0 %v1610
        %2232 = vmatprep.subr.bf16.mxu0 %v1615
        %2233 = vmatpush1.bf16.msra.mxu0 %v1614
        %2234 = vmatprep.subr.bf16.mxu0 %v1619
        %2235 = vmatpush1.bf16.msra.mxu0 %v1618
        %2236 = vmatprep.subr.bf16.mxu0 %v1623
        %2237 = vmatpush1.bf16.msra.mxu0 %v1622
        %2238 = vmatprep.subr.bf16.mxu0 %v1627
        %2239 = vmatpush1.bf16.msra.mxu0 %v1626
        %2240 = vmatprep.subr.bf16.mxu0 %v1631
        %2241 = vmatpush1.bf16.msra.mxu0 %v1630
        %2242 = vmatprep.subr.bf16.mxu0 %v1635
        %2243 = vmatpush1.bf16.msra.mxu0 %v1634
        %2244 = vmatprep.subr.bf16.mxu0 %v1639
        %2245 = vmatpush1.bf16.msra.mxu0 %v1638
        %2246 = vmatprep.subr.bf16.mxu0 %v1643
        %2247 = vmatpush1.bf16.msra.mxu0 %v1642
        %2248 = vmatprep.subr.bf16.mxu0 %v1647
        %2249 = vmatpush1.bf16.msra.mxu0 %v1646
        %2250 = vmatprep.subr.bf16.mxu0 %v1651
        %2251 = vmatpush1.bf16.msra.mxu0 %v1650
        %2252 = vmatprep.subr.bf16.mxu0 %v1655
        %2253 = vmatpush1.bf16.msra.mxu0 %v1654
        %2254 = vmatprep.mubr.bf16.mxu0 %v683
        %2255 = vmatmul.mubr.bf16.gmra.mrb[0].mxu0 %v669
        %v2256 = vpop.f32.mrb[0].mxu0
        %v2257 = vadd.f32 %v2216, %v2256
        %v2258 = vpop.f32.mrb[0].mxu0
        %v2259 = vadd.f32 %v2218, %v2258
        %v2260 = vpop.f32.mrb[0].mxu0
        %v2261 = vpop.f32.mrb[0].mxu0
        %2262 = vdwg.mxu0
        %2263 = vmatprep.subr.bf16.mxu0 %v1659
        %2264 = vmatpush1.bf16.msra.mxu0 %v1658
        %2265 = vmatprep.subr.bf16.mxu0 %v1663
        %2266 = vmatpush1.bf16.msra.mxu0 %v1662
        %2267 = vmatprep.subr.bf16.mxu0 %v1667
        %2268 = vmatpush1.bf16.msra.mxu0 %v1666
        %2269 = vmatprep.subr.bf16.mxu0 %v1671
        %2270 = vmatpush1.bf16.msra.mxu0 %v1670
        %2271 = vmatprep.subr.bf16.mxu0 %v1675
        %2272 = vmatpush1.bf16.msra.mxu0 %v1674
        %2273 = vmatprep.subr.bf16.mxu0 %v1679
        %2274 = vmatpush1.bf16.msra.mxu0 %v1678
        %2275 = vmatprep.subr.bf16.mxu0 %v1683
        %2276 = vmatpush1.bf16.msra.mxu0 %v1682
        %2277 = vmatprep.subr.bf16.mxu0 %v1687
        %2278 = vmatpush1.bf16.msra.mxu0 %v1686
        %2279 = vmatprep.subr.bf16.mxu0 %v1691
        %2280 = vmatpush1.bf16.msra.mxu0 %v1690
        %2281 = vmatprep.subr.bf16.mxu0 %v1695
        %2282 = vmatpush1.bf16.msra.mxu0 %v1694
        %2283 = vmatprep.subr.bf16.mxu0 %v1699
        %2284 = vmatpush1.bf16.msra.mxu0 %v1698
        %2285 = vmatprep.subr.bf16.mxu0 %v1703
        %2286 = vmatpush1.bf16.msra.mxu0 %v1702
        %2287 = vmatprep.subr.bf16.mxu0 %v1707
        %2288 = vmatpush1.bf16.msra.mxu0 %v1706
        %2289 = vmatprep.subr.bf16.mxu0 %v1711
        %2290 = vmatpush1.bf16.msra.mxu0 %v1710
        %2291 = vmatprep.subr.bf16.mxu0 %v1715
        %2292 = vmatpush1.bf16.msra.mxu0 %v1714
        %2293 = vmatprep.subr.bf16.mxu0 %v1719
        %2294 = vmatpush1.bf16.msra.mxu0 %v1718
        %2295 = vmatprep.mubr.bf16.mxu0 %v687
        %2296 = vmatmul.mubr.bf16.gmra.mrb[0].mxu0 %v685
        %v2297 = vpop.f32.mrb[0].mxu0
        %v2298 = vadd.f32 %v2257, %v2297
        %v2299 = vpop.f32.mrb[0].mxu0
        %v2300 = vadd.f32 %v2259, %v2299
        %v2301 = vpop.f32.mrb[0].mxu0
        %v2302 = vpop.f32.mrb[0].mxu0
        %2303 = vdwg.mxu0
        %vm2304 = vcmask 1041408
        %v2305 = vsel %vm2304, %v2134, 0.0
        %v2306 = vrot.slane %v2305, 4
        %v2307 = vadd.f32 %v2305, %v2306
        %v2308 = vrot.slane %v2307, 2
        %v2309 = vadd.f32 %v2307, %v2308
        %v2310 = vrot.slane %v2309, 1
        %v2311 = vadd.f32 %v2309, %v2310
        %v2312 = vsel %vm2304, %v2136, 0.0
        %v2313 = vrot.slane %v2312, 4
        %v2314 = vadd.f32 %v2312, %v2313
        %v2315 = vrot.slane %v2314, 2
        %v2316 = vadd.f32 %v2314, %v2315
        %v2317 = vrot.slane %v2316, 1
        %v2318 = vadd.f32 %v2316, %v2317
        %v2319 = vsel %vm2304, %v2298, 0.0
        %v2320 = vrot.slane %v2319, 4
        %v2321 = vadd.f32 %v2319, %v2320
        %v2322 = vrot.slane %v2321, 2
        %v2323 = vadd.f32 %v2321, %v2322
        %v2324 = vrot.slane %v2323, 1
        %v2325 = vadd.f32 %v2323, %v2324
        %v2326 = vsel %vm2304, %v2300, 0.0
        %v2327 = vrot.slane %v2326, 4
        %v2328 = vadd.f32 %v2326, %v2327
        %v2329 = vrot.slane %v2328, 2
        %v2330 = vadd.f32 %v2328, %v2329
        %v2331 = vrot.slane %v2330, 1
        %v2332 = vadd.f32 %v2330, %v2331
        %v2333 = vrcp.pop 2.0
        %v2334 = vmul.f32 %v2311, %v2333
        %v2335 = vmul.f32 %v2318, %v2333
        %v2336 = vmul.f32 %v2325, %v2333
        %v2337 = vmul.f32 %v2332, %v2333
        %v2338 = vsub.f32 %v2134, %v2334
        %v2339 = vsub.f32 %v2136, %v2335
        %v2340 = vsub.f32 %v2298, %v2336
        %v2341 = vsub.f32 %v2300, %v2337
        %v2342 = vmul.f32 %v2338, %v2338
        %v2343 = vmul.f32 %v2339, %v2339
        %v2344 = vmul.f32 %v2340, %v2340
        %v2345 = vmul.f32 %v2341, %v2341
        %v2346 = vsel %vm2304, %v2342, 0.0
        %v2347 = vrot.slane %v2346, 4
        %v2348 = vadd.f32 %v2346, %v2347
        %v2349 = vrot.slane %v2348, 2
        %v2350 = vadd.f32 %v2348, %v2349
        %v2351 = vrot.slane %v2350, 1
        %v2352 = vadd.f32 %v2350, %v2351
        %v2353 = vsel %vm2304, %v2343, 0.0
        %v2354 = vrot.slane %v2353, 4
        %v2355 = vadd.f32 %v2353, %v2354
        %v2356 = vrot.slane %v2355, 2
        %v2357 = vadd.f32 %v2355, %v2356
        %v2358 = vrot.slane %v2357, 1
        %v2359 = vadd.f32 %v2357, %v2358
        %v2360 = vsel %vm2304, %v2344, 0.0
        %v2361 = vrot.slane %v2360, 4
        %v2362 = vadd.f32 %v2360, %v2361
        %v2363 = vrot.slane %v2362, 2
        %v2364 = vadd.f32 %v2362, %v2363
        %v2365 = vrot.slane %v2364, 1
        %v2366 = vadd.f32 %v2364, %v2365
        %v2367 = vsel %vm2304, %v2345, 0.0
        %v2368 = vrot.slane %v2367, 4
        %v2369 = vadd.f32 %v2367, %v2368
        %v2370 = vrot.slane %v2369, 2
        %v2371 = vadd.f32 %v2369, %v2370
        %v2372 = vrot.slane %v2371, 1
        %v2373 = vadd.f32 %v2371, %v2372
        %v2374 = vmul.f32 %v2352, %v2333
        %v2375 = vmul.f32 %v2359, %v2333
        %v2376 = vmul.f32 %v2366, %v2333
        %v2377 = vmul.f32 %v2373, %v2333
        %v2378 = vadd.f32 %v2374, 0.8
        %v2379 = vadd.f32 %v2375, 0.8
        %v2380 = vadd.f32 %v2376, 0.8
        %v2381 = vadd.f32 %v2377, 0.8
        %v2382 = vrsqrt.pop %v2378
        %v2383 = vrsqrt.pop %v2379
        %v2384 = vrsqrt.pop %v2380
        %v2385 = vrsqrt.pop %v2381
        %v2386 = vmul.f32 %v2338, %v2382
        %v2387 = vmul.f32 %v2339, %v2383
        %v2388 = vmul.f32 %v2340, %v2384
        %v2389 = vmul.f32 %v2341, %v2385
        %v2390 = vld [vmem:[%s300] sm:$0xf]
        %v2392 = vlaneseq
        %v2393 = vshrl.u32 %v2392, 7
        %v2394 = vsub.s32 0, %v2393
        %v2395 = vrot.slane %v2390, %v2394
        %v2396 = vlaneseq
        %v2397 = vshrl.u32 %v2396, 7
        %v2398 = vsub.s32 1, %v2397
        %v2399 = vrot.slane %v2390, %v2398
        %v2400 = vlaneseq
        %v2401 = vshrl.u32 %v2400, 7
        %v2402 = vsub.s32 2, %v2401
        %v2403 = vrot.slane %v2390, %v2402
        %v2404 = vlaneseq
        %v2405 = vshrl.u32 %v2404, 7
        %v2406 = vsub.s32 3, %v2405
        %v2407 = vrot.slane %v2390, %v2406
        %v2412 = vmul.f32 %v2386, %v2395
        %v2413 = vmul.f32 %v2387, %v2399
        %v2414 = vmul.f32 %v2388, %v2403
        %v2415 = vmul.f32 %v2389, %v2407
        %v2416 = vld [vmem:[%s309] sm:$0xf]
        %v2418 = vlaneseq
        %v2419 = vshrl.u32 %v2418, 7
        %v2420 = vsub.s32 0, %v2419
        %v2421 = vrot.slane %v2416, %v2420
        %v2422 = vlaneseq
        %v2423 = vshrl.u32 %v2422, 7
        %v2424 = vsub.s32 1, %v2423
        %v2425 = vrot.slane %v2416, %v2424
        %v2426 = vlaneseq
        %v2427 = vshrl.u32 %v2426, 7
        %v2428 = vsub.s32 2, %v2427
        %v2429 = vrot.slane %v2416, %v2428
        %v2430 = vlaneseq
        %v2431 = vshrl.u32 %v2430, 7
        %v2432 = vsub.s32 3, %v2431
        %v2433 = vrot.slane %v2416, %v2432
        %v2438 = vadd.f32 %v2412, %v2421
        %v2439 = vadd.f32 %v2413, %v2425
        %v2440 = vadd.f32 %v2414, %v2429
        %v2441 = vadd.f32 %v2415, %v2433
        %vm2442 = vcmp.ge.f32.partialorder %v2438, 0.0
        %vm2443 = vcmp.ge.f32.partialorder %v2439, 0.0
        %vm2444 = vcmp.ge.f32.partialorder %v2440, 0.0
        %vm2445 = vcmp.ge.f32.partialorder %v2441, 0.0
        %v2446 = vmul.f32 %v2438, 0.2
        %v2447 = vmul.f32 %v2439, 0.2
        %v2448 = vmul.f32 %v2440, 0.2
        %v2449 = vmul.f32 %v2441, 0.2
        %v2450 = vsel %vm2442, %v2438, %v2446
        %v2451 = vsel %vm2443, %v2439, %v2447
        %v2452 = vsel %vm2444, %v2440, %v2448
        %v2453 = vsel %vm2445, %v2441, %v2449
        %v2454 = vpack.c.bf16 %v2450, %v2450
        %v2455 = vpack.c.bf16 %v2451, %v2451
        %v2456 = vpack.c.bf16 %v2452, %v2452
        %v2457 = vpack.c.bf16 %v2453, %v2453
        %v2462 = vcombine.low %v2454, %v2455
        %v2463 = vcombine.low %v2456, %v2457
        %v2465 = vunpack.c.l.s4 1966171168
        %v2466 = vunpack.c.0.s8 %v2465
        %v2467 = vlaneseq
        %v2468 = vshrl.u32 %v2467, 7
        %v2469 = vsub.s32 %v2466, %v2468
        %v2470 = vrot.slane %v2462, %v2469
        %v2472 = vunpack.c.l.s4 1966171168
        %v2473 = vunpack.c.0.s8 %v2472
        %v2474 = vlaneseq
        %v2475 = vshrl.u32 %v2474, 7
        %v2476 = vsub.s32 %v2473, %v2475
        %v2477 = vrot.slane %v2463, %v2476
        %v2478 = vcombine.low %v2470, %v2477
        %v2480 = vunpack.c.l.s4 1966171168
        %v2481 = vunpack.c.0.s8 %v2480
        %v2482 = vlaneseq
        %v2483 = vshrl.u32 %v2482, 7
        %v2484 = vsub.s32 %v2481, %v2483
        %v2485 = vrot.slane %v2478, %v2484
        %2487 = vst [vmem:[%s357] sm:$0xf] %v2485
        %s2488 = smul.u32 4, %s25
        %p2489 = scmp.lt.s32.totalorder %s2488, 15
        %s2490 = scalar_select %p2489, %s2488, 15
        %s2491 = scalar_lea.vmem %s5, %s2490
        // Predicated region
        $region57: #{generator_forward.8} parent=39 // pred_check
          %p2492 = pneg %p168
        $region58: #{generator_forward.8} parent=39 // pred_check_branch
          %2494 = sbr.rel (%p2492) target = $region60
        $region59: #{generator_forward.8} parent=39 // pred_region
          %s2495 = smul.u32 4, %s25
        $region60: #{generator_forward.8} parent=39 // pred_fallthru
          _
      $region40: #{generator_forward.8} parent=5 // pred_fallthru
        _
      %p2496 = scmp.le.s32.totalorder 2, %s20
      // Predicated region
      $region61: #{generator_forward.8} parent=5 // pred_check
        %p2497 = pneg %p2496
      $region62: #{generator_forward.8} parent=5 // pred_check_branch
        %2499 = sbr.rel (%p2497) target = $region64
      $region63: #{generator_forward.8} parent=5 // pred_region
        %s2500 = ssub.s32 %s20, 2
        // Predicated region
        $region65: #{generator_forward.8} parent=63 // pred_check
          %p2501 = pneg %p174
        $region66: #{generator_forward.8} parent=63 // pred_check_branch
          %2503 = sbr.rel (%p2501) target = $region68
        $region67: #{generator_forward.8} parent=63 // pred_region
          %s2504 = smul.u32 4, %s26
          %p2505 = scmp.lt.s32.totalorder %s2504, 15
          %s2506 = scalar_select %p2505, %s2504, 15
          %s2507 = scalar_lea.vmem %s5, %s2506
        $region68: #{generator_forward.8} parent=63 // pred_fallthru
          _
      $region64: #{generator_forward.8} parent=5 // pred_fallthru
        _
    $region6: #{generator_forward.8} parent=1 // loop_footer
      %s24 = sadd.s32 1, %s20
    $region7: #{generator_forward.8} parent=1 // loop_footer_branch
      %19 = sbr.rel target = $region3
    $region8: #{generator_forward.8} parent=1 // loop_exit
      _
    %2508 = vsyncpa [#allocation3], 1
    %s2509 = scalar_lea.sflag [#allocation3], 1
    %2510 = vsyncpa %s2509, 1
    %2511 = vsyncpa [#allocation5], 1
    %s2512 = scalar_lea.sflag [#allocation5], 1
    %2513 = vsyncpa %s2512, 1
    %2514 = vsyncpa [#allocation8], 1
    %s2515 = scalar_lea.sflag [#allocation8], 1
    %2516 = vsyncpa %s2515, 1

// kernel: generator_forward.9
$region0: #{generator_forward.9}
  #allocation0 [shape = 'u32[]', space=smem, size = 0x4, offset = 0x4, fixed_abs, tag = 'smem constant byte address 0x4 - core index']
  #allocation1 [shape = 'u32[144,128]{1,0:T(1,128)}', space=vmem, size = 0x12000, scoped, tag = 'internal scratch']
  %s0 = inlined_call_operand.vmem [shape: bf16[2,2048], index: 0, kind: input, shape index: {}]
  %s1 = inlined_call_operand.vmem [shape: bf16[2048,1024], index: 1, kind: input, shape index: {}]
  %s2 = inlined_call_operand.vmem [shape: f32[1,1024], index: 2, kind: input, shape index: {}]
  %s3 = inlined_call_operand.vmem [shape: f32[2,1024], index: 3, kind: output, shape index: {}]
  %s4 = sld [smem:[#allocation0]]
  $region68: #{generator_forward.9} parent=0
    _
  %s6 = ssub.s32 1, %s4
  %s7 = scalar_select 0, %s6, %s4
  $region1: #{generator_forward.9} parent=0
    #allocation2 [shape = 'u8[4194304]{0}', space=vmem, size = 0x400000, scoped, tag = 'input window, operand 1']
    loop: start=0, step=1, limit=4
    $region2: #{generator_forward.9} parent=1 // loop_pre_header
      _
    $region3: #{generator_forward.9} parent=1 // loop_header
      %s9 = sphi 0, %s13
      %p10 = scmp.ge.s32.totalorder %s9, 4
      %s17 = sphi 0, %s17
      %s19 = sphi 0, %s17
      %s20 = sphi 0, %s19
      %s34 = sphi 0, %s20
      %s40 = sphi 0, %s42
      %s43 = sphi 0, %s40
      %s44 = sphi 0, %s43
      %s60 = sphi 0, %s44
      %s66 = sphi 0, %s68
      %s69 = sphi 0, %s66
      %s70 = sphi 0, %s69
      %s86 = sphi 0, %s70
      %s92 = sphi 0, %s94
      %s95 = sphi 0, %s92
      %s96 = sphi 0, %s95
      %s112 = sphi 0, %s96
    $region4: #{generator_forward.9} parent=1 // loop_header_branch
      %12 = sbr.rel (%p10) target = $region8
    $region5: #{generator_forward.9} parent=1 // loop_body
      %s14 = ssub.s32 %s9, 1
      %s15 = ssub.s32 %s9, 2
      %s16 = sadd.s32 %s9, 1
      %s18 = sadd.s32 %s17, 1
      %p21 = scmp.eq.s32.totalorder %s9, 1
      %p22 = scmp.ne.s32.totalorder %s17, %s19
      %p23 = scmp.eq.s32.totalorder %s9, 0
      %p24 = por %p22, %p23
      %p25 = scmp.ne.s32.totalorder %s17, %s19
      %p26 = scmp.eq.s32.totalorder %s14, 1
      %p27 = por %p25, %p26
      %p28 = scmp.ne.s32.totalorder %s19, %s20
      %p29 = scmp.eq.s32.totalorder %s14, 0
      %p30 = por %p28, %p29
      %p31 = scmp.ne.s32.totalorder %s19, %s20
      %p32 = scmp.eq.s32.totalorder %s15, 1
      %p33 = por %p31, %p32
      %p35 = scmp.ne.s32.totalorder %s20, %s34
      %p36 = scmp.eq.s32.totalorder %s15, 0
      %p37 = por %p35, %p36
      %s38 = ssub.s32 %s9, %s16
      %p39 = scmp.eq.s32.totalorder %s38, 0
      %s41 = sadd.s32 %s40, 1
      %s42 = scalar_select %p39, %s40, %s41
      %p45 = pneg %p39
      %p46 = scmp.eq.s32.totalorder %s9, 1
      %p47 = por %p45, %p46
      %p48 = scmp.ne.s32.totalorder %s40, %s43
      %p49 = scmp.eq.s32.totalorder %s9, 0
      %p50 = por %p48, %p49
      %p51 = scmp.ne.s32.totalorder %s40, %s43
      %p52 = scmp.eq.s32.totalorder %s14, 1
      %p53 = por %p51, %p52
      %p54 = scmp.ne.s32.totalorder %s43, %s44
      %p55 = scmp.eq.s32.totalorder %s14, 0
      %p56 = por %p54, %p55
      %p57 = scmp.ne.s32.totalorder %s43, %s44
      %p58 = scmp.eq.s32.totalorder %s15, 1
      %p59 = por %p57, %p58
      %p61 = scmp.ne.s32.totalorder %s44, %s60
      %p62 = scmp.eq.s32.totalorder %s15, 0
      %p63 = por %p61, %p62
      %s64 = ssub.s32 %s9, %s16
      %p65 = scmp.eq.s32.totalorder %s64, 0
      %s67 = sadd.s32 %s66, 1
      %s68 = scalar_select %p65, %s66, %s67
      %p71 = pneg %p65
      %p72 = scmp.eq.s32.totalorder %s9, 1
      %p73 = por %p71, %p72
      %p74 = scmp.ne.s32.totalorder %s66, %s69
      %p75 = scmp.eq.s32.totalorder %s9, 0
      %p76 = por %p74, %p75
      %p77 = scmp.ne.s32.totalorder %s66, %s69
      %p78 = scmp.eq.s32.totalorder %s14, 1
      %p79 = por %p77, %p78
      %p80 = scmp.ne.s32.totalorder %s69, %s70
      %p81 = scmp.eq.s32.totalorder %s14, 0
      %p82 = por %p80, %p81
      %p83 = scmp.ne.s32.totalorder %s69, %s70
      %p84 = scmp.eq.s32.totalorder %s15, 1
      %p85 = por %p83, %p84
      %p87 = scmp.ne.s32.totalorder %s70, %s86
      %p88 = scmp.eq.s32.totalorder %s15, 0
      %p89 = por %p87, %p88
      %s90 = ssub.s32 %s9, %s16
      %p91 = scmp.eq.s32.totalorder %s90, 0
      %s93 = sadd.s32 %s92, 1
      %s94 = scalar_select %p91, %s92, %s93
      %p97 = pneg %p91
      %p98 = scmp.eq.s32.totalorder %s9, 1
      %p99 = por %p97, %p98
      %p100 = scmp.ne.s32.totalorder %s92, %s95
      %p101 = scmp.eq.s32.totalorder %s9, 0
      %p102 = por %p100, %p101
      %p103 = scmp.ne.s32.totalorder %s92, %s95
      %p104 = scmp.eq.s32.totalorder %s14, 1
      %p105 = por %p103, %p104
      %p106 = scmp.ne.s32.totalorder %s95, %s96
      %p107 = scmp.eq.s32.totalorder %s14, 0
      %p108 = por %p106, %p107
      %p109 = scmp.ne.s32.totalorder %s95, %s96
      %p110 = scmp.eq.s32.totalorder %s15, 1
      %p111 = por %p109, %p110
      %p113 = scmp.ne.s32.totalorder %s96, %s112
      %p114 = scmp.eq.s32.totalorder %s15, 0
      %p115 = por %p113, %p114
      %p116 = scmp.le.s32.totalorder 1, %s9
      %p117 = scmp.lt.s32.totalorder %s9, 3
      %p118 = pnand %p116, %p117
      %p119 = pneg %p118
      // Predicated region
      $region9: #{generator_forward.9} parent=5 // pred_check
        _
      $region10: #{generator_forward.9} parent=5 // pred_check_branch
        %121 = sbr.rel (%p118) target = $region12
      $region11: #{generator_forward.9} parent=5 // pred_region
        %s122 = ssub.s32 %s9, 1
        // Predicated region
        $region13: #{generator_forward.9} parent=11 // pred_check
          %p123 = pneg %p30
        $region14: #{generator_forward.9} parent=11 // pred_check_branch
          %125 = sbr.rel (%p123) target = $region16
        $region15: #{generator_forward.9} parent=11 // pred_region
          _
        $region16: #{generator_forward.9} parent=11 // pred_fallthru
          _
      $region12: #{generator_forward.9} parent=5 // pred_fallthru
        _
      %p126 = scmp.lt.s32.totalorder %s9, 2
      // Predicated region
      $region17: #{generator_forward.9} parent=5 // pred_check
        %p127 = pneg %p126
      $region18: #{generator_forward.9} parent=5 // pred_check_branch
        %129 = sbr.rel (%p127) target = $region20
      $region19: #{generator_forward.9} parent=5 // pred_region
        // Predicated region
        $region21: #{generator_forward.9} parent=19 // pred_check
          %p130 = pneg %p50
        $region22: #{generator_forward.9} parent=19 // pred_check_branch
          %132 = sbr.rel (%p130) target = $region24
        $region23: #{generator_forward.9} parent=19 // pred_region
          %s133 = sand.u32 %s40, 1
          %s134 = sand.u32 %s40, 1
          %s135 = smul.addr %s134, 4096
          %s136 = scalar_lea.vmem [#allocation2], %s135
          %s137 = smul.u32 4, %s9
          %s138 = smul.addr %s137, 4
          %s139 = scalar_lea.vmem %s1, %s138
          // Predicated region
          $region25: #{generator_forward.9} parent=23 // pred_check
            _
          $region26: #{generator_forward.9} parent=23 // pred_check_branch
            %141 = sbr.rel (0) target = $region28
          $region27: #{generator_forward.9} parent=23 // pred_region
            // Predicated region
            $region29: #{generator_forward.9} parent=27 // pred_check
              _
            $region30: #{generator_forward.9} parent=27 // pred_check_branch
              %143 = sbr.rel (0) target = $region32
            $region31: #{generator_forward.9} parent=27 // pred_region
              loop: start=0, step=1, limit=1
              $region33: #{generator_forward.9} parent=31 // loop_pre_header
                _
              $region34: #{generator_forward.9} parent=31 // loop_header
                %s145 = sphi 0, %s149
                %p146 = scmp.ge.s32.totalorder %s145, 1
                %s150 = sphi %s139, %s139
                %s151 = sphi %s136, %s136
              $region35: #{generator_forward.9} parent=31 // loop_header_branch
                %148 = sbr.rel (%p146) target = $region39
              $region36: #{generator_forward.9} parent=31 // loop_body
                %v152 = vld [vmem:[%s150] sm:$0xff]
                %153 = vst [vmem:[%s151] sm:$0xff] %v152
                %v154 = vld [vmem:[%s150 + $0x8] sm:$0xff]
                %155 = vst [vmem:[%s151 + $0x8] sm:$0xff] %v154
                %v156 = vld [vmem:[%s150 + $0x20] sm:$0xff]
                %157 = vst [vmem:[%s151 + $0x10] sm:$0xff] %v156
                %v158 = vld [vmem:[%s150 + $0x28] sm:$0xff]
                %159 = vst [vmem:[%s151 + $0x18] sm:$0xff] %v158
                %v160 = vld [vmem:[%s150 + $0x40] sm:$0xff]
                %161 = vst [vmem:[%s151 + $0x20] sm:$0xff] %v160
                %v162 = vld [vmem:[%s150 + $0x48] sm:$0xff]
                %163 = vst [vmem:[%s151 + $0x28] sm:$0xff] %v162
                %v164 = vld [vmem:[%s150 + $0x60] sm:$0xff]
                %165 = vst [vmem:[%s151 + $0x30] sm:$0xff] %v164
                %v166 = vld [vmem:[%s150 + $0x68] sm:$0xff]
                %167 = vst [vmem:[%s151 + $0x38] sm:$0xff] %v166
                %v168 = vld [vmem:[%s150 + $0x80] sm:$0xff]
                %169 = vst [vmem:[%s151 + $0x40] sm:$0xff] %v168
                %v170 = vld [vmem:[%s150 + $0x88] sm:$0xff]
                %171 = vst [vmem:[%s151 + $0x48] sm:$0xff] %v170
                %v172 = vld [vmem:[%s150 + $0xa0] sm:$0xff]
                %173 = vst [vmem:[%s151 + $0x50] sm:$0xff] %v172
                %v174 = vld [vmem:[%s150 + $0xa8] sm:$0xff]
                %175 = vst [vmem:[%s151 + $0x58] sm:$0xff] %v174
                %v176 = vld [vmem:[%s150 + $0xc0] sm:$0xff]
                %177 = vst [vmem:[%s151 + $0x60] sm:$0xff] %v176
                %v178 = vld [vmem:[%s150 + $0xc8] sm:$0xff]
                %179 = vst [vmem:[%s151 + $0x68] sm:$0xff] %v178
                %v180 = vld [vmem:[%s150 + $0xe0] sm:$0xff]
                %181 = vst [vmem:[%s151 + $0x70] sm:$0xff] %v180
                %v182 = vld [vmem:[%s150 + $0xe8] sm:$0xff]
                %183 = vst [vmem:[%s151 + $0x78] sm:$0xff] %v182
                %v184 = vld [vmem:[%s150 + $0x100] sm:$0xff]
                %185 = vst [vmem:[%s151 + $0x80] sm:$0xff] %v184
                %v186 = vld [vmem:[%s150 + $0x108] sm:$0xff]
                %187 = vst [vmem:[%s151 + $0x88] sm:$0xff] %v186
                %v188 = vld [vmem:[%s150 + $0x120] sm:$0xff]
                %189 = vst [vmem:[%s151 + $0x90] sm:$0xff] %v188
                %v190 = vld [vmem:[%s150 + $0x128] sm:$0xff]
                %191 = vst [vmem:[%s151 + $0x98] sm:$0xff] %v190
                %v192 = vld [vmem:[%s150 + $0x140] sm:$0xff]
                %193 = vst [vmem:[%s151 + $0xa0] sm:$0xff] %v192
                %v194 = vld [vmem:[%s150 + $0x148] sm:$0xff]
                %195 = vst [vmem:[%s151 + $0xa8] sm:$0xff] %v194
                %v196 = vld [vmem:[%s150 + $0x160] sm:$0xff]
                %197 = vst [vmem:[%s151 + $0xb0] sm:$0xff] %v196
                %v198 = vld [vmem:[%s150 + $0x168] sm:$0xff]
                %199 = vst [vmem:[%s151 + $0xb8] sm:$0xff] %v198
                %v200 = vld [vmem:[%s150 + $0x180] sm:$0xff]
                %201 = vst [vmem:[%s151 + $0xc0] sm:$0xff] %v200
                %v202 = vld [vmem:[%s150 + $0x188] sm:$0xff]
                %203 = vst [vmem:[%s151 + $0xc8] sm:$0xff] %v202
                %v204 = vld [vmem:[%s150 + $0x1a0] sm:$0xff]
                %205 = vst [vmem:[%s151 + $0xd0] sm:$0xff] %v204
                %v206 = vld [vmem:[%s150 + $0x1a8] sm:$0xff]
                %207 = vst [vmem:[%s151 + $0xd8] sm:$0xff] %v206
                %v208 = vld [vmem:[%s150 + $0x1c0] sm:$0xff]
                %209 = vst [vmem:[%s151 + $0xe0] sm:$0xff] %v208
                %v210 = vld [vmem:[%s150 + $0x1c8] sm:$0xff]
                %211 = vst [vmem:[%s151 + $0xe8] sm:$0xff] %v210
                %v212 = vld [vmem:[%s150 + $0x1e0] sm:$0xff]
                %213 = vst [vmem:[%s151 + $0xf0] sm:$0xff] %v212
                %v214 = vld [vmem:[%s150 + $0x1e8] sm:$0xff]
                %215 = vst [vmem:[%s151 + $0xf8] sm:$0xff] %v214
                %v216 = vld [vmem:[%s150 + $0x200] sm:$0xff]
                %217 = vst [vmem:[%s151 + $0x100] sm:$0xff] %v216
                %v218 = vld [vmem:[%s150 + $0x208] sm:$0xff]
                %219 = vst [vmem:[%s151 + $0x108] sm:$0xff] %v218
                %v220 = vld [vmem:[%s150 + $0x220] sm:$0xff]
                %221 = vst [vmem:[%s151 + $0x110] sm:$0xff] %v220
                %v222 = vld [vmem:[%s150 + $0x228] sm:$0xff]
                %223 = vst [vmem:[%s151 + $0x118] sm:$0xff] %v222
                %v224 = vld [vmem:[%s150 + $0x240] sm:$0xff]
                %225 = vst [vmem:[%s151 + $0x120] sm:$0xff] %v224
                %v226 = vld [vmem:[%s150 + $0x248] sm:$0xff]
                %227 = vst [vmem:[%s151 + $0x128] sm:$0xff] %v226
                %v228 = vld [vmem:[%s150 + $0x260] sm:$0xff]
                %229 = vst [vmem:[%s151 + $0x130] sm:$0xff] %v228
                %v230 = vld [vmem:[%s150 + $0x268] sm:$0xff]
                %231 = vst [vmem:[%s151 + $0x138] sm:$0xff] %v230
                %v232 = vld [vmem:[%s150 + $0x280] sm:$0xff]
                %233 = vst [vmem:[%s151 + $0x140] sm:$0xff] %v232
                %v234 = vld [vmem:[%s150 + $0x288] sm:$0xff]
                %235 = vst [vmem:[%s151 + $0x148] sm:$0xff] %v234
                %v236 = vld [vmem:[%s150 + $0x2a0] sm:$0xff]
                %237 = vst [vmem:[%s151 + $0x150] sm:$0xff] %v236
                %v238 = vld [vmem:[%s150 + $0x2a8] sm:$0xff]
                %239 = vst [vmem:[%s151 + $0x158] sm:$0xff] %v238
                %v240 = vld [vmem:[%s150 + $0x2c0] sm:$0xff]
                %241 = vst [vmem:[%s151 + $0x160] sm:$0xff] %v240
                %v242 = vld [vmem:[%s150 + $0x2c8] sm:$0xff]
                %243 = vst [vmem:[%s151 + $0x168] sm:$0xff] %v242
                %v244 = vld [vmem:[%s150 + $0x2e0] sm:$0xff]
                %245 = vst [vmem:[%s151 + $0x170] sm:$0xff] %v244
                %v246 = vld [vmem:[%s150 + $0x2e8] sm:$0xff]
                %247 = vst [vmem:[%s151 + $0x178] sm:$0xff] %v246
                %v248 = vld [vmem:[%s150 + $0x300] sm:$0xff]
                %249 = vst [vmem:[%s151 + $0x180] sm:$0xff] %v248
                %v250 = vld [vmem:[%s150 + $0x308] sm:$0xff]
                %251 = vst [vmem:[%s151 + $0x188] sm:$0xff] %v250
                %v252 = vld [vmem:[%s150 + $0x320] sm:$0xff]
                %253 = vst [vmem:[%s151 + $0x190] sm:$0xff] %v252
                %v254 = vld [vmem:[%s150 + $0x328] sm:$0xff]
                %255 = vst [vmem:[%s151 + $0x198] sm:$0xff] %v254
                %v256 = vld [vmem:[%s150 + $0x340] sm:$0xff]
                %257 = vst [vmem:[%s151 + $0x1a0] sm:$0xff] %v256
                %v258 = vld [vmem:[%s150 + $0x348] sm:$0xff]
                %259 = vst [vmem:[%s151 + $0x1a8] sm:$0xff] %v258
                %v260 = vld [vmem:[%s150 + $0x360] sm:$0xff]
                %261 = vst [vmem:[%s151 + $0x1b0] sm:$0xff] %v260
                %v262 = vld [vmem:[%s150 + $0x368] sm:$0xff]
                %263 = vst [vmem:[%s151 + $0x1b8] sm:$0xff] %v262
                %v264 = vld [vmem:[%s150 + $0x380] sm:$0xff]
                %265 = vst [vmem:[%s151 + $0x1c0] sm:$0xff] %v264
                %v266 = vld [vmem:[%s150 + $0x388] sm:$0xff]
                %267 = vst [vmem:[%s151 + $0x1c8] sm:$0xff] %v266
                %v268 = vld [vmem:[%s150 + $0x3a0] sm:$0xff]
                %269 = vst [vmem:[%s151 + $0x1d0] sm:$0xff] %v268
                %v270 = vld [vmem:[%s150 + $0x3a8] sm:$0xff]
                %271 = vst [vmem:[%s151 + $0x1d8] sm:$0xff] %v270
                %v272 = vld [vmem:[%s150 + $0x3c0] sm:$0xff]
                %273 = vst [vmem:[%s151 + $0x1e0] sm:$0xff] %v272
                %v274 = vld [vmem:[%s150 + $0x3c8] sm:$0xff]
                %275 = vst [vmem:[%s151 + $0x1e8] sm:$0xff] %v274
                %v276 = vld [vmem:[%s150 + $0x3e0] sm:$0xff]
                %277 = vst [vmem:[%s151 + $0x1f0] sm:$0xff] %v276
                %v278 = vld [vmem:[%s150 + $0x3e8] sm:$0xff]
                %279 = vst [vmem:[%s151 + $0x1f8] sm:$0xff] %v278
                %v280 = vld [vmem:[%s150 + $0x400] sm:$0xff]
                %281 = vst [vmem:[%s151 + $0x200] sm:$0xff] %v280
                %v282 = vld [vmem:[%s150 + $0x408] sm:$0xff]
                %283 = vst [vmem:[%s151 + $0x208] sm:$0xff] %v282
                %v284 = vld [vmem:[%s150 + $0x420] sm:$0xff]
                %285 = vst [vmem:[%s151 + $0x210] sm:$0xff] %v284
                %v286 = vld [vmem:[%s150 + $0x428] sm:$0xff]
                %287 = vst [vmem:[%s151 + $0x218] sm:$0xff] %v286
                %v288 = vld [vmem:[%s150 + $0x440] sm:$0xff]
                %289 = vst [vmem:[%s151 + $0x220] sm:$0xff] %v288
                %v290 = vld [vmem:[%s150 + $0x448] sm:$0xff]
                %291 = vst [vmem:[%s151 + $0x228] sm:$0xff] %v290
                %v292 = vld [vmem:[%s150 + $0x460] sm:$0xff]
                %293 = vst [vmem:[%s151 + $0x230] sm:$0xff] %v292
                %v294 = vld [vmem:[%s150 + $0x468] sm:$0xff]
                %295 = vst [vmem:[%s151 + $0x238] sm:$0xff] %v294
                %v296 = vld [vmem:[%s150 + $0x480] sm:$0xff]
                %297 = vst [vmem:[%s151 + $0x240] sm:$0xff] %v296
                %v298 = vld [vmem:[%s150 + $0x488] sm:$0xff]
                %299 = vst [vmem:[%s151 + $0x248] sm:$0xff] %v298
                %v300 = vld [vmem:[%s150 + $0x4a0] sm:$0xff]
                %301 = vst [vmem:[%s151 + $0x250] sm:$0xff] %v300
                %v302 = vld [vmem:[%s150 + $0x4a8] sm:$0xff]
                %303 = vst [vmem:[%s151 + $0x258] sm:$0xff] %v302
                %v304 = vld [vmem:[%s150 + $0x4c0] sm:$0xff]
                %305 = vst [vmem:[%s151 + $0x260] sm:$0xff] %v304
                %v306 = vld [vmem:[%s150 + $0x4c8] sm:$0xff]
                %307 = vst [vmem:[%s151 + $0x268] sm:$0xff] %v306
                %v308 = vld [vmem:[%s150 + $0x4e0] sm:$0xff]
                %309 = vst [vmem:[%s151 + $0x270] sm:$0xff] %v308
                %v310 = vld [vmem:[%s150 + $0x4e8] sm:$0xff]
                %311 = vst [vmem:[%s151 + $0x278] sm:$0xff] %v310
                %v312 = vld [vmem:[%s150 + $0x500] sm:$0xff]
                %313 = vst [vmem:[%s151 + $0x280] sm:$0xff] %v312
                %v314 = vld [vmem:[%s150 + $0x508] sm:$0xff]
                %315 = vst [vmem:[%s151 + $0x288] sm:$0xff] %v314
                %v316 = vld [vmem:[%s150 + $0x520] sm:$0xff]
                %317 = vst [vmem:[%s151 + $0x290] sm:$0xff] %v316
                %v318 = vld [vmem:[%s150 + $0x528] sm:$0xff]
                %319 = vst [vmem:[%s151 + $0x298] sm:$0xff] %v318
                %v320 = vld [vmem:[%s150 + $0x540] sm:$0xff]
                %321 = vst [vmem:[%s151 + $0x2a0] sm:$0xff] %v320
                %v322 = vld [vmem:[%s150 + $0x548] sm:$0xff]
                %323 = vst [vmem:[%s151 + $0x2a8] sm:$0xff] %v322
                %v324 = vld [vmem:[%s150 + $0x560] sm:$0xff]
                %325 = vst [vmem:[%s151 + $0x2b0] sm:$0xff] %v324
                %v326 = vld [vmem:[%s150 + $0x568] sm:$0xff]
                %327 = vst [vmem:[%s151 + $0x2b8] sm:$0xff] %v326
                %v328 = vld [vmem:[%s150 + $0x580] sm:$0xff]
                %329 = vst [vmem:[%s151 + $0x2c0] sm:$0xff] %v328
                %v330 = vld [vmem:[%s150 + $0x588] sm:$0xff]
                %331 = vst [vmem:[%s151 + $0x2c8] sm:$0xff] %v330
                %v332 = vld [vmem:[%s150 + $0x5a0] sm:$0xff]
                %333 = vst [vmem:[%s151 + $0x2d0] sm:$0xff] %v332
                %v334 = vld [vmem:[%s150 + $0x5a8] sm:$0xff]
                %335 = vst [vmem:[%s151 + $0x2d8] sm:$0xff] %v334
                %v336 = vld [vmem:[%s150 + $0x5c0] sm:$0xff]
                %337 = vst [vmem:[%s151 + $0x2e0] sm:$0xff] %v336
                %v338 = vld [vmem:[%s150 + $0x5c8] sm:$0xff]
                %339 = vst [vmem:[%s151 + $0x2e8] sm:$0xff] %v338
                %v340 = vld [vmem:[%s150 + $0x5e0] sm:$0xff]
                %341 = vst [vmem:[%s151 + $0x2f0] sm:$0xff] %v340
                %v342 = vld [vmem:[%s150 + $0x5e8] sm:$0xff]
                %343 = vst [vmem:[%s151 + $0x2f8] sm:$0xff] %v342
                %v344 = vld [vmem:[%s150 + $0x600] sm:$0xff]
                %345 = vst [vmem:[%s151 + $0x300] sm:$0xff] %v344
                %v346 = vld [vmem:[%s150 + $0x608] sm:$0xff]
                %347 = vst [vmem:[%s151 + $0x308] sm:$0xff] %v346
                %v348 = vld [vmem:[%s150 + $0x620] sm:$0xff]
                %349 = vst [vmem:[%s151 + $0x310] sm:$0xff] %v348
                %v350 = vld [vmem:[%s150 + $0x628] sm:$0xff]
                %351 = vst [vmem:[%s151 + $0x318] sm:$0xff] %v350
                %v352 = vld [vmem:[%s150 + $0x640] sm:$0xff]
                %353 = vst [vmem:[%s151 + $0x320] sm:$0xff] %v352
                %v354 = vld [vmem:[%s150 + $0x648] sm:$0xff]
                %355 = vst [vmem:[%s151 + $0x328] sm:$0xff] %v354
                %v356 = vld [vmem:[%s150 + $0x660] sm:$0xff]
                %357 = vst [vmem:[%s151 + $0x330] sm:$0xff] %v356
                %v358 = vld [vmem:[%s150 + $0x668] sm:$0xff]
                %359 = vst [vmem:[%s151 + $0x338] sm:$0xff] %v358
                %v360 = vld [vmem:[%s150 + $0x680] sm:$0xff]
                %361 = vst [vmem:[%s151 + $0x340] sm:$0xff] %v360
                %v362 = vld [vmem:[%s150 + $0x688] sm:$0xff]
                %363 = vst [vmem:[%s151 + $0x348] sm:$0xff] %v362
                %v364 = vld [vmem:[%s150 + $0x6a0] sm:$0xff]
                %365 = vst [vmem:[%s151 + $0x350] sm:$0xff] %v364
                %v366 = vld [vmem:[%s150 + $0x6a8] sm:$0xff]
                %367 = vst [vmem:[%s151 + $0x358] sm:$0xff] %v366
                %v368 = vld [vmem:[%s150 + $0x6c0] sm:$0xff]
                %369 = vst [vmem:[%s151 + $0x360] sm:$0xff] %v368
                %v370 = vld [vmem:[%s150 + $0x6c8] sm:$0xff]
                %371 = vst [vmem:[%s151 + $0x368] sm:$0xff] %v370
                %v372 = vld [vmem:[%s150 + $0x6e0] sm:$0xff]
                %373 = vst [vmem:[%s151 + $0x370] sm:$0xff] %v372
                %v374 = vld [vmem:[%s150 + $0x6e8] sm:$0xff]
                %375 = vst [vmem:[%s151 + $0x378] sm:$0xff] %v374
                %v376 = vld [vmem:[%s150 + $0x700] sm:$0xff]
                %377 = vst [vmem:[%s151 + $0x380] sm:$0xff] %v376
                %v378 = vld [vmem:[%s150 + $0x708] sm:$0xff]
                %379 = vst [vmem:[%s151 + $0x388] sm:$0xff] %v378
                %v380 = vld [vmem:[%s150 + $0x720] sm:$0xff]
                %381 = vst [vmem:[%s151 + $0x390] sm:$0xff] %v380
                %v382 = vld [vmem:[%s150 + $0x728] sm:$0xff]
                %383 = vst [vmem:[%s151 + $0x398] sm:$0xff] %v382
                %v384 = vld [vmem:[%s150 + $0x740] sm:$0xff]
                %385 = vst [vmem:[%s151 + $0x3a0] sm:$0xff] %v384
                %v386 = vld [vmem:[%s150 + $0x748] sm:$0xff]
                %387 = vst [vmem:[%s151 + $0x3a8] sm:$0xff] %v386
                %v388 = vld [vmem:[%s150 + $0x760] sm:$0xff]
                %389 = vst [vmem:[%s151 + $0x3b0] sm:$0xff] %v388
                %v390 = vld [vmem:[%s150 + $0x768] sm:$0xff]
                %391 = vst [vmem:[%s151 + $0x3b8] sm:$0xff] %v390
                %v392 = vld [vmem:[%s150 + $0x780] sm:$0xff]
                %393 = vst [vmem:[%s151 + $0x3c0] sm:$0xff] %v392
                %v394 = vld [vmem:[%s150 + $0x788] sm:$0xff]
                %395 = vst [vmem:[%s151 + $0x3c8] sm:$0xff] %v394
                %v396 = vld [vmem:[%s150 + $0x7a0] sm:$0xff]
                %397 = vst [vmem:[%s151 + $0x3d0] sm:$0xff] %v396
                %v398 = vld [vmem:[%s150 + $0x7a8] sm:$0xff]
                %399 = vst [vmem:[%s151 + $0x3d8] sm:$0xff] %v398
                %v400 = vld [vmem:[%s150 + $0x7c0] sm:$0xff]
                %401 = vst [vmem:[%s151 + $0x3e0] sm:$0xff] %v400
                %v402 = vld [vmem:[%s150 + $0x7c8] sm:$0xff]
                %403 = vst [vmem:[%s151 + $0x3e8] sm:$0xff] %v402
                %v404 = vld [vmem:[%s150 + $0x7e0] sm:$0xff]
                %405 = vst [vmem:[%s151 + $0x3f0] sm:$0xff] %v404
                %v406 = vld [vmem:[%s150 + $0x7e8] sm:$0xff]
                %407 = vst [vmem:[%s151 + $0x3f8] sm:$0xff] %v406
                %v408 = vld [vmem:[%s150 + $0x800] sm:$0xff]
                %409 = vst [vmem:[%s151 + $0x400] sm:$0xff] %v408
                %v410 = vld [vmem:[%s150 + $0x808] sm:$0xff]
                %411 = vst [vmem:[%s151 + $0x408] sm:$0xff] %v410
                %v412 = vld [vmem:[%s150 + $0x820] sm:$0xff]
                %413 = vst [vmem:[%s151 + $0x410] sm:$0xff] %v412
                %v414 = vld [vmem:[%s150 + $0x828] sm:$0xff]
                %415 = vst [vmem:[%s151 + $0x418] sm:$0xff] %v414
                %v416 = vld [vmem:[%s150 + $0x840] sm:$0xff]
                %417 = vst [vmem:[%s151 + $0x420] sm:$0xff] %v416
                %v418 = vld [vmem:[%s150 + $0x848] sm:$0xff]
                %419 = vst [vmem:[%s151 + $0x428] sm:$0xff] %v418
                %v420 = vld [vmem:[%s150 + $0x860] sm:$0xff]
                %421 = vst [vmem:[%s151 + $0x430] sm:$0xff] %v420
                %v422 = vld [vmem:[%s150 + $0x868] sm:$0xff]
                %423 = vst [vmem:[%s151 + $0x438] sm:$0xff] %v422
                %v424 = vld [vmem:[%s150 + $0x880] sm:$0xff]
                %425 = vst [vmem:[%s151 + $0x440] sm:$0xff] %v424
                %v426 = vld [vmem:[%s150 + $0x888] sm:$0xff]
                %427 = vst [vmem:[%s151 + $0x448] sm:$0xff] %v426
                %v428 = vld [vmem:[%s150 + $0x8a0] sm:$0xff]
                %429 = vst [vmem:[%s151 + $0x450] sm:$0xff] %v428
                %v430 = vld [vmem:[%s150 + $0x8a8] sm:$0xff]
                %431 = vst [vmem:[%s151 + $0x458] sm:$0xff] %v430
                %v432 = vld [vmem:[%s150 + $0x8c0] sm:$0xff]
                %433 = vst [vmem:[%s151 + $0x460] sm:$0xff] %v432
                %v434 = vld [vmem:[%s150 + $0x8c8] sm:$0xff]
                %435 = vst [vmem:[%s151 + $0x468] sm:$0xff] %v434
                %v436 = vld [vmem:[%s150 + $0x8e0] sm:$0xff]
                %437 = vst [vmem:[%s151 + $0x470] sm:$0xff] %v436
                %v438 = vld [vmem:[%s150 + $0x8e8] sm:$0xff]
                %439 = vst [vmem:[%s151 + $0x478] sm:$0xff] %v438
                %v440 = vld [vmem:[%s150 + $0x900] sm:$0xff]
                %441 = vst [vmem:[%s151 + $0x480] sm:$0xff] %v440
                %v442 = vld [vmem:[%s150 + $0x908] sm:$0xff]
                %443 = vst [vmem:[%s151 + $0x488] sm:$0xff] %v442
                %v444 = vld [vmem:[%s150 + $0x920] sm:$0xff]
                %445 = vst [vmem:[%s151 + $0x490] sm:$0xff] %v444
                %v446 = vld [vmem:[%s150 + $0x928] sm:$0xff]
                %447 = vst [vmem:[%s151 + $0x498] sm:$0xff] %v446
                %v448 = vld [vmem:[%s150 + $0x940] sm:$0xff]
                %449 = vst [vmem:[%s151 + $0x4a0] sm:$0xff] %v448
                %v450 = vld [vmem:[%s150 + $0x948] sm:$0xff]
                %451 = vst [vmem:[%s151 + $0x4a8] sm:$0xff] %v450
                %v452 = vld [vmem:[%s150 + $0x960] sm:$0xff]
                %453 = vst [vmem:[%s151 + $0x4b0] sm:$0xff] %v452
                %v454 = vld [vmem:[%s150 + $0x968] sm:$0xff]
                %455 = vst [vmem:[%s151 + $0x4b8] sm:$0xff] %v454
                %v456 = vld [vmem:[%s150 + $0x980] sm:$0xff]
                %457 = vst [vmem:[%s151 + $0x4c0] sm:$0xff] %v456
                %v458 = vld [vmem:[%s150 + $0x988] sm:$0xff]
                %459 = vst [vmem:[%s151 + $0x4c8] sm:$0xff] %v458
                %v460 = vld [vmem:[%s150 + $0x9a0] sm:$0xff]
                %461 = vst [vmem:[%s151 + $0x4d0] sm:$0xff] %v460
                %v462 = vld [vmem:[%s150 + $0x9a8] sm:$0xff]
                %463 = vst [vmem:[%s151 + $0x4d8] sm:$0xff] %v462
                %v464 = vld [vmem:[%s150 + $0x9c0] sm:$0xff]
                %465 = vst [vmem:[%s151 + $0x4e0] sm:$0xff] %v464
                %v466 = vld [vmem:[%s150 + $0x9c8] sm:$0xff]
                %467 = vst [vmem:[%s151 + $0x4e8] sm:$0xff] %v466
                %v468 = vld [vmem:[%s150 + $0x9e0] sm:$0xff]
                %469 = vst [vmem:[%s151 + $0x4f0] sm:$0xff] %v468
                %v470 = vld [vmem:[%s150 + $0x9e8] sm:$0xff]
                %471 = vst [vmem:[%s151 + $0x4f8] sm:$0xff] %v470
                %v472 = vld [vmem:[%s150 + $0xa00] sm:$0xff]
                %473 = vst [vmem:[%s151 + $0x500] sm:$0xff] %v472
                %v474 = vld [vmem:[%s150 + $0xa08] sm:$0xff]
                %475 = vst [vmem:[%s151 + $0x508] sm:$0xff] %v474
                %v476 = vld [vmem:[%s150 + $0xa20] sm:$0xff]
                %477 = vst [vmem:[%s151 + $0x510] sm:$0xff] %v476
                %v478 = vld [vmem:[%s150 + $0xa28] sm:$0xff]
                %479 = vst [vmem:[%s151 + $0x518] sm:$0xff] %v478
                %v480 = vld [vmem:[%s150 + $0xa40] sm:$0xff]
                %481 = vst [vmem:[%s151 + $0x520] sm:$0xff] %v480
                %v482 = vld [vmem:[%s150 + $0xa48] sm:$0xff]
                %483 = vst [vmem:[%s151 + $0x528] sm:$0xff] %v482
                %v484 = vld [vmem:[%s150 + $0xa60] sm:$0xff]
                %485 = vst [vmem:[%s151 + $0x530] sm:$0xff] %v484
                %v486 = vld [vmem:[%s150 + $0xa68] sm:$0xff]
                %487 = vst [vmem:[%s151 + $0x538] sm:$0xff] %v486
                %v488 = vld [vmem:[%s150 + $0xa80] sm:$0xff]
                %489 = vst [vmem:[%s151 + $0x540] sm:$0xff] %v488
                %v490 = vld [vmem:[%s150 + $0xa88] sm:$0xff]
                %491 = vst [vmem:[%s151 + $0x548] sm:$0xff] %v490
                %v492 = vld [vmem:[%s150 + $0xaa0] sm:$0xff]
                %493 = vst [vmem:[%s151 + $0x550] sm:$0xff] %v492
                %v494 = vld [vmem:[%s150 + $0xaa8] sm:$0xff]
                %495 = vst [vmem:[%s151 + $0x558] sm:$0xff] %v494
                %v496 = vld [vmem:[%s150 + $0xac0] sm:$0xff]
                %497 = vst [vmem:[%s151 + $0x560] sm:$0xff] %v496
                %v498 = vld [vmem:[%s150 + $0xac8] sm:$0xff]
                %499 = vst [vmem:[%s151 + $0x568] sm:$0xff] %v498
                %v500 = vld [vmem:[%s150 + $0xae0] sm:$0xff]
                %501 = vst [vmem:[%s151 + $0x570] sm:$0xff] %v500
                %v502 = vld [vmem:[%s150 + $0xae8] sm:$0xff]
                %503 = vst [vmem:[%s151 + $0x578] sm:$0xff] %v502
                %v504 = vld [vmem:[%s150 + $0xb00] sm:$0xff]
                %505 = vst [vmem:[%s151 + $0x580] sm:$0xff] %v504
                %v506 = vld [vmem:[%s150 + $0xb08] sm:$0xff]
                %507 = vst [vmem:[%s151 + $0x588] sm:$0xff] %v506
                %v508 = vld [vmem:[%s150 + $0xb20] sm:$0xff]
                %509 = vst [vmem:[%s151 + $0x590] sm:$0xff] %v508
                %v510 = vld [vmem:[%s150 + $0xb28] sm:$0xff]
                %511 = vst [vmem:[%s151 + $0x598] sm:$0xff] %v510
                %v512 = vld [vmem:[%s150 + $0xb40] sm:$0xff]
                %513 = vst [vmem:[%s151 + $0x5a0] sm:$0xff] %v512
                %v514 = vld [vmem:[%s150 + $0xb48] sm:$0xff]
                %515 = vst [vmem:[%s151 + $0x5a8] sm:$0xff] %v514
                %v516 = vld [vmem:[%s150 + $0xb60] sm:$0xff]
                %517 = vst [vmem:[%s151 + $0x5b0] sm:$0xff] %v516
                %v518 = vld [vmem:[%s150 + $0xb68] sm:$0xff]
                %519 = vst [vmem:[%s151 + $0x5b8] sm:$0xff] %v518
                %v520 = vld [vmem:[%s150 + $0xb80] sm:$0xff]
                %521 = vst [vmem:[%s151 + $0x5c0] sm:$0xff] %v520
                %v522 = vld [vmem:[%s150 + $0xb88] sm:$0xff]
                %523 = vst [vmem:[%s151 + $0x5c8] sm:$0xff] %v522
                %v524 = vld [vmem:[%s150 + $0xba0] sm:$0xff]
                %525 = vst [vmem:[%s151 + $0x5d0] sm:$0xff] %v524
                %v526 = vld [vmem:[%s150 + $0xba8] sm:$0xff]
                %527 = vst [vmem:[%s151 + $0x5d8] sm:$0xff] %v526
                %v528 = vld [vmem:[%s150 + $0xbc0] sm:$0xff]
                %529 = vst [vmem:[%s151 + $0x5e0] sm:$0xff] %v528
                %v530 = vld [vmem:[%s150 + $0xbc8] sm:$0xff]
                %531 = vst [vmem:[%s151 + $0x5e8] sm:$0xff] %v530
                %v532 = vld [vmem:[%s150 + $0xbe0] sm:$0xff]
                %533 = vst [vmem:[%s151 + $0x5f0] sm:$0xff] %v532
                %v534 = vld [vmem:[%s150 + $0xbe8] sm:$0xff]
                %535 = vst [vmem:[%s151 + $0x5f8] sm:$0xff] %v534
                %v536 = vld [vmem:[%s150 + $0xc00] sm:$0xff]
                %537 = vst [vmem:[%s151 + $0x600] sm:$0xff] %v536
                %v538 = vld [vmem:[%s150 + $0xc08] sm:$0xff]
                %539 = vst [vmem:[%s151 + $0x608] sm:$0xff] %v538
                %v540 = vld [vmem:[%s150 + $0xc20] sm:$0xff]
                %541 = vst [vmem:[%s151 + $0x610] sm:$0xff] %v540
                %v542 = vld [vmem:[%s150 + $0xc28] sm:$0xff]
                %543 = vst [vmem:[%s151 + $0x618] sm:$0xff] %v542
                %v544 = vld [vmem:[%s150 + $0xc40] sm:$0xff]
                %545 = vst [vmem:[%s151 + $0x620] sm:$0xff] %v544
                %v546 = vld [vmem:[%s150 + $0xc48] sm:$0xff]
                %547 = vst [vmem:[%s151 + $0x628] sm:$0xff] %v546
                %v548 = vld [vmem:[%s150 + $0xc60] sm:$0xff]
                %549 = vst [vmem:[%s151 + $0x630] sm:$0xff] %v548
                %v550 = vld [vmem:[%s150 + $0xc68] sm:$0xff]
                %551 = vst [vmem:[%s151 + $0x638] sm:$0xff] %v550
                %v552 = vld [vmem:[%s150 + $0xc80] sm:$0xff]
                %553 = vst [vmem:[%s151 + $0x640] sm:$0xff] %v552
                %v554 = vld [vmem:[%s150 + $0xc88] sm:$0xff]
                %555 = vst [vmem:[%s151 + $0x648] sm:$0xff] %v554
                %v556 = vld [vmem:[%s150 + $0xca0] sm:$0xff]
                %557 = vst [vmem:[%s151 + $0x650] sm:$0xff] %v556
                %v558 = vld [vmem:[%s150 + $0xca8] sm:$0xff]
                %559 = vst [vmem:[%s151 + $0x658] sm:$0xff] %v558
                %v560 = vld [vmem:[%s150 + $0xcc0] sm:$0xff]
                %561 = vst [vmem:[%s151 + $0x660] sm:$0xff] %v560
                %v562 = vld [vmem:[%s150 + $0xcc8] sm:$0xff]
                %563 = vst [vmem:[%s151 + $0x668] sm:$0xff] %v562
                %v564 = vld [vmem:[%s150 + $0xce0] sm:$0xff]
                %565 = vst [vmem:[%s151 + $0x670] sm:$0xff] %v564
                %v566 = vld [vmem:[%s150 + $0xce8] sm:$0xff]
                %567 = vst [vmem:[%s151 + $0x678] sm:$0xff] %v566
                %v568 = vld [vmem:[%s150 + $0xd00] sm:$0xff]
                %569 = vst [vmem:[%s151 + $0x680] sm:$0xff] %v568
                %v570 = vld [vmem:[%s150 + $0xd08] sm:$0xff]
                %571 = vst [vmem:[%s151 + $0x688] sm:$0xff] %v570
                %v572 = vld [vmem:[%s150 + $0xd20] sm:$0xff]
                %573 = vst [vmem:[%s151 + $0x690] sm:$0xff] %v572
                %v574 = vld [vmem:[%s150 + $0xd28] sm:$0xff]
                %575 = vst [vmem:[%s151 + $0x698] sm:$0xff] %v574
                %v576 = vld [vmem:[%s150 + $0xd40] sm:$0xff]
                %577 = vst [vmem:[%s151 + $0x6a0] sm:$0xff] %v576
                %v578 = vld [vmem:[%s150 + $0xd48] sm:$0xff]
                %579 = vst [vmem:[%s151 + $0x6a8] sm:$0xff] %v578
                %v580 = vld [vmem:[%s150 + $0xd60] sm:$0xff]
                %581 = vst [vmem:[%s151 + $0x6b0] sm:$0xff] %v580
                %v582 = vld [vmem:[%s150 + $0xd68] sm:$0xff]
                %583 = vst [vmem:[%s151 + $0x6b8] sm:$0xff] %v582
                %v584 = vld [vmem:[%s150 + $0xd80] sm:$0xff]
                %585 = vst [vmem:[%s151 + $0x6c0] sm:$0xff] %v584
                %v586 = vld [vmem:[%s150 + $0xd88] sm:$0xff]
                %587 = vst [vmem:[%s151 + $0x6c8] sm:$0xff] %v586
                %v588 = vld [vmem:[%s150 + $0xda0] sm:$0xff]
                %589 = vst [vmem:[%s151 + $0x6d0] sm:$0xff] %v588
                %v590 = vld [vmem:[%s150 + $0xda8] sm:$0xff]
                %591 = vst [vmem:[%s151 + $0x6d8] sm:$0xff] %v590
                %v592 = vld [vmem:[%s150 + $0xdc0] sm:$0xff]
                %593 = vst [vmem:[%s151 + $0x6e0] sm:$0xff] %v592
                %v594 = vld [vmem:[%s150 + $0xdc8] sm:$0xff]
                %595 = vst [vmem:[%s151 + $0x6e8] sm:$0xff] %v594
                %v596 = vld [vmem:[%s150 + $0xde0] sm:$0xff]
                %597 = vst [vmem:[%s151 + $0x6f0] sm:$0xff] %v596
                %v598 = vld [vmem:[%s150 + $0xde8] sm:$0xff]
                %599 = vst [vmem:[%s151 + $0x6f8] sm:$0xff] %v598
                %v600 = vld [vmem:[%s150 + $0xe00] sm:$0xff]
                %601 = vst [vmem:[%s151 + $0x700] sm:$0xff] %v600
                %v602 = vld [vmem:[%s150 + $0xe08] sm:$0xff]
                %603 = vst [vmem:[%s151 + $0x708] sm:$0xff] %v602
                %v604 = vld [vmem:[%s150 + $0xe20] sm:$0xff]
                %605 = vst [vmem:[%s151 + $0x710] sm:$0xff] %v604
                %v606 = vld [vmem:[%s150 + $0xe28] sm:$0xff]
                %607 = vst [vmem:[%s151 + $0x718] sm:$0xff] %v606
                %v608 = vld [vmem:[%s150 + $0xe40] sm:$0xff]
                %609 = vst [vmem:[%s151 + $0x720] sm:$0xff] %v608
                %v610 = vld [vmem:[%s150 + $0xe48] sm:$0xff]
                %611 = vst [vmem:[%s151 + $0x728] sm:$0xff] %v610
                %v612 = vld [vmem:[%s150 + $0xe60] sm:$0xff]
                %613 = vst [vmem:[%s151 + $0x730] sm:$0xff] %v612
                %v614 = vld [vmem:[%s150 + $0xe68] sm:$0xff]
                %615 = vst [vmem:[%s151 + $0x738] sm:$0xff] %v614
                %v616 = vld [vmem:[%s150 + $0xe80] sm:$0xff]
                %617 = vst [vmem:[%s151 + $0x740] sm:$0xff] %v616
                %v618 = vld [vmem:[%s150 + $0xe88] sm:$0xff]
                %619 = vst [vmem:[%s151 + $0x748] sm:$0xff] %v618
                %v620 = vld [vmem:[%s150 + $0xea0] sm:$0xff]
                %621 = vst [vmem:[%s151 + $0x750] sm:$0xff] %v620
                %v622 = vld [vmem:[%s150 + $0xea8] sm:$0xff]
                %623 = vst [vmem:[%s151 + $0x758] sm:$0xff] %v622
                %v624 = vld [vmem:[%s150 + $0xec0] sm:$0xff]
                %625 = vst [vmem:[%s151 + $0x760] sm:$0xff] %v624
                %v626 = vld [vmem:[%s150 + $0xec8] sm:$0xff]
                %627 = vst [vmem:[%s151 + $0x768] sm:$0xff] %v626
                %v628 = vld [vmem:[%s150 + $0xee0] sm:$0xff]
                %629 = vst [vmem:[%s151 + $0x770] sm:$0xff] %v628
                %v630 = vld [vmem:[%s150 + $0xee8] sm:$0xff]
                %631 = vst [vmem:[%s151 + $0x778] sm:$0xff] %v630
                %v632 = vld [vmem:[%s150 + $0xf00] sm:$0xff]
                %633 = vst [vmem:[%s151 + $0x780] sm:$0xff] %v632
                %v634 = vld [vmem:[%s150 + $0xf08] sm:$0xff]
                %635 = vst [vmem:[%s151 + $0x788] sm:$0xff] %v634
                %v636 = vld [vmem:[%s150 + $0xf20] sm:$0xff]
                %637 = vst [vmem:[%s151 + $0x790] sm:$0xff] %v636
                %v638 = vld [vmem:[%s150 + $0xf28] sm:$0xff]
                %639 = vst [vmem:[%s151 + $0x798] sm:$0xff] %v638
                %v640 = vld [vmem:[%s150 + $0xf40] sm:$0xff]
                %641 = vst [vmem:[%s151 + $0x7a0] sm:$0xff] %v640
                %v642 = vld [vmem:[%s150 + $0xf48] sm:$0xff]
                %643 = vst [vmem:[%s151 + $0x7a8] sm:$0xff] %v642
                %v644 = vld [vmem:[%s150 + $0xf60] sm:$0xff]
                %645 = vst [vmem:[%s151 + $0x7b0] sm:$0xff] %v644
                %v646 = vld [vmem:[%s150 + $0xf68] sm:$0xff]
                %647 = vst [vmem:[%s151 + $0x7b8] sm:$0xff] %v646
                %v648 = vld [vmem:[%s150 + $0xf80] sm:$0xff]
                %649 = vst [vmem:[%s151 + $0x7c0] sm:$0xff] %v648
                %v650 = vld [vmem:[%s150 + $0xf88] sm:$0xff]
                %651 = vst [vmem:[%s151 + $0x7c8] sm:$0xff] %v650
                %v652 = vld [vmem:[%s150 + $0xfa0] sm:$0xff]
                %653 = vst [vmem:[%s151 + $0x7d0] sm:$0xff] %v652
                %v654 = vld [vmem:[%s150 + $0xfa8] sm:$0xff]
                %655 = vst [vmem:[%s151 + $0x7d8] sm:$0xff] %v654
                %v656 = vld [vmem:[%s150 + $0xfc0] sm:$0xff]
                %657 = vst [vmem:[%s151 + $0x7e0] sm:$0xff] %v656
                %v658 = vld [vmem:[%s150 + $0xfc8] sm:$0xff]
                %659 = vst [vmem:[%s151 + $0x7e8] sm:$0xff] %v658
                %v660 = vld [vmem:[%s150 + $0xfe0] sm:$0xff]
                %661 = vst [vmem:[%s151 + $0x7f0] sm:$0xff] %v660
                %v662 = vld [vmem:[%s150 + $0xfe8] sm:$0xff]
                %663 = vst [vmem:[%s151 + $0x7f8] sm:$0xff] %v662
                %v664 = vld [vmem:[%s150 + $0x1000] sm:$0xff]
                %665 = vst [vmem:[%s151 + $0x800] sm:$0xff] %v664
                %v666 = vld [vmem:[%s150 + $0x1008] sm:$0xff]
                %667 = vst [vmem:[%s151 + $0x808] sm:$0xff] %v666
                %v668 = vld [vmem:[%s150 + $0x1020] sm:$0xff]
                %669 = vst [vmem:[%s151 + $0x810] sm:$0xff] %v668
                %v670 = vld [vmem:[%s150 + $0x1028] sm:$0xff]
                %671 = vst [vmem:[%s151 + $0x818] sm:$0xff] %v670
                %v672 = vld [vmem:[%s150 + $0x1040] sm:$0xff]
                %673 = vst [vmem:[%s151 + $0x820] sm:$0xff] %v672
                %v674 = vld [vmem:[%s150 + $0x1048] sm:$0xff]
                %675 = vst [vmem:[%s151 + $0x828] sm:$0xff] %v674
                %v676 = vld [vmem:[%s150 + $0x1060] sm:$0xff]
                %677 = vst [vmem:[%s151 + $0x830] sm:$0xff] %v676
                %v678 = vld [vmem:[%s150 + $0x1068] sm:$0xff]
                %679 = vst [vmem:[%s151 + $0x838] sm:$0xff] %v678
                %v680 = vld [vmem:[%s150 + $0x1080] sm:$0xff]
                %681 = vst [vmem:[%s151 + $0x840] sm:$0xff] %v680
                %v682 = vld [vmem:[%s150 + $0x1088] sm:$0xff]
                %683 = vst [vmem:[%s151 + $0x848] sm:$0xff] %v682
                %v684 = vld [vmem:[%s150 + $0x10a0] sm:$0xff]
                %685 = vst [vmem:[%s151 + $0x850] sm:$0xff] %v684
                %v686 = vld [vmem:[%s150 + $0x10a8] sm:$0xff]
                %687 = vst [vmem:[%s151 + $0x858] sm:$0xff] %v686
                %v688 = vld [vmem:[%s150 + $0x10c0] sm:$0xff]
                %689 = vst [vmem:[%s151 + $0x860] sm:$0xff] %v688
                %v690 = vld [vmem:[%s150 + $0x10c8] sm:$0xff]
                %691 = vst [vmem:[%s151 + $0x868] sm:$0xff] %v690
                %v692 = vld [vmem:[%s150 + $0x10e0] sm:$0xff]
                %693 = vst [vmem:[%s151 + $0x870] sm:$0xff] %v692
                %v694 = vld [vmem:[%s150 + $0x10e8] sm:$0xff]
                %695 = vst [vmem:[%s151 + $0x878] sm:$0xff] %v694
                %v696 = vld [vmem:[%s150 + $0x1100] sm:$0xff]
                %697 = vst [vmem:[%s151 + $0x880] sm:$0xff] %v696
                %v698 = vld [vmem:[%s150 + $0x1108] sm:$0xff]
                %699 = vst [vmem:[%s151 + $0x888] sm:$0xff] %v698
                %v700 = vld [vmem:[%s150 + $0x1120] sm:$0xff]
                %701 = vst [vmem:[%s151 + $0x890] sm:$0xff] %v700
                %v702 = vld [vmem:[%s150 + $0x1128] sm:$0xff]
                %703 = vst [vmem:[%s151 + $0x898] sm:$0xff] %v702
                %v704 = vld [vmem:[%s150 + $0x1140] sm:$0xff]
                %705 = vst [vmem:[%s151 + $0x8a0] sm:$0xff] %v704
                %v706 = vld [vmem:[%s150 + $0x1148] sm:$0xff]
                %707 = vst [vmem:[%s151 + $0x8a8] sm:$0xff] %v706
                %v708 = vld [vmem:[%s150 + $0x1160] sm:$0xff]
                %709 = vst [vmem:[%s151 + $0x8b0] sm:$0xff] %v708
                %v710 = vld [vmem:[%s150 + $0x1168] sm:$0xff]
                %711 = vst [vmem:[%s151 + $0x8b8] sm:$0xff] %v710
                %v712 = vld [vmem:[%s150 + $0x1180] sm:$0xff]
                %713 = vst [vmem:[%s151 + $0x8c0] sm:$0xff] %v712
                %v714 = vld [vmem:[%s150 + $0x1188] sm:$0xff]
                %715 = vst [vmem:[%s151 + $0x8c8] sm:$0xff] %v714
                %v716 = vld [vmem:[%s150 + $0x11a0] sm:$0xff]
                %717 = vst [vmem:[%s151 + $0x8d0] sm:$0xff] %v716
                %v718 = vld [vmem:[%s150 + $0x11a8] sm:$0xff]
                %719 = vst [vmem:[%s151 + $0x8d8] sm:$0xff] %v718
                %v720 = vld [vmem:[%s150 + $0x11c0] sm:$0xff]
                %721 = vst [vmem:[%s151 + $0x8e0] sm:$0xff] %v720
                %v722 = vld [vmem:[%s150 + $0x11c8] sm:$0xff]
                %723 = vst [vmem:[%s151 + $0x8e8] sm:$0xff] %v722
                %v724 = vld [vmem:[%s150 + $0x11e0] sm:$0xff]
                %725 = vst [vmem:[%s151 + $0x8f0] sm:$0xff] %v724
                %v726 = vld [vmem:[%s150 + $0x11e8] sm:$0xff]
                %727 = vst [vmem:[%s151 + $0x8f8] sm:$0xff] %v726
                %v728 = vld [vmem:[%s150 + $0x1200] sm:$0xff]
                %729 = vst [vmem:[%s151 + $0x900] sm:$0xff] %v728
                %v730 = vld [vmem:[%s150 + $0x1208] sm:$0xff]
                %731 = vst [vmem:[%s151 + $0x908] sm:$0xff] %v730
                %v732 = vld [vmem:[%s150 + $0x1220] sm:$0xff]
                %733 = vst [vmem:[%s151 + $0x910] sm:$0xff] %v732
                %v734 = vld [vmem:[%s150 + $0x1228] sm:$0xff]
                %735 = vst [vmem:[%s151 + $0x918] sm:$0xff] %v734
                %v736 = vld [vmem:[%s150 + $0x1240] sm:$0xff]
                %737 = vst [vmem:[%s151 + $0x920] sm:$0xff] %v736
                %v738 = vld [vmem:[%s150 + $0x1248] sm:$0xff]
                %739 = vst [vmem:[%s151 + $0x928] sm:$0xff] %v738
                %v740 = vld [vmem:[%s150 + $0x1260] sm:$0xff]
                %741 = vst [vmem:[%s151 + $0x930] sm:$0xff] %v740
                %v742 = vld [vmem:[%s150 + $0x1268] sm:$0xff]
                %743 = vst [vmem:[%s151 + $0x938] sm:$0xff] %v742
                %v744 = vld [vmem:[%s150 + $0x1280] sm:$0xff]
                %745 = vst [vmem:[%s151 + $0x940] sm:$0xff] %v744
                %v746 = vld [vmem:[%s150 + $0x1288] sm:$0xff]
                %747 = vst [vmem:[%s151 + $0x948] sm:$0xff] %v746
                %v748 = vld [vmem:[%s150 + $0x12a0] sm:$0xff]
                %749 = vst [vmem:[%s151 + $0x950] sm:$0xff] %v748
                %v750 = vld [vmem:[%s150 + $0x12a8] sm:$0xff]
                %751 = vst [vmem:[%s151 + $0x958] sm:$0xff] %v750
                %v752 = vld [vmem:[%s150 + $0x12c0] sm:$0xff]
                %753 = vst [vmem:[%s151 + $0x960] sm:$0xff] %v752
                %v754 = vld [vmem:[%s150 + $0x12c8] sm:$0xff]
                %755 = vst [vmem:[%s151 + $0x968] sm:$0xff] %v754
                %v756 = vld [vmem:[%s150 + $0x12e0] sm:$0xff]
                %757 = vst [vmem:[%s151 + $0x970] sm:$0xff] %v756
                %v758 = vld [vmem:[%s150 + $0x12e8] sm:$0xff]
                %759 = vst [vmem:[%s151 + $0x978] sm:$0xff] %v758
                %v760 = vld [vmem:[%s150 + $0x1300] sm:$0xff]
                %761 = vst [vmem:[%s151 + $0x980] sm:$0xff] %v760
                %v762 = vld [vmem:[%s150 + $0x1308] sm:$0xff]
                %763 = vst [vmem:[%s151 + $0x988] sm:$0xff] %v762
                %v764 = vld [vmem:[%s150 + $0x1320] sm:$0xff]
                %765 = vst [vmem:[%s151 + $0x990] sm:$0xff] %v764
                %v766 = vld [vmem:[%s150 + $0x1328] sm:$0xff]
                %767 = vst [vmem:[%s151 + $0x998] sm:$0xff] %v766
                %v768 = vld [vmem:[%s150 + $0x1340] sm:$0xff]
                %769 = vst [vmem:[%s151 + $0x9a0] sm:$0xff] %v768
                %v770 = vld [vmem:[%s150 + $0x1348] sm:$0xff]
                %771 = vst [vmem:[%s151 + $0x9a8] sm:$0xff] %v770
                %v772 = vld [vmem:[%s150 + $0x1360] sm:$0xff]
                %773 = vst [vmem:[%s151 + $0x9b0] sm:$0xff] %v772
                %v774 = vld [vmem:[%s150 + $0x1368] sm:$0xff]
                %775 = vst [vmem:[%s151 + $0x9b8] sm:$0xff] %v774
                %v776 = vld [vmem:[%s150 + $0x1380] sm:$0xff]
                %777 = vst [vmem:[%s151 + $0x9c0] sm:$0xff] %v776
                %v778 = vld [vmem:[%s150 + $0x1388] sm:$0xff]
                %779 = vst [vmem:[%s151 + $0x9c8] sm:$0xff] %v778
                %v780 = vld [vmem:[%s150 + $0x13a0] sm:$0xff]
                %781 = vst [vmem:[%s151 + $0x9d0] sm:$0xff] %v780
                %v782 = vld [vmem:[%s150 + $0x13a8] sm:$0xff]
                %783 = vst [vmem:[%s151 + $0x9d8] sm:$0xff] %v782
                %v784 = vld [vmem:[%s150 + $0x13c0] sm:$0xff]
                %785 = vst [vmem:[%s151 + $0x9e0] sm:$0xff] %v784
                %v786 = vld [vmem:[%s150 + $0x13c8] sm:$0xff]
                %787 = vst [vmem:[%s151 + $0x9e8] sm:$0xff] %v786
                %v788 = vld [vmem:[%s150 + $0x13e0] sm:$0xff]
                %789 = vst [vmem:[%s151 + $0x9f0] sm:$0xff] %v788
                %v790 = vld [vmem:[%s150 + $0x13e8] sm:$0xff]
                %791 = vst [vmem:[%s151 + $0x9f8] sm:$0xff] %v790
                %v792 = vld [vmem:[%s150 + $0x1400] sm:$0xff]
                %793 = vst [vmem:[%s151 + $0xa00] sm:$0xff] %v792
                %v794 = vld [vmem:[%s150 + $0x1408] sm:$0xff]
                %795 = vst [vmem:[%s151 + $0xa08] sm:$0xff] %v794
                %v796 = vld [vmem:[%s150 + $0x1420] sm:$0xff]
                %797 = vst [vmem:[%s151 + $0xa10] sm:$0xff] %v796
                %v798 = vld [vmem:[%s150 + $0x1428] sm:$0xff]
                %799 = vst [vmem:[%s151 + $0xa18] sm:$0xff] %v798
                %v800 = vld [vmem:[%s150 + $0x1440] sm:$0xff]
                %801 = vst [vmem:[%s151 + $0xa20] sm:$0xff] %v800
                %v802 = vld [vmem:[%s150 + $0x1448] sm:$0xff]
                %803 = vst [vmem:[%s151 + $0xa28] sm:$0xff] %v802
                %v804 = vld [vmem:[%s150 + $0x1460] sm:$0xff]
                %805 = vst [vmem:[%s151 + $0xa30] sm:$0xff] %v804
                %v806 = vld [vmem:[%s150 + $0x1468] sm:$0xff]
                %807 = vst [vmem:[%s151 + $0xa38] sm:$0xff] %v806
                %v808 = vld [vmem:[%s150 + $0x1480] sm:$0xff]
                %809 = vst [vmem:[%s151 + $0xa40] sm:$0xff] %v808
                %v810 = vld [vmem:[%s150 + $0x1488] sm:$0xff]
                %811 = vst [vmem:[%s151 + $0xa48] sm:$0xff] %v810
                %v812 = vld [vmem:[%s150 + $0x14a0] sm:$0xff]
                %813 = vst [vmem:[%s151 + $0xa50] sm:$0xff] %v812
                %v814 = vld [vmem:[%s150 + $0x14a8] sm:$0xff]
                %815 = vst [vmem:[%s151 + $0xa58] sm:$0xff] %v814
                %v816 = vld [vmem:[%s150 + $0x14c0] sm:$0xff]
                %817 = vst [vmem:[%s151 + $0xa60] sm:$0xff] %v816
                %v818 = vld [vmem:[%s150 + $0x14c8] sm:$0xff]
                %819 = vst [vmem:[%s151 + $0xa68] sm:$0xff] %v818
                %v820 = vld [vmem:[%s150 + $0x14e0] sm:$0xff]
                %821 = vst [vmem:[%s151 + $0xa70] sm:$0xff] %v820
                %v822 = vld [vmem:[%s150 + $0x14e8] sm:$0xff]
                %823 = vst [vmem:[%s151 + $0xa78] sm:$0xff] %v822
                %v824 = vld [vmem:[%s150 + $0x1500] sm:$0xff]
                %825 = vst [vmem:[%s151 + $0xa80] sm:$0xff] %v824
                %v826 = vld [vmem:[%s150 + $0x1508] sm:$0xff]
                %827 = vst [vmem:[%s151 + $0xa88] sm:$0xff] %v826
                %v828 = vld [vmem:[%s150 + $0x1520] sm:$0xff]
                %829 = vst [vmem:[%s151 + $0xa90] sm:$0xff] %v828
                %v830 = vld [vmem:[%s150 + $0x1528] sm:$0xff]
                %831 = vst [vmem:[%s151 + $0xa98] sm:$0xff] %v830
                %v832 = vld [vmem:[%s150 + $0x1540] sm:$0xff]
                %833 = vst [vmem:[%s151 + $0xaa0] sm:$0xff] %v832
                %v834 = vld [vmem:[%s150 + $0x1548] sm:$0xff]
                %835 = vst [vmem:[%s151 + $0xaa8] sm:$0xff] %v834
                %v836 = vld [vmem:[%s150 + $0x1560] sm:$0xff]
                %837 = vst [vmem:[%s151 + $0xab0] sm:$0xff] %v836
                %v838 = vld [vmem:[%s150 + $0x1568] sm:$0xff]
                %839 = vst [vmem:[%s151 + $0xab8] sm:$0xff] %v838
                %v840 = vld [vmem:[%s150 + $0x1580] sm:$0xff]
                %841 = vst [vmem:[%s151 + $0xac0] sm:$0xff] %v840
                %v842 = vld [vmem:[%s150 + $0x1588] sm:$0xff]
                %843 = vst [vmem:[%s151 + $0xac8] sm:$0xff] %v842
                %v844 = vld [vmem:[%s150 + $0x15a0] sm:$0xff]
                %845 = vst [vmem:[%s151 + $0xad0] sm:$0xff] %v844
                %v846 = vld [vmem:[%s150 + $0x15a8] sm:$0xff]
                %847 = vst [vmem:[%s151 + $0xad8] sm:$0xff] %v846
                %v848 = vld [vmem:[%s150 + $0x15c0] sm:$0xff]
                %849 = vst [vmem:[%s151 + $0xae0] sm:$0xff] %v848
                %v850 = vld [vmem:[%s150 + $0x15c8] sm:$0xff]
                %851 = vst [vmem:[%s151 + $0xae8] sm:$0xff] %v850
                %v852 = vld [vmem:[%s150 + $0x15e0] sm:$0xff]
                %853 = vst [vmem:[%s151 + $0xaf0] sm:$0xff] %v852
                %v854 = vld [vmem:[%s150 + $0x15e8] sm:$0xff]
                %855 = vst [vmem:[%s151 + $0xaf8] sm:$0xff] %v854
                %v856 = vld [vmem:[%s150 + $0x1600] sm:$0xff]
                %857 = vst [vmem:[%s151 + $0xb00] sm:$0xff] %v856
                %v858 = vld [vmem:[%s150 + $0x1608] sm:$0xff]
                %859 = vst [vmem:[%s151 + $0xb08] sm:$0xff] %v858
                %v860 = vld [vmem:[%s150 + $0x1620] sm:$0xff]
                %861 = vst [vmem:[%s151 + $0xb10] sm:$0xff] %v860
                %v862 = vld [vmem:[%s150 + $0x1628] sm:$0xff]
                %863 = vst [vmem:[%s151 + $0xb18] sm:$0xff] %v862
                %v864 = vld [vmem:[%s150 + $0x1640] sm:$0xff]
                %865 = vst [vmem:[%s151 + $0xb20] sm:$0xff] %v864
                %v866 = vld [vmem:[%s150 + $0x1648] sm:$0xff]
                %867 = vst [vmem:[%s151 + $0xb28] sm:$0xff] %v866
                %v868 = vld [vmem:[%s150 + $0x1660] sm:$0xff]
                %869 = vst [vmem:[%s151 + $0xb30] sm:$0xff] %v868
                %v870 = vld [vmem:[%s150 + $0x1668] sm:$0xff]
                %871 = vst [vmem:[%s151 + $0xb38] sm:$0xff] %v870
                %v872 = vld [vmem:[%s150 + $0x1680] sm:$0xff]
                %873 = vst [vmem:[%s151 + $0xb40] sm:$0xff] %v872
                %v874 = vld [vmem:[%s150 + $0x1688] sm:$0xff]
                %875 = vst [vmem:[%s151 + $0xb48] sm:$0xff] %v874
                %v876 = vld [vmem:[%s150 + $0x16a0] sm:$0xff]
                %877 = vst [vmem:[%s151 + $0xb50] sm:$0xff] %v876
                %v878 = vld [vmem:[%s150 + $0x16a8] sm:$0xff]
                %879 = vst [vmem:[%s151 + $0xb58] sm:$0xff] %v878
                %v880 = vld [vmem:[%s150 + $0x16c0] sm:$0xff]
                %881 = vst [vmem:[%s151 + $0xb60] sm:$0xff] %v880
                %v882 = vld [vmem:[%s150 + $0x16c8] sm:$0xff]
                %883 = vst [vmem:[%s151 + $0xb68] sm:$0xff] %v882
                %v884 = vld [vmem:[%s150 + $0x16e0] sm:$0xff]
                %885 = vst [vmem:[%s151 + $0xb70] sm:$0xff] %v884
                %v886 = vld [vmem:[%s150 + $0x16e8] sm:$0xff]
                %887 = vst [vmem:[%s151 + $0xb78] sm:$0xff] %v886
                %v888 = vld [vmem:[%s150 + $0x1700] sm:$0xff]
                %889 = vst [vmem:[%s151 + $0xb80] sm:$0xff] %v888
                %v890 = vld [vmem:[%s150 + $0x1708] sm:$0xff]
                %891 = vst [vmem:[%s151 + $0xb88] sm:$0xff] %v890
                %v892 = vld [vmem:[%s150 + $0x1720] sm:$0xff]
                %893 = vst [vmem:[%s151 + $0xb90] sm:$0xff] %v892
                %v894 = vld [vmem:[%s150 + $0x1728] sm:$0xff]
                %895 = vst [vmem:[%s151 + $0xb98] sm:$0xff] %v894
                %v896 = vld [vmem:[%s150 + $0x1740] sm:$0xff]
                %897 = vst [vmem:[%s151 + $0xba0] sm:$0xff] %v896
                %v898 = vld [vmem:[%s150 + $0x1748] sm:$0xff]
                %899 = vst [vmem:[%s151 + $0xba8] sm:$0xff] %v898
                %v900 = vld [vmem:[%s150 + $0x1760] sm:$0xff]
                %901 = vst [vmem:[%s151 + $0xbb0] sm:$0xff] %v900
                %v902 = vld [vmem:[%s150 + $0x1768] sm:$0xff]
                %903 = vst [vmem:[%s151 + $0xbb8] sm:$0xff] %v902
                %v904 = vld [vmem:[%s150 + $0x1780] sm:$0xff]
                %905 = vst [vmem:[%s151 + $0xbc0] sm:$0xff] %v904
                %v906 = vld [vmem:[%s150 + $0x1788] sm:$0xff]
                %907 = vst [vmem:[%s151 + $0xbc8] sm:$0xff] %v906
                %v908 = vld [vmem:[%s150 + $0x17a0] sm:$0xff]
                %909 = vst [vmem:[%s151 + $0xbd0] sm:$0xff] %v908
                %v910 = vld [vmem:[%s150 + $0x17a8] sm:$0xff]
                %911 = vst [vmem:[%s151 + $0xbd8] sm:$0xff] %v910
                %v912 = vld [vmem:[%s150 + $0x17c0] sm:$0xff]
                %913 = vst [vmem:[%s151 + $0xbe0] sm:$0xff] %v912
                %v914 = vld [vmem:[%s150 + $0x17c8] sm:$0xff]
                %915 = vst [vmem:[%s151 + $0xbe8] sm:$0xff] %v914
                %v916 = vld [vmem:[%s150 + $0x17e0] sm:$0xff]
                %917 = vst [vmem:[%s151 + $0xbf0] sm:$0xff] %v916
                %v918 = vld [vmem:[%s150 + $0x17e8] sm:$0xff]
                %919 = vst [vmem:[%s151 + $0xbf8] sm:$0xff] %v918
                %v920 = vld [vmem:[%s150 + $0x1800] sm:$0xff]
                %921 = vst [vmem:[%s151 + $0xc00] sm:$0xff] %v920
                %v922 = vld [vmem:[%s150 + $0x1808] sm:$0xff]
                %923 = vst [vmem:[%s151 + $0xc08] sm:$0xff] %v922
                %v924 = vld [vmem:[%s150 + $0x1820] sm:$0xff]
                %925 = vst [vmem:[%s151 + $0xc10] sm:$0xff] %v924
                %v926 = vld [vmem:[%s150 + $0x1828] sm:$0xff]
                %927 = vst [vmem:[%s151 + $0xc18] sm:$0xff] %v926
                %v928 = vld [vmem:[%s150 + $0x1840] sm:$0xff]
                %929 = vst [vmem:[%s151 + $0xc20] sm:$0xff] %v928
                %v930 = vld [vmem:[%s150 + $0x1848] sm:$0xff]
                %931 = vst [vmem:[%s151 + $0xc28] sm:$0xff] %v930
                %v932 = vld [vmem:[%s150 + $0x1860] sm:$0xff]
                %933 = vst [vmem:[%s151 + $0xc30] sm:$0xff] %v932
                %v934 = vld [vmem:[%s150 + $0x1868] sm:$0xff]
                %935 = vst [vmem:[%s151 + $0xc38] sm:$0xff] %v934
                %v936 = vld [vmem:[%s150 + $0x1880] sm:$0xff]
                %937 = vst [vmem:[%s151 + $0xc40] sm:$0xff] %v936
                %v938 = vld [vmem:[%s150 + $0x1888] sm:$0xff]
                %939 = vst [vmem:[%s151 + $0xc48] sm:$0xff] %v938
                %v940 = vld [vmem:[%s150 + $0x18a0] sm:$0xff]
                %941 = vst [vmem:[%s151 + $0xc50] sm:$0xff] %v940
                %v942 = vld [vmem:[%s150 + $0x18a8] sm:$0xff]
                %943 = vst [vmem:[%s151 + $0xc58] sm:$0xff] %v942
                %v944 = vld [vmem:[%s150 + $0x18c0] sm:$0xff]
                %945 = vst [vmem:[%s151 + $0xc60] sm:$0xff] %v944
                %v946 = vld [vmem:[%s150 + $0x18c8] sm:$0xff]
                %947 = vst [vmem:[%s151 + $0xc68] sm:$0xff] %v946
                %v948 = vld [vmem:[%s150 + $0x18e0] sm:$0xff]
                %949 = vst [vmem:[%s151 + $0xc70] sm:$0xff] %v948
                %v950 = vld [vmem:[%s150 + $0x18e8] sm:$0xff]
                %951 = vst [vmem:[%s151 + $0xc78] sm:$0xff] %v950
                %v952 = vld [vmem:[%s150 + $0x1900] sm:$0xff]
                %953 = vst [vmem:[%s151 + $0xc80] sm:$0xff] %v952
                %v954 = vld [vmem:[%s150 + $0x1908] sm:$0xff]
                %955 = vst [vmem:[%s151 + $0xc88] sm:$0xff] %v954
                %v956 = vld [vmem:[%s150 + $0x1920] sm:$0xff]
                %957 = vst [vmem:[%s151 + $0xc90] sm:$0xff] %v956
                %v958 = vld [vmem:[%s150 + $0x1928] sm:$0xff]
                %959 = vst [vmem:[%s151 + $0xc98] sm:$0xff] %v958
                %v960 = vld [vmem:[%s150 + $0x1940] sm:$0xff]
                %961 = vst [vmem:[%s151 + $0xca0] sm:$0xff] %v960
                %v962 = vld [vmem:[%s150 + $0x1948] sm:$0xff]
                %963 = vst [vmem:[%s151 + $0xca8] sm:$0xff] %v962
                %v964 = vld [vmem:[%s150 + $0x1960] sm:$0xff]
                %965 = vst [vmem:[%s151 + $0xcb0] sm:$0xff] %v964
                %v966 = vld [vmem:[%s150 + $0x1968] sm:$0xff]
                %967 = vst [vmem:[%s151 + $0xcb8] sm:$0xff] %v966
                %v968 = vld [vmem:[%s150 + $0x1980] sm:$0xff]
                %969 = vst [vmem:[%s151 + $0xcc0] sm:$0xff] %v968
                %v970 = vld [vmem:[%s150 + $0x1988] sm:$0xff]
                %971 = vst [vmem:[%s151 + $0xcc8] sm:$0xff] %v970
                %v972 = vld [vmem:[%s150 + $0x19a0] sm:$0xff]
                %973 = vst [vmem:[%s151 + $0xcd0] sm:$0xff] %v972
                %v974 = vld [vmem:[%s150 + $0x19a8] sm:$0xff]
                %975 = vst [vmem:[%s151 + $0xcd8] sm:$0xff] %v974
                %v976 = vld [vmem:[%s150 + $0x19c0] sm:$0xff]
                %977 = vst [vmem:[%s151 + $0xce0] sm:$0xff] %v976
                %v978 = vld [vmem:[%s150 + $0x19c8] sm:$0xff]
                %979 = vst [vmem:[%s151 + $0xce8] sm:$0xff] %v978
                %v980 = vld [vmem:[%s150 + $0x19e0] sm:$0xff]
                %981 = vst [vmem:[%s151 + $0xcf0] sm:$0xff] %v980
                %v982 = vld [vmem:[%s150 + $0x19e8] sm:$0xff]
                %983 = vst [vmem:[%s151 + $0xcf8] sm:$0xff] %v982
                %v984 = vld [vmem:[%s150 + $0x1a00] sm:$0xff]
                %985 = vst [vmem:[%s151 + $0xd00] sm:$0xff] %v984
                %v986 = vld [vmem:[%s150 + $0x1a08] sm:$0xff]
                %987 = vst [vmem:[%s151 + $0xd08] sm:$0xff] %v986
                %v988 = vld [vmem:[%s150 + $0x1a20] sm:$0xff]
                %989 = vst [vmem:[%s151 + $0xd10] sm:$0xff] %v988
                %v990 = vld [vmem:[%s150 + $0x1a28] sm:$0xff]
                %991 = vst [vmem:[%s151 + $0xd18] sm:$0xff] %v990
                %v992 = vld [vmem:[%s150 + $0x1a40] sm:$0xff]
                %993 = vst [vmem:[%s151 + $0xd20] sm:$0xff] %v992
                %v994 = vld [vmem:[%s150 + $0x1a48] sm:$0xff]
                %995 = vst [vmem:[%s151 + $0xd28] sm:$0xff] %v994
                %v996 = vld [vmem:[%s150 + $0x1a60] sm:$0xff]
                %997 = vst [vmem:[%s151 + $0xd30] sm:$0xff] %v996
                %v998 = vld [vmem:[%s150 + $0x1a68] sm:$0xff]
                %999 = vst [vmem:[%s151 + $0xd38] sm:$0xff] %v998
                %v1000 = vld [vmem:[%s150 + $0x1a80] sm:$0xff]
                %1001 = vst [vmem:[%s151 + $0xd40] sm:$0xff] %v1000
                %v1002 = vld [vmem:[%s150 + $0x1a88] sm:$0xff]
                %1003 = vst [vmem:[%s151 + $0xd48] sm:$0xff] %v1002
                %v1004 = vld [vmem:[%s150 + $0x1aa0] sm:$0xff]
                %1005 = vst [vmem:[%s151 + $0xd50] sm:$0xff] %v1004
                %v1006 = vld [vmem:[%s150 + $0x1aa8] sm:$0xff]
                %1007 = vst [vmem:[%s151 + $0xd58] sm:$0xff] %v1006
                %v1008 = vld [vmem:[%s150 + $0x1ac0] sm:$0xff]
                %1009 = vst [vmem:[%s151 + $0xd60] sm:$0xff] %v1008
                %v1010 = vld [vmem:[%s150 + $0x1ac8] sm:$0xff]
                %1011 = vst [vmem:[%s151 + $0xd68] sm:$0xff] %v1010
                %v1012 = vld [vmem:[%s150 + $0x1ae0] sm:$0xff]
                %1013 = vst [vmem:[%s151 + $0xd70] sm:$0xff] %v1012
                %v1014 = vld [vmem:[%s150 + $0x1ae8] sm:$0xff]
                %1015 = vst [vmem:[%s151 + $0xd78] sm:$0xff] %v1014
                %v1016 = vld [vmem:[%s150 + $0x1b00] sm:$0xff]
                %1017 = vst [vmem:[%s151 + $0xd80] sm:$0xff] %v1016
                %v1018 = vld [vmem:[%s150 + $0x1b08] sm:$0xff]
                %1019 = vst [vmem:[%s151 + $0xd88] sm:$0xff] %v1018
                %v1020 = vld [vmem:[%s150 + $0x1b20] sm:$0xff]
                %1021 = vst [vmem:[%s151 + $0xd90] sm:$0xff] %v1020
                %v1022 = vld [vmem:[%s150 + $0x1b28] sm:$0xff]
                %1023 = vst [vmem:[%s151 + $0xd98] sm:$0xff] %v1022
                %v1024 = vld [vmem:[%s150 + $0x1b40] sm:$0xff]
                %1025 = vst [vmem:[%s151 + $0xda0] sm:$0xff] %v1024
                %v1026 = vld [vmem:[%s150 + $0x1b48] sm:$0xff]
                %1027 = vst [vmem:[%s151 + $0xda8] sm:$0xff] %v1026
                %v1028 = vld [vmem:[%s150 + $0x1b60] sm:$0xff]
                %1029 = vst [vmem:[%s151 + $0xdb0] sm:$0xff] %v1028
                %v1030 = vld [vmem:[%s150 + $0x1b68] sm:$0xff]
                %1031 = vst [vmem:[%s151 + $0xdb8] sm:$0xff] %v1030
                %v1032 = vld [vmem:[%s150 + $0x1b80] sm:$0xff]
                %1033 = vst [vmem:[%s151 + $0xdc0] sm:$0xff] %v1032
                %v1034 = vld [vmem:[%s150 + $0x1b88] sm:$0xff]
                %1035 = vst [vmem:[%s151 + $0xdc8] sm:$0xff] %v1034
                %v1036 = vld [vmem:[%s150 + $0x1ba0] sm:$0xff]
                %1037 = vst [vmem:[%s151 + $0xdd0] sm:$0xff] %v1036
                %v1038 = vld [vmem:[%s150 + $0x1ba8] sm:$0xff]
                %1039 = vst [vmem:[%s151 + $0xdd8] sm:$0xff] %v1038
                %v1040 = vld [vmem:[%s150 + $0x1bc0] sm:$0xff]
                %1041 = vst [vmem:[%s151 + $0xde0] sm:$0xff] %v1040
                %v1042 = vld [vmem:[%s150 + $0x1bc8] sm:$0xff]
                %1043 = vst [vmem:[%s151 + $0xde8] sm:$0xff] %v1042
                %v1044 = vld [vmem:[%s150 + $0x1be0] sm:$0xff]
                %1045 = vst [vmem:[%s151 + $0xdf0] sm:$0xff] %v1044
                %v1046 = vld [vmem:[%s150 + $0x1be8] sm:$0xff]
                %1047 = vst [vmem:[%s151 + $0xdf8] sm:$0xff] %v1046
                %v1048 = vld [vmem:[%s150 + $0x1c00] sm:$0xff]
                %1049 = vst [vmem:[%s151 + $0xe00] sm:$0xff] %v1048
                %v1050 = vld [vmem:[%s150 + $0x1c08] sm:$0xff]
                %1051 = vst [vmem:[%s151 + $0xe08] sm:$0xff] %v1050
                %v1052 = vld [vmem:[%s150 + $0x1c20] sm:$0xff]
                %1053 = vst [vmem:[%s151 + $0xe10] sm:$0xff] %v1052
                %v1054 = vld [vmem:[%s150 + $0x1c28] sm:$0xff]
                %1055 = vst [vmem:[%s151 + $0xe18] sm:$0xff] %v1054
                %v1056 = vld [vmem:[%s150 + $0x1c40] sm:$0xff]
                %1057 = vst [vmem:[%s151 + $0xe20] sm:$0xff] %v1056
                %v1058 = vld [vmem:[%s150 + $0x1c48] sm:$0xff]
                %1059 = vst [vmem:[%s151 + $0xe28] sm:$0xff] %v1058
                %v1060 = vld [vmem:[%s150 + $0x1c60] sm:$0xff]
                %1061 = vst [vmem:[%s151 + $0xe30] sm:$0xff] %v1060
                %v1062 = vld [vmem:[%s150 + $0x1c68] sm:$0xff]
                %1063 = vst [vmem:[%s151 + $0xe38] sm:$0xff] %v1062
                %v1064 = vld [vmem:[%s150 + $0x1c80] sm:$0xff]
                %1065 = vst [vmem:[%s151 + $0xe40] sm:$0xff] %v1064
                %v1066 = vld [vmem:[%s150 + $0x1c88] sm:$0xff]
                %1067 = vst [vmem:[%s151 + $0xe48] sm:$0xff] %v1066
                %v1068 = vld [vmem:[%s150 + $0x1ca0] sm:$0xff]
                %1069 = vst [vmem:[%s151 + $0xe50] sm:$0xff] %v1068
                %v1070 = vld [vmem:[%s150 + $0x1ca8] sm:$0xff]
                %1071 = vst [vmem:[%s151 + $0xe58] sm:$0xff] %v1070
                %v1072 = vld [vmem:[%s150 + $0x1cc0] sm:$0xff]
                %1073 = vst [vmem:[%s151 + $0xe60] sm:$0xff] %v1072
                %v1074 = vld [vmem:[%s150 + $0x1cc8] sm:$0xff]
                %1075 = vst [vmem:[%s151 + $0xe68] sm:$0xff] %v1074
                %v1076 = vld [vmem:[%s150 + $0x1ce0] sm:$0xff]
                %1077 = vst [vmem:[%s151 + $0xe70] sm:$0xff] %v1076
                %v1078 = vld [vmem:[%s150 + $0x1ce8] sm:$0xff]
                %1079 = vst [vmem:[%s151 + $0xe78] sm:$0xff] %v1078
                %v1080 = vld [vmem:[%s150 + $0x1d00] sm:$0xff]
                %1081 = vst [vmem:[%s151 + $0xe80] sm:$0xff] %v1080
                %v1082 = vld [vmem:[%s150 + $0x1d08] sm:$0xff]
                %1083 = vst [vmem:[%s151 + $0xe88] sm:$0xff] %v1082
                %v1084 = vld [vmem:[%s150 + $0x1d20] sm:$0xff]
                %1085 = vst [vmem:[%s151 + $0xe90] sm:$0xff] %v1084
                %v1086 = vld [vmem:[%s150 + $0x1d28] sm:$0xff]
                %1087 = vst [vmem:[%s151 + $0xe98] sm:$0xff] %v1086
                %v1088 = vld [vmem:[%s150 + $0x1d40] sm:$0xff]
                %1089 = vst [vmem:[%s151 + $0xea0] sm:$0xff] %v1088
                %v1090 = vld [vmem:[%s150 + $0x1d48] sm:$0xff]
                %1091 = vst [vmem:[%s151 + $0xea8] sm:$0xff] %v1090
                %v1092 = vld [vmem:[%s150 + $0x1d60] sm:$0xff]
                %1093 = vst [vmem:[%s151 + $0xeb0] sm:$0xff] %v1092
                %v1094 = vld [vmem:[%s150 + $0x1d68] sm:$0xff]
                %1095 = vst [vmem:[%s151 + $0xeb8] sm:$0xff] %v1094
                %v1096 = vld [vmem:[%s150 + $0x1d80] sm:$0xff]
                %1097 = vst [vmem:[%s151 + $0xec0] sm:$0xff] %v1096
                %v1098 = vld [vmem:[%s150 + $0x1d88] sm:$0xff]
                %1099 = vst [vmem:[%s151 + $0xec8] sm:$0xff] %v1098
                %v1100 = vld [vmem:[%s150 + $0x1da0] sm:$0xff]
                %1101 = vst [vmem:[%s151 + $0xed0] sm:$0xff] %v1100
                %v1102 = vld [vmem:[%s150 + $0x1da8] sm:$0xff]
                %1103 = vst [vmem:[%s151 + $0xed8] sm:$0xff] %v1102
                %v1104 = vld [vmem:[%s150 + $0x1dc0] sm:$0xff]
                %1105 = vst [vmem:[%s151 + $0xee0] sm:$0xff] %v1104
                %v1106 = vld [vmem:[%s150 + $0x1dc8] sm:$0xff]
                %1107 = vst [vmem:[%s151 + $0xee8] sm:$0xff] %v1106
                %v1108 = vld [vmem:[%s150 + $0x1de0] sm:$0xff]
                %1109 = vst [vmem:[%s151 + $0xef0] sm:$0xff] %v1108
                %v1110 = vld [vmem:[%s150 + $0x1de8] sm:$0xff]
                %1111 = vst [vmem:[%s151 + $0xef8] sm:$0xff] %v1110
                %v1112 = vld [vmem:[%s150 + $0x1e00] sm:$0xff]
                %1113 = vst [vmem:[%s151 + $0xf00] sm:$0xff] %v1112
                %v1114 = vld [vmem:[%s150 + $0x1e08] sm:$0xff]
                %1115 = vst [vmem:[%s151 + $0xf08] sm:$0xff] %v1114
                %v1116 = vld [vmem:[%s150 + $0x1e20] sm:$0xff]
                %1117 = vst [vmem:[%s151 + $0xf10] sm:$0xff] %v1116
                %v1118 = vld [vmem:[%s150 + $0x1e28] sm:$0xff]
                %1119 = vst [vmem:[%s151 + $0xf18] sm:$0xff] %v1118
                %v1120 = vld [vmem:[%s150 + $0x1e40] sm:$0xff]
                %1121 = vst [vmem:[%s151 + $0xf20] sm:$0xff] %v1120
                %v1122 = vld [vmem:[%s150 + $0x1e48] sm:$0xff]
                %1123 = vst [vmem:[%s151 + $0xf28] sm:$0xff] %v1122
                %v1124 = vld [vmem:[%s150 + $0x1e60] sm:$0xff]
                %1125 = vst [vmem:[%s151 + $0xf30] sm:$0xff] %v1124
                %v1126 = vld [vmem:[%s150 + $0x1e68] sm:$0xff]
                %1127 = vst [vmem:[%s151 + $0xf38] sm:$0xff] %v1126
                %v1128 = vld [vmem:[%s150 + $0x1e80] sm:$0xff]
                %1129 = vst [vmem:[%s151 + $0xf40] sm:$0xff] %v1128
                %v1130 = vld [vmem:[%s150 + $0x1e88] sm:$0xff]
                %1131 = vst [vmem:[%s151 + $0xf48] sm:$0xff] %v1130
                %v1132 = vld [vmem:[%s150 + $0x1ea0] sm:$0xff]
                %1133 = vst [vmem:[%s151 + $0xf50] sm:$0xff] %v1132
                %v1134 = vld [vmem:[%s150 + $0x1ea8] sm:$0xff]
                %1135 = vst [vmem:[%s151 + $0xf58] sm:$0xff] %v1134
                %v1136 = vld [vmem:[%s150 + $0x1ec0] sm:$0xff]
                %1137 = vst [vmem:[%s151 + $0xf60] sm:$0xff] %v1136
                %v1138 = vld [vmem:[%s150 + $0x1ec8] sm:$0xff]
                %1139 = vst [vmem:[%s151 + $0xf68] sm:$0xff] %v1138
                %v1140 = vld [vmem:[%s150 + $0x1ee0] sm:$0xff]
                %1141 = vst [vmem:[%s151 + $0xf70] sm:$0xff] %v1140
                %v1142 = vld [vmem:[%s150 + $0x1ee8] sm:$0xff]
                %1143 = vst [vmem:[%s151 + $0xf78] sm:$0xff] %v1142
                %v1144 = vld [vmem:[%s150 + $0x1f00] sm:$0xff]
                %1145 = vst [vmem:[%s151 + $0xf80] sm:$0xff] %v1144
                %v1146 = vld [vmem:[%s150 + $0x1f08] sm:$0xff]
                %1147 = vst [vmem:[%s151 + $0xf88] sm:$0xff] %v1146
                %v1148 = vld [vmem:[%s150 + $0x1f20] sm:$0xff]
                %1149 = vst [vmem:[%s151 + $0xf90] sm:$0xff] %v1148
                %v1150 = vld [vmem:[%s150 + $0x1f28] sm:$0xff]
                %1151 = vst [vmem:[%s151 + $0xf98] sm:$0xff] %v1150
                %v1152 = vld [vmem:[%s150 + $0x1f40] sm:$0xff]
                %1153 = vst [vmem:[%s151 + $0xfa0] sm:$0xff] %v1152
                %v1154 = vld [vmem:[%s150 + $0x1f48] sm:$0xff]
                %1155 = vst [vmem:[%s151 + $0xfa8] sm:$0xff] %v1154
                %v1156 = vld [vmem:[%s150 + $0x1f60] sm:$0xff]
                %1157 = vst [vmem:[%s151 + $0xfb0] sm:$0xff] %v1156
                %v1158 = vld [vmem:[%s150 + $0x1f68] sm:$0xff]
                %1159 = vst [vmem:[%s151 + $0xfb8] sm:$0xff] %v1158
                %v1160 = vld [vmem:[%s150 + $0x1f80] sm:$0xff]
                %1161 = vst [vmem:[%s151 + $0xfc0] sm:$0xff] %v1160
                %v1162 = vld [vmem:[%s150 + $0x1f88] sm:$0xff]
                %1163 = vst [vmem:[%s151 + $0xfc8] sm:$0xff] %v1162
                %v1164 = vld [vmem:[%s150 + $0x1fa0] sm:$0xff]
                %1165 = vst [vmem:[%s151 + $0xfd0] sm:$0xff] %v1164
                %v1166 = vld [vmem:[%s150 + $0x1fa8] sm:$0xff]
                %1167 = vst [vmem:[%s151 + $0xfd8] sm:$0xff] %v1166
                %v1168 = vld [vmem:[%s150 + $0x1fc0] sm:$0xff]
                %1169 = vst [vmem:[%s151 + $0xfe0] sm:$0xff] %v1168
                %v1170 = vld [vmem:[%s150 + $0x1fc8] sm:$0xff]
                %1171 = vst [vmem:[%s151 + $0xfe8] sm:$0xff] %v1170
                %v1172 = vld [vmem:[%s150 + $0x1fe0] sm:$0xff]
                %1173 = vst [vmem:[%s151 + $0xff0] sm:$0xff] %v1172
                %v1174 = vld [vmem:[%s150 + $0x1fe8] sm:$0xff]
                %1175 = vst [vmem:[%s151 + $0xff8] sm:$0xff] %v1174
              $region37: #{generator_forward.9} parent=31 // loop_footer
                %s149 = sadd.s32 1, %s145
              $region38: #{generator_forward.9} parent=31 // loop_footer_branch
                %144 = sbr.rel target = $region34
              $region39: #{generator_forward.9} parent=31 // loop_exit
                _
            $region32: #{generator_forward.9} parent=27 // pred_fallthru
              _
            // Predicated region
            $region40: #{generator_forward.9} parent=27 // pred_check
              _
            $region41: #{generator_forward.9} parent=27 // pred_check_branch
              %1177 = sbr.rel target = $region43
            $region42: #{generator_forward.9} parent=27 // pred_region
              _
            $region43: #{generator_forward.9} parent=27 // pred_fallthru
              _
          $region28: #{generator_forward.9} parent=23 // pred_fallthru
            _
          %1178 = vnop
        $region24: #{generator_forward.9} parent=19 // pred_fallthru
          _
        // Predicated region
        $region44: #{generator_forward.9} parent=19 // pred_check
          %p1179 = pneg %p76
        $region45: #{generator_forward.9} parent=19 // pred_check_branch
          %1181 = sbr.rel (%p1179) target = $region47
        $region46: #{generator_forward.9} parent=19 // pred_region
          %s1182 = smul.u32 4, %s9
          %p1183 = scmp.lt.s32.totalorder %s1182, 7
          %s1184 = scalar_select %p1183, %s1182, 7
          %s1185 = scalar_lea.vmem %s2, %s1184
          %s1186 = smul.u32 4, %s9
        $region47: #{generator_forward.9} parent=19 // pred_fallthru
          _
      $region20: #{generator_forward.9} parent=5 // pred_fallthru
        _
      %p1187 = scmp.le.s32.totalorder 1, %s9
      %p1188 = scmp.lt.s32.totalorder %s9, 3
      %p1189 = pnand %p1187, %p1188
      %p1190 = pneg %p1189
      // Predicated region
      $region48: #{generator_forward.9} parent=5 // pred_check
        _
      $region49: #{generator_forward.9} parent=5 // pred_check_branch
        %1192 = sbr.rel (%p1189) target = $region51
      $region50: #{generator_forward.9} parent=5 // pred_region
        %s1193 = ssub.s32 %s9, 1
        %s1194 = sand.u32 %s43, 1
        %s1195 = sand.u32 %s43, 1
        %s1196 = smul.addr %s1195, 4096
        %s1197 = scalar_lea.vmem [#allocation2], %s1196
        // Predicated region
        $region52: #{generator_forward.9} parent=50 // pred_check
          %p1198 = pneg %p56
        $region53: #{generator_forward.9} parent=50 // pred_check_branch
          %1200 = sbr.rel (%p1198) target = $region55
        $region54: #{generator_forward.9} parent=50 // pred_region
          _
        $region55: #{generator_forward.9} parent=50 // pred_fallthru
          _
        %p1201 = pneg %p30
        %p1202 = pneg %p27
        %s1203 = sand.u32 %s43, 1
        %s1204 = sand.u32 %s43, 1
        %s1205 = smul.addr %s1204, 4096
        %s1206 = scalar_lea.vmem [#allocation2], %s1205
        %p1207 = pneg %p56
        %p1208 = pneg %p53
        %s1209 = smul.u32 4, %s14
        %p1210 = scmp.lt.s32.totalorder %s1209, 7
        %s1211 = scalar_select %p1210, %s1209, 7
        %s1212 = scalar_lea.vmem %s2, %s1211
        %p1213 = pneg %p82
        %p1214 = pneg %p79
        %p1215 = pneg %p108
        %p1216 = pneg %p105
        %s1217 = smul.u32 4, %s14
        %p1218 = scmp.lt.s32.totalorder %s1217, 7
        %s1219 = scalar_select %p1218, %s1217, 7
        %s1220 = smul.addr %s1219, 2
        %s1221 = scalar_lea.vmem %s3, %s1220
        %s1222 = smul.u32 4, %s14
        %s1223 = smul.u32 4, %s14
        %p1224 = scmp.lt.s32.totalorder %s1223, 7
        %s1225 = scalar_select %p1224, %s1223, 7
        %s1226 = scalar_lea.vmem %s2, %s1225
        %s1227 = smul.u32 4, %s14
        %s1228 = smul.u32 4, %s14
        %p1229 = scmp.lt.s32.totalorder %s1228, 7
        %s1230 = scalar_select %p1229, %s1228, 7
        %s1231 = smul.addr %s1230, 2
        %s1232 = scalar_lea.vmem %s3, %s1231
        %s1233 = smul.u32 4, %s14
        %v1234 = vld [vmem:[%s0] sm:$0xff]
        %v1235 = vld [vmem:[%s0 + $0x8] sm:$0xff]
        %v1236 = vld [vmem:[%s1197] sm:$0xff]
        %v1237 = vld [vmem:[%s1197 + $0x8] sm:$0xff]
        %v1238 = vld [vmem:[%s1197 + $0x10] sm:$0xff]
        %v1239 = vld [vmem:[%s1197 + $0x18] sm:$0xff]
        %v1240 = vld [vmem:[%s1197 + $0x20] sm:$0xff]
        %v1241 = vld [vmem:[%s1197 + $0x28] sm:$0xff]
        %v1242 = vld [vmem:[%s1197 + $0x30] sm:$0xff]
        %v1243 = vld [vmem:[%s1197 + $0x38] sm:$0xff]
        %v1244 = vld [vmem:[%s1197 + $0x40] sm:$0xff]
        %v1245 = vld [vmem:[%s1197 + $0x48] sm:$0xff]
        %v1246 = vld [vmem:[%s1197 + $0x50] sm:$0xff]
        %v1247 = vld [vmem:[%s1197 + $0x58] sm:$0xff]
        %v1248 = vld [vmem:[%s1197 + $0x60] sm:$0xff]
        %v1249 = vld [vmem:[%s1197 + $0x68] sm:$0xff]
        %v1250 = vld [vmem:[%s1197 + $0x70] sm:$0xff]
        %v1251 = vld [vmem:[%s1197 + $0x78] sm:$0xff]
        %v1252 = vld [vmem:[%s1197 + $0x80] sm:$0xff]
        %v1253 = vld [vmem:[%s1197 + $0x88] sm:$0xff]
        %v1254 = vld [vmem:[%s1197 + $0x90] sm:$0xff]
        %v1255 = vld [vmem:[%s1197 + $0x98] sm:$0xff]
        %v1256 = vld [vmem:[%s1197 + $0xa0] sm:$0xff]
        %v1257 = vld [vmem:[%s1197 + $0xa8] sm:$0xff]
        %v1258 = vld [vmem:[%s1197 + $0xb0] sm:$0xff]
        %v1259 = vld [vmem:[%s1197 + $0xb8] sm:$0xff]
        %v1260 = vld [vmem:[%s1197 + $0xc0] sm:$0xff]
        %v1261 = vld [vmem:[%s1197 + $0xc8] sm:$0xff]
        %v1262 = vld [vmem:[%s1197 + $0xd0] sm:$0xff]
        %v1263 = vld [vmem:[%s1197 + $0xd8] sm:$0xff]
        %v1264 = vld [vmem:[%s1197 + $0xe0] sm:$0xff]
        %v1265 = vld [vmem:[%s1197 + $0xe8] sm:$0xff]
        %v1266 = vld [vmem:[%s1197 + $0xf0] sm:$0xff]
        %v1267 = vld [vmem:[%s1197 + $0xf8] sm:$0xff]
        %v1268 = vld [vmem:[%s1197 + $0x100] sm:$0xff]
        %v1269 = vld [vmem:[%s1197 + $0x108] sm:$0xff]
        %v1270 = vld [vmem:[%s1197 + $0x110] sm:$0xff]
        %v1271 = vld [vmem:[%s1197 + $0x118] sm:$0xff]
        %v1272 = vld [vmem:[%s1197 + $0x120] sm:$0xff]
        %v1273 = vld [vmem:[%s1197 + $0x128] sm:$0xff]
        %v1274 = vld [vmem:[%s1197 + $0x130] sm:$0xff]
        %v1275 = vld [vmem:[%s1197 + $0x138] sm:$0xff]
        %v1276 = vld [vmem:[%s1197 + $0x140] sm:$0xff]
        %v1277 = vld [vmem:[%s1197 + $0x148] sm:$0xff]
        %v1278 = vld [vmem:[%s1197 + $0x150] sm:$0xff]
        %v1279 = vld [vmem:[%s1197 + $0x158] sm:$0xff]
        %v1280 = vld [vmem:[%s1197 + $0x160] sm:$0xff]
        %v1281 = vld [vmem:[%s1197 + $0x168] sm:$0xff]
        %v1282 = vld [vmem:[%s1197 + $0x170] sm:$0xff]
        %v1283 = vld [vmem:[%s1197 + $0x178] sm:$0xff]
        %v1284 = vld [vmem:[%s1197 + $0x180] sm:$0xff]
        %v1285 = vld [vmem:[%s1197 + $0x188] sm:$0xff]
        %v1286 = vld [vmem:[%s1197 + $0x190] sm:$0xff]
        %v1287 = vld [vmem:[%s1197 + $0x198] sm:$0xff]
        %v1288 = vld [vmem:[%s1197 + $0x1a0] sm:$0xff]
        %v1289 = vld [vmem:[%s1197 + $0x1a8] sm:$0xff]
        %v1290 = vld [vmem:[%s1197 + $0x1b0] sm:$0xff]
        %v1291 = vld [vmem:[%s1197 + $0x1b8] sm:$0xff]
        %v1292 = vld [vmem:[%s1197 + $0x1c0] sm:$0xff]
        %v1293 = vld [vmem:[%s1197 + $0x1c8] sm:$0xff]
        %v1294 = vld [vmem:[%s1197 + $0x1d0] sm:$0xff]
        %v1295 = vld [vmem:[%s1197 + $0x1d8] sm:$0xff]
        %v1296 = vld [vmem:[%s1197 + $0x1e0] sm:$0xff]
        %v1297 = vld [vmem:[%s1197 + $0x1e8] sm:$0xff]
        %v1298 = vld [vmem:[%s1197 + $0x1f0] sm:$0xff]
        %v1299 = vld [vmem:[%s1197 + $0x1f8] sm:$0xff]
        %v1300 = vld [vmem:[%s1197 + $0x200] sm:$0xff]
        %v1301 = vld [vmem:[%s1197 + $0x208] sm:$0xff]
        %v1302 = vld [vmem:[%s1197 + $0x210] sm:$0xff]
        %v1303 = vld [vmem:[%s1197 + $0x218] sm:$0xff]
        %v1304 = vld [vmem:[%s1197 + $0x220] sm:$0xff]
        %v1305 = vld [vmem:[%s1197 + $0x228] sm:$0xff]
        %v1306 = vld [vmem:[%s1197 + $0x230] sm:$0xff]
        %v1307 = vld [vmem:[%s1197 + $0x238] sm:$0xff]
        %v1308 = vld [vmem:[%s1197 + $0x240] sm:$0xff]
        %v1309 = vld [vmem:[%s1197 + $0x248] sm:$0xff]
        %v1310 = vld [vmem:[%s1197 + $0x250] sm:$0xff]
        %v1311 = vld [vmem:[%s1197 + $0x258] sm:$0xff]
        %v1312 = vld [vmem:[%s1197 + $0x260] sm:$0xff]
        %v1313 = vld [vmem:[%s1197 + $0x268] sm:$0xff]
        %v1314 = vld [vmem:[%s1197 + $0x270] sm:$0xff]
        %v1315 = vld [vmem:[%s1197 + $0x278] sm:$0xff]
        %v1316 = vld [vmem:[%s1197 + $0x280] sm:$0xff]
        %v1317 = vld [vmem:[%s1197 + $0x288] sm:$0xff]
        %v1318 = vld [vmem:[%s1197 + $0x290] sm:$0xff]
        %v1319 = vld [vmem:[%s1197 + $0x298] sm:$0xff]
        %v1320 = vld [vmem:[%s1197 + $0x2a0] sm:$0xff]
        %v1321 = vld [vmem:[%s1197 + $0x2a8] sm:$0xff]
        %v1322 = vld [vmem:[%s1197 + $0x2b0] sm:$0xff]
        %v1323 = vld [vmem:[%s1197 + $0x2b8] sm:$0xff]
        %v1324 = vld [vmem:[%s1197 + $0x2c0] sm:$0xff]
        %v1325 = vld [vmem:[%s1197 + $0x2c8] sm:$0xff]
        %v1326 = vld [vmem:[%s1197 + $0x2d0] sm:$0xff]
        %v1327 = vld [vmem:[%s1197 + $0x2d8] sm:$0xff]
        %v1328 = vld [vmem:[%s1197 + $0x2e0] sm:$0xff]
        %v1329 = vld [vmem:[%s1197 + $0x2e8] sm:$0xff]
        %v1330 = vld [vmem:[%s1197 + $0x2f0] sm:$0xff]
        %v1331 = vld [vmem:[%s1197 + $0x2f8] sm:$0xff]
        %v1332 = vld [vmem:[%s1197 + $0x300] sm:$0xff]
        %v1333 = vld [vmem:[%s1197 + $0x308] sm:$0xff]
        %v1334 = vld [vmem:[%s1197 + $0x310] sm:$0xff]
        %v1335 = vld [vmem:[%s1197 + $0x318] sm:$0xff]
        %v1336 = vld [vmem:[%s1197 + $0x320] sm:$0xff]
        %v1337 = vld [vmem:[%s1197 + $0x328] sm:$0xff]
        %v1338 = vld [vmem:[%s1197 + $0x330] sm:$0xff]
        %v1339 = vld [vmem:[%s1197 + $0x338] sm:$0xff]
        %v1340 = vld [vmem:[%s1197 + $0x340] sm:$0xff]
        %v1341 = vld [vmem:[%s1197 + $0x348] sm:$0xff]
        %v1342 = vld [vmem:[%s1197 + $0x350] sm:$0xff]
        %v1343 = vld [vmem:[%s1197 + $0x358] sm:$0xff]
        %v1344 = vld [vmem:[%s1197 + $0x360] sm:$0xff]
        %v1345 = vld [vmem:[%s1197 + $0x368] sm:$0xff]
        %v1346 = vld [vmem:[%s1197 + $0x370] sm:$0xff]
        %v1347 = vld [vmem:[%s1197 + $0x378] sm:$0xff]
        %v1348 = vld [vmem:[%s1197 + $0x380] sm:$0xff]
        %v1349 = vld [vmem:[%s1197 + $0x388] sm:$0xff]
        %v1350 = vld [vmem:[%s1197 + $0x390] sm:$0xff]
        %v1351 = vld [vmem:[%s1197 + $0x398] sm:$0xff]
        %v1352 = vld [vmem:[%s1197 + $0x3a0] sm:$0xff]
        %v1353 = vld [vmem:[%s1197 + $0x3a8] sm:$0xff]
        %v1354 = vld [vmem:[%s1197 + $0x3b0] sm:$0xff]
        %v1355 = vld [vmem:[%s1197 + $0x3b8] sm:$0xff]
        %v1356 = vld [vmem:[%s1197 + $0x3c0] sm:$0xff]
        %v1357 = vld [vmem:[%s1197 + $0x3c8] sm:$0xff]
        %v1358 = vld [vmem:[%s1197 + $0x3d0] sm:$0xff]
        %v1359 = vld [vmem:[%s1197 + $0x3d8] sm:$0xff]
        %v1360 = vld [vmem:[%s1197 + $0x3e0] sm:$0xff]
        %v1361 = vld [vmem:[%s1197 + $0x3e8] sm:$0xff]
        %v1362 = vld [vmem:[%s1197 + $0x3f0] sm:$0xff]
        %v1363 = vld [vmem:[%s1197 + $0x3f8] sm:$0xff]
        %v1364 = vld [vmem:[%s1197 + $0x400] sm:$0xff]
        %v1365 = vld [vmem:[%s1197 + $0x408] sm:$0xff]
        %v1366 = vld [vmem:[%s1197 + $0x410] sm:$0xff]
        %v1367 = vld [vmem:[%s1197 + $0x418] sm:$0xff]
        %v1368 = vld [vmem:[%s1197 + $0x420] sm:$0xff]
        %v1369 = vld [vmem:[%s1197 + $0x428] sm:$0xff]
        %v1370 = vld [vmem:[%s1197 + $0x430] sm:$0xff]
        %v1371 = vld [vmem:[%s1197 + $0x438] sm:$0xff]
        %v1372 = vld [vmem:[%s1197 + $0x440] sm:$0xff]
        %v1373 = vld [vmem:[%s1197 + $0x448] sm:$0xff]
        %v1374 = vld [vmem:[%s1197 + $0x450] sm:$0xff]
        %v1375 = vld [vmem:[%s1197 + $0x458] sm:$0xff]
        %v1376 = vld [vmem:[%s1197 + $0x460] sm:$0xff]
        %v1377 = vld [vmem:[%s1197 + $0x468] sm:$0xff]
        %v1378 = vld [vmem:[%s1197 + $0x470] sm:$0xff]
        %v1379 = vld [vmem:[%s1197 + $0x478] sm:$0xff]
        %v1380 = vld [vmem:[%s1197 + $0x480] sm:$0xff]
        %v1381 = vld [vmem:[%s1197 + $0x488] sm:$0xff]
        %v1382 = vld [vmem:[%s1197 + $0x490] sm:$0xff]
        %v1383 = vld [vmem:[%s1197 + $0x498] sm:$0xff]
        %v1384 = vld [vmem:[%s1197 + $0x4a0] sm:$0xff]
        %v1385 = vld [vmem:[%s1197 + $0x4a8] sm:$0xff]
        %v1386 = vld [vmem:[%s1197 + $0x4b0] sm:$0xff]
        %v1387 = vld [vmem:[%s1197 + $0x4b8] sm:$0xff]
        %v1388 = vld [vmem:[%s1197 + $0x4c0] sm:$0xff]
        %v1389 = vld [vmem:[%s1197 + $0x4c8] sm:$0xff]
        %v1390 = vld [vmem:[%s1197 + $0x4d0] sm:$0xff]
        %v1391 = vld [vmem:[%s1197 + $0x4d8] sm:$0xff]
        %v1392 = vld [vmem:[%s1197 + $0x4e0] sm:$0xff]
        %v1393 = vld [vmem:[%s1197 + $0x4e8] sm:$0xff]
        %v1394 = vld [vmem:[%s1197 + $0x4f0] sm:$0xff]
        %v1395 = vld [vmem:[%s1197 + $0x4f8] sm:$0xff]
        %v1396 = vld [vmem:[%s1197 + $0x500] sm:$0xff]
        %v1397 = vld [vmem:[%s1197 + $0x508] sm:$0xff]
        %v1398 = vld [vmem:[%s1197 + $0x510] sm:$0xff]
        %v1399 = vld [vmem:[%s1197 + $0x518] sm:$0xff]
        %v1400 = vld [vmem:[%s1197 + $0x520] sm:$0xff]
        %v1401 = vld [vmem:[%s1197 + $0x528] sm:$0xff]
        %v1402 = vld [vmem:[%s1197 + $0x530] sm:$0xff]
        %v1403 = vld [vmem:[%s1197 + $0x538] sm:$0xff]
        %v1404 = vld [vmem:[%s1197 + $0x540] sm:$0xff]
        %v1405 = vld [vmem:[%s1197 + $0x548] sm:$0xff]
        %v1406 = vld [vmem:[%s1197 + $0x550] sm:$0xff]
        %v1407 = vld [vmem:[%s1197 + $0x558] sm:$0xff]
        %v1408 = vld [vmem:[%s1197 + $0x560] sm:$0xff]
        %v1409 = vld [vmem:[%s1197 + $0x568] sm:$0xff]
        %v1410 = vld [vmem:[%s1197 + $0x570] sm:$0xff]
        %v1411 = vld [vmem:[%s1197 + $0x578] sm:$0xff]
        %v1412 = vld [vmem:[%s1197 + $0x580] sm:$0xff]
        %v1413 = vld [vmem:[%s1197 + $0x588] sm:$0xff]
        %v1414 = vld [vmem:[%s1197 + $0x590] sm:$0xff]
        %v1415 = vld [vmem:[%s1197 + $0x598] sm:$0xff]
        %v1416 = vld [vmem:[%s1197 + $0x5a0] sm:$0xff]
        %v1417 = vld [vmem:[%s1197 + $0x5a8] sm:$0xff]
        %v1418 = vld [vmem:[%s1197 + $0x5b0] sm:$0xff]
        %v1419 = vld [vmem:[%s1197 + $0x5b8] sm:$0xff]
        %v1420 = vld [vmem:[%s1197 + $0x5c0] sm:$0xff]
        %v1421 = vld [vmem:[%s1197 + $0x5c8] sm:$0xff]
        %v1422 = vld [vmem:[%s1197 + $0x5d0] sm:$0xff]
        %v1423 = vld [vmem:[%s1197 + $0x5d8] sm:$0xff]
        %v1424 = vld [vmem:[%s1197 + $0x5e0] sm:$0xff]
        %v1425 = vld [vmem:[%s1197 + $0x5e8] sm:$0xff]
        %v1426 = vld [vmem:[%s1197 + $0x5f0] sm:$0xff]
        %v1427 = vld [vmem:[%s1197 + $0x5f8] sm:$0xff]
        %v1428 = vld [vmem:[%s1197 + $0x600] sm:$0xff]
        %v1429 = vld [vmem:[%s1197 + $0x608] sm:$0xff]
        %v1430 = vld [vmem:[%s1197 + $0x610] sm:$0xff]
        %v1431 = vld [vmem:[%s1197 + $0x618] sm:$0xff]
        %v1432 = vld [vmem:[%s1197 + $0x620] sm:$0xff]
        %v1433 = vld [vmem:[%s1197 + $0x628] sm:$0xff]
        %v1434 = vld [vmem:[%s1197 + $0x630] sm:$0xff]
        %v1435 = vld [vmem:[%s1197 + $0x638] sm:$0xff]
        %v1436 = vld [vmem:[%s1197 + $0x640] sm:$0xff]
        %v1437 = vld [vmem:[%s1197 + $0x648] sm:$0xff]
        %v1438 = vld [vmem:[%s1197 + $0x650] sm:$0xff]
        %v1439 = vld [vmem:[%s1197 + $0x658] sm:$0xff]
        %v1440 = vld [vmem:[%s1197 + $0x660] sm:$0xff]
        %v1441 = vld [vmem:[%s1197 + $0x668] sm:$0xff]
        %v1442 = vld [vmem:[%s1197 + $0x670] sm:$0xff]
        %v1443 = vld [vmem:[%s1197 + $0x678] sm:$0xff]
        %v1444 = vld [vmem:[%s1197 + $0x680] sm:$0xff]
        %v1445 = vld [vmem:[%s1197 + $0x688] sm:$0xff]
        %v1446 = vld [vmem:[%s1197 + $0x690] sm:$0xff]
        %v1447 = vld [vmem:[%s1197 + $0x698] sm:$0xff]
        %v1448 = vld [vmem:[%s1197 + $0x6a0] sm:$0xff]
        %v1449 = vld [vmem:[%s1197 + $0x6a8] sm:$0xff]
        %v1450 = vld [vmem:[%s1197 + $0x6b0] sm:$0xff]
        %v1451 = vld [vmem:[%s1197 + $0x6b8] sm:$0xff]
        %v1452 = vld [vmem:[%s1197 + $0x6c0] sm:$0xff]
        %v1453 = vld [vmem:[%s1197 + $0x6c8] sm:$0xff]
        %v1454 = vld [vmem:[%s1197 + $0x6d0] sm:$0xff]
        %v1455 = vld [vmem:[%s1197 + $0x6d8] sm:$0xff]
        %v1456 = vld [vmem:[%s1197 + $0x6e0] sm:$0xff]
        %v1457 = vld [vmem:[%s1197 + $0x6e8] sm:$0xff]
        %v1458 = vld [vmem:[%s1197 + $0x6f0] sm:$0xff]
        %v1459 = vld [vmem:[%s1197 + $0x6f8] sm:$0xff]
        %v1460 = vld [vmem:[%s1197 + $0x700] sm:$0xff]
        %v1461 = vld [vmem:[%s1197 + $0x708] sm:$0xff]
        %v1462 = vld [vmem:[%s1197 + $0x710] sm:$0xff]
        %v1463 = vld [vmem:[%s1197 + $0x718] sm:$0xff]
        %v1464 = vld [vmem:[%s1197 + $0x720] sm:$0xff]
        %v1465 = vld [vmem:[%s1197 + $0x728] sm:$0xff]
        %v1466 = vld [vmem:[%s1197 + $0x730] sm:$0xff]
        %v1467 = vld [vmem:[%s1197 + $0x738] sm:$0xff]
        %v1468 = vld [vmem:[%s1197 + $0x740] sm:$0xff]
        %v1469 = vld [vmem:[%s1197 + $0x748] sm:$0xff]
        %v1470 = vld [vmem:[%s1197 + $0x750] sm:$0xff]
        %v1471 = vld [vmem:[%s1197 + $0x758] sm:$0xff]
        %v1472 = vld [vmem:[%s1197 + $0x760] sm:$0xff]
        %v1473 = vld [vmem:[%s1197 + $0x768] sm:$0xff]
        %v1474 = vld [vmem:[%s1197 + $0x770] sm:$0xff]
        %v1475 = vld [vmem:[%s1197 + $0x778] sm:$0xff]
        %v1476 = vld [vmem:[%s1197 + $0x780] sm:$0xff]
        %v1477 = vld [vmem:[%s1197 + $0x788] sm:$0xff]
        %v1478 = vld [vmem:[%s1197 + $0x790] sm:$0xff]
        %v1479 = vld [vmem:[%s1197 + $0x798] sm:$0xff]
        %v1480 = vld [vmem:[%s1197 + $0x7a0] sm:$0xff]
        %v1481 = vld [vmem:[%s1197 + $0x7a8] sm:$0xff]
        %v1482 = vld [vmem:[%s1197 + $0x7b0] sm:$0xff]
        %v1483 = vld [vmem:[%s1197 + $0x7b8] sm:$0xff]
        %v1484 = vld [vmem:[%s1197 + $0x7c0] sm:$0xff]
        %v1485 = vld [vmem:[%s1197 + $0x7c8] sm:$0xff]
        %v1486 = vld [vmem:[%s1197 + $0x7d0] sm:$0xff]
        %v1487 = vld [vmem:[%s1197 + $0x7d8] sm:$0xff]
        %v1488 = vld [vmem:[%s1197 + $0x7e0] sm:$0xff]
        %v1489 = vld [vmem:[%s1197 + $0x7e8] sm:$0xff]
        %v1490 = vld [vmem:[%s1197 + $0x7f0] sm:$0xff]
        %v1491 = vld [vmem:[%s1197 + $0x7f8] sm:$0xff]
        %v1492 = vld [vmem:[%s1197 + $0x800] sm:$0xff]
        %v1493 = vld [vmem:[%s1197 + $0x808] sm:$0xff]
        %v1494 = vld [vmem:[%s1197 + $0x810] sm:$0xff]
        %v1495 = vld [vmem:[%s1197 + $0x818] sm:$0xff]
        %v1496 = vld [vmem:[%s1197 + $0x820] sm:$0xff]
        %v1497 = vld [vmem:[%s1197 + $0x828] sm:$0xff]
        %v1498 = vld [vmem:[%s1197 + $0x830] sm:$0xff]
        %v1499 = vld [vmem:[%s1197 + $0x838] sm:$0xff]
        %v1500 = vld [vmem:[%s1197 + $0x840] sm:$0xff]
        %v1501 = vld [vmem:[%s1197 + $0x848] sm:$0xff]
        %v1502 = vld [vmem:[%s1197 + $0x850] sm:$0xff]
        %v1503 = vld [vmem:[%s1197 + $0x858] sm:$0xff]
        %v1504 = vld [vmem:[%s1197 + $0x860] sm:$0xff]
        %v1505 = vld [vmem:[%s1197 + $0x868] sm:$0xff]
        %v1506 = vld [vmem:[%s1197 + $0x870] sm:$0xff]
        %v1507 = vld [vmem:[%s1197 + $0x878] sm:$0xff]
        %v1508 = vld [vmem:[%s1197 + $0x880] sm:$0xff]
        %v1509 = vld [vmem:[%s1197 + $0x888] sm:$0xff]
        %v1510 = vld [vmem:[%s1197 + $0x890] sm:$0xff]
        %v1511 = vld [vmem:[%s1197 + $0x898] sm:$0xff]
        %v1512 = vld [vmem:[%s1197 + $0x8a0] sm:$0xff]
        %v1513 = vld [vmem:[%s1197 + $0x8a8] sm:$0xff]
        %v1514 = vld [vmem:[%s1197 + $0x8b0] sm:$0xff]
        %v1515 = vld [vmem:[%s1197 + $0x8b8] sm:$0xff]
        %v1516 = vld [vmem:[%s1197 + $0x8c0] sm:$0xff]
        %v1517 = vld [vmem:[%s1197 + $0x8c8] sm:$0xff]
        %v1518 = vld [vmem:[%s1197 + $0x8d0] sm:$0xff]
        %v1519 = vld [vmem:[%s1197 + $0x8d8] sm:$0xff]
        %v1520 = vld [vmem:[%s1197 + $0x8e0] sm:$0xff]
        %v1521 = vld [vmem:[%s1197 + $0x8e8] sm:$0xff]
        %v1522 = vld [vmem:[%s1197 + $0x8f0] sm:$0xff]
        %v1523 = vld [vmem:[%s1197 + $0x8f8] sm:$0xff]
        %v1524 = vld [vmem:[%s1197 + $0x900] sm:$0xff]
        %v1525 = vld [vmem:[%s1197 + $0x908] sm:$0xff]
        %v1526 = vld [vmem:[%s1197 + $0x910] sm:$0xff]
        %v1527 = vld [vmem:[%s1197 + $0x918] sm:$0xff]
        %v1528 = vld [vmem:[%s1197 + $0x920] sm:$0xff]
        %v1529 = vld [vmem:[%s1197 + $0x928] sm:$0xff]
        %v1530 = vld [vmem:[%s1197 + $0x930] sm:$0xff]
        %v1531 = vld [vmem:[%s1197 + $0x938] sm:$0xff]
        %v1532 = vld [vmem:[%s1197 + $0x940] sm:$0xff]
        %v1533 = vld [vmem:[%s1197 + $0x948] sm:$0xff]
        %v1534 = vld [vmem:[%s1197 + $0x950] sm:$0xff]
        %v1535 = vld [vmem:[%s1197 + $0x958] sm:$0xff]
        %v1536 = vld [vmem:[%s1197 + $0x960] sm:$0xff]
        %v1537 = vld [vmem:[%s1197 + $0x968] sm:$0xff]
        %v1538 = vld [vmem:[%s1197 + $0x970] sm:$0xff]
        %v1539 = vld [vmem:[%s1197 + $0x978] sm:$0xff]
        %v1540 = vld [vmem:[%s1197 + $0x980] sm:$0xff]
        %v1541 = vld [vmem:[%s1197 + $0x988] sm:$0xff]
        %v1542 = vld [vmem:[%s1197 + $0x990] sm:$0xff]
        %v1543 = vld [vmem:[%s1197 + $0x998] sm:$0xff]
        %v1544 = vld [vmem:[%s1197 + $0x9a0] sm:$0xff]
        %v1545 = vld [vmem:[%s1197 + $0x9a8] sm:$0xff]
        %v1546 = vld [vmem:[%s1197 + $0x9b0] sm:$0xff]
        %v1547 = vld [vmem:[%s1197 + $0x9b8] sm:$0xff]
        %v1548 = vld [vmem:[%s1197 + $0x9c0] sm:$0xff]
        %v1549 = vld [vmem:[%s1197 + $0x9c8] sm:$0xff]
        %v1550 = vld [vmem:[%s1197 + $0x9d0] sm:$0xff]
        %v1551 = vld [vmem:[%s1197 + $0x9d8] sm:$0xff]
        %v1552 = vld [vmem:[%s1197 + $0x9e0] sm:$0xff]
        %v1553 = vld [vmem:[%s1197 + $0x9e8] sm:$0xff]
        %v1554 = vld [vmem:[%s1197 + $0x9f0] sm:$0xff]
        %v1555 = vld [vmem:[%s1197 + $0x9f8] sm:$0xff]
        %v1556 = vld [vmem:[%s1197 + $0xa00] sm:$0xff]
        %v1557 = vld [vmem:[%s1197 + $0xa08] sm:$0xff]
        %v1558 = vld [vmem:[%s1197 + $0xa10] sm:$0xff]
        %v1559 = vld [vmem:[%s1197 + $0xa18] sm:$0xff]
        %v1560 = vld [vmem:[%s1197 + $0xa20] sm:$0xff]
        %v1561 = vld [vmem:[%s1197 + $0xa28] sm:$0xff]
        %v1562 = vld [vmem:[%s1197 + $0xa30] sm:$0xff]
        %v1563 = vld [vmem:[%s1197 + $0xa38] sm:$0xff]
        %v1564 = vld [vmem:[%s1197 + $0xa40] sm:$0xff]
        %v1565 = vld [vmem:[%s1197 + $0xa48] sm:$0xff]
        %v1566 = vld [vmem:[%s1197 + $0xa50] sm:$0xff]
        %v1567 = vld [vmem:[%s1197 + $0xa58] sm:$0xff]
        %v1568 = vld [vmem:[%s1197 + $0xa60] sm:$0xff]
        %v1569 = vld [vmem:[%s1197 + $0xa68] sm:$0xff]
        %v1570 = vld [vmem:[%s1197 + $0xa70] sm:$0xff]
        %v1571 = vld [vmem:[%s1197 + $0xa78] sm:$0xff]
        %v1572 = vld [vmem:[%s1197 + $0xa80] sm:$0xff]
        %v1573 = vld [vmem:[%s1197 + $0xa88] sm:$0xff]
        %v1574 = vld [vmem:[%s1197 + $0xa90] sm:$0xff]
        %v1575 = vld [vmem:[%s1197 + $0xa98] sm:$0xff]
        %v1576 = vld [vmem:[%s1197 + $0xaa0] sm:$0xff]
        %v1577 = vld [vmem:[%s1197 + $0xaa8] sm:$0xff]
        %v1578 = vld [vmem:[%s1197 + $0xab0] sm:$0xff]
        %v1579 = vld [vmem:[%s1197 + $0xab8] sm:$0xff]
        %v1580 = vld [vmem:[%s1197 + $0xac0] sm:$0xff]
        %v1581 = vld [vmem:[%s1197 + $0xac8] sm:$0xff]
        %v1582 = vld [vmem:[%s1197 + $0xad0] sm:$0xff]
        %v1583 = vld [vmem:[%s1197 + $0xad8] sm:$0xff]
        %v1584 = vld [vmem:[%s1197 + $0xae0] sm:$0xff]
        %v1585 = vld [vmem:[%s1197 + $0xae8] sm:$0xff]
        %v1586 = vld [vmem:[%s1197 + $0xaf0] sm:$0xff]
        %v1587 = vld [vmem:[%s1197 + $0xaf8] sm:$0xff]
        %v1588 = vld [vmem:[%s1197 + $0xb00] sm:$0xff]
        %v1589 = vld [vmem:[%s1197 + $0xb08] sm:$0xff]
        %v1590 = vld [vmem:[%s1197 + $0xb10] sm:$0xff]
        %v1591 = vld [vmem:[%s1197 + $0xb18] sm:$0xff]
        %v1592 = vld [vmem:[%s1197 + $0xb20] sm:$0xff]
        %v1593 = vld [vmem:[%s1197 + $0xb28] sm:$0xff]
        %v1594 = vld [vmem:[%s1197 + $0xb30] sm:$0xff]
        %v1595 = vld [vmem:[%s1197 + $0xb38] sm:$0xff]
        %v1596 = vld [vmem:[%s1197 + $0xb40] sm:$0xff]
        %v1597 = vld [vmem:[%s1197 + $0xb48] sm:$0xff]
        %v1598 = vld [vmem:[%s1197 + $0xb50] sm:$0xff]
        %v1599 = vld [vmem:[%s1197 + $0xb58] sm:$0xff]
        %v1600 = vld [vmem:[%s1197 + $0xb60] sm:$0xff]
        %v1601 = vld [vmem:[%s1197 + $0xb68] sm:$0xff]
        %v1602 = vld [vmem:[%s1197 + $0xb70] sm:$0xff]
        %v1603 = vld [vmem:[%s1197 + $0xb78] sm:$0xff]
        %v1604 = vld [vmem:[%s1197 + $0xb80] sm:$0xff]
        %v1605 = vld [vmem:[%s1197 + $0xb88] sm:$0xff]
        %v1606 = vld [vmem:[%s1197 + $0xb90] sm:$0xff]
        %v1607 = vld [vmem:[%s1197 + $0xb98] sm:$0xff]
        %v1608 = vld [vmem:[%s1197 + $0xba0] sm:$0xff]
        %v1609 = vld [vmem:[%s1197 + $0xba8] sm:$0xff]
        %v1610 = vld [vmem:[%s1197 + $0xbb0] sm:$0xff]
        %v1611 = vld [vmem:[%s1197 + $0xbb8] sm:$0xff]
        %v1612 = vld [vmem:[%s1197 + $0xbc0] sm:$0xff]
        %v1613 = vld [vmem:[%s1197 + $0xbc8] sm:$0xff]
        %v1614 = vld [vmem:[%s1197 + $0xbd0] sm:$0xff]
        %v1615 = vld [vmem:[%s1197 + $0xbd8] sm:$0xff]
        %v1616 = vld [vmem:[%s1197 + $0xbe0] sm:$0xff]
        %v1617 = vld [vmem:[%s1197 + $0xbe8] sm:$0xff]
        %v1618 = vld [vmem:[%s1197 + $0xbf0] sm:$0xff]
        %v1619 = vld [vmem:[%s1197 + $0xbf8] sm:$0xff]
        %v1620 = vld [vmem:[%s1197 + $0xc00] sm:$0xff]
        %v1621 = vld [vmem:[%s1197 + $0xc08] sm:$0xff]
        %v1622 = vld [vmem:[%s1197 + $0xc10] sm:$0xff]
        %v1623 = vld [vmem:[%s1197 + $0xc18] sm:$0xff]
        %v1624 = vld [vmem:[%s1197 + $0xc20] sm:$0xff]
        %v1625 = vld [vmem:[%s1197 + $0xc28] sm:$0xff]
        %v1626 = vld [vmem:[%s1197 + $0xc30] sm:$0xff]
        %v1627 = vld [vmem:[%s1197 + $0xc38] sm:$0xff]
        %v1628 = vld [vmem:[%s1197 + $0xc40] sm:$0xff]
        %v1629 = vld [vmem:[%s1197 + $0xc48] sm:$0xff]
        %v1630 = vld [vmem:[%s1197 + $0xc50] sm:$0xff]
        %v1631 = vld [vmem:[%s1197 + $0xc58] sm:$0xff]
        %v1632 = vld [vmem:[%s1197 + $0xc60] sm:$0xff]
        %v1633 = vld [vmem:[%s1197 + $0xc68] sm:$0xff]
        %v1634 = vld [vmem:[%s1197 + $0xc70] sm:$0xff]
        %v1635 = vld [vmem:[%s1197 + $0xc78] sm:$0xff]
        %v1636 = vld [vmem:[%s1197 + $0xc80] sm:$0xff]
        %v1637 = vld [vmem:[%s1197 + $0xc88] sm:$0xff]
        %v1638 = vld [vmem:[%s1197 + $0xc90] sm:$0xff]
        %v1639 = vld [vmem:[%s1197 + $0xc98] sm:$0xff]
        %v1640 = vld [vmem:[%s1197 + $0xca0] sm:$0xff]
        %v1641 = vld [vmem:[%s1197 + $0xca8] sm:$0xff]
        %v1642 = vld [vmem:[%s1197 + $0xcb0] sm:$0xff]
        %v1643 = vld [vmem:[%s1197 + $0xcb8] sm:$0xff]
        %v1644 = vld [vmem:[%s1197 + $0xcc0] sm:$0xff]
        %v1645 = vld [vmem:[%s1197 + $0xcc8] sm:$0xff]
        %v1646 = vld [vmem:[%s1197 + $0xcd0] sm:$0xff]
        %v1647 = vld [vmem:[%s1197 + $0xcd8] sm:$0xff]
        %v1648 = vld [vmem:[%s1197 + $0xce0] sm:$0xff]
        %v1649 = vld [vmem:[%s1197 + $0xce8] sm:$0xff]
        %v1650 = vld [vmem:[%s1197 + $0xcf0] sm:$0xff]
        %v1651 = vld [vmem:[%s1197 + $0xcf8] sm:$0xff]
        %v1652 = vld [vmem:[%s1197 + $0xd00] sm:$0xff]
        %v1653 = vld [vmem:[%s1197 + $0xd08] sm:$0xff]
        %v1654 = vld [vmem:[%s1197 + $0xd10] sm:$0xff]
        %v1655 = vld [vmem:[%s1197 + $0xd18] sm:$0xff]
        %v1656 = vld [vmem:[%s1197 + $0xd20] sm:$0xff]
        %v1657 = vld [vmem:[%s1197 + $0xd28] sm:$0xff]
        %v1658 = vld [vmem:[%s1197 + $0xd30] sm:$0xff]
        %v1659 = vld [vmem:[%s1197 + $0xd38] sm:$0xff]
        %v1660 = vld [vmem:[%s1197 + $0xd40] sm:$0xff]
        %v1661 = vld [vmem:[%s1197 + $0xd48] sm:$0xff]
        %v1662 = vld [vmem:[%s1197 + $0xd50] sm:$0xff]
        %v1663 = vld [vmem:[%s1197 + $0xd58] sm:$0xff]
        %v1664 = vld [vmem:[%s1197 + $0xd60] sm:$0xff]
        %v1665 = vld [vmem:[%s1197 + $0xd68] sm:$0xff]
        %v1666 = vld [vmem:[%s1197 + $0xd70] sm:$0xff]
        %v1667 = vld [vmem:[%s1197 + $0xd78] sm:$0xff]
        %v1668 = vld [vmem:[%s1197 + $0xd80] sm:$0xff]
        %v1669 = vld [vmem:[%s1197 + $0xd88] sm:$0xff]
        %v1670 = vld [vmem:[%s1197 + $0xd90] sm:$0xff]
        %v1671 = vld [vmem:[%s1197 + $0xd98] sm:$0xff]
        %v1672 = vld [vmem:[%s1197 + $0xda0] sm:$0xff]
        %v1673 = vld [vmem:[%s1197 + $0xda8] sm:$0xff]
        %v1674 = vld [vmem:[%s1197 + $0xdb0] sm:$0xff]
        %v1675 = vld [vmem:[%s1197 + $0xdb8] sm:$0xff]
        %v1676 = vld [vmem:[%s1197 + $0xdc0] sm:$0xff]
        %v1677 = vld [vmem:[%s1197 + $0xdc8] sm:$0xff]
        %v1678 = vld [vmem:[%s1197 + $0xdd0] sm:$0xff]
        %v1679 = vld [vmem:[%s1197 + $0xdd8] sm:$0xff]
        %v1680 = vld [vmem:[%s1197 + $0xde0] sm:$0xff]
        %v1681 = vld [vmem:[%s1197 + $0xde8] sm:$0xff]
        %v1682 = vld [vmem:[%s1197 + $0xdf0] sm:$0xff]
        %v1683 = vld [vmem:[%s1197 + $0xdf8] sm:$0xff]
        %v1684 = vld [vmem:[%s1197 + $0xe00] sm:$0xff]
        %v1685 = vld [vmem:[%s1197 + $0xe08] sm:$0xff]
        %v1686 = vld [vmem:[%s1197 + $0xe10] sm:$0xff]
        %v1687 = vld [vmem:[%s1197 + $0xe18] sm:$0xff]
        %v1688 = vld [vmem:[%s1197 + $0xe20] sm:$0xff]
        %v1689 = vld [vmem:[%s1197 + $0xe28] sm:$0xff]
        %v1690 = vld [vmem:[%s1197 + $0xe30] sm:$0xff]
        %v1691 = vld [vmem:[%s1197 + $0xe38] sm:$0xff]
        %v1692 = vld [vmem:[%s1197 + $0xe40] sm:$0xff]
        %v1693 = vld [vmem:[%s1197 + $0xe48] sm:$0xff]
        %v1694 = vld [vmem:[%s1197 + $0xe50] sm:$0xff]
        %v1695 = vld [vmem:[%s1197 + $0xe58] sm:$0xff]
        %v1696 = vld [vmem:[%s1197 + $0xe60] sm:$0xff]
        %v1697 = vld [vmem:[%s1197 + $0xe68] sm:$0xff]
        %v1698 = vld [vmem:[%s1197 + $0xe70] sm:$0xff]
        %v1699 = vld [vmem:[%s1197 + $0xe78] sm:$0xff]
        %v1700 = vld [vmem:[%s1197 + $0xe80] sm:$0xff]
        %v1701 = vld [vmem:[%s1197 + $0xe88] sm:$0xff]
        %v1702 = vld [vmem:[%s1197 + $0xe90] sm:$0xff]
        %v1703 = vld [vmem:[%s1197 + $0xe98] sm:$0xff]
        %v1704 = vld [vmem:[%s1197 + $0xea0] sm:$0xff]
        %v1705 = vld [vmem:[%s1197 + $0xea8] sm:$0xff]
        %v1706 = vld [vmem:[%s1197 + $0xeb0] sm:$0xff]
        %v1707 = vld [vmem:[%s1197 + $0xeb8] sm:$0xff]
        %v1708 = vld [vmem:[%s1197 + $0xec0] sm:$0xff]
        %v1709 = vld [vmem:[%s1197 + $0xec8] sm:$0xff]
        %v1710 = vld [vmem:[%s1197 + $0xed0] sm:$0xff]
        %v1711 = vld [vmem:[%s1197 + $0xed8] sm:$0xff]
        %v1712 = vld [vmem:[%s1197 + $0xee0] sm:$0xff]
        %v1713 = vld [vmem:[%s1197 + $0xee8] sm:$0xff]
        %v1714 = vld [vmem:[%s1197 + $0xef0] sm:$0xff]
        %v1715 = vld [vmem:[%s1197 + $0xef8] sm:$0xff]
        %v1716 = vld [vmem:[%s1197 + $0xf00] sm:$0xff]
        %v1717 = vld [vmem:[%s1197 + $0xf08] sm:$0xff]
        %v1718 = vld [vmem:[%s1197 + $0xf10] sm:$0xff]
        %v1719 = vld [vmem:[%s1197 + $0xf18] sm:$0xff]
        %v1720 = vld [vmem:[%s1197 + $0xf20] sm:$0xff]
        %v1721 = vld [vmem:[%s1197 + $0xf28] sm:$0xff]
        %v1722 = vld [vmem:[%s1197 + $0xf30] sm:$0xff]
        %v1723 = vld [vmem:[%s1197 + $0xf38] sm:$0xff]
        %v1724 = vld [vmem:[%s1197 + $0xf40] sm:$0xff]
        %v1725 = vld [vmem:[%s1197 + $0xf48] sm:$0xff]
        %v1726 = vld [vmem:[%s1197 + $0xf50] sm:$0xff]
        %v1727 = vld [vmem:[%s1197 + $0xf58] sm:$0xff]
        %v1728 = vld [vmem:[%s1197 + $0xf60] sm:$0xff]
        %v1729 = vld [vmem:[%s1197 + $0xf68] sm:$0xff]
        %v1730 = vld [vmem:[%s1197 + $0xf70] sm:$0xff]
        %v1731 = vld [vmem:[%s1197 + $0xf78] sm:$0xff]
        %v1732 = vld [vmem:[%s1197 + $0xf80] sm:$0xff]
        %v1733 = vld [vmem:[%s1197 + $0xf88] sm:$0xff]
        %v1734 = vld [vmem:[%s1197 + $0xf90] sm:$0xff]
        %v1735 = vld [vmem:[%s1197 + $0xf98] sm:$0xff]
        %v1736 = vld [vmem:[%s1197 + $0xfa0] sm:$0xff]
        %v1737 = vld [vmem:[%s1197 + $0xfa8] sm:$0xff]
        %v1738 = vld [vmem:[%s1197 + $0xfb0] sm:$0xff]
        %v1739 = vld [vmem:[%s1197 + $0xfb8] sm:$0xff]
        %v1740 = vld [vmem:[%s1197 + $0xfc0] sm:$0xff]
        %v1741 = vld [vmem:[%s1197 + $0xfc8] sm:$0xff]
        %v1742 = vld [vmem:[%s1197 + $0xfd0] sm:$0xff]
        %v1743 = vld [vmem:[%s1197 + $0xfd8] sm:$0xff]
        %v1744 = vld [vmem:[%s1197 + $0xfe0] sm:$0xff]
        %v1745 = vld [vmem:[%s1197 + $0xfe8] sm:$0xff]
        %v1746 = vld [vmem:[%s1197 + $0xff0] sm:$0xff]
        %v1747 = vld [vmem:[%s1197 + $0xff8] sm:$0xff]
        %v1748 = vld [vmem:[%s1226] sm:$0xf]
        %v1750 = vlaneseq
        %v1751 = vshrl.u32 %v1750, 7
        %v1752 = vsub.s32 0, %v1751
        %v1753 = vrot.slane %v1748, %v1752
        %v1754 = vlaneseq
        %v1755 = vshrl.u32 %v1754, 7
        %v1756 = vsub.s32 1, %v1755
        %v1757 = vrot.slane %v1748, %v1756
        %v1758 = vlaneseq
        %v1759 = vshrl.u32 %v1758, 7
        %v1760 = vsub.s32 2, %v1759
        %v1761 = vrot.slane %v1748, %v1760
        %v1762 = vlaneseq
        %v1763 = vshrl.u32 %v1762, 7
        %v1764 = vsub.s32 3, %v1763
        %v1765 = vrot.slane %v1748, %v1764
        %v1772 = vcombine.high %v1234, %v1234
        %v1774 = vunpack.c.l.s4 1966171168
        %v1775 = vunpack.c.0.s8 %v1774
        %v1776 = vlaneseq
        %v1777 = vshrl.u32 %v1776, 7
        %v1778 = vsub.s32 %v1775, %v1777
        %v1779 = vrot.slane %v1234, %v1778
        %v1781 = vunpack.c.l.s4 1966171168
        %v1782 = vunpack.c.0.s8 %v1781
        %v1783 = vlaneseq
        %v1784 = vshrl.u32 %v1783, 7
        %v1785 = vsub.s32 %v1782, %v1784
        %v1786 = vrot.slane %v1772, %v1785
        %v1787 = vcombine.high %v1779, %v1779
        %v1788 = vcombine.high %v1786, %v1786
        %v1790 = vunpack.c.l.s4 1966171168
        %v1791 = vunpack.c.0.s8 %v1790
        %v1792 = vlaneseq
        %v1793 = vshrl.u32 %v1792, 7
        %v1794 = vsub.s32 %v1791, %v1793
        %v1795 = vrot.slane %v1779, %v1794
        %v1797 = vunpack.c.l.s4 1966171168
        %v1798 = vunpack.c.0.s8 %v1797
        %v1799 = vlaneseq
        %v1800 = vshrl.u32 %v1799, 7
        %v1801 = vsub.s32 %v1798, %v1800
        %v1802 = vrot.slane %v1786, %v1801
        %v1804 = vunpack.c.l.s4 1966171168
        %v1805 = vunpack.c.0.s8 %v1804
        %v1806 = vlaneseq
        %v1807 = vshrl.u32 %v1806, 7
        %v1808 = vsub.s32 %v1805, %v1807
        %v1809 = vrot.slane %v1787, %v1808
        %v1811 = vunpack.c.l.s4 1966171168
        %v1812 = vunpack.c.0.s8 %v1811
        %v1813 = vlaneseq
        %v1814 = vshrl.u32 %v1813, 7
        %v1815 = vsub.s32 %v1812, %v1814
        %v1816 = vrot.slane %v1788, %v1815
        %v1817 = vcombine.high %v1795, %v1795
        %v1818 = vcombine.high %v1802, %v1802
        %v1819 = vcombine.high %v1809, %v1809
        %v1820 = vcombine.high %v1816, %v1816
        %v1821 = vcombine.high %v1235, %v1235
        %v1823 = vunpack.c.l.s4 1966171168
        %v1824 = vunpack.c.0.s8 %v1823
        %v1825 = vlaneseq
        %v1826 = vshrl.u32 %v1825, 7
        %v1827 = vsub.s32 %v1824, %v1826
        %v1828 = vrot.slane %v1235, %v1827
        %v1830 = vunpack.c.l.s4 1966171168
        %v1831 = vunpack.c.0.s8 %v1830
        %v1832 = vlaneseq
        %v1833 = vshrl.u32 %v1832, 7
        %v1834 = vsub.s32 %v1831, %v1833
        %v1835 = vrot.slane %v1821, %v1834
        %v1836 = vcombine.high %v1828, %v1828
        %v1837 = vcombine.high %v1835, %v1835
        %v1839 = vunpack.c.l.s4 1966171168
        %v1840 = vunpack.c.0.s8 %v1839
        %v1841 = vlaneseq
        %v1842 = vshrl.u32 %v1841, 7
        %v1843 = vsub.s32 %v1840, %v1842
        %v1844 = vrot.slane %v1828, %v1843
        %v1846 = vunpack.c.l.s4 1966171168
        %v1847 = vunpack.c.0.s8 %v1846
        %v1848 = vlaneseq
        %v1849 = vshrl.u32 %v1848, 7
        %v1850 = vsub.s32 %v1847, %v1849
        %v1851 = vrot.slane %v1835, %v1850
        %v1853 = vunpack.c.l.s4 1966171168
        %v1854 = vunpack.c.0.s8 %v1853
        %v1855 = vlaneseq
        %v1856 = vshrl.u32 %v1855, 7
        %v1857 = vsub.s32 %v1854, %v1856
        %v1858 = vrot.slane %v1836, %v1857
        %v1860 = vunpack.c.l.s4 1966171168
        %v1861 = vunpack.c.0.s8 %v1860
        %v1862 = vlaneseq
        %v1863 = vshrl.u32 %v1862, 7
        %v1864 = vsub.s32 %v1861, %v1863
        %v1865 = vrot.slane %v1837, %v1864
        %v1866 = vcombine.high %v1844, %v1844
        %v1867 = vcombine.high %v1851, %v1851
        %v1868 = vcombine.high %v1858, %v1858
        %v1869 = vcombine.high %v1865, %v1865
        %v2398 = vunpack.c.l.b16 %v1236
        %v2399 = vunpack.c.h.b16 %v1236
        %v2400 = vunpack.c.l.b16 %v1237
        %v2401 = vunpack.c.h.b16 %v1237
        %v2402 = vunpack.c.l.b16 %v1238
        %v2403 = vunpack.c.h.b16 %v1238
        %v2404 = vunpack.c.l.b16 %v1239
        %v2405 = vunpack.c.h.b16 %v1239
        %v2406 = vunpack.c.l.b16 %v1240
        %v2407 = vunpack.c.h.b16 %v1240
        %v2408 = vunpack.c.l.b16 %v1241
        %v2409 = vunpack.c.h.b16 %v1241
        %v2410 = vunpack.c.l.b16 %v1242
        %v2411 = vunpack.c.h.b16 %v1242
        %v2412 = vunpack.c.l.b16 %v1243
        %v2413 = vunpack.c.h.b16 %v1243
        %v2414 = vunpack.c.l.b16 %v1244
        %v2415 = vunpack.c.h.b16 %v1244
        %v2416 = vunpack.c.l.b16 %v1245
        %v2417 = vunpack.c.h.b16 %v1245
        %v2418 = vunpack.c.l.b16 %v1246
        %v2419 = vunpack.c.h.b16 %v1246
        %v2420 = vunpack.c.l.b16 %v1247
        %v2421 = vunpack.c.h.b16 %v1247
        %v2422 = vunpack.c.l.b16 %v1248
        %v2423 = vunpack.c.h.b16 %v1248
        %v2424 = vunpack.c.l.b16 %v1249
        %v2425 = vunpack.c.h.b16 %v1249
        %v2426 = vunpack.c.l.b16 %v1250
        %v2427 = vunpack.c.h.b16 %v1250
        %v2428 = vunpack.c.l.b16 %v1251
        %v2429 = vunpack.c.h.b16 %v1251
        %v2430 = vunpack.c.l.b16 %v1252
        %v2431 = vunpack.c.h.b16 %v1252
        %v2432 = vunpack.c.l.b16 %v1253
        %v2433 = vunpack.c.h.b16 %v1253
        %v2434 = vunpack.c.l.b16 %v1254
        %v2435 = vunpack.c.h.b16 %v1254
        %v2436 = vunpack.c.l.b16 %v1255
        %v2437 = vunpack.c.h.b16 %v1255
        %v2438 = vunpack.c.l.b16 %v1256
        %v2439 = vunpack.c.h.b16 %v1256
        %v2440 = vunpack.c.l.b16 %v1257
        %v2441 = vunpack.c.h.b16 %v1257
        %v2442 = vunpack.c.l.b16 %v1258
        %v2443 = vunpack.c.h.b16 %v1258
        %v2444 = vunpack.c.l.b16 %v1259
        %v2445 = vunpack.c.h.b16 %v1259
        %v2446 = vunpack.c.l.b16 %v1260
        %v2447 = vunpack.c.h.b16 %v1260
        %v2448 = vunpack.c.l.b16 %v1261
        %v2449 = vunpack.c.h.b16 %v1261
        %v2450 = vunpack.c.l.b16 %v1262
        %v2451 = vunpack.c.h.b16 %v1262
        %v2452 = vunpack.c.l.b16 %v1263
        %v2453 = vunpack.c.h.b16 %v1263
        %v2454 = vunpack.c.l.b16 %v1264
        %v2455 = vunpack.c.h.b16 %v1264
        %v2456 = vunpack.c.l.b16 %v1265
        %v2457 = vunpack.c.h.b16 %v1265
        %v2458 = vunpack.c.l.b16 %v1266
        %v2459 = vunpack.c.h.b16 %v1266
        %v2460 = vunpack.c.l.b16 %v1267
        %v2461 = vunpack.c.h.b16 %v1267
        %v2462 = vunpack.c.l.b16 %v1268
        %v2463 = vunpack.c.h.b16 %v1268
        %v2464 = vunpack.c.l.b16 %v1269
        %v2465 = vunpack.c.h.b16 %v1269
        %v2466 = vunpack.c.l.b16 %v1270
        %v2467 = vunpack.c.h.b16 %v1270
        %v2468 = vunpack.c.l.b16 %v1271
        %v2469 = vunpack.c.h.b16 %v1271
        %v2470 = vunpack.c.l.b16 %v1272
        %v2471 = vunpack.c.h.b16 %v1272
        %v2472 = vunpack.c.l.b16 %v1273
        %v2473 = vunpack.c.h.b16 %v1273
        %v2474 = vunpack.c.l.b16 %v1274
        %v2475 = vunpack.c.h.b16 %v1274
        %v2476 = vunpack.c.l.b16 %v1275
        %v2477 = vunpack.c.h.b16 %v1275
        %v2478 = vunpack.c.l.b16 %v1276
        %v2479 = vunpack.c.h.b16 %v1276
        %v2480 = vunpack.c.l.b16 %v1277
        %v2481 = vunpack.c.h.b16 %v1277
        %v2482 = vunpack.c.l.b16 %v1278
        %v2483 = vunpack.c.h.b16 %v1278
        %v2484 = vunpack.c.l.b16 %v1279
        %v2485 = vunpack.c.h.b16 %v1279
        %v2486 = vunpack.c.l.b16 %v1280
        %v2487 = vunpack.c.h.b16 %v1280
        %v2488 = vunpack.c.l.b16 %v1281
        %v2489 = vunpack.c.h.b16 %v1281
        %v2490 = vunpack.c.l.b16 %v1282
        %v2491 = vunpack.c.h.b16 %v1282
        %v2492 = vunpack.c.l.b16 %v1283
        %v2493 = vunpack.c.h.b16 %v1283
        %v2494 = vunpack.c.l.b16 %v1284
        %v2495 = vunpack.c.h.b16 %v1284
        %v2496 = vunpack.c.l.b16 %v1285
        %v2497 = vunpack.c.h.b16 %v1285
        %v2498 = vunpack.c.l.b16 %v1286
        %v2499 = vunpack.c.h.b16 %v1286
        %v2500 = vunpack.c.l.b16 %v1287
        %v2501 = vunpack.c.h.b16 %v1287
        %v2502 = vunpack.c.l.b16 %v1288
        %v2503 = vunpack.c.h.b16 %v1288
        %v2504 = vunpack.c.l.b16 %v1289
        %v2505 = vunpack.c.h.b16 %v1289
        %v2506 = vunpack.c.l.b16 %v1290
        %v2507 = vunpack.c.h.b16 %v1290
        %v2508 = vunpack.c.l.b16 %v1291
        %v2509 = vunpack.c.h.b16 %v1291
        %v2510 = vunpack.c.l.b16 %v1292
        %v2511 = vunpack.c.h.b16 %v1292
        %v2512 = vunpack.c.l.b16 %v1293
        %v2513 = vunpack.c.h.b16 %v1293
        %v2514 = vunpack.c.l.b16 %v1294
        %v2515 = vunpack.c.h.b16 %v1294
        %v2516 = vunpack.c.l.b16 %v1295
        %v2517 = vunpack.c.h.b16 %v1295
        %v2518 = vunpack.c.l.b16 %v1296
        %v2519 = vunpack.c.h.b16 %v1296
        %v2520 = vunpack.c.l.b16 %v1297
        %v2521 = vunpack.c.h.b16 %v1297
        %v2522 = vunpack.c.l.b16 %v1298
        %v2523 = vunpack.c.h.b16 %v1298
        %v2524 = vunpack.c.l.b16 %v1299
        %v2525 = vunpack.c.h.b16 %v1299
        %v2526 = vunpack.c.l.b16 %v1300
        %v2527 = vunpack.c.h.b16 %v1300
        %v2528 = vunpack.c.l.b16 %v1301
        %v2529 = vunpack.c.h.b16 %v1301
        %v2530 = vunpack.c.l.b16 %v1302
        %v2531 = vunpack.c.h.b16 %v1302
        %v2532 = vunpack.c.l.b16 %v1303
        %v2533 = vunpack.c.h.b16 %v1303
        %v2534 = vunpack.c.l.b16 %v1304
        %v2535 = vunpack.c.h.b16 %v1304
        %v2536 = vunpack.c.l.b16 %v1305
        %v2537 = vunpack.c.h.b16 %v1305
        %v2538 = vunpack.c.l.b16 %v1306
        %v2539 = vunpack.c.h.b16 %v1306
        %v2540 = vunpack.c.l.b16 %v1307
        %v2541 = vunpack.c.h.b16 %v1307
        %v2542 = vunpack.c.l.b16 %v1308
        %v2543 = vunpack.c.h.b16 %v1308
        %v2544 = vunpack.c.l.b16 %v1309
        %v2545 = vunpack.c.h.b16 %v1309
        %v2546 = vunpack.c.l.b16 %v1310
        %v2547 = vunpack.c.h.b16 %v1310
        %v2548 = vunpack.c.l.b16 %v1311
        %v2549 = vunpack.c.h.b16 %v1311
        %v2550 = vunpack.c.l.b16 %v1312
        %v2551 = vunpack.c.h.b16 %v1312
        %v2552 = vunpack.c.l.b16 %v1313
        %v2553 = vunpack.c.h.b16 %v1313
        %v2554 = vunpack.c.l.b16 %v1314
        %v2555 = vunpack.c.h.b16 %v1314
        %v2556 = vunpack.c.l.b16 %v1315
        %v2557 = vunpack.c.h.b16 %v1315
        %v2558 = vunpack.c.l.b16 %v1316
        %v2559 = vunpack.c.h.b16 %v1316
        %v2560 = vunpack.c.l.b16 %v1317
        %v2561 = vunpack.c.h.b16 %v1317
        %v2562 = vunpack.c.l.b16 %v1318
        %v2563 = vunpack.c.h.b16 %v1318
        %v2564 = vunpack.c.l.b16 %v1319
        %v2565 = vunpack.c.h.b16 %v1319
        %v2566 = vunpack.c.l.b16 %v1320
        %v2567 = vunpack.c.h.b16 %v1320
        %v2568 = vunpack.c.l.b16 %v1321
        %v2569 = vunpack.c.h.b16 %v1321
        %v2570 = vunpack.c.l.b16 %v1322
        %v2571 = vunpack.c.h.b16 %v1322
        %v2572 = vunpack.c.l.b16 %v1323
        %v2573 = vunpack.c.h.b16 %v1323
        %v2574 = vunpack.c.l.b16 %v1324
        %v2575 = vunpack.c.h.b16 %v1324
        %v2576 = vunpack.c.l.b16 %v1325
        %v2577 = vunpack.c.h.b16 %v1325
        %v2578 = vunpack.c.l.b16 %v1326
        %v2579 = vunpack.c.h.b16 %v1326
        %v2580 = vunpack.c.l.b16 %v1327
        %v2581 = vunpack.c.h.b16 %v1327
        %v2582 = vunpack.c.l.b16 %v1328
        %v2583 = vunpack.c.h.b16 %v1328
        %v2584 = vunpack.c.l.b16 %v1329
        %v2585 = vunpack.c.h.b16 %v1329
        %v2586 = vunpack.c.l.b16 %v1330
        %v2587 = vunpack.c.h.b16 %v1330
        %v2588 = vunpack.c.l.b16 %v1331
        %v2589 = vunpack.c.h.b16 %v1331
        %v2590 = vunpack.c.l.b16 %v1332
        %v2591 = vunpack.c.h.b16 %v1332
        %v2592 = vunpack.c.l.b16 %v1333
        %v2593 = vunpack.c.h.b16 %v1333
        %v2594 = vunpack.c.l.b16 %v1334
        %v2595 = vunpack.c.h.b16 %v1334
        %v2596 = vunpack.c.l.b16 %v1335
        %v2597 = vunpack.c.h.b16 %v1335
        %v2598 = vunpack.c.l.b16 %v1336
        %v2599 = vunpack.c.h.b16 %v1336
        %v2600 = vunpack.c.l.b16 %v1337
        %v2601 = vunpack.c.h.b16 %v1337
        %v2602 = vunpack.c.l.b16 %v1338
        %v2603 = vunpack.c.h.b16 %v1338
        %v2604 = vunpack.c.l.b16 %v1339
        %v2605 = vunpack.c.h.b16 %v1339
        %v2606 = vunpack.c.l.b16 %v1340
        %v2607 = vunpack.c.h.b16 %v1340
        %v2608 = vunpack.c.l.b16 %v1341
        %v2609 = vunpack.c.h.b16 %v1341
        %v2610 = vunpack.c.l.b16 %v1342
        %v2611 = vunpack.c.h.b16 %v1342
        %v2612 = vunpack.c.l.b16 %v1343
        %v2613 = vunpack.c.h.b16 %v1343
        %v2614 = vunpack.c.l.b16 %v1344
        %v2615 = vunpack.c.h.b16 %v1344
        %v2616 = vunpack.c.l.b16 %v1345
        %v2617 = vunpack.c.h.b16 %v1345
        %v2618 = vunpack.c.l.b16 %v1346
        %v2619 = vunpack.c.h.b16 %v1346
        %v2620 = vunpack.c.l.b16 %v1347
        %v2621 = vunpack.c.h.b16 %v1347
        %v2622 = vunpack.c.l.b16 %v1348
        %v2623 = vunpack.c.h.b16 %v1348
        %v2624 = vunpack.c.l.b16 %v1349
        %v2625 = vunpack.c.h.b16 %v1349
        %v2626 = vunpack.c.l.b16 %v1350
        %v2627 = vunpack.c.h.b16 %v1350
        %v2628 = vunpack.c.l.b16 %v1351
        %v2629 = vunpack.c.h.b16 %v1351
        %v2630 = vunpack.c.l.b16 %v1352
        %v2631 = vunpack.c.h.b16 %v1352
        %v2632 = vunpack.c.l.b16 %v1353
        %v2633 = vunpack.c.h.b16 %v1353
        %v2634 = vunpack.c.l.b16 %v1354
        %v2635 = vunpack.c.h.b16 %v1354
        %v2636 = vunpack.c.l.b16 %v1355
        %v2637 = vunpack.c.h.b16 %v1355
        %v2638 = vunpack.c.l.b16 %v1356
        %v2639 = vunpack.c.h.b16 %v1356
        %v2640 = vunpack.c.l.b16 %v1357
        %v2641 = vunpack.c.h.b16 %v1357
        %v2642 = vunpack.c.l.b16 %v1358
        %v2643 = vunpack.c.h.b16 %v1358
        %v2644 = vunpack.c.l.b16 %v1359
        %v2645 = vunpack.c.h.b16 %v1359
        %v2646 = vunpack.c.l.b16 %v1360
        %v2647 = vunpack.c.h.b16 %v1360
        %v2648 = vunpack.c.l.b16 %v1361
        %v2649 = vunpack.c.h.b16 %v1361
        %v2650 = vunpack.c.l.b16 %v1362
        %v2651 = vunpack.c.h.b16 %v1362
        %v2652 = vunpack.c.l.b16 %v1363
        %v2653 = vunpack.c.h.b16 %v1363
        %v2654 = vunpack.c.l.b16 %v1364
        %v2655 = vunpack.c.h.b16 %v1364
        %v2656 = vunpack.c.l.b16 %v1365
        %v2657 = vunpack.c.h.b16 %v1365
        %v2658 = vunpack.c.l.b16 %v1366
        %v2659 = vunpack.c.h.b16 %v1366
        %v2660 = vunpack.c.l.b16 %v1367
        %v2661 = vunpack.c.h.b16 %v1367
        %v2662 = vunpack.c.l.b16 %v1368
        %v2663 = vunpack.c.h.b16 %v1368
        %v2664 = vunpack.c.l.b16 %v1369
        %v2665 = vunpack.c.h.b16 %v1369
        %v2666 = vunpack.c.l.b16 %v1370
        %v2667 = vunpack.c.h.b16 %v1370
        %v2668 = vunpack.c.l.b16 %v1371
        %v2669 = vunpack.c.h.b16 %v1371
        %v2670 = vunpack.c.l.b16 %v1372
        %v2671 = vunpack.c.h.b16 %v1372
        %v2672 = vunpack.c.l.b16 %v1373
        %v2673 = vunpack.c.h.b16 %v1373
        %v2674 = vunpack.c.l.b16 %v1374
        %v2675 = vunpack.c.h.b16 %v1374
        %v2676 = vunpack.c.l.b16 %v1375
        %v2677 = vunpack.c.h.b16 %v1375
        %v2678 = vunpack.c.l.b16 %v1376
        %v2679 = vunpack.c.h.b16 %v1376
        %v2680 = vunpack.c.l.b16 %v1377
        %v2681 = vunpack.c.h.b16 %v1377
        %v2682 = vunpack.c.l.b16 %v1378
        %v2683 = vunpack.c.h.b16 %v1378
        %v2684 = vunpack.c.l.b16 %v1379
        %v2685 = vunpack.c.h.b16 %v1379
        %v2686 = vunpack.c.l.b16 %v1380
        %v2687 = vunpack.c.h.b16 %v1380
        %v2688 = vunpack.c.l.b16 %v1381
        %v2689 = vunpack.c.h.b16 %v1381
        %v2690 = vunpack.c.l.b16 %v1382
        %v2691 = vunpack.c.h.b16 %v1382
        %v2692 = vunpack.c.l.b16 %v1383
        %v2693 = vunpack.c.h.b16 %v1383
        %v2694 = vunpack.c.l.b16 %v1384
        %v2695 = vunpack.c.h.b16 %v1384
        %v2696 = vunpack.c.l.b16 %v1385
        %v2697 = vunpack.c.h.b16 %v1385
        %v2698 = vunpack.c.l.b16 %v1386
        %v2699 = vunpack.c.h.b16 %v1386
        %v2700 = vunpack.c.l.b16 %v1387
        %v2701 = vunpack.c.h.b16 %v1387
        %v2702 = vunpack.c.l.b16 %v1388
        %v2703 = vunpack.c.h.b16 %v1388
        %v2704 = vunpack.c.l.b16 %v1389
        %v2705 = vunpack.c.h.b16 %v1389
        %v2706 = vunpack.c.l.b16 %v1390
        %v2707 = vunpack.c.h.b16 %v1390
        %v2708 = vunpack.c.l.b16 %v1391
        %v2709 = vunpack.c.h.b16 %v1391
        %v2710 = vunpack.c.l.b16 %v1392
        %v2711 = vunpack.c.h.b16 %v1392
        %v2712 = vunpack.c.l.b16 %v1393
        %v2713 = vunpack.c.h.b16 %v1393
        %v2714 = vunpack.c.l.b16 %v1394
        %v2715 = vunpack.c.h.b16 %v1394
        %v2716 = vunpack.c.l.b16 %v1395
        %v2717 = vunpack.c.h.b16 %v1395
        %v2718 = vunpack.c.l.b16 %v1396
        %v2719 = vunpack.c.h.b16 %v1396
        %v2720 = vunpack.c.l.b16 %v1397
        %v2721 = vunpack.c.h.b16 %v1397
        %v2722 = vunpack.c.l.b16 %v1398
        %v2723 = vunpack.c.h.b16 %v1398
        %v2724 = vunpack.c.l.b16 %v1399
        %v2725 = vunpack.c.h.b16 %v1399
        %v2726 = vunpack.c.l.b16 %v1400
        %v2727 = vunpack.c.h.b16 %v1400
        %v2728 = vunpack.c.l.b16 %v1401
        %v2729 = vunpack.c.h.b16 %v1401
        %v2730 = vunpack.c.l.b16 %v1402
        %v2731 = vunpack.c.h.b16 %v1402
        %v2732 = vunpack.c.l.b16 %v1403
        %v2733 = vunpack.c.h.b16 %v1403
        %v2734 = vunpack.c.l.b16 %v1404
        %v2735 = vunpack.c.h.b16 %v1404
        %v2736 = vunpack.c.l.b16 %v1405
        %v2737 = vunpack.c.h.b16 %v1405
        %v2738 = vunpack.c.l.b16 %v1406
        %v2739 = vunpack.c.h.b16 %v1406
        %v2740 = vunpack.c.l.b16 %v1407
        %v2741 = vunpack.c.h.b16 %v1407
        %v2742 = vunpack.c.l.b16 %v1408
        %v2743 = vunpack.c.h.b16 %v1408
        %v2744 = vunpack.c.l.b16 %v1409
        %v2745 = vunpack.c.h.b16 %v1409
        %v2746 = vunpack.c.l.b16 %v1410
        %v2747 = vunpack.c.h.b16 %v1410
        %v2748 = vunpack.c.l.b16 %v1411
        %v2749 = vunpack.c.h.b16 %v1411
        %v2750 = vunpack.c.l.b16 %v1412
        %v2751 = vunpack.c.h.b16 %v1412
        %v2752 = vunpack.c.l.b16 %v1413
        %v2753 = vunpack.c.h.b16 %v1413
        %v2754 = vunpack.c.l.b16 %v1414
        %v2755 = vunpack.c.h.b16 %v1414
        %v2756 = vunpack.c.l.b16 %v1415
        %v2757 = vunpack.c.h.b16 %v1415
        %v2758 = vunpack.c.l.b16 %v1416
        %v2759 = vunpack.c.h.b16 %v1416
        %v2760 = vunpack.c.l.b16 %v1417
        %v2761 = vunpack.c.h.b16 %v1417
        %v2762 = vunpack.c.l.b16 %v1418
        %v2763 = vunpack.c.h.b16 %v1418
        %v2764 = vunpack.c.l.b16 %v1419
        %v2765 = vunpack.c.h.b16 %v1419
        %v2766 = vunpack.c.l.b16 %v1420
        %v2767 = vunpack.c.h.b16 %v1420
        %v2768 = vunpack.c.l.b16 %v1421
        %v2769 = vunpack.c.h.b16 %v1421
        %v2770 = vunpack.c.l.b16 %v1422
        %v2771 = vunpack.c.h.b16 %v1422
        %v2772 = vunpack.c.l.b16 %v1423
        %v2773 = vunpack.c.h.b16 %v1423
        %v2774 = vunpack.c.l.b16 %v1424
        %v2775 = vunpack.c.h.b16 %v1424
        %v2776 = vunpack.c.l.b16 %v1425
        %v2777 = vunpack.c.h.b16 %v1425
        %v2778 = vunpack.c.l.b16 %v1426
        %v2779 = vunpack.c.h.b16 %v1426
        %v2780 = vunpack.c.l.b16 %v1427
        %v2781 = vunpack.c.h.b16 %v1427
        %v2782 = vunpack.c.l.b16 %v1428
        %v2783 = vunpack.c.h.b16 %v1428
        %v2784 = vunpack.c.l.b16 %v1429
        %v2785 = vunpack.c.h.b16 %v1429
        %v2786 = vunpack.c.l.b16 %v1430
        %v2787 = vunpack.c.h.b16 %v1430
        %v2788 = vunpack.c.l.b16 %v1431
        %v2789 = vunpack.c.h.b16 %v1431
        %v2790 = vunpack.c.l.b16 %v1432
        %v2791 = vunpack.c.h.b16 %v1432
        %v2792 = vunpack.c.l.b16 %v1433
        %v2793 = vunpack.c.h.b16 %v1433
        %v2794 = vunpack.c.l.b16 %v1434
        %v2795 = vunpack.c.h.b16 %v1434
        %v2796 = vunpack.c.l.b16 %v1435
        %v2797 = vunpack.c.h.b16 %v1435
        %v2798 = vunpack.c.l.b16 %v1436
        %v2799 = vunpack.c.h.b16 %v1436
        %v2800 = vunpack.c.l.b16 %v1437
        %v2801 = vunpack.c.h.b16 %v1437
        %v2802 = vunpack.c.l.b16 %v1438
        %v2803 = vunpack.c.h.b16 %v1438
        %v2804 = vunpack.c.l.b16 %v1439
        %v2805 = vunpack.c.h.b16 %v1439
        %v2806 = vunpack.c.l.b16 %v1440
        %v2807 = vunpack.c.h.b16 %v1440
        %v2808 = vunpack.c.l.b16 %v1441
        %v2809 = vunpack.c.h.b16 %v1441
        %v2810 = vunpack.c.l.b16 %v1442
        %v2811 = vunpack.c.h.b16 %v1442
        %v2812 = vunpack.c.l.b16 %v1443
        %v2813 = vunpack.c.h.b16 %v1443
        %v2814 = vunpack.c.l.b16 %v1444
        %v2815 = vunpack.c.h.b16 %v1444
        %v2816 = vunpack.c.l.b16 %v1445
        %v2817 = vunpack.c.h.b16 %v1445
        %v2818 = vunpack.c.l.b16 %v1446
        %v2819 = vunpack.c.h.b16 %v1446
        %v2820 = vunpack.c.l.b16 %v1447
        %v2821 = vunpack.c.h.b16 %v1447
        %v2822 = vunpack.c.l.b16 %v1448
        %v2823 = vunpack.c.h.b16 %v1448
        %v2824 = vunpack.c.l.b16 %v1449
        %v2825 = vunpack.c.h.b16 %v1449
        %v2826 = vunpack.c.l.b16 %v1450
        %v2827 = vunpack.c.h.b16 %v1450
        %v2828 = vunpack.c.l.b16 %v1451
        %v2829 = vunpack.c.h.b16 %v1451
        %v2830 = vunpack.c.l.b16 %v1452
        %v2831 = vunpack.c.h.b16 %v1452
        %v2832 = vunpack.c.l.b16 %v1453
        %v2833 = vunpack.c.h.b16 %v1453
        %v2834 = vunpack.c.l.b16 %v1454
        %v2835 = vunpack.c.h.b16 %v1454
        %v2836 = vunpack.c.l.b16 %v1455
        %v2837 = vunpack.c.h.b16 %v1455
        %v2838 = vunpack.c.l.b16 %v1456
        %v2839 = vunpack.c.h.b16 %v1456
        %v2840 = vunpack.c.l.b16 %v1457
        %v2841 = vunpack.c.h.b16 %v1457
        %v2842 = vunpack.c.l.b16 %v1458
        %v2843 = vunpack.c.h.b16 %v1458
        %v2844 = vunpack.c.l.b16 %v1459
        %v2845 = vunpack.c.h.b16 %v1459
        %v2846 = vunpack.c.l.b16 %v1460
        %v2847 = vunpack.c.h.b16 %v1460
        %v2848 = vunpack.c.l.b16 %v1461
        %v2849 = vunpack.c.h.b16 %v1461
        %v2850 = vunpack.c.l.b16 %v1462
        %v2851 = vunpack.c.h.b16 %v1462
        %v2852 = vunpack.c.l.b16 %v1463
        %v2853 = vunpack.c.h.b16 %v1463
        %v2854 = vunpack.c.l.b16 %v1464
        %v2855 = vunpack.c.h.b16 %v1464
        %v2856 = vunpack.c.l.b16 %v1465
        %v2857 = vunpack.c.h.b16 %v1465
        %v2858 = vunpack.c.l.b16 %v1466
        %v2859 = vunpack.c.h.b16 %v1466
        %v2860 = vunpack.c.l.b16 %v1467
        %v2861 = vunpack.c.h.b16 %v1467
        %v2862 = vunpack.c.l.b16 %v1468
        %v2863 = vunpack.c.h.b16 %v1468
        %v2864 = vunpack.c.l.b16 %v1469
        %v2865 = vunpack.c.h.b16 %v1469
        %v2866 = vunpack.c.l.b16 %v1470
        %v2867 = vunpack.c.h.b16 %v1470
        %v2868 = vunpack.c.l.b16 %v1471
        %v2869 = vunpack.c.h.b16 %v1471
        %v2870 = vunpack.c.l.b16 %v1472
        %v2871 = vunpack.c.h.b16 %v1472
        %v2872 = vunpack.c.l.b16 %v1473
        %v2873 = vunpack.c.h.b16 %v1473
        %v2874 = vunpack.c.l.b16 %v1474
        %v2875 = vunpack.c.h.b16 %v1474
        %v2876 = vunpack.c.l.b16 %v1475
        %v2877 = vunpack.c.h.b16 %v1475
        %v2878 = vunpack.c.l.b16 %v1476
        %v2879 = vunpack.c.h.b16 %v1476
        %v2880 = vunpack.c.l.b16 %v1477
        %v2881 = vunpack.c.h.b16 %v1477
        %v2882 = vunpack.c.l.b16 %v1478
        %v2883 = vunpack.c.h.b16 %v1478
        %v2884 = vunpack.c.l.b16 %v1479
        %v2885 = vunpack.c.h.b16 %v1479
        %v2886 = vunpack.c.l.b16 %v1480
        %v2887 = vunpack.c.h.b16 %v1480
        %v2888 = vunpack.c.l.b16 %v1481
        %v2889 = vunpack.c.h.b16 %v1481
        %v2890 = vunpack.c.l.b16 %v1482
        %v2891 = vunpack.c.h.b16 %v1482
        %v2892 = vunpack.c.l.b16 %v1483
        %v2893 = vunpack.c.h.b16 %v1483
        %v2894 = vunpack.c.l.b16 %v1484
        %v2895 = vunpack.c.h.b16 %v1484
        %v2896 = vunpack.c.l.b16 %v1485
        %v2897 = vunpack.c.h.b16 %v1485
        %v2898 = vunpack.c.l.b16 %v1486
        %v2899 = vunpack.c.h.b16 %v1486
        %v2900 = vunpack.c.l.b16 %v1487
        %v2901 = vunpack.c.h.b16 %v1487
        %v2902 = vunpack.c.l.b16 %v1488
        %v2903 = vunpack.c.h.b16 %v1488
        %v2904 = vunpack.c.l.b16 %v1489
        %v2905 = vunpack.c.h.b16 %v1489
        %v2906 = vunpack.c.l.b16 %v1490
        %v2907 = vunpack.c.h.b16 %v1490
        %v2908 = vunpack.c.l.b16 %v1491
        %v2909 = vunpack.c.h.b16 %v1491
        %v2910 = vunpack.c.l.b16 %v1492
        %v2911 = vunpack.c.h.b16 %v1492
        %v2912 = vunpack.c.l.b16 %v1493
        %v2913 = vunpack.c.h.b16 %v1493
        %v2914 = vunpack.c.l.b16 %v1494
        %v2915 = vunpack.c.h.b16 %v1494
        %v2916 = vunpack.c.l.b16 %v1495
        %v2917 = vunpack.c.h.b16 %v1495
        %v2918 = vunpack.c.l.b16 %v1496
        %v2919 = vunpack.c.h.b16 %v1496
        %v2920 = vunpack.c.l.b16 %v1497
        %v2921 = vunpack.c.h.b16 %v1497
        %v2922 = vunpack.c.l.b16 %v1498
        %v2923 = vunpack.c.h.b16 %v1498
        %v2924 = vunpack.c.l.b16 %v1499
        %v2925 = vunpack.c.h.b16 %v1499
        %v2926 = vunpack.c.l.b16 %v1500
        %v2927 = vunpack.c.h.b16 %v1500
        %v2928 = vunpack.c.l.b16 %v1501
        %v2929 = vunpack.c.h.b16 %v1501
        %v2930 = vunpack.c.l.b16 %v1502
        %v2931 = vunpack.c.h.b16 %v1502
        %v2932 = vunpack.c.l.b16 %v1503
        %v2933 = vunpack.c.h.b16 %v1503
        %v2934 = vunpack.c.l.b16 %v1504
        %v2935 = vunpack.c.h.b16 %v1504
        %v2936 = vunpack.c.l.b16 %v1505
        %v2937 = vunpack.c.h.b16 %v1505
        %v2938 = vunpack.c.l.b16 %v1506
        %v2939 = vunpack.c.h.b16 %v1506
        %v2940 = vunpack.c.l.b16 %v1507
        %v2941 = vunpack.c.h.b16 %v1507
        %v2942 = vunpack.c.l.b16 %v1508
        %v2943 = vunpack.c.h.b16 %v1508
        %v2944 = vunpack.c.l.b16 %v1509
        %v2945 = vunpack.c.h.b16 %v1509
        %v2946 = vunpack.c.l.b16 %v1510
        %v2947 = vunpack.c.h.b16 %v1510
        %v2948 = vunpack.c.l.b16 %v1511
        %v2949 = vunpack.c.h.b16 %v1511
        %v2950 = vunpack.c.l.b16 %v1512
        %v2951 = vunpack.c.h.b16 %v1512
        %v2952 = vunpack.c.l.b16 %v1513
        %v2953 = vunpack.c.h.b16 %v1513
        %v2954 = vunpack.c.l.b16 %v1514
        %v2955 = vunpack.c.h.b16 %v1514
        %v2956 = vunpack.c.l.b16 %v1515
        %v2957 = vunpack.c.h.b16 %v1515
        %v2958 = vunpack.c.l.b16 %v1516
        %v2959 = vunpack.c.h.b16 %v1516
        %v2960 = vunpack.c.l.b16 %v1517
        %v2961 = vunpack.c.h.b16 %v1517
        %v2962 = vunpack.c.l.b16 %v1518
        %v2963 = vunpack.c.h.b16 %v1518
        %v2964 = vunpack.c.l.b16 %v1519
        %v2965 = vunpack.c.h.b16 %v1519
        %v2966 = vunpack.c.l.b16 %v1520
        %v2967 = vunpack.c.h.b16 %v1520
        %v2968 = vunpack.c.l.b16 %v1521
        %v2969 = vunpack.c.h.b16 %v1521
        %v2970 = vunpack.c.l.b16 %v1522
        %v2971 = vunpack.c.h.b16 %v1522
        %v2972 = vunpack.c.l.b16 %v1523
        %v2973 = vunpack.c.h.b16 %v1523
        %v2974 = vunpack.c.l.b16 %v1524
        %v2975 = vunpack.c.h.b16 %v1524
        %v2976 = vunpack.c.l.b16 %v1525
        %v2977 = vunpack.c.h.b16 %v1525
        %v2978 = vunpack.c.l.b16 %v1526
        %v2979 = vunpack.c.h.b16 %v1526
        %v2980 = vunpack.c.l.b16 %v1527
        %v2981 = vunpack.c.h.b16 %v1527
        %v2982 = vunpack.c.l.b16 %v1528
        %v2983 = vunpack.c.h.b16 %v1528
        %v2984 = vunpack.c.l.b16 %v1529
        %v2985 = vunpack.c.h.b16 %v1529
        %v2986 = vunpack.c.l.b16 %v1530
        %v2987 = vunpack.c.h.b16 %v1530
        %v2988 = vunpack.c.l.b16 %v1531
        %v2989 = vunpack.c.h.b16 %v1531
        %v2990 = vunpack.c.l.b16 %v1532
        %v2991 = vunpack.c.h.b16 %v1532
        %v2992 = vunpack.c.l.b16 %v1533
        %v2993 = vunpack.c.h.b16 %v1533
        %v2994 = vunpack.c.l.b16 %v1534
        %v2995 = vunpack.c.h.b16 %v1534
        %v2996 = vunpack.c.l.b16 %v1535
        %v2997 = vunpack.c.h.b16 %v1535
        %v2998 = vunpack.c.l.b16 %v1536
        %v2999 = vunpack.c.h.b16 %v1536
        %v3000 = vunpack.c.l.b16 %v1537
        %v3001 = vunpack.c.h.b16 %v1537
        %v3002 = vunpack.c.l.b16 %v1538
        %v3003 = vunpack.c.h.b16 %v1538
        %v3004 = vunpack.c.l.b16 %v1539
        %v3005 = vunpack.c.h.b16 %v1539
        %v3006 = vunpack.c.l.b16 %v1540
        %v3007 = vunpack.c.h.b16 %v1540
        %v3008 = vunpack.c.l.b16 %v1541
        %v3009 = vunpack.c.h.b16 %v1541
        %v3010 = vunpack.c.l.b16 %v1542
        %v3011 = vunpack.c.h.b16 %v1542
        %v3012 = vunpack.c.l.b16 %v1543
        %v3013 = vunpack.c.h.b16 %v1543
        %v3014 = vunpack.c.l.b16 %v1544
        %v3015 = vunpack.c.h.b16 %v1544
        %v3016 = vunpack.c.l.b16 %v1545
        %v3017 = vunpack.c.h.b16 %v1545
        %v3018 = vunpack.c.l.b16 %v1546
        %v3019 = vunpack.c.h.b16 %v1546
        %v3020 = vunpack.c.l.b16 %v1547
        %v3021 = vunpack.c.h.b16 %v1547
        %v3022 = vunpack.c.l.b16 %v1548
        %v3023 = vunpack.c.h.b16 %v1548
        %v3024 = vunpack.c.l.b16 %v1549
        %v3025 = vunpack.c.h.b16 %v1549
        %v3026 = vunpack.c.l.b16 %v1550
        %v3027 = vunpack.c.h.b16 %v1550
        %v3028 = vunpack.c.l.b16 %v1551
        %v3029 = vunpack.c.h.b16 %v1551
        %v3030 = vunpack.c.l.b16 %v1552
        %v3031 = vunpack.c.h.b16 %v1552
        %v3032 = vunpack.c.l.b16 %v1553
        %v3033 = vunpack.c.h.b16 %v1553
        %v3034 = vunpack.c.l.b16 %v1554
        %v3035 = vunpack.c.h.b16 %v1554
        %v3036 = vunpack.c.l.b16 %v1555
        %v3037 = vunpack.c.h.b16 %v1555
        %v3038 = vunpack.c.l.b16 %v1556
        %v3039 = vunpack.c.h.b16 %v1556
        %v3040 = vunpack.c.l.b16 %v1557
        %v3041 = vunpack.c.h.b16 %v1557
        %v3042 = vunpack.c.l.b16 %v1558
        %v3043 = vunpack.c.h.b16 %v1558
        %v3044 = vunpack.c.l.b16 %v1559
        %v3045 = vunpack.c.h.b16 %v1559
        %v3046 = vunpack.c.l.b16 %v1560
        %v3047 = vunpack.c.h.b16 %v1560
        %v3048 = vunpack.c.l.b16 %v1561
        %v3049 = vunpack.c.h.b16 %v1561
        %v3050 = vunpack.c.l.b16 %v1562
        %v3051 = vunpack.c.h.b16 %v1562
        %v3052 = vunpack.c.l.b16 %v1563
        %v3053 = vunpack.c.h.b16 %v1563
        %v3054 = vunpack.c.l.b16 %v1564
        %v3055 = vunpack.c.h.b16 %v1564
        %v3056 = vunpack.c.l.b16 %v1565
        %v3057 = vunpack.c.h.b16 %v1565
        %v3058 = vunpack.c.l.b16 %v1566
        %v3059 = vunpack.c.h.b16 %v1566
        %v3060 = vunpack.c.l.b16 %v1567
        %v3061 = vunpack.c.h.b16 %v1567
        %v3062 = vunpack.c.l.b16 %v1568
        %v3063 = vunpack.c.h.b16 %v1568
        %v3064 = vunpack.c.l.b16 %v1569
        %v3065 = vunpack.c.h.b16 %v1569
        %v3066 = vunpack.c.l.b16 %v1570
        %v3067 = vunpack.c.h.b16 %v1570
        %v3068 = vunpack.c.l.b16 %v1571
        %v3069 = vunpack.c.h.b16 %v1571
        %v3070 = vunpack.c.l.b16 %v1572
        %v3071 = vunpack.c.h.b16 %v1572
        %v3072 = vunpack.c.l.b16 %v1573
        %v3073 = vunpack.c.h.b16 %v1573
        %v3074 = vunpack.c.l.b16 %v1574
        %v3075 = vunpack.c.h.b16 %v1574
        %v3076 = vunpack.c.l.b16 %v1575
        %v3077 = vunpack.c.h.b16 %v1575
        %v3078 = vunpack.c.l.b16 %v1576
        %v3079 = vunpack.c.h.b16 %v1576
        %v3080 = vunpack.c.l.b16 %v1577
        %v3081 = vunpack.c.h.b16 %v1577
        %v3082 = vunpack.c.l.b16 %v1578
        %v3083 = vunpack.c.h.b16 %v1578
        %v3084 = vunpack.c.l.b16 %v1579
        %v3085 = vunpack.c.h.b16 %v1579
        %v3086 = vunpack.c.l.b16 %v1580
        %v3087 = vunpack.c.h.b16 %v1580
        %v3088 = vunpack.c.l.b16 %v1581
        %v3089 = vunpack.c.h.b16 %v1581
        %v3090 = vunpack.c.l.b16 %v1582
        %v3091 = vunpack.c.h.b16 %v1582
        %v3092 = vunpack.c.l.b16 %v1583
        %v3093 = vunpack.c.h.b16 %v1583
        %v3094 = vunpack.c.l.b16 %v1584
        %v3095 = vunpack.c.h.b16 %v1584
        %v3096 = vunpack.c.l.b16 %v1585
        %v3097 = vunpack.c.h.b16 %v1585
        %v3098 = vunpack.c.l.b16 %v1586
        %v3099 = vunpack.c.h.b16 %v1586
        %v3100 = vunpack.c.l.b16 %v1587
        %v3101 = vunpack.c.h.b16 %v1587
        %v3102 = vunpack.c.l.b16 %v1588
        %v3103 = vunpack.c.h.b16 %v1588
        %v3104 = vunpack.c.l.b16 %v1589
        %v3105 = vunpack.c.h.b16 %v1589
        %v3106 = vunpack.c.l.b16 %v1590
        %v3107 = vunpack.c.h.b16 %v1590
        %v3108 = vunpack.c.l.b16 %v1591
        %v3109 = vunpack.c.h.b16 %v1591
        %v3110 = vunpack.c.l.b16 %v1592
        %v3111 = vunpack.c.h.b16 %v1592
        %v3112 = vunpack.c.l.b16 %v1593
        %v3113 = vunpack.c.h.b16 %v1593
        %v3114 = vunpack.c.l.b16 %v1594
        %v3115 = vunpack.c.h.b16 %v1594
        %v3116 = vunpack.c.l.b16 %v1595
        %v3117 = vunpack.c.h.b16 %v1595
        %v3118 = vunpack.c.l.b16 %v1596
        %v3119 = vunpack.c.h.b16 %v1596
        %v3120 = vunpack.c.l.b16 %v1597
        %v3121 = vunpack.c.h.b16 %v1597
        %v3122 = vunpack.c.l.b16 %v1598
        %v3123 = vunpack.c.h.b16 %v1598
        %v3124 = vunpack.c.l.b16 %v1599
        %v3125 = vunpack.c.h.b16 %v1599
        %v3126 = vunpack.c.l.b16 %v1600
        %v3127 = vunpack.c.h.b16 %v1600
        %v3128 = vunpack.c.l.b16 %v1601
        %v3129 = vunpack.c.h.b16 %v1601
        %v3130 = vunpack.c.l.b16 %v1602
        %v3131 = vunpack.c.h.b16 %v1602
        %v3132 = vunpack.c.l.b16 %v1603
        %v3133 = vunpack.c.h.b16 %v1603
        %v3134 = vunpack.c.l.b16 %v1604
        %v3135 = vunpack.c.h.b16 %v1604
        %v3136 = vunpack.c.l.b16 %v1605
        %v3137 = vunpack.c.h.b16 %v1605
        %v3138 = vunpack.c.l.b16 %v1606
        %v3139 = vunpack.c.h.b16 %v1606
        %v3140 = vunpack.c.l.b16 %v1607
        %v3141 = vunpack.c.h.b16 %v1607
        %v3142 = vunpack.c.l.b16 %v1608
        %v3143 = vunpack.c.h.b16 %v1608
        %v3144 = vunpack.c.l.b16 %v1609
        %v3145 = vunpack.c.h.b16 %v1609
        %v3146 = vunpack.c.l.b16 %v1610
        %v3147 = vunpack.c.h.b16 %v1610
        %v3148 = vunpack.c.l.b16 %v1611
        %v3149 = vunpack.c.h.b16 %v1611
        %v3150 = vunpack.c.l.b16 %v1612
        %v3151 = vunpack.c.h.b16 %v1612
        %v3152 = vunpack.c.l.b16 %v1613
        %v3153 = vunpack.c.h.b16 %v1613
        %v3154 = vunpack.c.l.b16 %v1614
        %v3155 = vunpack.c.h.b16 %v1614
        %v3156 = vunpack.c.l.b16 %v1615
        %v3157 = vunpack.c.h.b16 %v1615
        %v3158 = vunpack.c.l.b16 %v1616
        %v3159 = vunpack.c.h.b16 %v1616
        %v3160 = vunpack.c.l.b16 %v1617
        %v3161 = vunpack.c.h.b16 %v1617
        %v3162 = vunpack.c.l.b16 %v1618
        %v3163 = vunpack.c.h.b16 %v1618
        %v3164 = vunpack.c.l.b16 %v1619
        %v3165 = vunpack.c.h.b16 %v1619
        %v3166 = vunpack.c.l.b16 %v1620
        %v3167 = vunpack.c.h.b16 %v1620
        %v3168 = vunpack.c.l.b16 %v1621
        %v3169 = vunpack.c.h.b16 %v1621
        %v3170 = vunpack.c.l.b16 %v1622
        %v3171 = vunpack.c.h.b16 %v1622
        %v3172 = vunpack.c.l.b16 %v1623
        %v3173 = vunpack.c.h.b16 %v1623
        %v3174 = vunpack.c.l.b16 %v1624
        %v3175 = vunpack.c.h.b16 %v1624
        %v3176 = vunpack.c.l.b16 %v1625
        %v3177 = vunpack.c.h.b16 %v1625
        %v3178 = vunpack.c.l.b16 %v1626
        %v3179 = vunpack.c.h.b16 %v1626
        %v3180 = vunpack.c.l.b16 %v1627
        %v3181 = vunpack.c.h.b16 %v1627
        %v3182 = vunpack.c.l.b16 %v1628
        %v3183 = vunpack.c.h.b16 %v1628
        %v3184 = vunpack.c.l.b16 %v1629
        %v3185 = vunpack.c.h.b16 %v1629
        %v3186 = vunpack.c.l.b16 %v1630
        %v3187 = vunpack.c.h.b16 %v1630
        %v3188 = vunpack.c.l.b16 %v1631
        %v3189 = vunpack.c.h.b16 %v1631
        %v3190 = vunpack.c.l.b16 %v1632
        %v3191 = vunpack.c.h.b16 %v1632
        %v3192 = vunpack.c.l.b16 %v1633
        %v3193 = vunpack.c.h.b16 %v1633
        %v3194 = vunpack.c.l.b16 %v1634
        %v3195 = vunpack.c.h.b16 %v1634
        %v3196 = vunpack.c.l.b16 %v1635
        %v3197 = vunpack.c.h.b16 %v1635
        %v3198 = vunpack.c.l.b16 %v1636
        %v3199 = vunpack.c.h.b16 %v1636
        %v3200 = vunpack.c.l.b16 %v1637
        %v3201 = vunpack.c.h.b16 %v1637
        %v3202 = vunpack.c.l.b16 %v1638
        %v3203 = vunpack.c.h.b16 %v1638
        %v3204 = vunpack.c.l.b16 %v1639
        %v3205 = vunpack.c.h.b16 %v1639
        %v3206 = vunpack.c.l.b16 %v1640
        %v3207 = vunpack.c.h.b16 %v1640
        %v3208 = vunpack.c.l.b16 %v1641
        %v3209 = vunpack.c.h.b16 %v1641
        %v3210 = vunpack.c.l.b16 %v1642
        %v3211 = vunpack.c.h.b16 %v1642
        %v3212 = vunpack.c.l.b16 %v1643
        %v3213 = vunpack.c.h.b16 %v1643
        %v3214 = vunpack.c.l.b16 %v1644
        %v3215 = vunpack.c.h.b16 %v1644
        %v3216 = vunpack.c.l.b16 %v1645
        %v3217 = vunpack.c.h.b16 %v1645
        %v3218 = vunpack.c.l.b16 %v1646
        %v3219 = vunpack.c.h.b16 %v1646
        %v3220 = vunpack.c.l.b16 %v1647
        %v3221 = vunpack.c.h.b16 %v1647
        %v3222 = vunpack.c.l.b16 %v1648
        %v3223 = vunpack.c.h.b16 %v1648
        %v3224 = vunpack.c.l.b16 %v1649
        %v3225 = vunpack.c.h.b16 %v1649
        %v3226 = vunpack.c.l.b16 %v1650
        %v3227 = vunpack.c.h.b16 %v1650
        %v3228 = vunpack.c.l.b16 %v1651
        %v3229 = vunpack.c.h.b16 %v1651
        %v3230 = vunpack.c.l.b16 %v1652
        %v3231 = vunpack.c.h.b16 %v1652
        %v3232 = vunpack.c.l.b16 %v1653
        %v3233 = vunpack.c.h.b16 %v1653
        %v3234 = vunpack.c.l.b16 %v1654
        %v3235 = vunpack.c.h.b16 %v1654
        %v3236 = vunpack.c.l.b16 %v1655
        %v3237 = vunpack.c.h.b16 %v1655
        %v3238 = vunpack.c.l.b16 %v1656
        %v3239 = vunpack.c.h.b16 %v1656
        %v3240 = vunpack.c.l.b16 %v1657
        %v3241 = vunpack.c.h.b16 %v1657
        %v3242 = vunpack.c.l.b16 %v1658
        %v3243 = vunpack.c.h.b16 %v1658
        %v3244 = vunpack.c.l.b16 %v1659
        %v3245 = vunpack.c.h.b16 %v1659
        %v3246 = vunpack.c.l.b16 %v1660
        %v3247 = vunpack.c.h.b16 %v1660
        %v3248 = vunpack.c.l.b16 %v1661
        %v3249 = vunpack.c.h.b16 %v1661
        %v3250 = vunpack.c.l.b16 %v1662
        %v3251 = vunpack.c.h.b16 %v1662
        %v3252 = vunpack.c.l.b16 %v1663
        %v3253 = vunpack.c.h.b16 %v1663
        %v3254 = vunpack.c.l.b16 %v1664
        %v3255 = vunpack.c.h.b16 %v1664
        %v3256 = vunpack.c.l.b16 %v1665
        %v3257 = vunpack.c.h.b16 %v1665
        %v3258 = vunpack.c.l.b16 %v1666
        %v3259 = vunpack.c.h.b16 %v1666
        %v3260 = vunpack.c.l.b16 %v1667
        %v3261 = vunpack.c.h.b16 %v1667
        %v3262 = vunpack.c.l.b16 %v1668
        %v3263 = vunpack.c.h.b16 %v1668
        %v3264 = vunpack.c.l.b16 %v1669
        %v3265 = vunpack.c.h.b16 %v1669
        %v3266 = vunpack.c.l.b16 %v1670
        %v3267 = vunpack.c.h.b16 %v1670
        %v3268 = vunpack.c.l.b16 %v1671
        %v3269 = vunpack.c.h.b16 %v1671
        %v3270 = vunpack.c.l.b16 %v1672
        %v3271 = vunpack.c.h.b16 %v1672
        %v3272 = vunpack.c.l.b16 %v1673
        %v3273 = vunpack.c.h.b16 %v1673
        %v3274 = vunpack.c.l.b16 %v1674
        %v3275 = vunpack.c.h.b16 %v1674
        %v3276 = vunpack.c.l.b16 %v1675
        %v3277 = vunpack.c.h.b16 %v1675
        %v3278 = vunpack.c.l.b16 %v1676
        %v3279 = vunpack.c.h.b16 %v1676
        %v3280 = vunpack.c.l.b16 %v1677
        %v3281 = vunpack.c.h.b16 %v1677
        %v3282 = vunpack.c.l.b16 %v1678
        %v3283 = vunpack.c.h.b16 %v1678
        %v3284 = vunpack.c.l.b16 %v1679
        %v3285 = vunpack.c.h.b16 %v1679
        %v3286 = vunpack.c.l.b16 %v1680
        %v3287 = vunpack.c.h.b16 %v1680
        %v3288 = vunpack.c.l.b16 %v1681
        %v3289 = vunpack.c.h.b16 %v1681
        %v3290 = vunpack.c.l.b16 %v1682
        %v3291 = vunpack.c.h.b16 %v1682
        %v3292 = vunpack.c.l.b16 %v1683
        %v3293 = vunpack.c.h.b16 %v1683
        %v3294 = vunpack.c.l.b16 %v1684
        %v3295 = vunpack.c.h.b16 %v1684
        %v3296 = vunpack.c.l.b16 %v1685
        %v3297 = vunpack.c.h.b16 %v1685
        %v3298 = vunpack.c.l.b16 %v1686
        %v3299 = vunpack.c.h.b16 %v1686
        %v3300 = vunpack.c.l.b16 %v1687
        %v3301 = vunpack.c.h.b16 %v1687
        %v3302 = vunpack.c.l.b16 %v1688
        %v3303 = vunpack.c.h.b16 %v1688
        %v3304 = vunpack.c.l.b16 %v1689
        %v3305 = vunpack.c.h.b16 %v1689
        %v3306 = vunpack.c.l.b16 %v1690
        %v3307 = vunpack.c.h.b16 %v1690
        %v3308 = vunpack.c.l.b16 %v1691
        %v3309 = vunpack.c.h.b16 %v1691
        %v3310 = vunpack.c.l.b16 %v1692
        %v3311 = vunpack.c.h.b16 %v1692
        %v3312 = vunpack.c.l.b16 %v1693
        %v3313 = vunpack.c.h.b16 %v1693
        %v3314 = vunpack.c.l.b16 %v1694
        %v3315 = vunpack.c.h.b16 %v1694
        %v3316 = vunpack.c.l.b16 %v1695
        %v3317 = vunpack.c.h.b16 %v1695
        %v3318 = vunpack.c.l.b16 %v1696
        %v3319 = vunpack.c.h.b16 %v1696
        %v3320 = vunpack.c.l.b16 %v1697
        %v3321 = vunpack.c.h.b16 %v1697
        %v3322 = vunpack.c.l.b16 %v1698
        %v3323 = vunpack.c.h.b16 %v1698
        %v3324 = vunpack.c.l.b16 %v1699
        %v3325 = vunpack.c.h.b16 %v1699
        %v3326 = vunpack.c.l.b16 %v1700
        %v3327 = vunpack.c.h.b16 %v1700
        %v3328 = vunpack.c.l.b16 %v1701
        %v3329 = vunpack.c.h.b16 %v1701
        %v3330 = vunpack.c.l.b16 %v1702
        %v3331 = vunpack.c.h.b16 %v1702
        %v3332 = vunpack.c.l.b16 %v1703
        %v3333 = vunpack.c.h.b16 %v1703
        %v3334 = vunpack.c.l.b16 %v1704
        %v3335 = vunpack.c.h.b16 %v1704
        %v3336 = vunpack.c.l.b16 %v1705
        %v3337 = vunpack.c.h.b16 %v1705
        %v3338 = vunpack.c.l.b16 %v1706
        %v3339 = vunpack.c.h.b16 %v1706
        %v3340 = vunpack.c.l.b16 %v1707
        %v3341 = vunpack.c.h.b16 %v1707
        %v3342 = vunpack.c.l.b16 %v1708
        %v3343 = vunpack.c.h.b16 %v1708
        %v3344 = vunpack.c.l.b16 %v1709
        %v3345 = vunpack.c.h.b16 %v1709
        %v3346 = vunpack.c.l.b16 %v1710
        %v3347 = vunpack.c.h.b16 %v1710
        %v3348 = vunpack.c.l.b16 %v1711
        %v3349 = vunpack.c.h.b16 %v1711
        %v3350 = vunpack.c.l.b16 %v1712
        %v3351 = vunpack.c.h.b16 %v1712
        %v3352 = vunpack.c.l.b16 %v1713
        %v3353 = vunpack.c.h.b16 %v1713
        %v3354 = vunpack.c.l.b16 %v1714
        %v3355 = vunpack.c.h.b16 %v1714
        %v3356 = vunpack.c.l.b16 %v1715
        %v3357 = vunpack.c.h.b16 %v1715
        %v3358 = vunpack.c.l.b16 %v1716
        %v3359 = vunpack.c.h.b16 %v1716
        %v3360 = vunpack.c.l.b16 %v1717
        %v3361 = vunpack.c.h.b16 %v1717
        %v3362 = vunpack.c.l.b16 %v1718
        %v3363 = vunpack.c.h.b16 %v1718
        %v3364 = vunpack.c.l.b16 %v1719
        %v3365 = vunpack.c.h.b16 %v1719
        %v3366 = vunpack.c.l.b16 %v1720
        %v3367 = vunpack.c.h.b16 %v1720
        %v3368 = vunpack.c.l.b16 %v1721
        %v3369 = vunpack.c.h.b16 %v1721
        %v3370 = vunpack.c.l.b16 %v1722
        %v3371 = vunpack.c.h.b16 %v1722
        %v3372 = vunpack.c.l.b16 %v1723
        %v3373 = vunpack.c.h.b16 %v1723
        %v3374 = vunpack.c.l.b16 %v1724
        %v3375 = vunpack.c.h.b16 %v1724
        %v3376 = vunpack.c.l.b16 %v1725
        %v3377 = vunpack.c.h.b16 %v1725
        %v3378 = vunpack.c.l.b16 %v1726
        %v3379 = vunpack.c.h.b16 %v1726
        %v3380 = vunpack.c.l.b16 %v1727
        %v3381 = vunpack.c.h.b16 %v1727
        %v3382 = vunpack.c.l.b16 %v1728
        %v3383 = vunpack.c.h.b16 %v1728
        %v3384 = vunpack.c.l.b16 %v1729
        %v3385 = vunpack.c.h.b16 %v1729
        %v3386 = vunpack.c.l.b16 %v1730
        %v3387 = vunpack.c.h.b16 %v1730
        %v3388 = vunpack.c.l.b16 %v1731
        %v3389 = vunpack.c.h.b16 %v1731
        %v3390 = vunpack.c.l.b16 %v1732
        %v3391 = vunpack.c.h.b16 %v1732
        %v3392 = vunpack.c.l.b16 %v1733
        %v3393 = vunpack.c.h.b16 %v1733
        %v3394 = vunpack.c.l.b16 %v1734
        %v3395 = vunpack.c.h.b16 %v1734
        %v3396 = vunpack.c.l.b16 %v1735
        %v3397 = vunpack.c.h.b16 %v1735
        %v3398 = vunpack.c.l.b16 %v1736
        %v3399 = vunpack.c.h.b16 %v1736
        %v3400 = vunpack.c.l.b16 %v1737
        %v3401 = vunpack.c.h.b16 %v1737
        %v3402 = vunpack.c.l.b16 %v1738
        %v3403 = vunpack.c.h.b16 %v1738
        %v3404 = vunpack.c.l.b16 %v1739
        %v3405 = vunpack.c.h.b16 %v1739
        %v3406 = vunpack.c.l.b16 %v1740
        %v3407 = vunpack.c.h.b16 %v1740
        %v3408 = vunpack.c.l.b16 %v1741
        %v3409 = vunpack.c.h.b16 %v1741
        %v3410 = vunpack.c.l.b16 %v1742
        %v3411 = vunpack.c.h.b16 %v1742
        %v3412 = vunpack.c.l.b16 %v1743
        %v3413 = vunpack.c.h.b16 %v1743
        %v3414 = vunpack.c.l.b16 %v1744
        %v3415 = vunpack.c.h.b16 %v1744
        %v3416 = vunpack.c.l.b16 %v1745
        %v3417 = vunpack.c.h.b16 %v1745
        %v3418 = vunpack.c.l.b16 %v1746
        %v3419 = vunpack.c.h.b16 %v1746
        %v3420 = vunpack.c.l.b16 %v1747
        %v3421 = vunpack.c.h.b16 %v1747
        %v3422 = vpack.c.b16 %v2402, %v2398
        %v3423 = vpack.c.b16 %v2403, %v2399
        %v3424 = vpack.c.b16 %v2404, %v2400
        %v3425 = vpack.c.b16 %v2405, %v2401
        %v3426 = vpack.c.b16 %v2410, %v2406
        %v3427 = vpack.c.b16 %v2411, %v2407
        %v3428 = vpack.c.b16 %v2412, %v2408
        %v3429 = vpack.c.b16 %v2413, %v2409
        %v3430 = vpack.c.b16 %v2418, %v2414
        %v3431 = vpack.c.b16 %v2419, %v2415
        %v3432 = vpack.c.b16 %v2420, %v2416
        %v3433 = vpack.c.b16 %v2421, %v2417
        %v3434 = vpack.c.b16 %v2426, %v2422
        %v3435 = vpack.c.b16 %v2427, %v2423
        %v3436 = vpack.c.b16 %v2428, %v2424
        %v3437 = vpack.c.b16 %v2429, %v2425
        %v3438 = vpack.c.b16 %v2434, %v2430
        %v3439 = vpack.c.b16 %v2435, %v2431
        %v3440 = vpack.c.b16 %v2436, %v2432
        %v3441 = vpack.c.b16 %v2437, %v2433
        %v3442 = vpack.c.b16 %v2442, %v2438
        %v3443 = vpack.c.b16 %v2443, %v2439
        %v3444 = vpack.c.b16 %v2444, %v2440
        %v3445 = vpack.c.b16 %v2445, %v2441
        %v3446 = vpack.c.b16 %v2450, %v2446
        %v3447 = vpack.c.b16 %v2451, %v2447
        %v3448 = vpack.c.b16 %v2452, %v2448
        %v3449 = vpack.c.b16 %v2453, %v2449
        %v3450 = vpack.c.b16 %v2458, %v2454
        %v3451 = vpack.c.b16 %v2459, %v2455
        %v3452 = vpack.c.b16 %v2460, %v2456
        %v3453 = vpack.c.b16 %v2461, %v2457
        %v3454 = vpack.c.b16 %v2466, %v2462
        %v3455 = vpack.c.b16 %v2467, %v2463
        %v3456 = vpack.c.b16 %v2468, %v2464
        %v3457 = vpack.c.b16 %v2469, %v2465
        %v3458 = vpack.c.b16 %v2474, %v2470
        %v3459 = vpack.c.b16 %v2475, %v2471
        %v3460 = vpack.c.b16 %v2476, %v2472
        %v3461 = vpack.c.b16 %v2477, %v2473
        %v3462 = vpack.c.b16 %v2482, %v2478
        %v3463 = vpack.c.b16 %v2483, %v2479
        %v3464 = vpack.c.b16 %v2484, %v2480
        %v3465 = vpack.c.b16 %v2485, %v2481
        %v3466 = vpack.c.b16 %v2490, %v2486
        %v3467 = vpack.c.b16 %v2491, %v2487
        %v3468 = vpack.c.b16 %v2492, %v2488
        %v3469 = vpack.c.b16 %v2493, %v2489
        %v3470 = vpack.c.b16 %v2498, %v2494
        %v3471 = vpack.c.b16 %v2499, %v2495
        %v3472 = vpack.c.b16 %v2500, %v2496
        %v3473 = vpack.c.b16 %v2501, %v2497
        %v3474 = vpack.c.b16 %v2506, %v2502
        %v3475 = vpack.c.b16 %v2507, %v2503
        %v3476 = vpack.c.b16 %v2508, %v2504
        %v3477 = vpack.c.b16 %v2509, %v2505
        %v3478 = vpack.c.b16 %v2514, %v2510
        %v3479 = vpack.c.b16 %v2515, %v2511
        %v3480 = vpack.c.b16 %v2516, %v2512
        %v3481 = vpack.c.b16 %v2517, %v2513
        %v3482 = vpack.c.b16 %v2522, %v2518
        %v3483 = vpack.c.b16 %v2523, %v2519
        %v3484 = vpack.c.b16 %v2524, %v2520
        %v3485 = vpack.c.b16 %v2525, %v2521
        %v3486 = vpack.c.b16 %v2530, %v2526
        %v3487 = vpack.c.b16 %v2531, %v2527
        %v3488 = vpack.c.b16 %v2532, %v2528
        %v3489 = vpack.c.b16 %v2533, %v2529
        %v3490 = vpack.c.b16 %v2538, %v2534
        %v3491 = vpack.c.b16 %v2539, %v2535
        %v3492 = vpack.c.b16 %v2540, %v2536
        %v3493 = vpack.c.b16 %v2541, %v2537
        %v3494 = vpack.c.b16 %v2546, %v2542
        %v3495 = vpack.c.b16 %v2547, %v2543
        %v3496 = vpack.c.b16 %v2548, %v2544
        %v3497 = vpack.c.b16 %v2549, %v2545
        %v3498 = vpack.c.b16 %v2554, %v2550
        %v3499 = vpack.c.b16 %v2555, %v2551
        %v3500 = vpack.c.b16 %v2556, %v2552
        %v3501 = vpack.c.b16 %v2557, %v2553
        %v3502 = vpack.c.b16 %v2562, %v2558
        %v3503 = vpack.c.b16 %v2563, %v2559
        %v3504 = vpack.c.b16 %v2564, %v2560
        %v3505 = vpack.c.b16 %v2565, %v2561
        %v3506 = vpack.c.b16 %v2570, %v2566
        %v3507 = vpack.c.b16 %v2571, %v2567
        %v3508 = vpack.c.b16 %v2572, %v2568
        %v3509 = vpack.c.b16 %v2573, %v2569
        %v3510 = vpack.c.b16 %v2578, %v2574
        %v3511 = vpack.c.b16 %v2579, %v2575
        %v3512 = vpack.c.b16 %v2580, %v2576
        %v3513 = vpack.c.b16 %v2581, %v2577
        %v3514 = vpack.c.b16 %v2586, %v2582
        %v3515 = vpack.c.b16 %v2587, %v2583
        %v3516 = vpack.c.b16 %v2588, %v2584
        %v3517 = vpack.c.b16 %v2589, %v2585
        %v3518 = vpack.c.b16 %v2594, %v2590
        %v3519 = vpack.c.b16 %v2595, %v2591
        %v3520 = vpack.c.b16 %v2596, %v2592
        %v3521 = vpack.c.b16 %v2597, %v2593
        %v3522 = vpack.c.b16 %v2602, %v2598
        %v3523 = vpack.c.b16 %v2603, %v2599
        %v3524 = vpack.c.b16 %v2604, %v2600
        %v3525 = vpack.c.b16 %v2605, %v2601
        %v3526 = vpack.c.b16 %v2610, %v2606
        %v3527 = vpack.c.b16 %v2611, %v2607
        %v3528 = vpack.c.b16 %v2612, %v2608
        %v3529 = vpack.c.b16 %v2613, %v2609
        %v3530 = vpack.c.b16 %v2618, %v2614
        %v3531 = vpack.c.b16 %v2619, %v2615
        %v3532 = vpack.c.b16 %v2620, %v2616
        %v3533 = vpack.c.b16 %v2621, %v2617
        %v3534 = vpack.c.b16 %v2626, %v2622
        %v3535 = vpack.c.b16 %v2627, %v2623
        %v3536 = vpack.c.b16 %v2628, %v2624
        %v3537 = vpack.c.b16 %v2629, %v2625
        %v3538 = vpack.c.b16 %v2634, %v2630
        %v3539 = vpack.c.b16 %v2635, %v2631
        %v3540 = vpack.c.b16 %v2636, %v2632
        %v3541 = vpack.c.b16 %v2637, %v2633
        %v3542 = vpack.c.b16 %v2642, %v2638
        %v3543 = vpack.c.b16 %v2643, %v2639
        %v3544 = vpack.c.b16 %v2644, %v2640
        %v3545 = vpack.c.b16 %v2645, %v2641
        %v3546 = vpack.c.b16 %v2650, %v2646
        %v3547 = vpack.c.b16 %v2651, %v2647
        %v3548 = vpack.c.b16 %v2652, %v2648
        %v3549 = vpack.c.b16 %v2653, %v2649
        %v3550 = vpack.c.b16 %v2658, %v2654
        %v3551 = vpack.c.b16 %v2659, %v2655
        %v3552 = vpack.c.b16 %v2660, %v2656
        %v3553 = vpack.c.b16 %v2661, %v2657
        %v3554 = vpack.c.b16 %v2666, %v2662
        %v3555 = vpack.c.b16 %v2667, %v2663
        %v3556 = vpack.c.b16 %v2668, %v2664
        %v3557 = vpack.c.b16 %v2669, %v2665
        %v3558 = vpack.c.b16 %v2674, %v2670
        %v3559 = vpack.c.b16 %v2675, %v2671
        %v3560 = vpack.c.b16 %v2676, %v2672
        %v3561 = vpack.c.b16 %v2677, %v2673
        %v3562 = vpack.c.b16 %v2682, %v2678
        %v3563 = vpack.c.b16 %v2683, %v2679
        %v3564 = vpack.c.b16 %v2684, %v2680
        %v3565 = vpack.c.b16 %v2685, %v2681
        %v3566 = vpack.c.b16 %v2690, %v2686
        %v3567 = vpack.c.b16 %v2691, %v2687
        %v3568 = vpack.c.b16 %v2692, %v2688
        %v3569 = vpack.c.b16 %v2693, %v2689
        %v3570 = vpack.c.b16 %v2698, %v2694
        %v3571 = vpack.c.b16 %v2699, %v2695
        %v3572 = vpack.c.b16 %v2700, %v2696
        %v3573 = vpack.c.b16 %v2701, %v2697
        %v3574 = vpack.c.b16 %v2706, %v2702
        %v3575 = vpack.c.b16 %v2707, %v2703
        %v3576 = vpack.c.b16 %v2708, %v2704
        %v3577 = vpack.c.b16 %v2709, %v2705
        %v3578 = vpack.c.b16 %v2714, %v2710
        %v3579 = vpack.c.b16 %v2715, %v2711
        %v3580 = vpack.c.b16 %v2716, %v2712
        %v3581 = vpack.c.b16 %v2717, %v2713
        %v3582 = vpack.c.b16 %v2722, %v2718
        %v3583 = vpack.c.b16 %v2723, %v2719
        %v3584 = vpack.c.b16 %v2724, %v2720
        %v3585 = vpack.c.b16 %v2725, %v2721
        %v3586 = vpack.c.b16 %v2730, %v2726
        %v3587 = vpack.c.b16 %v2731, %v2727
        %v3588 = vpack.c.b16 %v2732, %v2728
        %v3589 = vpack.c.b16 %v2733, %v2729
        %v3590 = vpack.c.b16 %v2738, %v2734
        %v3591 = vpack.c.b16 %v2739, %v2735
        %v3592 = vpack.c.b16 %v2740, %v2736
        %v3593 = vpack.c.b16 %v2741, %v2737
        %v3594 = vpack.c.b16 %v2746, %v2742
        %v3595 = vpack.c.b16 %v2747, %v2743
        %v3596 = vpack.c.b16 %v2748, %v2744
        %v3597 = vpack.c.b16 %v2749, %v2745
        %v3598 = vpack.c.b16 %v2754, %v2750
        %v3599 = vpack.c.b16 %v2755, %v2751
        %v3600 = vpack.c.b16 %v2756, %v2752
        %v3601 = vpack.c.b16 %v2757, %v2753
        %v3602 = vpack.c.b16 %v2762, %v2758
        %v3603 = vpack.c.b16 %v2763, %v2759
        %v3604 = vpack.c.b16 %v2764, %v2760
        %v3605 = vpack.c.b16 %v2765, %v2761
        %v3606 = vpack.c.b16 %v2770, %v2766
        %v3607 = vpack.c.b16 %v2771, %v2767
        %v3608 = vpack.c.b16 %v2772, %v2768
        %v3609 = vpack.c.b16 %v2773, %v2769
        %v3610 = vpack.c.b16 %v2778, %v2774
        %v3611 = vpack.c.b16 %v2779, %v2775
        %v3612 = vpack.c.b16 %v2780, %v2776
        %v3613 = vpack.c.b16 %v2781, %v2777
        %v3614 = vpack.c.b16 %v2786, %v2782
        %v3615 = vpack.c.b16 %v2787, %v2783
        %v3616 = vpack.c.b16 %v2788, %v2784
        %v3617 = vpack.c.b16 %v2789, %v2785
        %v3618 = vpack.c.b16 %v2794, %v2790
        %v3619 = vpack.c.b16 %v2795, %v2791
        %v3620 = vpack.c.b16 %v2796, %v2792
        %v3621 = vpack.c.b16 %v2797, %v2793
        %v3622 = vpack.c.b16 %v2802, %v2798
        %v3623 = vpack.c.b16 %v2803, %v2799
        %v3624 = vpack.c.b16 %v2804, %v2800
        %v3625 = vpack.c.b16 %v2805, %v2801
        %v3626 = vpack.c.b16 %v2810, %v2806
        %v3627 = vpack.c.b16 %v2811, %v2807
        %v3628 = vpack.c.b16 %v2812, %v2808
        %v3629 = vpack.c.b16 %v2813, %v2809
        %v3630 = vpack.c.b16 %v2818, %v2814
        %v3631 = vpack.c.b16 %v2819, %v2815
        %v3632 = vpack.c.b16 %v2820, %v2816
        %v3633 = vpack.c.b16 %v2821, %v2817
        %v3634 = vpack.c.b16 %v2826, %v2822
        %v3635 = vpack.c.b16 %v2827, %v2823
        %v3636 = vpack.c.b16 %v2828, %v2824
        %v3637 = vpack.c.b16 %v2829, %v2825
        %v3638 = vpack.c.b16 %v2834, %v2830
        %v3639 = vpack.c.b16 %v2835, %v2831
        %v3640 = vpack.c.b16 %v2836, %v2832
        %v3641 = vpack.c.b16 %v2837, %v2833
        %v3642 = vpack.c.b16 %v2842, %v2838
        %v3643 = vpack.c.b16 %v2843, %v2839
        %v3644 = vpack.c.b16 %v2844, %v2840
        %v3645 = vpack.c.b16 %v2845, %v2841
        %v3646 = vpack.c.b16 %v2850, %v2846
        %v3647 = vpack.c.b16 %v2851, %v2847
        %v3648 = vpack.c.b16 %v2852, %v2848
        %v3649 = vpack.c.b16 %v2853, %v2849
        %v3650 = vpack.c.b16 %v2858, %v2854
        %v3651 = vpack.c.b16 %v2859, %v2855
        %v3652 = vpack.c.b16 %v2860, %v2856
        %v3653 = vpack.c.b16 %v2861, %v2857
        %v3654 = vpack.c.b16 %v2866, %v2862
        %v3655 = vpack.c.b16 %v2867, %v2863
        %v3656 = vpack.c.b16 %v2868, %v2864
        %v3657 = vpack.c.b16 %v2869, %v2865
        %v3658 = vpack.c.b16 %v2874, %v2870
        %v3659 = vpack.c.b16 %v2875, %v2871
        %v3660 = vpack.c.b16 %v2876, %v2872
        %v3661 = vpack.c.b16 %v2877, %v2873
        %v3662 = vpack.c.b16 %v2882, %v2878
        %v3663 = vpack.c.b16 %v2883, %v2879
        %v3664 = vpack.c.b16 %v2884, %v2880
        %v3665 = vpack.c.b16 %v2885, %v2881
        %v3666 = vpack.c.b16 %v2890, %v2886
        %v3667 = vpack.c.b16 %v2891, %v2887
        %v3668 = vpack.c.b16 %v2892, %v2888
        %v3669 = vpack.c.b16 %v2893, %v2889
        %v3670 = vpack.c.b16 %v2898, %v2894
        %v3671 = vpack.c.b16 %v2899, %v2895
        %v3672 = vpack.c.b16 %v2900, %v2896
        %v3673 = vpack.c.b16 %v2901, %v2897
        %v3674 = vpack.c.b16 %v2906, %v2902
        %v3675 = vpack.c.b16 %v2907, %v2903
        %v3676 = vpack.c.b16 %v2908, %v2904
        %v3677 = vpack.c.b16 %v2909, %v2905
        %v3678 = vpack.c.b16 %v2914, %v2910
        %v3679 = vpack.c.b16 %v2915, %v2911
        %v3680 = vpack.c.b16 %v2916, %v2912
        %v3681 = vpack.c.b16 %v2917, %v2913
        %v3682 = vpack.c.b16 %v2922, %v2918
        %v3683 = vpack.c.b16 %v2923, %v2919
        %v3684 = vpack.c.b16 %v2924, %v2920
        %v3685 = vpack.c.b16 %v2925, %v2921
        %v3686 = vpack.c.b16 %v2930, %v2926
        %v3687 = vpack.c.b16 %v2931, %v2927
        %v3688 = vpack.c.b16 %v2932, %v2928
        %v3689 = vpack.c.b16 %v2933, %v2929
        %v3690 = vpack.c.b16 %v2938, %v2934
        %v3691 = vpack.c.b16 %v2939, %v2935
        %v3692 = vpack.c.b16 %v2940, %v2936
        %v3693 = vpack.c.b16 %v2941, %v2937
        %v3694 = vpack.c.b16 %v2946, %v2942
        %v3695 = vpack.c.b16 %v2947, %v2943
        %v3696 = vpack.c.b16 %v2948, %v2944
        %v3697 = vpack.c.b16 %v2949, %v2945
        %v3698 = vpack.c.b16 %v2954, %v2950
        %v3699 = vpack.c.b16 %v2955, %v2951
        %v3700 = vpack.c.b16 %v2956, %v2952
        %v3701 = vpack.c.b16 %v2957, %v2953
        %v3702 = vpack.c.b16 %v2962, %v2958
        %v3703 = vpack.c.b16 %v2963, %v2959
        %v3704 = vpack.c.b16 %v2964, %v2960
        %v3705 = vpack.c.b16 %v2965, %v2961
        %v3706 = vpack.c.b16 %v2970, %v2966
        %v3707 = vpack.c.b16 %v2971, %v2967
        %v3708 = vpack.c.b16 %v2972, %v2968
        %v3709 = vpack.c.b16 %v2973, %v2969
        %v3710 = vpack.c.b16 %v2978, %v2974
        %v3711 = vpack.c.b16 %v2979, %v2975
        %v3712 = vpack.c.b16 %v2980, %v2976
        %v3713 = vpack.c.b16 %v2981, %v2977
        %v3714 = vpack.c.b16 %v2986, %v2982
        %v3715 = vpack.c.b16 %v2987, %v2983
        %v3716 = vpack.c.b16 %v2988, %v2984
        %v3717 = vpack.c.b16 %v2989, %v2985
        %v3718 = vpack.c.b16 %v2994, %v2990
        %v3719 = vpack.c.b16 %v2995, %v2991
        %v3720 = vpack.c.b16 %v2996, %v2992
        %v3721 = vpack.c.b16 %v2997, %v2993
        %v3722 = vpack.c.b16 %v3002, %v2998
        %v3723 = vpack.c.b16 %v3003, %v2999
        %v3724 = vpack.c.b16 %v3004, %v3000
        %v3725 = vpack.c.b16 %v3005, %v3001
        %v3726 = vpack.c.b16 %v3010, %v3006
        %v3727 = vpack.c.b16 %v3011, %v3007
        %v3728 = vpack.c.b16 %v3012, %v3008
        %v3729 = vpack.c.b16 %v3013, %v3009
        %v3730 = vpack.c.b16 %v3018, %v3014
        %v3731 = vpack.c.b16 %v3019, %v3015
        %v3732 = vpack.c.b16 %v3020, %v3016
        %v3733 = vpack.c.b16 %v3021, %v3017
        %v3734 = vpack.c.b16 %v3026, %v3022
        %v3735 = vpack.c.b16 %v3027, %v3023
        %v3736 = vpack.c.b16 %v3028, %v3024
        %v3737 = vpack.c.b16 %v3029, %v3025
        %v3738 = vpack.c.b16 %v3034, %v3030
        %v3739 = vpack.c.b16 %v3035, %v3031
        %v3740 = vpack.c.b16 %v3036, %v3032
        %v3741 = vpack.c.b16 %v3037, %v3033
        %v3742 = vpack.c.b16 %v3042, %v3038
        %v3743 = vpack.c.b16 %v3043, %v3039
        %v3744 = vpack.c.b16 %v3044, %v3040
        %v3745 = vpack.c.b16 %v3045, %v3041
        %v3746 = vpack.c.b16 %v3050, %v3046
        %v3747 = vpack.c.b16 %v3051, %v3047
        %v3748 = vpack.c.b16 %v3052, %v3048
        %v3749 = vpack.c.b16 %v3053, %v3049
        %v3750 = vpack.c.b16 %v3058, %v3054
        %v3751 = vpack.c.b16 %v3059, %v3055
        %v3752 = vpack.c.b16 %v3060, %v3056
        %v3753 = vpack.c.b16 %v3061, %v3057
        %v3754 = vpack.c.b16 %v3066, %v3062
        %v3755 = vpack.c.b16 %v3067, %v3063
        %v3756 = vpack.c.b16 %v3068, %v3064
        %v3757 = vpack.c.b16 %v3069, %v3065
        %v3758 = vpack.c.b16 %v3074, %v3070
        %v3759 = vpack.c.b16 %v3075, %v3071
        %v3760 = vpack.c.b16 %v3076, %v3072
        %v3761 = vpack.c.b16 %v3077, %v3073
        %v3762 = vpack.c.b16 %v3082, %v3078
        %v3763 = vpack.c.b16 %v3083, %v3079
        %v3764 = vpack.c.b16 %v3084, %v3080
        %v3765 = vpack.c.b16 %v3085, %v3081
        %v3766 = vpack.c.b16 %v3090, %v3086
        %v3767 = vpack.c.b16 %v3091, %v3087
        %v3768 = vpack.c.b16 %v3092, %v3088
        %v3769 = vpack.c.b16 %v3093, %v3089
        %v3770 = vpack.c.b16 %v3098, %v3094
        %v3771 = vpack.c.b16 %v3099, %v3095
        %v3772 = vpack.c.b16 %v3100, %v3096
        %v3773 = vpack.c.b16 %v3101, %v3097
        %v3774 = vpack.c.b16 %v3106, %v3102
        %v3775 = vpack.c.b16 %v3107, %v3103
        %v3776 = vpack.c.b16 %v3108, %v3104
        %v3777 = vpack.c.b16 %v3109, %v3105
        %v3778 = vpack.c.b16 %v3114, %v3110
        %v3779 = vpack.c.b16 %v3115, %v3111
        %v3780 = vpack.c.b16 %v3116, %v3112
        %v3781 = vpack.c.b16 %v3117, %v3113
        %v3782 = vpack.c.b16 %v3122, %v3118
        %v3783 = vpack.c.b16 %v3123, %v3119
        %v3784 = vpack.c.b16 %v3124, %v3120
        %v3785 = vpack.c.b16 %v3125, %v3121
        %v3786 = vpack.c.b16 %v3130, %v3126
        %v3787 = vpack.c.b16 %v3131, %v3127
        %v3788 = vpack.c.b16 %v3132, %v3128
        %v3789 = vpack.c.b16 %v3133, %v3129
        %v3790 = vpack.c.b16 %v3138, %v3134
        %v3791 = vpack.c.b16 %v3139, %v3135
        %v3792 = vpack.c.b16 %v3140, %v3136
        %v3793 = vpack.c.b16 %v3141, %v3137
        %v3794 = vpack.c.b16 %v3146, %v3142
        %v3795 = vpack.c.b16 %v3147, %v3143
        %v3796 = vpack.c.b16 %v3148, %v3144
        %v3797 = vpack.c.b16 %v3149, %v3145
        %v3798 = vpack.c.b16 %v3154, %v3150
        %v3799 = vpack.c.b16 %v3155, %v3151
        %v3800 = vpack.c.b16 %v3156, %v3152
        %v3801 = vpack.c.b16 %v3157, %v3153
        %v3802 = vpack.c.b16 %v3162, %v3158
        %v3803 = vpack.c.b16 %v3163, %v3159
        %v3804 = vpack.c.b16 %v3164, %v3160
        %v3805 = vpack.c.b16 %v3165, %v3161
        %v3806 = vpack.c.b16 %v3170, %v3166
        %v3807 = vpack.c.b16 %v3171, %v3167
        %v3808 = vpack.c.b16 %v3172, %v3168
        %v3809 = vpack.c.b16 %v3173, %v3169
        %v3810 = vpack.c.b16 %v3178, %v3174
        %v3811 = vpack.c.b16 %v3179, %v3175
        %v3812 = vpack.c.b16 %v3180, %v3176
        %v3813 = vpack.c.b16 %v3181, %v3177
        %v3814 = vpack.c.b16 %v3186, %v3182
        %v3815 = vpack.c.b16 %v3187, %v3183
        %v3816 = vpack.c.b16 %v3188, %v3184
        %v3817 = vpack.c.b16 %v3189, %v3185
        %v3818 = vpack.c.b16 %v3194, %v3190
        %v3819 = vpack.c.b16 %v3195, %v3191
        %v3820 = vpack.c.b16 %v3196, %v3192
        %v3821 = vpack.c.b16 %v3197, %v3193
        %v3822 = vpack.c.b16 %v3202, %v3198
        %v3823 = vpack.c.b16 %v3203, %v3199
        %v3824 = vpack.c.b16 %v3204, %v3200
        %v3825 = vpack.c.b16 %v3205, %v3201
        %v3826 = vpack.c.b16 %v3210, %v3206
        %v3827 = vpack.c.b16 %v3211, %v3207
        %v3828 = vpack.c.b16 %v3212, %v3208
        %v3829 = vpack.c.b16 %v3213, %v3209
        %v3830 = vpack.c.b16 %v3218, %v3214
        %v3831 = vpack.c.b16 %v3219, %v3215
        %v3832 = vpack.c.b16 %v3220, %v3216
        %v3833 = vpack.c.b16 %v3221, %v3217
        %v3834 = vpack.c.b16 %v3226, %v3222
        %v3835 = vpack.c.b16 %v3227, %v3223
        %v3836 = vpack.c.b16 %v3228, %v3224
        %v3837 = vpack.c.b16 %v3229, %v3225
        %v3838 = vpack.c.b16 %v3234, %v3230
        %v3839 = vpack.c.b16 %v3235, %v3231
        %v3840 = vpack.c.b16 %v3236, %v3232
        %v3841 = vpack.c.b16 %v3237, %v3233
        %v3842 = vpack.c.b16 %v3242, %v3238
        %v3843 = vpack.c.b16 %v3243, %v3239
        %v3844 = vpack.c.b16 %v3244, %v3240
        %v3845 = vpack.c.b16 %v3245, %v3241
        %v3846 = vpack.c.b16 %v3250, %v3246
        %v3847 = vpack.c.b16 %v3251, %v3247
        %v3848 = vpack.c.b16 %v3252, %v3248
        %v3849 = vpack.c.b16 %v3253, %v3249
        %v3850 = vpack.c.b16 %v3258, %v3254
        %v3851 = vpack.c.b16 %v3259, %v3255
        %v3852 = vpack.c.b16 %v3260, %v3256
        %v3853 = vpack.c.b16 %v3261, %v3257
        %v3854 = vpack.c.b16 %v3266, %v3262
        %v3855 = vpack.c.b16 %v3267, %v3263
        %v3856 = vpack.c.b16 %v3268, %v3264
        %v3857 = vpack.c.b16 %v3269, %v3265
        %v3858 = vpack.c.b16 %v3274, %v3270
        %v3859 = vpack.c.b16 %v3275, %v3271
        %v3860 = vpack.c.b16 %v3276, %v3272
        %v3861 = vpack.c.b16 %v3277, %v3273
        %v3862 = vpack.c.b16 %v3282, %v3278
        %v3863 = vpack.c.b16 %v3283, %v3279
        %v3864 = vpack.c.b16 %v3284, %v3280
        %v3865 = vpack.c.b16 %v3285, %v3281
        %v3866 = vpack.c.b16 %v3290, %v3286
        %v3867 = vpack.c.b16 %v3291, %v3287
        %v3868 = vpack.c.b16 %v3292, %v3288
        %v3869 = vpack.c.b16 %v3293, %v3289
        %v3870 = vpack.c.b16 %v3298, %v3294
        %v3871 = vpack.c.b16 %v3299, %v3295
        %v3872 = vpack.c.b16 %v3300, %v3296
        %v3873 = vpack.c.b16 %v3301, %v3297
        %v3874 = vpack.c.b16 %v3306, %v3302
        %v3875 = vpack.c.b16 %v3307, %v3303
        %v3876 = vpack.c.b16 %v3308, %v3304
        %v3877 = vpack.c.b16 %v3309, %v3305
        %v3878 = vpack.c.b16 %v3314, %v3310
        %v3879 = vpack.c.b16 %v3315, %v3311
        %v3880 = vpack.c.b16 %v3316, %v3312
        %v3881 = vpack.c.b16 %v3317, %v3313
        %v3882 = vpack.c.b16 %v3322, %v3318
        %v3883 = vpack.c.b16 %v3323, %v3319
        %v3884 = vpack.c.b16 %v3324, %v3320
        %v3885 = vpack.c.b16 %v3325, %v3321
        %v3886 = vpack.c.b16 %v3330, %v3326
        %v3887 = vpack.c.b16 %v3331, %v3327
        %v3888 = vpack.c.b16 %v3332, %v3328
        %v3889 = vpack.c.b16 %v3333, %v3329
        %v3890 = vpack.c.b16 %v3338, %v3334
        %v3891 = vpack.c.b16 %v3339, %v3335
        %v3892 = vpack.c.b16 %v3340, %v3336
        %v3893 = vpack.c.b16 %v3341, %v3337
        %v3894 = vpack.c.b16 %v3346, %v3342
        %v3895 = vpack.c.b16 %v3347, %v3343
        %v3896 = vpack.c.b16 %v3348, %v3344
        %v3897 = vpack.c.b16 %v3349, %v3345
        %v3898 = vpack.c.b16 %v3354, %v3350
        %v3899 = vpack.c.b16 %v3355, %v3351
        %v3900 = vpack.c.b16 %v3356, %v3352
        %v3901 = vpack.c.b16 %v3357, %v3353
        %v3902 = vpack.c.b16 %v3362, %v3358
        %v3903 = vpack.c.b16 %v3363, %v3359
        %v3904 = vpack.c.b16 %v3364, %v3360
        %v3905 = vpack.c.b16 %v3365, %v3361
        %v3906 = vpack.c.b16 %v3370, %v3366
        %v3907 = vpack.c.b16 %v3371, %v3367
        %v3908 = vpack.c.b16 %v3372, %v3368
        %v3909 = vpack.c.b16 %v3373, %v3369
        %v3910 = vpack.c.b16 %v3378, %v3374
        %v3911 = vpack.c.b16 %v3379, %v3375
        %v3912 = vpack.c.b16 %v3380, %v3376
        %v3913 = vpack.c.b16 %v3381, %v3377
        %v3914 = vpack.c.b16 %v3386, %v3382
        %v3915 = vpack.c.b16 %v3387, %v3383
        %v3916 = vpack.c.b16 %v3388, %v3384
        %v3917 = vpack.c.b16 %v3389, %v3385
        %v3918 = vpack.c.b16 %v3394, %v3390
        %v3919 = vpack.c.b16 %v3395, %v3391
        %v3920 = vpack.c.b16 %v3396, %v3392
        %v3921 = vpack.c.b16 %v3397, %v3393
        %v3922 = vpack.c.b16 %v3402, %v3398
        %v3923 = vpack.c.b16 %v3403, %v3399
        %v3924 = vpack.c.b16 %v3404, %v3400
        %v3925 = vpack.c.b16 %v3405, %v3401
        %v3926 = vpack.c.b16 %v3410, %v3406
        %v3927 = vpack.c.b16 %v3411, %v3407
        %v3928 = vpack.c.b16 %v3412, %v3408
        %v3929 = vpack.c.b16 %v3413, %v3409
        %v3930 = vpack.c.b16 %v3418, %v3414
        %v3931 = vpack.c.b16 %v3419, %v3415
        %v3932 = vpack.c.b16 %v3420, %v3416
        %v3933 = vpack.c.b16 %v3421, %v3417
        %4446 = vmatprep.subr.bf16.mxu0 %v3423
        %4447 = vmatpush1.bf16.msra.mxu0 %v3422
        %4448 = vmatprep.subr.bf16.mxu0 %v3427
        %4449 = vmatpush1.bf16.msra.mxu0 %v3426
        %4450 = vmatprep.subr.bf16.mxu0 %v3431
        %4451 = vmatpush1.bf16.msra.mxu0 %v3430
        %4452 = vmatprep.subr.bf16.mxu0 %v3435
        %4453 = vmatpush1.bf16.msra.mxu0 %v3434
        %4454 = vmatprep.subr.bf16.mxu0 %v3439
        %4455 = vmatpush1.bf16.msra.mxu0 %v3438
        %4456 = vmatprep.subr.bf16.mxu0 %v3443
        %4457 = vmatpush1.bf16.msra.mxu0 %v3442
        %4458 = vmatprep.subr.bf16.mxu0 %v3447
        %4459 = vmatpush1.bf16.msra.mxu0 %v3446
        %4460 = vmatprep.subr.bf16.mxu0 %v3451
        %4461 = vmatpush1.bf16.msra.mxu0 %v3450
        %4462 = vmatprep.subr.bf16.mxu0 %v3455
        %4463 = vmatpush1.bf16.msra.mxu0 %v3454
        %4464 = vmatprep.subr.bf16.mxu0 %v3459
        %4465 = vmatpush1.bf16.msra.mxu0 %v3458
        %4466 = vmatprep.subr.bf16.mxu0 %v3463
        %4467 = vmatpush1.bf16.msra.mxu0 %v3462
        %4468 = vmatprep.subr.bf16.mxu0 %v3467
        %4469 = vmatpush1.bf16.msra.mxu0 %v3466
        %4470 = vmatprep.subr.bf16.mxu0 %v3471
        %4471 = vmatpush1.bf16.msra.mxu0 %v3470
        %4472 = vmatprep.subr.bf16.mxu0 %v3475
        %4473 = vmatpush1.bf16.msra.mxu0 %v3474
        %4474 = vmatprep.subr.bf16.mxu0 %v3479
        %4475 = vmatpush1.bf16.msra.mxu0 %v3478
        %4476 = vmatprep.subr.bf16.mxu0 %v3483
        %4477 = vmatpush1.bf16.msra.mxu0 %v3482
        %4478 = vmatprep.mubr.bf16.mxu0 %v1809
        %4479 = vmatmul.mubr.bf16.gmra.mrb[0].mxu0 %v1795
        %v4480 = vpop.f32.mrb[0].mxu0
        %v4481 = vadd.f32 %v1753, %v4480
        %v4482 = vpop.f32.mrb[0].mxu0
        %v4483 = vadd.f32 %v1757, %v4482
        %v4484 = vpop.f32.mrb[0].mxu0
        %v4485 = vpop.f32.mrb[0].mxu0
        %4486 = vdwg.mxu0
        %4487 = vmatprep.subr.bf16.mxu0 %v3487
        %4488 = vmatpush1.bf16.msra.mxu0 %v3486
        %4489 = vmatprep.subr.bf16.mxu0 %v3491
        %4490 = vmatpush1.bf16.msra.mxu0 %v3490
        %4491 = vmatprep.subr.bf16.mxu0 %v3495
        %4492 = vmatpush1.bf16.msra.mxu0 %v3494
        %4493 = vmatprep.subr.bf16.mxu0 %v3499
        %4494 = vmatpush1.bf16.msra.mxu0 %v3498
        %4495 = vmatprep.subr.bf16.mxu0 %v3503
        %4496 = vmatpush1.bf16.msra.mxu0 %v3502
        %4497 = vmatprep.subr.bf16.mxu0 %v3507
        %4498 = vmatpush1.bf16.msra.mxu0 %v3506
        %4499 = vmatprep.subr.bf16.mxu0 %v3511
        %4500 = vmatpush1.bf16.msra.mxu0 %v3510
        %4501 = vmatprep.subr.bf16.mxu0 %v3515
        %4502 = vmatpush1.bf16.msra.mxu0 %v3514
        %4503 = vmatprep.subr.bf16.mxu0 %v3519
        %4504 = vmatpush1.bf16.msra.mxu0 %v3518
        %4505 = vmatprep.subr.bf16.mxu0 %v3523
        %4506 = vmatpush1.bf16.msra.mxu0 %v3522
        %4507 = vmatprep.subr.bf16.mxu0 %v3527
        %4508 = vmatpush1.bf16.msra.mxu0 %v3526
        %4509 = vmatprep.subr.bf16.mxu0 %v3531
        %4510 = vmatpush1.bf16.msra.mxu0 %v3530
        %4511 = vmatprep.subr.bf16.mxu0 %v3535
        %4512 = vmatpush1.bf16.msra.mxu0 %v3534
        %4513 = vmatprep.subr.bf16.mxu0 %v3539
        %4514 = vmatpush1.bf16.msra.mxu0 %v3538
        %4515 = vmatprep.subr.bf16.mxu0 %v3543
        %4516 = vmatpush1.bf16.msra.mxu0 %v3542
        %4517 = vmatprep.subr.bf16.mxu0 %v3547
        %4518 = vmatpush1.bf16.msra.mxu0 %v3546
        %4519 = vmatprep.mubr.bf16.mxu0 %v1819
        %4520 = vmatmul.mubr.bf16.gmra.mrb[0].mxu0 %v1817
        %v4521 = vpop.f32.mrb[0].mxu0
        %v4522 = vadd.f32 %v4481, %v4521
        %v4523 = vpop.f32.mrb[0].mxu0
        %v4524 = vadd.f32 %v4483, %v4523
        %v4525 = vpop.f32.mrb[0].mxu0
        %v4526 = vpop.f32.mrb[0].mxu0
        %4527 = vdwg.mxu0
        %4528 = vmatprep.subr.bf16.mxu0 %v3551
        %4529 = vmatpush1.bf16.msra.mxu0 %v3550
        %4530 = vmatprep.subr.bf16.mxu0 %v3555
        %4531 = vmatpush1.bf16.msra.mxu0 %v3554
        %4532 = vmatprep.subr.bf16.mxu0 %v3559
        %4533 = vmatpush1.bf16.msra.mxu0 %v3558
        %4534 = vmatprep.subr.bf16.mxu0 %v3563
        %4535 = vmatpush1.bf16.msra.mxu0 %v3562
        %4536 = vmatprep.subr.bf16.mxu0 %v3567
        %4537 = vmatpush1.bf16.msra.mxu0 %v3566
        %4538 = vmatprep.subr.bf16.mxu0 %v3571
        %4539 = vmatpush1.bf16.msra.mxu0 %v3570
        %4540 = vmatprep.subr.bf16.mxu0 %v3575
        %4541 = vmatpush1.bf16.msra.mxu0 %v3574
        %4542 = vmatprep.subr.bf16.mxu0 %v3579
        %4543 = vmatpush1.bf16.msra.mxu0 %v3578
        %4544 = vmatprep.subr.bf16.mxu0 %v3583
        %4545 = vmatpush1.bf16.msra.mxu0 %v3582
        %4546 = vmatprep.subr.bf16.mxu0 %v3587
        %4547 = vmatpush1.bf16.msra.mxu0 %v3586
        %4548 = vmatprep.subr.bf16.mxu0 %v3591
        %4549 = vmatpush1.bf16.msra.mxu0 %v3590
        %4550 = vmatprep.subr.bf16.mxu0 %v3595
        %4551 = vmatpush1.bf16.msra.mxu0 %v3594
        %4552 = vmatprep.subr.bf16.mxu0 %v3599
        %4553 = vmatpush1.bf16.msra.mxu0 %v3598
        %4554 = vmatprep.subr.bf16.mxu0 %v3603
        %4555 = vmatpush1.bf16.msra.mxu0 %v3602
        %4556 = vmatprep.subr.bf16.mxu0 %v3607
        %4557 = vmatpush1.bf16.msra.mxu0 %v3606
        %4558 = vmatprep.subr.bf16.mxu0 %v3611
        %4559 = vmatpush1.bf16.msra.mxu0 %v3610
        %4560 = vmatprep.mubr.bf16.mxu0 %v1816
        %4561 = vmatmul.mubr.bf16.gmra.mrb[0].mxu0 %v1802
        %v4562 = vpop.f32.mrb[0].mxu0
        %v4563 = vadd.f32 %v4522, %v4562
        %v4564 = vpop.f32.mrb[0].mxu0
        %v4565 = vadd.f32 %v4524, %v4564
        %v4566 = vpop.f32.mrb[0].mxu0
        %v4567 = vpop.f32.mrb[0].mxu0
        %4568 = vdwg.mxu0
        %4569 = vmatprep.subr.bf16.mxu0 %v3615
        %4570 = vmatpush1.bf16.msra.mxu0 %v3614
        %4571 = vmatprep.subr.bf16.mxu0 %v3619
        %4572 = vmatpush1.bf16.msra.mxu0 %v3618
        %4573 = vmatprep.subr.bf16.mxu0 %v3623
        %4574 = vmatpush1.bf16.msra.mxu0 %v3622
        %4575 = vmatprep.subr.bf16.mxu0 %v3627
        %4576 = vmatpush1.bf16.msra.mxu0 %v3626
        %4577 = vmatprep.subr.bf16.mxu0 %v3631
        %4578 = vmatpush1.bf16.msra.mxu0 %v3630
        %4579 = vmatprep.subr.bf16.mxu0 %v3635
        %4580 = vmatpush1.bf16.msra.mxu0 %v3634
        %4581 = vmatprep.subr.bf16.mxu0 %v3639
        %4582 = vmatpush1.bf16.msra.mxu0 %v3638
        %4583 = vmatprep.subr.bf16.mxu0 %v3643
        %4584 = vmatpush1.bf16.msra.mxu0 %v3642
        %4585 = vmatprep.subr.bf16.mxu0 %v3647
        %4586 = vmatpush1.bf16.msra.mxu0 %v3646
        %4587 = vmatprep.subr.bf16.mxu0 %v3651
        %4588 = vmatpush1.bf16.msra.mxu0 %v3650
        %4589 = vmatprep.subr.bf16.mxu0 %v3655
        %4590 = vmatpush1.bf16.msra.mxu0 %v3654
        %4591 = vmatprep.subr.bf16.mxu0 %v3659
        %4592 = vmatpush1.bf16.msra.mxu0 %v3658
        %4593 = vmatprep.subr.bf16.mxu0 %v3663
        %4594 = vmatpush1.bf16.msra.mxu0 %v3662
        %4595 = vmatprep.subr.bf16.mxu0 %v3667
        %4596 = vmatpush1.bf16.msra.mxu0 %v3666
        %4597 = vmatprep.subr.bf16.mxu0 %v3671
        %4598 = vmatpush1.bf16.msra.mxu0 %v3670
        %4599 = vmatprep.subr.bf16.mxu0 %v3675
        %4600 = vmatpush1.bf16.msra.mxu0 %v3674
        %4601 = vmatprep.mubr.bf16.mxu0 %v1820
        %4602 = vmatmul.mubr.bf16.gmra.mrb[0].mxu0 %v1818
        %v4603 = vpop.f32.mrb[0].mxu0
        %v4604 = vadd.f32 %v4563, %v4603
        %v4605 = vpop.f32.mrb[0].mxu0
        %v4606 = vadd.f32 %v4565, %v4605
        %v4607 = vpop.f32.mrb[0].mxu0
        %v4608 = vpop.f32.mrb[0].mxu0
        %4609 = vdwg.mxu0
        %4610 = vmatprep.subr.bf16.mxu0 %v3679
        %4611 = vmatpush1.bf16.msra.mxu0 %v3678
        %4612 = vmatprep.subr.bf16.mxu0 %v3683
        %4613 = vmatpush1.bf16.msra.mxu0 %v3682
        %4614 = vmatprep.subr.bf16.mxu0 %v3687
        %4615 = vmatpush1.bf16.msra.mxu0 %v3686
        %4616 = vmatprep.subr.bf16.mxu0 %v3691
        %4617 = vmatpush1.bf16.msra.mxu0 %v3690
        %4618 = vmatprep.subr.bf16.mxu0 %v3695
        %4619 = vmatpush1.bf16.msra.mxu0 %v3694
        %4620 = vmatprep.subr.bf16.mxu0 %v3699
        %4621 = vmatpush1.bf16.msra.mxu0 %v3698
        %4622 = vmatprep.subr.bf16.mxu0 %v3703
        %4623 = vmatpush1.bf16.msra.mxu0 %v3702
        %4624 = vmatprep.subr.bf16.mxu0 %v3707
        %4625 = vmatpush1.bf16.msra.mxu0 %v3706
        %4626 = vmatprep.subr.bf16.mxu0 %v3711
        %4627 = vmatpush1.bf16.msra.mxu0 %v3710
        %4628 = vmatprep.subr.bf16.mxu0 %v3715
        %4629 = vmatpush1.bf16.msra.mxu0 %v3714
        %4630 = vmatprep.subr.bf16.mxu0 %v3719
        %4631 = vmatpush1.bf16.msra.mxu0 %v3718
        %4632 = vmatprep.subr.bf16.mxu0 %v3723
        %4633 = vmatpush1.bf16.msra.mxu0 %v3722
        %4634 = vmatprep.subr.bf16.mxu0 %v3727
        %4635 = vmatpush1.bf16.msra.mxu0 %v3726
        %4636 = vmatprep.subr.bf16.mxu0 %v3731
        %4637 = vmatpush1.bf16.msra.mxu0 %v3730
        %4638 = vmatprep.subr.bf16.mxu0 %v3735
        %4639 = vmatpush1.bf16.msra.mxu0 %v3734
        %4640 = vmatprep.subr.bf16.mxu0 %v3739
        %4641 = vmatpush1.bf16.msra.mxu0 %v3738
        %4642 = vmatprep.mubr.bf16.mxu0 %v1858
        %4643 = vmatmul.mubr.bf16.gmra.mrb[0].mxu0 %v1844
        %v4644 = vpop.f32.mrb[0].mxu0
        %v4645 = vadd.f32 %v4604, %v4644
        %v4646 = vpop.f32.mrb[0].mxu0
        %v4647 = vadd.f32 %v4606, %v4646
        %v4648 = vpop.f32.mrb[0].mxu0
        %v4649 = vpop.f32.mrb[0].mxu0
        %4650 = vdwg.mxu0
        %4651 = vmatprep.subr.bf16.mxu0 %v3743
        %4652 = vmatpush1.bf16.msra.mxu0 %v3742
        %4653 = vmatprep.subr.bf16.mxu0 %v3747
        %4654 = vmatpush1.bf16.msra.mxu0 %v3746
        %4655 = vmatprep.subr.bf16.mxu0 %v3751
        %4656 = vmatpush1.bf16.msra.mxu0 %v3750
        %4657 = vmatprep.subr.bf16.mxu0 %v3755
        %4658 = vmatpush1.bf16.msra.mxu0 %v3754
        %4659 = vmatprep.subr.bf16.mxu0 %v3759
        %4660 = vmatpush1.bf16.msra.mxu0 %v3758
        %4661 = vmatprep.subr.bf16.mxu0 %v3763
        %4662 = vmatpush1.bf16.msra.mxu0 %v3762
        %4663 = vmatprep.subr.bf16.mxu0 %v3767
        %4664 = vmatpush1.bf16.msra.mxu0 %v3766
        %4665 = vmatprep.subr.bf16.mxu0 %v3771
        %4666 = vmatpush1.bf16.msra.mxu0 %v3770
        %4667 = vmatprep.subr.bf16.mxu0 %v3775
        %4668 = vmatpush1.bf16.msra.mxu0 %v3774
        %4669 = vmatprep.subr.bf16.mxu0 %v3779
        %4670 = vmatpush1.bf16.msra.mxu0 %v3778
        %4671 = vmatprep.subr.bf16.mxu0 %v3783
        %4672 = vmatpush1.bf16.msra.mxu0 %v3782
        %4673 = vmatprep.subr.bf16.mxu0 %v3787
        %4674 = vmatpush1.bf16.msra.mxu0 %v3786
        %4675 = vmatprep.subr.bf16.mxu0 %v3791
        %4676 = vmatpush1.bf16.msra.mxu0 %v3790
        %4677 = vmatprep.subr.bf16.mxu0 %v3795
        %4678 = vmatpush1.bf16.msra.mxu0 %v3794
        %4679 = vmatprep.subr.bf16.mxu0 %v3799
        %4680 = vmatpush1.bf16.msra.mxu0 %v3798
        %4681 = vmatprep.subr.bf16.mxu0 %v3803
        %4682 = vmatpush1.bf16.msra.mxu0 %v3802
        %4683 = vmatprep.mubr.bf16.mxu0 %v1868
        %4684 = vmatmul.mubr.bf16.gmra.mrb[0].mxu0 %v1866
        %v4685 = vpop.f32.mrb[0].mxu0
        %v4686 = vadd.f32 %v4645, %v4685
        %v4687 = vpop.f32.mrb[0].mxu0
        %v4688 = vadd.f32 %v4647, %v4687
        %v4689 = vpop.f32.mrb[0].mxu0
        %v4690 = vpop.f32.mrb[0].mxu0
        %4691 = vdwg.mxu0
        %4692 = vmatprep.subr.bf16.mxu0 %v3807
        %4693 = vmatpush1.bf16.msra.mxu0 %v3806
        %4694 = vmatprep.subr.bf16.mxu0 %v3811
        %4695 = vmatpush1.bf16.msra.mxu0 %v3810
        %4696 = vmatprep.subr.bf16.mxu0 %v3815
        %4697 = vmatpush1.bf16.msra.mxu0 %v3814
        %4698 = vmatprep.subr.bf16.mxu0 %v3819
        %4699 = vmatpush1.bf16.msra.mxu0 %v3818
        %4700 = vmatprep.subr.bf16.mxu0 %v3823
        %4701 = vmatpush1.bf16.msra.mxu0 %v3822
        %4702 = vmatprep.subr.bf16.mxu0 %v3827
        %4703 = vmatpush1.bf16.msra.mxu0 %v3826
        %4704 = vmatprep.subr.bf16.mxu0 %v3831
        %4705 = vmatpush1.bf16.msra.mxu0 %v3830
        %4706 = vmatprep.subr.bf16.mxu0 %v3835
        %4707 = vmatpush1.bf16.msra.mxu0 %v3834
        %4708 = vmatprep.subr.bf16.mxu0 %v3839
        %4709 = vmatpush1.bf16.msra.mxu0 %v3838
        %4710 = vmatprep.subr.bf16.mxu0 %v3843
        %4711 = vmatpush1.bf16.msra.mxu0 %v3842
        %4712 = vmatprep.subr.bf16.mxu0 %v3847
        %4713 = vmatpush1.bf16.msra.mxu0 %v3846
        %4714 = vmatprep.subr.bf16.mxu0 %v3851
        %4715 = vmatpush1.bf16.msra.mxu0 %v3850
        %4716 = vmatprep.subr.bf16.mxu0 %v3855
        %4717 = vmatpush1.bf16.msra.mxu0 %v3854
        %4718 = vmatprep.subr.bf16.mxu0 %v3859
        %4719 = vmatpush1.bf16.msra.mxu0 %v3858
        %4720 = vmatprep.subr.bf16.mxu0 %v3863
        %4721 = vmatpush1.bf16.msra.mxu0 %v3862
        %4722 = vmatprep.subr.bf16.mxu0 %v3867
        %4723 = vmatpush1.bf16.msra.mxu0 %v3866
        %4724 = vmatprep.mubr.bf16.mxu0 %v1865
        %4725 = vmatmul.mubr.bf16.gmra.mrb[0].mxu0 %v1851
        %v4726 = vpop.f32.mrb[0].mxu0
        %v4727 = vadd.f32 %v4686, %v4726
        %v4728 = vpop.f32.mrb[0].mxu0
        %v4729 = vadd.f32 %v4688, %v4728
        %v4730 = vpop.f32.mrb[0].mxu0
        %v4731 = vpop.f32.mrb[0].mxu0
        %4732 = vdwg.mxu0
        %4733 = vmatprep.subr.bf16.mxu0 %v3871
        %4734 = vmatpush1.bf16.msra.mxu0 %v3870
        %4735 = vmatprep.subr.bf16.mxu0 %v3875
        %4736 = vmatpush1.bf16.msra.mxu0 %v3874
        %4737 = vmatprep.subr.bf16.mxu0 %v3879
        %4738 = vmatpush1.bf16.msra.mxu0 %v3878
        %4739 = vmatprep.subr.bf16.mxu0 %v3883
        %4740 = vmatpush1.bf16.msra.mxu0 %v3882
        %4741 = vmatprep.subr.bf16.mxu0 %v3887
        %4742 = vmatpush1.bf16.msra.mxu0 %v3886
        %4743 = vmatprep.subr.bf16.mxu0 %v3891
        %4744 = vmatpush1.bf16.msra.mxu0 %v3890
        %4745 = vmatprep.subr.bf16.mxu0 %v3895
        %4746 = vmatpush1.bf16.msra.mxu0 %v3894
        %4747 = vmatprep.subr.bf16.mxu0 %v3899
        %4748 = vmatpush1.bf16.msra.mxu0 %v3898
        %4749 = vmatprep.subr.bf16.mxu0 %v3903
        %4750 = vmatpush1.bf16.msra.mxu0 %v3902
        %4751 = vmatprep.subr.bf16.mxu0 %v3907
        %4752 = vmatpush1.bf16.msra.mxu0 %v3906
        %4753 = vmatprep.subr.bf16.mxu0 %v3911
        %4754 = vmatpush1.bf16.msra.mxu0 %v3910
        %4755 = vmatprep.subr.bf16.mxu0 %v3915
        %4756 = vmatpush1.bf16.msra.mxu0 %v3914
        %4757 = vmatprep.subr.bf16.mxu0 %v3919
        %4758 = vmatpush1.bf16.msra.mxu0 %v3918
        %4759 = vmatprep.subr.bf16.mxu0 %v3923
        %4760 = vmatpush1.bf16.msra.mxu0 %v3922
        %4761 = vmatprep.subr.bf16.mxu0 %v3927
        %4762 = vmatpush1.bf16.msra.mxu0 %v3926
        %4763 = vmatprep.subr.bf16.mxu0 %v3931
        %4764 = vmatpush1.bf16.msra.mxu0 %v3930
        %4765 = vmatprep.mubr.bf16.mxu0 %v1869
        %4766 = vmatmul.mubr.bf16.gmra.mrb[0].mxu0 %v1867
        %v4767 = vpop.f32.mrb[0].mxu0
        %v4768 = vadd.f32 %v4727, %v4767
        %v4769 = vpop.f32.mrb[0].mxu0
        %v4770 = vadd.f32 %v4729, %v4769
        %v4771 = vpop.f32.mrb[0].mxu0
        %v4772 = vpop.f32.mrb[0].mxu0
        %4773 = vdwg.mxu0
        %4774 = vmatprep.subr.bf16.mxu0 %v3425
        %4775 = vmatpush1.bf16.msra.mxu0 %v3424
        %4776 = vmatprep.subr.bf16.mxu0 %v3429
        %4777 = vmatpush1.bf16.msra.mxu0 %v3428
        %4778 = vmatprep.subr.bf16.mxu0 %v3433
        %4779 = vmatpush1.bf16.msra.mxu0 %v3432
        %4780 = vmatprep.subr.bf16.mxu0 %v3437
        %4781 = vmatpush1.bf16.msra.mxu0 %v3436
        %4782 = vmatprep.subr.bf16.mxu0 %v3441
        %4783 = vmatpush1.bf16.msra.mxu0 %v3440
        %4784 = vmatprep.subr.bf16.mxu0 %v3445
        %4785 = vmatpush1.bf16.msra.mxu0 %v3444
        %4786 = vmatprep.subr.bf16.mxu0 %v3449
        %4787 = vmatpush1.bf16.msra.mxu0 %v3448
        %4788 = vmatprep.subr.bf16.mxu0 %v3453
        %4789 = vmatpush1.bf16.msra.mxu0 %v3452
        %4790 = vmatprep.subr.bf16.mxu0 %v3457
        %4791 = vmatpush1.bf16.msra.mxu0 %v3456
        %4792 = vmatprep.subr.bf16.mxu0 %v3461
        %4793 = vmatpush1.bf16.msra.mxu0 %v3460
        %4794 = vmatprep.subr.bf16.mxu0 %v3465
        %4795 = vmatpush1.bf16.msra.mxu0 %v3464
        %4796 = vmatprep.subr.bf16.mxu0 %v3469
        %4797 = vmatpush1.bf16.msra.mxu0 %v3468
        %4798 = vmatprep.subr.bf16.mxu0 %v3473
        %4799 = vmatpush1.bf16.msra.mxu0 %v3472
        %4800 = vmatprep.subr.bf16.mxu0 %v3477
        %4801 = vmatpush1.bf16.msra.mxu0 %v3476
        %4802 = vmatprep.subr.bf16.mxu0 %v3481
        %4803 = vmatpush1.bf16.msra.mxu0 %v3480
        %4804 = vmatprep.subr.bf16.mxu0 %v3485
        %4805 = vmatpush1.bf16.msra.mxu0 %v3484
        %4806 = vmatprep.mubr.bf16.mxu0 %v1809
        %4807 = vmatmul.mubr.bf16.gmra.mrb[0].mxu0 %v1795
        %v4808 = vpop.f32.mrb[0].mxu0
        %v4809 = vadd.f32 %v1761, %v4808
        %v4810 = vpop.f32.mrb[0].mxu0
        %v4811 = vadd.f32 %v1765, %v4810
        %v4812 = vpop.f32.mrb[0].mxu0
        %v4813 = vpop.f32.mrb[0].mxu0
        %4814 = vdwg.mxu0
        %4815 = vmatprep.subr.bf16.mxu0 %v3489
        %4816 = vmatpush1.bf16.msra.mxu0 %v3488
        %4817 = vmatprep.subr.bf16.mxu0 %v3493
        %4818 = vmatpush1.bf16.msra.mxu0 %v3492
        %4819 = vmatprep.subr.bf16.mxu0 %v3497
        %4820 = vmatpush1.bf16.msra.mxu0 %v3496
        %4821 = vmatprep.subr.bf16.mxu0 %v3501
        %4822 = vmatpush1.bf16.msra.mxu0 %v3500
        %4823 = vmatprep.subr.bf16.mxu0 %v3505
        %4824 = vmatpush1.bf16.msra.mxu0 %v3504
        %4825 = vmatprep.subr.bf16.mxu0 %v3509
        %4826 = vmatpush1.bf16.msra.mxu0 %v3508
        %4827 = vmatprep.subr.bf16.mxu0 %v3513
        %4828 = vmatpush1.bf16.msra.mxu0 %v3512
        %4829 = vmatprep.subr.bf16.mxu0 %v3517
        %4830 = vmatpush1.bf16.msra.mxu0 %v3516
        %4831 = vmatprep.subr.bf16.mxu0 %v3521
        %4832 = vmatpush1.bf16.msra.mxu0 %v3520
        %4833 = vmatprep.subr.bf16.mxu0 %v3525
        %4834 = vmatpush1.bf16.msra.mxu0 %v3524
        %4835 = vmatprep.subr.bf16.mxu0 %v3529
        %4836 = vmatpush1.bf16.msra.mxu0 %v3528
        %4837 = vmatprep.subr.bf16.mxu0 %v3533
        %4838 = vmatpush1.bf16.msra.mxu0 %v3532
        %4839 = vmatprep.subr.bf16.mxu0 %v3537
        %4840 = vmatpush1.bf16.msra.mxu0 %v3536
        %4841 = vmatprep.subr.bf16.mxu0 %v3541
        %4842 = vmatpush1.bf16.msra.mxu0 %v3540
        %4843 = vmatprep.subr.bf16.mxu0 %v3545
        %4844 = vmatpush1.bf16.msra.mxu0 %v3544
        %4845 = vmatprep.subr.bf16.mxu0 %v3549
        %4846 = vmatpush1.bf16.msra.mxu0 %v3548
        %4847 = vmatprep.mubr.bf16.mxu0 %v1819
        %4848 = vmatmul.mubr.bf16.gmra.mrb[0].mxu0 %v1817
        %v4849 = vpop.f32.mrb[0].mxu0
        %v4850 = vadd.f32 %v4809, %v4849
        %v4851 = vpop.f32.mrb[0].mxu0
        %v4852 = vadd.f32 %v4811, %v4851
        %v4853 = vpop.f32.mrb[0].mxu0
        %v4854 = vpop.f32.mrb[0].mxu0
        %4855 = vdwg.mxu0
        %4856 = vmatprep.subr.bf16.mxu0 %v3553
        %4857 = vmatpush1.bf16.msra.mxu0 %v3552
        %4858 = vmatprep.subr.bf16.mxu0 %v3557
        %4859 = vmatpush1.bf16.msra.mxu0 %v3556
        %4860 = vmatprep.subr.bf16.mxu0 %v3561
        %4861 = vmatpush1.bf16.msra.mxu0 %v3560
        %4862 = vmatprep.subr.bf16.mxu0 %v3565
        %4863 = vmatpush1.bf16.msra.mxu0 %v3564
        %4864 = vmatprep.subr.bf16.mxu0 %v3569
        %4865 = vmatpush1.bf16.msra.mxu0 %v3568
        %4866 = vmatprep.subr.bf16.mxu0 %v3573
        %4867 = vmatpush1.bf16.msra.mxu0 %v3572
        %4868 = vmatprep.subr.bf16.mxu0 %v3577
        %4869 = vmatpush1.bf16.msra.mxu0 %v3576
        %4870 = vmatprep.subr.bf16.mxu0 %v3581
        %4871 = vmatpush1.bf16.msra.mxu0 %v3580
        %4872 = vmatprep.subr.bf16.mxu0 %v3585
        %4873 = vmatpush1.bf16.msra.mxu0 %v3584
        %4874 = vmatprep.subr.bf16.mxu0 %v3589
        %4875 = vmatpush1.bf16.msra.mxu0 %v3588
        %4876 = vmatprep.subr.bf16.mxu0 %v3593
        %4877 = vmatpush1.bf16.msra.mxu0 %v3592
        %4878 = vmatprep.subr.bf16.mxu0 %v3597
        %4879 = vmatpush1.bf16.msra.mxu0 %v3596
        %4880 = vmatprep.subr.bf16.mxu0 %v3601
        %4881 = vmatpush1.bf16.msra.mxu0 %v3600
        %4882 = vmatprep.subr.bf16.mxu0 %v3605
        %4883 = vmatpush1.bf16.msra.mxu0 %v3604
        %4884 = vmatprep.subr.bf16.mxu0 %v3609
        %4885 = vmatpush1.bf16.msra.mxu0 %v3608
        %4886 = vmatprep.subr.bf16.mxu0 %v3613
        %4887 = vmatpush1.bf16.msra.mxu0 %v3612
        %4888 = vmatprep.mubr.bf16.mxu0 %v1816
        %4889 = vmatmul.mubr.bf16.gmra.mrb[0].mxu0 %v1802
        %v4890 = vpop.f32.mrb[0].mxu0
        %v4891 = vadd.f32 %v4850, %v4890
        %v4892 = vpop.f32.mrb[0].mxu0
        %v4893 = vadd.f32 %v4852, %v4892
        %v4894 = vpop.f32.mrb[0].mxu0
        %v4895 = vpop.f32.mrb[0].mxu0
        %4896 = vdwg.mxu0
        %4897 = vmatprep.subr.bf16.mxu0 %v3617
        %4898 = vmatpush1.bf16.msra.mxu0 %v3616
        %4899 = vmatprep.subr.bf16.mxu0 %v3621
        %4900 = vmatpush1.bf16.msra.mxu0 %v3620
        %4901 = vmatprep.subr.bf16.mxu0 %v3625
        %4902 = vmatpush1.bf16.msra.mxu0 %v3624
        %4903 = vmatprep.subr.bf16.mxu0 %v3629
        %4904 = vmatpush1.bf16.msra.mxu0 %v3628
        %4905 = vmatprep.subr.bf16.mxu0 %v3633
        %4906 = vmatpush1.bf16.msra.mxu0 %v3632
        %4907 = vmatprep.subr.bf16.mxu0 %v3637
        %4908 = vmatpush1.bf16.msra.mxu0 %v3636
        %4909 = vmatprep.subr.bf16.mxu0 %v3641
        %4910 = vmatpush1.bf16.msra.mxu0 %v3640
        %4911 = vmatprep.subr.bf16.mxu0 %v3645
        %4912 = vmatpush1.bf16.msra.mxu0 %v3644
        %4913 = vmatprep.subr.bf16.mxu0 %v3649
        %4914 = vmatpush1.bf16.msra.mxu0 %v3648
        %4915 = vmatprep.subr.bf16.mxu0 %v3653
        %4916 = vmatpush1.bf16.msra.mxu0 %v3652
        %4917 = vmatprep.subr.bf16.mxu0 %v3657
        %4918 = vmatpush1.bf16.msra.mxu0 %v3656
        %4919 = vmatprep.subr.bf16.mxu0 %v3661
        %4920 = vmatpush1.bf16.msra.mxu0 %v3660
        %4921 = vmatprep.subr.bf16.mxu0 %v3665
        %4922 = vmatpush1.bf16.msra.mxu0 %v3664
        %4923 = vmatprep.subr.bf16.mxu0 %v3669
        %4924 = vmatpush1.bf16.msra.mxu0 %v3668
        %4925 = vmatprep.subr.bf16.mxu0 %v3673
        %4926 = vmatpush1.bf16.msra.mxu0 %v3672
        %4927 = vmatprep.subr.bf16.mxu0 %v3677
        %4928 = vmatpush1.bf16.msra.mxu0 %v3676
        %4929 = vmatprep.mubr.bf16.mxu0 %v1820
        %4930 = vmatmul.mubr.bf16.gmra.mrb[0].mxu0 %v1818
        %v4931 = vpop.f32.mrb[0].mxu0
        %v4932 = vadd.f32 %v4891, %v4931
        %v4933 = vpop.f32.mrb[0].mxu0
        %v4934 = vadd.f32 %v4893, %v4933
        %v4935 = vpop.f32.mrb[0].mxu0
        %v4936 = vpop.f32.mrb[0].mxu0
        %4937 = vdwg.mxu0
        %4938 = vmatprep.subr.bf16.mxu0 %v3681
        %4939 = vmatpush1.bf16.msra.mxu0 %v3680
        %4940 = vmatprep.subr.bf16.mxu0 %v3685
        %4941 = vmatpush1.bf16.msra.mxu0 %v3684
        %4942 = vmatprep.subr.bf16.mxu0 %v3689
        %4943 = vmatpush1.bf16.msra.mxu0 %v3688
        %4944 = vmatprep.subr.bf16.mxu0 %v3693
        %4945 = vmatpush1.bf16.msra.mxu0 %v3692
        %4946 = vmatprep.subr.bf16.mxu0 %v3697
        %4947 = vmatpush1.bf16.msra.mxu0 %v3696
        %4948 = vmatprep.subr.bf16.mxu0 %v3701
        %4949 = vmatpush1.bf16.msra.mxu0 %v3700
        %4950 = vmatprep.subr.bf16.mxu0 %v3705
        %4951 = vmatpush1.bf16.msra.mxu0 %v3704
        %4952 = vmatprep.subr.bf16.mxu0 %v3709
        %4953 = vmatpush1.bf16.msra.mxu0 %v3708
        %4954 = vmatprep.subr.bf16.mxu0 %v3713
        %4955 = vmatpush1.bf16.msra.mxu0 %v3712
        %4956 = vmatprep.subr.bf16.mxu0 %v3717
        %4957 = vmatpush1.bf16.msra.mxu0 %v3716
        %4958 = vmatprep.subr.bf16.mxu0 %v3721
        %4959 = vmatpush1.bf16.msra.mxu0 %v3720
        %4960 = vmatprep.subr.bf16.mxu0 %v3725
        %4961 = vmatpush1.bf16.msra.mxu0 %v3724
        %4962 = vmatprep.subr.bf16.mxu0 %v3729
        %4963 = vmatpush1.bf16.msra.mxu0 %v3728
        %4964 = vmatprep.subr.bf16.mxu0 %v3733
        %4965 = vmatpush1.bf16.msra.mxu0 %v3732
        %4966 = vmatprep.subr.bf16.mxu0 %v3737
        %4967 = vmatpush1.bf16.msra.mxu0 %v3736
        %4968 = vmatprep.subr.bf16.mxu0 %v3741
        %4969 = vmatpush1.bf16.msra.mxu0 %v3740
        %4970 = vmatprep.mubr.bf16.mxu0 %v1858
        %4971 = vmatmul.mubr.bf16.gmra.mrb[0].mxu0 %v1844
        %v4972 = vpop.f32.mrb[0].mxu0
        %v4973 = vadd.f32 %v4932, %v4972
        %v4974 = vpop.f32.mrb[0].mxu0
        %v4975 = vadd.f32 %v4934, %v4974
        %v4976 = vpop.f32.mrb[0].mxu0
        %v4977 = vpop.f32.mrb[0].mxu0
        %4978 = vdwg.mxu0
        %4979 = vmatprep.subr.bf16.mxu0 %v3745
        %4980 = vmatpush1.bf16.msra.mxu0 %v3744
        %4981 = vmatprep.subr.bf16.mxu0 %v3749
        %4982 = vmatpush1.bf16.msra.mxu0 %v3748
        %4983 = vmatprep.subr.bf16.mxu0 %v3753
        %4984 = vmatpush1.bf16.msra.mxu0 %v3752
        %4985 = vmatprep.subr.bf16.mxu0 %v3757
        %4986 = vmatpush1.bf16.msra.mxu0 %v3756
        %4987 = vmatprep.subr.bf16.mxu0 %v3761
        %4988 = vmatpush1.bf16.msra.mxu0 %v3760
        %4989 = vmatprep.subr.bf16.mxu0 %v3765
        %4990 = vmatpush1.bf16.msra.mxu0 %v3764
        %4991 = vmatprep.subr.bf16.mxu0 %v3769
        %4992 = vmatpush1.bf16.msra.mxu0 %v3768
        %4993 = vmatprep.subr.bf16.mxu0 %v3773
        %4994 = vmatpush1.bf16.msra.mxu0 %v3772
        %4995 = vmatprep.subr.bf16.mxu0 %v3777
        %4996 = vmatpush1.bf16.msra.mxu0 %v3776
        %4997 = vmatprep.subr.bf16.mxu0 %v3781
        %4998 = vmatpush1.bf16.msra.mxu0 %v3780
        %4999 = vmatprep.subr.bf16.mxu0 %v3785
        %5000 = vmatpush1.bf16.msra.mxu0 %v3784
        %5001 = vmatprep.subr.bf16.mxu0 %v3789
        %5002 = vmatpush1.bf16.msra.mxu0 %v3788
        %5003 = vmatprep.subr.bf16.mxu0 %v3793
        %5004 = vmatpush1.bf16.msra.mxu0 %v3792
        %5005 = vmatprep.subr.bf16.mxu0 %v3797
        %5006 = vmatpush1.bf16.msra.mxu0 %v3796
        %5007 = vmatprep.subr.bf16.mxu0 %v3801
        %5008 = vmatpush1.bf16.msra.mxu0 %v3800
        %5009 = vmatprep.subr.bf16.mxu0 %v3805
        %5010 = vmatpush1.bf16.msra.mxu0 %v3804
        %5011 = vmatprep.mubr.bf16.mxu0 %v1868
        %5012 = vmatmul.mubr.bf16.gmra.mrb[0].mxu0 %v1866
        %v5013 = vpop.f32.mrb[0].mxu0
        %v5014 = vadd.f32 %v4973, %v5013
        %v5015 = vpop.f32.mrb[0].mxu0
        %v5016 = vadd.f32 %v4975, %v5015
        %v5017 = vpop.f32.mrb[0].mxu0
        %v5018 = vpop.f32.mrb[0].mxu0
        %5019 = vdwg.mxu0
        %5020 = vmatprep.subr.bf16.mxu0 %v3809
        %5021 = vmatpush1.bf16.msra.mxu0 %v3808
        %5022 = vmatprep.subr.bf16.mxu0 %v3813
        %5023 = vmatpush1.bf16.msra.mxu0 %v3812
        %5024 = vmatprep.subr.bf16.mxu0 %v3817
        %5025 = vmatpush1.bf16.msra.mxu0 %v3816
        %5026 = vmatprep.subr.bf16.mxu0 %v3821
        %5027 = vmatpush1.bf16.msra.mxu0 %v3820
        %5028 = vmatprep.subr.bf16.mxu0 %v3825
        %5029 = vmatpush1.bf16.msra.mxu0 %v3824
        %5030 = vmatprep.subr.bf16.mxu0 %v3829
        %5031 = vmatpush1.bf16.msra.mxu0 %v3828
        %5032 = vmatprep.subr.bf16.mxu0 %v3833
        %5033 = vmatpush1.bf16.msra.mxu0 %v3832
        %5034 = vmatprep.subr.bf16.mxu0 %v3837
        %5035 = vmatpush1.bf16.msra.mxu0 %v3836
        %5036 = vmatprep.subr.bf16.mxu0 %v3841
        %5037 = vmatpush1.bf16.msra.mxu0 %v3840
        %5038 = vmatprep.subr.bf16.mxu0 %v3845
        %5039 = vmatpush1.bf16.msra.mxu0 %v3844
        %5040 = vmatprep.subr.bf16.mxu0 %v3849
        %5041 = vmatpush1.bf16.msra.mxu0 %v3848
        %5042 = vmatprep.subr.bf16.mxu0 %v3853
        %5043 = vmatpush1.bf16.msra.mxu0 %v3852
        %5044 = vmatprep.subr.bf16.mxu0 %v3857
        %5045 = vmatpush1.bf16.msra.mxu0 %v3856
        %5046 = vmatprep.subr.bf16.mxu0 %v3861
        %5047 = vmatpush1.bf16.msra.mxu0 %v3860
        %5048 = vmatprep.subr.bf16.mxu0 %v3865
        %5049 = vmatpush1.bf16.msra.mxu0 %v3864
        %5050 = vmatprep.subr.bf16.mxu0 %v3869
        %5051 = vmatpush1.bf16.msra.mxu0 %v3868
        %5052 = vmatprep.mubr.bf16.mxu0 %v1865
        %5053 = vmatmul.mubr.bf16.gmra.mrb[0].mxu0 %v1851
        %v5054 = vpop.f32.mrb[0].mxu0
        %v5055 = vadd.f32 %v5014, %v5054
        %v5056 = vpop.f32.mrb[0].mxu0
        %v5057 = vadd.f32 %v5016, %v5056
        %v5058 = vpop.f32.mrb[0].mxu0
        %v5059 = vpop.f32.mrb[0].mxu0
        %5060 = vdwg.mxu0
        %5061 = vmatprep.subr.bf16.mxu0 %v3873
        %5062 = vmatpush1.bf16.msra.mxu0 %v3872
        %5063 = vmatprep.subr.bf16.mxu0 %v3877
        %5064 = vmatpush1.bf16.msra.mxu0 %v3876
        %5065 = vmatprep.subr.bf16.mxu0 %v3881
        %5066 = vmatpush1.bf16.msra.mxu0 %v3880
        %5067 = vmatprep.subr.bf16.mxu0 %v3885
        %5068 = vmatpush1.bf16.msra.mxu0 %v3884
        %5069 = vmatprep.subr.bf16.mxu0 %v3889
        %5070 = vmatpush1.bf16.msra.mxu0 %v3888
        %5071 = vmatprep.subr.bf16.mxu0 %v3893
        %5072 = vmatpush1.bf16.msra.mxu0 %v3892
        %5073 = vmatprep.subr.bf16.mxu0 %v3897
        %5074 = vmatpush1.bf16.msra.mxu0 %v3896
        %5075 = vmatprep.subr.bf16.mxu0 %v3901
        %5076 = vmatpush1.bf16.msra.mxu0 %v3900
        %5077 = vmatprep.subr.bf16.mxu0 %v3905
        %5078 = vmatpush1.bf16.msra.mxu0 %v3904
        %5079 = vmatprep.subr.bf16.mxu0 %v3909
        %5080 = vmatpush1.bf16.msra.mxu0 %v3908
        %5081 = vmatprep.subr.bf16.mxu0 %v3913
        %5082 = vmatpush1.bf16.msra.mxu0 %v3912
        %5083 = vmatprep.subr.bf16.mxu0 %v3917
        %5084 = vmatpush1.bf16.msra.mxu0 %v3916
        %5085 = vmatprep.subr.bf16.mxu0 %v3921
        %5086 = vmatpush1.bf16.msra.mxu0 %v3920
        %5087 = vmatprep.subr.bf16.mxu0 %v3925
        %5088 = vmatpush1.bf16.msra.mxu0 %v3924
        %5089 = vmatprep.subr.bf16.mxu0 %v3929
        %5090 = vmatpush1.bf16.msra.mxu0 %v3928
        %5091 = vmatprep.subr.bf16.mxu0 %v3933
        %5092 = vmatpush1.bf16.msra.mxu0 %v3932
        %5093 = vmatprep.mubr.bf16.mxu0 %v1869
        %5094 = vmatmul.mubr.bf16.gmra.mrb[0].mxu0 %v1867
        %v5095 = vpop.f32.mrb[0].mxu0
        %v5096 = vadd.f32 %v5055, %v5095
        %v5097 = vpop.f32.mrb[0].mxu0
        %v5098 = vadd.f32 %v5057, %v5097
        %v5099 = vpop.f32.mrb[0].mxu0
        %v5100 = vpop.f32.mrb[0].mxu0
        %5101 = vdwg.mxu0
        %v5102 = vtanh.pop %v4768
        %v5103 = vtanh.pop %v4770
        %v5104 = vtanh.pop %v5096
        %v5105 = vtanh.pop %v5098
        %v5110 = vcombine.low %v5102, %v5103
        %v5111 = vcombine.low %v5104, %v5105
        %v5113 = vunpack.c.l.s4 1983009808
        %v5114 = vunpack.c.0.s8 %v5113
        %v5115 = vlaneseq
        %v5116 = vshrl.u32 %v5115, 7
        %v5117 = vsub.s32 %v5114, %v5116
        %v5118 = vrot.slane %v5110, %v5117
        %v5120 = vunpack.c.l.s4 1983009808
        %v5121 = vunpack.c.0.s8 %v5120
        %v5122 = vlaneseq
        %v5123 = vshrl.u32 %v5122, 7
        %v5124 = vsub.s32 %v5121, %v5123
        %v5125 = vrot.slane %v5111, %v5124
        %v5126 = vcombine.low %v5118, %v5125
        %5128 = vst [vmem:[%s1232] sm:$0xff] %v5126
        %s5129 = smul.u32 4, %s14
        %p5130 = scmp.lt.s32.totalorder %s5129, 7
        %s5131 = scalar_select %p5130, %s5129, 7
        %s5132 = smul.addr %s5131, 2
        %s5133 = scalar_lea.vmem %s3, %s5132
        // Predicated region
        $region56: #{generator_forward.9} parent=50 // pred_check
          %p5134 = pneg %p105
        $region57: #{generator_forward.9} parent=50 // pred_check_branch
          %5136 = sbr.rel (%p5134) target = $region59
        $region58: #{generator_forward.9} parent=50 // pred_region
          %s5137 = smul.u32 4, %s14
        $region59: #{generator_forward.9} parent=50 // pred_fallthru
          _
      $region51: #{generator_forward.9} parent=5 // pred_fallthru
        _
      %p5138 = scmp.le.s32.totalorder 2, %s9
      // Predicated region
      $region60: #{generator_forward.9} parent=5 // pred_check
        %p5139 = pneg %p5138
      $region61: #{generator_forward.9} parent=5 // pred_check_branch
        %5141 = sbr.rel (%p5139) target = $region63
      $region62: #{generator_forward.9} parent=5 // pred_region
        %s5142 = ssub.s32 %s9, 2
        // Predicated region
        $region64: #{generator_forward.9} parent=62 // pred_check
          %p5143 = pneg %p111
        $region65: #{generator_forward.9} parent=62 // pred_check_branch
          %5145 = sbr.rel (%p5143) target = $region67
        $region66: #{generator_forward.9} parent=62 // pred_region
          %s5146 = smul.u32 4, %s15
          %p5147 = scmp.lt.s32.totalorder %s5146, 7
          %s5148 = scalar_select %p5147, %s5146, 7
          %s5149 = smul.addr %s5148, 2
          %s5150 = scalar_lea.vmem %s3, %s5149
        $region67: #{generator_forward.9} parent=62 // pred_fallthru
          _
      $region63: #{generator_forward.9} parent=5 // pred_fallthru
        _
    $region6: #{generator_forward.9} parent=1 // loop_footer
      %s13 = sadd.s32 1, %s9
    $region7: #{generator_forward.9} parent=1 // loop_footer_branch
      %8 = sbr.rel target = $region3
    $region8: #{generator_forward.9} parent=1 // loop_exit
      _

</llo_original>
